<compile_context>
chip_gen: v7x
topology: tpu7x:2x2x1
jax: 0.10.0
libtpu: 0.0.40
codegen_flags: <defaults>
</compile_context>

<pallas_src>
import functools

import jax
import jax.numpy as jnp
import numpy as np
from jax import lax
from jax.experimental import pallas as pl
from jax.experimental.pallas import tpu as pltpu

_MXU_DTYPE = jnp.bfloat16   # matmul operand dtype (accumulation is always f32)
_EPS = 1e-5                 # InstanceNorm2d default eps
_NEG_SLOPE = 0.2            # LeakyReLU negative slope


def _round_up(x, m):
    return (x + m - 1) // m * m


# --------------------------------- kernel ---------------------------------
def _conv_in_lrelu(src_ref, w_ref, acc_ref, m_left, m_right, *, W, pad_rows):
    """One Conv3x3(pad=1, bias folded away) + InstanceNorm2d + LeakyReLU(0.2).

    Spatial-major layout: activations are (rows = H*W, lanes = C), so every tap matmul
    streams H*W rows through the MXU against a small resident (Cin, Cout) weight, and
    no 9x im2col patch is ever materialised.

    src_ref : (2*pad_rows + H*W, Cin) bf16; zero rows on top/bottom implement the dy
              part of the pad=1 halo, valid data lives in rows [pad_rows, pad_rows+H*W)
    w_ref   : (9*Cin, Cout) bf16 packed weights, row = tap*Cin + ci, tap = (dy+1)*3+(dx+1)
    acc_ref : (H*W, Cout) f32 VMEM accumulator (re-used by both layers)
    m_left  : (H*W, 1) bf16 {0,1}, zero where the dx=-1 neighbour is outside the image
    m_right : (H*W, 1) bf16 {0,1}, zero where the dx=+1 neighbour is outside the image
    returns : (H*W, Cout) f32 activation
    """
    HW = acc_ref.shape[0]
    cin = src_ref.shape[-1]

    acc_ref[...] = jnp.zeros_like(acc_ref)
    t = 0
    for dy in (-1, 0, 1):
        for dx in (-1, 0, 1):
            start = pad_rows + dy * W + dx
            xt = src_ref[start:start + HW, :]              # (HW, Cin) bf16 static slice
            if dx == -1:
                xt = xt * m_left                           # zero cols where j-1 < 0
            elif dx == 1:
                xt = xt * m_right                          # zero cols where j+1 >= W
            wt = w_ref[t * cin:(t + 1) * cin, :]           # (Cin, Cout) resident operand
            acc_ref[...] += jnp.dot(xt, wt, preferred_element_type=jnp.float32)
            t += 1

    # InstanceNorm2d(affine=False): biased variance over H*W, one-pass f32 stats,
    # clamped against cancellation-induced negative variance.
    acc = acc_ref[...]
    inv_hw = 1.0 / HW
    mean = jnp.sum(acc, axis=0, keepdims=True) * inv_hw
    ex2 = jnp.sum(acc * acc, axis=0, keepdims=True) * inv_hw
    var = jnp.maximum(ex2 - mean * mean, 0.0)
    y = (acc - mean) * lax.rsqrt(var + _EPS)

    return jnp.maximum(y, _NEG_SLOPE * y)                  # LeakyReLU(0.2) as one vmax


def _conv_block_kernel(x_ref, w1_ref, w2_ref, o_ref, xpad_ref, ypad_ref, acc_ref,
                       *, H, W, pad_rows):
    # x_ref : (1, H*W, C1p) bf16 one batch element, spatial-major, channel-padded
    # w1_ref: (9*C1p, C2p) bf16 packed layer-1 weights
    # w2_ref: (9*C2p, C2p) bf16 packed layer-2 weights
    # o_ref : (1, H*W, C2p) f32 output block
    # xpad_ref / ypad_ref: halo-padded VMEM staging scratches for layers 1 / 2
    # acc_ref: (H*W, C2p) f32 accumulator scratch (shared by both layers)
    HW = H * W
    c1p = x_ref.shape[-1]
    c2p = o_ref.shape[-1]
    rows = 2 * pad_rows + HW

    # Zero the dy halo rows every step (scratch is per-core and not zero-initialised;
    # unconditional so megacore "parallel" splitting on v7x stays correct).
    xpad_ref[0:pad_rows, :] = jnp.zeros((pad_rows, c1p), xpad_ref.dtype)
    xpad_ref[pad_rows + HW:rows, :] = jnp.zeros((pad_rows, c1p), xpad_ref.dtype)
    ypad_ref[0:pad_rows, :] = jnp.zeros((pad_rows, c2p), ypad_ref.dtype)
    ypad_ref[pad_rows + HW:rows, :] = jnp.zeros((pad_rows, c2p), ypad_ref.dtype)

    # dx halo masks generated in-kernel (no HBM mask DMA).  Fast exact path for the
    # (common) power-of-two W via bitwise AND.
    p = lax.broadcasted_iota(jnp.int32, (HW, 1), 0)
    if W & (W - 1) == 0:
        col = p & (W - 1)
    else:
        # TODO(synk): if vector remsi is unsupported on a given Mosaic build, fall back
        #             to a host-computed (H*W, 2) mask input for non-power-of-two W.
        col = lax.rem(p, W)
    m_left = (col >= 1).astype(_MXU_DTYPE)
    m_right = (col <= W - 2).astype(_MXU_DTYPE)

    # Layer 1: stage the (already bf16) input into the halo-padded scratch.
    xpad_ref[pad_rows:pad_rows + HW, :] = x_ref[0]
    y1 = _conv_in_lrelu(xpad_ref, w1_ref, acc_ref, m_left, m_right,
                        W=W, pad_rows=pad_rows)

    # Layer 2 reads the layer-1 activation back from VMEM (bounded live range).
    ypad_ref[pad_rows:pad_rows + HW, :] = y1.astype(ypad_ref.dtype)
    y2 = _conv_in_lrelu(ypad_ref, w2_ref, acc_ref, m_left, m_right,
                        W=W, pad_rows=pad_rows)

    o_ref[0] = y2.astype(o_ref.dtype)


# --------------------------------- wrapper ---------------------------------
def _pack_weights(w_hwio, cin_pad, cout_pad):
    """HWIO (3,3,Cin,Cout) -> (9*Cin_pad, Cout_pad) bf16; row = (kh*3+kw)*Cin_pad + ci."""
    _, _, cin, cout = w_hwio.shape
    w = jnp.pad(w_hwio, ((0, 0), (0, 0), (0, cin_pad - cin), (0, cout_pad - cout)))
    return w.reshape(9 * cin_pad, cout_pad).astype(_MXU_DTYPE)


def _vmem_bytes(shape, dtype):
    """Tile-padded VMEM footprint of one buffer (lanes -> 128, sublanes -> 8*(4/itemsize))."""
    itemsize = np.dtype(dtype).itemsize
    s = list(shape)
    s[-1] = _round_up(s[-1], 128)
    if len(s) >= 2:
        s[-2] = _round_up(s[-2], 8 * (4 // itemsize))
    return int(np.prod(s)) * itemsize


@jax.jit
def conv_block_forward(x_nchw, params):
    """Pallas conv_block.forward. x_nchw: (N, Cin, H, W) f32 -> (N, Cout, H, W) f32."""
    w1, b1, w2, b2 = params
    del b1, b2  # per-channel conv bias is exactly cancelled by InstanceNorm2d(affine=False)
    N, cin, H, W = x_nchw.shape
    cout = w1.shape[-1]
    HW = H * W
    c1p = _round_up(cin, 8)
    c2p = _round_up(cout, 8)
    pad_rows = _round_up(W + 1, 16)     # bf16 sublane-tile aligned dy halo
    rows = 2 * pad_rows + HW

    # NCHW -> spatial-major (N, H*W, C), channel-padded, bf16 (halves activation DMA).
    x = jnp.transpose(x_nchw, (0, 2, 3, 1)).reshape(N, HW, cin)
    if c1p != cin:
        x = jnp.pad(x, ((0, 0), (0, 0), (0, c1p - cin)))
    x = x.astype(_MXU_DTYPE)

    w1p = _pack_weights(w1, c1p, c2p)   # (9*c1p, c2p) bf16
    w2p = _pack_weights(w2, c2p, c2p)   # (9*c2p, c2p) bf16

    # VMEM budget from actual (tile-padded) block + scratch sizes, plus headroom for
    # Mosaic internal scratch -- v7x only has 64 MiB physical VMEM per TensorCore.
    vmem_needed = (
        2 * _vmem_bytes((1, HW, c1p), _MXU_DTYPE)       # double-buffered input block
        + 2 * _vmem_bytes((1, HW, c2p), jnp.float32)    # double-buffered output block
        + 2 * _vmem_bytes((9 * c1p, c2p), _MXU_DTYPE)   # layer-1 weights
        + 2 * _vmem_bytes((9 * c2p, c2p), _MXU_DTYPE)   # layer-2 weights
        + _vmem_bytes((rows, c1p), _MXU_DTYPE)          # xpad scratch
        + _vmem_bytes((rows, c2p), _MXU_DTYPE)          # ypad scratch
        + _vmem_bytes((HW, c2p), jnp.float32)           # f32 accumulator
    )
    vmem_limit = int(vmem_needed) + 12 * 1024 * 1024

    out = pl.pallas_call(
        functools.partial(_conv_block_kernel, H=H, W=W, pad_rows=pad_rows),
        out_shape=jax.ShapeDtypeStruct((N, HW, c2p), jnp.float32),
        grid_spec=pltpu.PrefetchScalarGridSpec(
            num_scalar_prefetch=0,
            grid=(N,),                                            # one image per step
            in_specs=[
                pl.BlockSpec((1, HW, c1p), lambda n: (n, 0, 0)),  # activations
                pl.BlockSpec((9 * c1p, c2p), lambda n: (0, 0)),   # layer-1 weights
                pl.BlockSpec((9 * c2p, c2p), lambda n: (0, 0)),   # layer-2 weights
            ],
            out_specs=pl.BlockSpec((1, HW, c2p), lambda n: (n, 0, 0)),
            scratch_shapes=[
                pltpu.VMEM((rows, c1p), _MXU_DTYPE),              # halo-padded layer-1 input
                pltpu.VMEM((rows, c2p), _MXU_DTYPE),              # halo-padded layer-2 input
                pltpu.VMEM((HW, c2p), jnp.float32),               # conv accumulator
            ],
        ),
        compiler_params=pltpu.CompilerParams(
            dimension_semantics=("parallel",),
            vmem_limit_bytes=vmem_limit,
        ),
    )(x, w1p, w2p)

    # spatial-major -> NCHW; channel un-pad only when actually needed.
    if c2p != cout:
        out = out[:, :, :cout]
    return jnp.transpose(out.reshape(N, H, W, cout), (0, 3, 1, 2))


# ---------------- pure-JAX reference (for correctness check) ----------------
def _ref_layer(x_nchw, w_hwio, bias):
    w_oihw = jnp.transpose(w_hwio, (3, 2, 0, 1))
    y = lax.conv_general_dilated(
        x_nchw, w_oihw, window_strides=(1, 1), padding=((1, 1), (1, 1)),
        dimension_numbers=("NCHW", "OIHW", "NCHW"))
    y = y + bias[None, :, None, None]
    mean = jnp.mean(y, axis=(2, 3), keepdims=True)
    var = jnp.mean((y - mean) ** 2, axis=(2, 3), keepdims=True)
    y = (y - mean) * lax.rsqrt(var + _EPS)
    return jnp.where(y > 0, y, _NEG_SLOPE * y)


def conv_block_reference(x_nchw, params):
    w1, b1, w2, b2 = params
    return _ref_layer(_ref_layer(x_nchw, w1, b1), w2, b2)


def init_params(key, ch_in, ch_out):
    k1, k2, k3, k4 = jax.random.split(key, 4)
    bound1 = 1.0 / np.sqrt(ch_in * 9)
    bound2 = 1.0 / np.sqrt(ch_out * 9)
    w1 = jax.random.uniform(k1, (3, 3, ch_in, ch_out), jnp.float32, -bound1, bound1)
    b1 = jax.random.uniform(k2, (ch_out,), jnp.float32, -bound1, bound1)
    w2 = jax.random.uniform(k3, (3, 3, ch_out, ch_out), jnp.float32, -bound2, bound2)
    b2 = jax.random.uniform(k4, (ch_out,), jnp.float32, -bound2, bound2)
    return (w1, b1, w2, b2)


if __name__ == "__main__":
    key = jax.random.PRNGKey(0)
    kx, kp = jax.random.split(key)

    N, CH_IN, CH_OUT, H, W = 2, 4, 8, 16, 16
    x = jax.random.normal(kx, (N, CH_IN, H, W), jnp.float32)
    params = init_params(kp, CH_IN, CH_OUT)

    out = jax.block_until_ready(conv_block_forward(x, params))
    ref = jax.block_until_ready(conv_block_reference(x, params))

    assert out.shape == (N, CH_OUT, H, W)
    # bf16 MXU operands (f32 accumulation) -> relaxed tolerance vs the f32 reference.
    np.testing.assert_allclose(np.asarray(out), np.asarray(ref), atol=6e-2, rtol=6e-2)
    print("KERNEL_OK")
</pallas_src>

<mosaic_0001>
module attributes {stable_mosaic.version = 11 : i64} {
  func.func @_conv_block_kernel(%arg0: i32, %arg1: memref<1x256x8xbf16, #tpu.memory_space<vmem>>, %arg2: memref<72x8xbf16, #tpu.memory_space<vmem>>, %arg3: memref<72x8xbf16, #tpu.memory_space<vmem>>, %arg4: memref<1x256x8xf32, #tpu.memory_space<vmem>>, %arg5: memref<320x8xbf16, #tpu.memory_space<vmem>>, %arg6: memref<320x8xbf16, #tpu.memory_space<vmem>>, %arg7: memref<256x8xf32, #tpu.memory_space<vmem>>) attributes {dimension_semantics = [#tpu.dimension_semantics<parallel>], iteration_bounds = array<i64: 2>, scalar_prefetch = 0 : i64, scratch_operands = 3 : i64, tpu.core_type = #tpu.core_type<tc>, window_params = [{transform_indices = @transform_0, window_bounds = array<i64: 1, 256, 8>}, {pipeline_mode = #tpu.pipeline_mode<synchronous>, transform_indices = @transform_1, window_bounds = array<i64: 72, 8>}, {pipeline_mode = #tpu.pipeline_mode<synchronous>, transform_indices = @transform_2, window_bounds = array<i64: 72, 8>}, {transform_indices = @transform_3, window_bounds = array<i64: 1, 256, 8>}]} {
    %cst = arith.constant 0.000000e+00 : bf16
    %0 = vector.broadcast %cst : bf16 to vector<32x8xbf16>
    %c0 = arith.constant 0 : index
    %c0_0 = arith.constant 0 : index
    %1 = vector.load %arg5[%c0, %c0_0] : memref<320x8xbf16, #tpu.memory_space<vmem>>, vector<32x8xbf16>
    tpu.vector_store %arg5[%c0, %c0_0], %0 {strides = array<i32>} : memref<320x8xbf16, #tpu.memory_space<vmem>>, vector<32x8xbf16>,
    %cst_1 = arith.constant 0.000000e+00 : bf16
    %2 = vector.broadcast %cst_1 : bf16 to vector<32x8xbf16>
    %c288 = arith.constant 288 : index
    %c0_2 = arith.constant 0 : index
    %3 = vector.load %arg5[%c288, %c0_2] : memref<320x8xbf16, #tpu.memory_space<vmem>>, vector<32x8xbf16>
    tpu.vector_store %arg5[%c288, %c0_2], %2 {strides = array<i32>} : memref<320x8xbf16, #tpu.memory_space<vmem>>, vector<32x8xbf16>,
    %cst_3 = arith.constant 0.000000e+00 : bf16
    %4 = vector.broadcast %cst_3 : bf16 to vector<32x8xbf16>
    %c0_4 = arith.constant 0 : index
    %c0_5 = arith.constant 0 : index
    %5 = vector.load %arg6[%c0_4, %c0_5] : memref<320x8xbf16, #tpu.memory_space<vmem>>, vector<32x8xbf16>
    tpu.vector_store %arg6[%c0_4, %c0_5], %4 {strides = array<i32>} : memref<320x8xbf16, #tpu.memory_space<vmem>>, vector<32x8xbf16>,
    %cst_6 = arith.constant 0.000000e+00 : bf16
    %6 = vector.broadcast %cst_6 : bf16 to vector<32x8xbf16>
    %c288_7 = arith.constant 288 : index
    %c0_8 = arith.constant 0 : index
    %7 = vector.load %arg6[%c288_7, %c0_8] : memref<320x8xbf16, #tpu.memory_space<vmem>>, vector<32x8xbf16>
    tpu.vector_store %arg6[%c288_7, %c0_8], %6 {strides = array<i32>} : memref<320x8xbf16, #tpu.memory_space<vmem>>, vector<32x8xbf16>,
    %8 = tpu.iota {dimensions = array<i32: 0>} : vector<256x1xi32>
    %c15_i32 = arith.constant 15 : i32
    %9 = vector.broadcast %c15_i32 : i32 to vector<256x1xi32>
    %10 = arith.andi %8, %9 : vector<256x1xi32>
    %c1_i32 = arith.constant 1 : i32
    %11 = vector.broadcast %c1_i32 : i32 to vector<256x1xi32>
    %12 = arith.cmpi sge, %10, %11 : vector<256x1xi32>
    %13 = arith.extui %12 : vector<256x1xi1> to vector<256x1xi32>
    %14 = arith.sitofp %13 : vector<256x1xi32> to vector<256x1xf32>
    %15 = arith.truncf %14 : vector<256x1xf32> to vector<256x1xbf16>
    %c14_i32 = arith.constant 14 : i32
    %16 = vector.broadcast %c14_i32 : i32 to vector<256x1xi32>
    %17 = arith.cmpi sle, %10, %16 : vector<256x1xi32>
    %18 = arith.extui %17 : vector<256x1xi1> to vector<256x1xi32>
    %19 = arith.sitofp %18 : vector<256x1xi32> to vector<256x1xf32>
    %20 = arith.truncf %19 : vector<256x1xf32> to vector<256x1xbf16>
    %c0_9 = arith.constant 0 : index
    %c0_10 = arith.constant 0 : index
    %c0_11 = arith.constant 0 : index
    %21 = vector.load %arg1[%c0_9, %c0_10, %c0_11] : memref<1x256x8xbf16, #tpu.memory_space<vmem>>, vector<1x256x8xbf16>
    %22 = vector.shape_cast %21 : vector<1x256x8xbf16> to vector<256x8xbf16>
    %c32 = arith.constant 32 : index
    %c0_12 = arith.constant 0 : index
    %23 = vector.load %arg5[%c32, %c0_12] : memref<320x8xbf16, #tpu.memory_space<vmem>>, vector<256x8xbf16>
    tpu.vector_store %arg5[%c32, %c0_12], %22 {strides = array<i32>} : memref<320x8xbf16, #tpu.memory_space<vmem>>, vector<256x8xbf16>,
    %cst_13 = arith.constant 0.000000e+00 : f32
    %24 = vector.broadcast %cst_13 : f32 to vector<256x8xf32>
    %c0_14 = arith.constant 0 : index
    %c0_15 = arith.constant 0 : index
    %25 = vector.load %arg7[%c0_14, %c0_15] : memref<256x8xf32, #tpu.memory_space<vmem>>, vector<256x8xf32>
    tpu.vector_store %arg7[%c0_14, %c0_15], %24 {strides = array<i32>} : memref<256x8xf32, #tpu.memory_space<vmem>>, vector<256x8xf32>,
    %c15 = arith.constant 15 : index
    %c0_16 = arith.constant 0 : index
    %26 = vector.load %arg5[%c15, %c0_16] : memref<320x8xbf16, #tpu.memory_space<vmem>>, vector<256x8xbf16>
    %27 = vector.broadcast %15 : vector<256x1xbf16> to vector<256x8xbf16>
    %28 = arith.mulf %26, %27 : vector<256x8xbf16>
    %c0_17 = arith.constant 0 : index
    %c0_18 = arith.constant 0 : index
    %29 = vector.load %arg2[%c0_17, %c0_18] : memref<72x8xbf16, #tpu.memory_space<vmem>>, vector<8x8xbf16>
    %c0_19 = arith.constant 0 : index
    %c0_20 = arith.constant 0 : index
    %30 = vector.load %arg7[%c0_19, %c0_20] : memref<256x8xf32, #tpu.memory_space<vmem>>, vector<256x8xf32>
    %cst_21 = arith.constant dense<0.000000e+00> : vector<256x8xf32>
    %31 = tpu.matmul %28, %29, %cst_21 {dimension_numbers = #tpu.dot_dimension_numbers<[1], [0], [0], [1], [0, 0, 1, 1], [], []>} : vector<256x8xbf16>, vector<8x8xbf16>, vector<256x8xf32> -> vector<256x8xf32>
    %32 = arith.addf %30, %31 : vector<256x8xf32>
    %c0_22 = arith.constant 0 : index
    %c0_23 = arith.constant 0 : index
    %33 = vector.load %arg7[%c0_22, %c0_23] : memref<256x8xf32, #tpu.memory_space<vmem>>, vector<256x8xf32>
    tpu.vector_store %arg7[%c0_22, %c0_23], %32 {strides = array<i32>} : memref<256x8xf32, #tpu.memory_space<vmem>>, vector<256x8xf32>,
    %c16 = arith.constant 16 : index
    %c0_24 = arith.constant 0 : index
    %34 = vector.load %arg5[%c16, %c0_24] : memref<320x8xbf16, #tpu.memory_space<vmem>>, vector<256x8xbf16>
    %c8 = arith.constant 8 : index
    %c0_25 = arith.constant 0 : index
    %35 = vector.load %arg2[%c8, %c0_25] : memref<72x8xbf16, #tpu.memory_space<vmem>>, vector<8x8xbf16>
    %c0_26 = arith.constant 0 : index
    %c0_27 = arith.constant 0 : index
    %36 = vector.load %arg7[%c0_26, %c0_27] : memref<256x8xf32, #tpu.memory_space<vmem>>, vector<256x8xf32>
    %cst_28 = arith.constant dense<0.000000e+00> : vector<256x8xf32>
    %37 = tpu.matmul %34, %35, %cst_28 {dimension_numbers = #tpu.dot_dimension_numbers<[1], [0], [0], [1], [0, 0, 1, 1], [], []>} : vector<256x8xbf16>, vector<8x8xbf16>, vector<256x8xf32> -> vector<256x8xf32>
    %38 = arith.addf %36, %37 : vector<256x8xf32>
    %c0_29 = arith.constant 0 : index
    %c0_30 = arith.constant 0 : index
    %39 = vector.load %arg7[%c0_29, %c0_30] : memref<256x8xf32, #tpu.memory_space<vmem>>, vector<256x8xf32>
    tpu.vector_store %arg7[%c0_29, %c0_30], %38 {strides = array<i32>} : memref<256x8xf32, #tpu.memory_space<vmem>>, vector<256x8xf32>,
    %c17 = arith.constant 17 : index
    %c0_31 = arith.constant 0 : index
    %40 = vector.load %arg5[%c17, %c0_31] : memref<320x8xbf16, #tpu.memory_space<vmem>>, vector<256x8xbf16>
    %41 = vector.broadcast %20 : vector<256x1xbf16> to vector<256x8xbf16>
    %42 = arith.mulf %40, %41 : vector<256x8xbf16>
    %c16_32 = arith.constant 16 : index
    %c0_33 = arith.constant 0 : index
    %43 = vector.load %arg2[%c16_32, %c0_33] : memref<72x8xbf16, #tpu.memory_space<vmem>>, vector<8x8xbf16>
    %c0_34 = arith.constant 0 : index
    %c0_35 = arith.constant 0 : index
    %44 = vector.load %arg7[%c0_34, %c0_35] : memref<256x8xf32, #tpu.memory_space<vmem>>, vector<256x8xf32>
    %cst_36 = arith.constant dense<0.000000e+00> : vector<256x8xf32>
    %45 = tpu.matmul %42, %43, %cst_36 {dimension_numbers = #tpu.dot_dimension_numbers<[1], [0], [0], [1], [0, 0, 1, 1], [], []>} : vector<256x8xbf16>, vector<8x8xbf16>, vector<256x8xf32> -> vector<256x8xf32>
    %46 = arith.addf %44, %45 : vector<256x8xf32>
    %c0_37 = arith.constant 0 : index
    %c0_38 = arith.constant 0 : index
    %47 = vector.load %arg7[%c0_37, %c0_38] : memref<256x8xf32, #tpu.memory_space<vmem>>, vector<256x8xf32>
    tpu.vector_store %arg7[%c0_37, %c0_38], %46 {strides = array<i32>} : memref<256x8xf32, #tpu.memory_space<vmem>>, vector<256x8xf32>,
    %c31 = arith.constant 31 : index
    %c0_39 = arith.constant 0 : index
    %48 = vector.load %arg5[%c31, %c0_39] : memref<320x8xbf16, #tpu.memory_space<vmem>>, vector<256x8xbf16>
    %49 = vector.broadcast %15 : vector<256x1xbf16> to vector<256x8xbf16>
    %50 = arith.mulf %48, %49 : vector<256x8xbf16>
    %c24 = arith.constant 24 : index
    %c0_40 = arith.constant 0 : index
    %51 = vector.load %arg2[%c24, %c0_40] : memref<72x8xbf16, #tpu.memory_space<vmem>>, vector<8x8xbf16>
    %c0_41 = arith.constant 0 : index
    %c0_42 = arith.constant 0 : index
    %52 = vector.load %arg7[%c0_41, %c0_42] : memref<256x8xf32, #tpu.memory_space<vmem>>, vector<256x8xf32>
    %cst_43 = arith.constant dense<0.000000e+00> : vector<256x8xf32>
    %53 = tpu.matmul %50, %51, %cst_43 {dimension_numbers = #tpu.dot_dimension_numbers<[1], [0], [0], [1], [0, 0, 1, 1], [], []>} : vector<256x8xbf16>, vector<8x8xbf16>, vector<256x8xf32> -> vector<256x8xf32>
    %54 = arith.addf %52, %53 : vector<256x8xf32>
    %c0_44 = arith.constant 0 : index
    %c0_45 = arith.constant 0 : index
    %55 = vector.load %arg7[%c0_44, %c0_45] : memref<256x8xf32, #tpu.memory_space<vmem>>, vector<256x8xf32>
    tpu.vector_store %arg7[%c0_44, %c0_45], %54 {strides = array<i32>} : memref<256x8xf32, #tpu.memory_space<vmem>>, vector<256x8xf32>,
    %c32_46 = arith.constant 32 : index
    %c0_47 = arith.constant 0 : index
    %56 = vector.load %arg5[%c32_46, %c0_47] : memref<320x8xbf16, #tpu.memory_space<vmem>>, vector<256x8xbf16>
    %c32_48 = arith.constant 32 : index
    %c0_49 = arith.constant 0 : index
    %57 = vector.load %arg2[%c32_48, %c0_49] : memref<72x8xbf16, #tpu.memory_space<vmem>>, vector<8x8xbf16>
    %c0_50 = arith.constant 0 : index
    %c0_51 = arith.constant 0 : index
    %58 = vector.load %arg7[%c0_50, %c0_51] : memref<256x8xf32, #tpu.memory_space<vmem>>, vector<256x8xf32>
    %cst_52 = arith.constant dense<0.000000e+00> : vector<256x8xf32>
    %59 = tpu.matmul %56, %57, %cst_52 {dimension_numbers = #tpu.dot_dimension_numbers<[1], [0], [0], [1], [0, 0, 1, 1], [], []>} : vector<256x8xbf16>, vector<8x8xbf16>, vector<256x8xf32> -> vector<256x8xf32>
    %60 = arith.addf %58, %59 : vector<256x8xf32>
    %c0_53 = arith.constant 0 : index
    %c0_54 = arith.constant 0 : index
    %61 = vector.load %arg7[%c0_53, %c0_54] : memref<256x8xf32, #tpu.memory_space<vmem>>, vector<256x8xf32>
    tpu.vector_store %arg7[%c0_53, %c0_54], %60 {strides = array<i32>} : memref<256x8xf32, #tpu.memory_space<vmem>>, vector<256x8xf32>,
    %c33 = arith.constant 33 : index
    %c0_55 = arith.constant 0 : index
    %62 = vector.load %arg5[%c33, %c0_55] : memref<320x8xbf16, #tpu.memory_space<vmem>>, vector<256x8xbf16>
    %63 = vector.broadcast %20 : vector<256x1xbf16> to vector<256x8xbf16>
    %64 = arith.mulf %62, %63 : vector<256x8xbf16>
    %c40 = arith.constant 40 : index
    %c0_56 = arith.constant 0 : index
    %65 = vector.load %arg2[%c40, %c0_56] : memref<72x8xbf16, #tpu.memory_space<vmem>>, vector<8x8xbf16>
    %c0_57 = arith.constant 0 : index
    %c0_58 = arith.constant 0 : index
    %66 = vector.load %arg7[%c0_57, %c0_58] : memref<256x8xf32, #tpu.memory_space<vmem>>, vector<256x8xf32>
    %cst_59 = arith.constant dense<0.000000e+00> : vector<256x8xf32>
    %67 = tpu.matmul %64, %65, %cst_59 {dimension_numbers = #tpu.dot_dimension_numbers<[1], [0], [0], [1], [0, 0, 1, 1], [], []>} : vector<256x8xbf16>, vector<8x8xbf16>, vector<256x8xf32> -> vector<256x8xf32>
    %68 = arith.addf %66, %67 : vector<256x8xf32>
    %c0_60 = arith.constant 0 : index
    %c0_61 = arith.constant 0 : index
    %69 = vector.load %arg7[%c0_60, %c0_61] : memref<256x8xf32, #tpu.memory_space<vmem>>, vector<256x8xf32>
    tpu.vector_store %arg7[%c0_60, %c0_61], %68 {strides = array<i32>} : memref<256x8xf32, #tpu.memory_space<vmem>>, vector<256x8xf32>,
    %c47 = arith.constant 47 : index
    %c0_62 = arith.constant 0 : index
    %70 = vector.load %arg5[%c47, %c0_62] : memref<320x8xbf16, #tpu.memory_space<vmem>>, vector<256x8xbf16>
    %71 = vector.broadcast %15 : vector<256x1xbf16> to vector<256x8xbf16>
    %72 = arith.mulf %70, %71 : vector<256x8xbf16>
    %c48 = arith.constant 48 : index
    %c0_63 = arith.constant 0 : index
    %73 = vector.load %arg2[%c48, %c0_63] : memref<72x8xbf16, #tpu.memory_space<vmem>>, vector<8x8xbf16>
    %c0_64 = arith.constant 0 : index
    %c0_65 = arith.constant 0 : index
    %74 = vector.load %arg7[%c0_64, %c0_65] : memref<256x8xf32, #tpu.memory_space<vmem>>, vector<256x8xf32>
    %cst_66 = arith.constant dense<0.000000e+00> : vector<256x8xf32>
    %75 = tpu.matmul %72, %73, %cst_66 {dimension_numbers = #tpu.dot_dimension_numbers<[1], [0], [0], [1], [0, 0, 1, 1], [], []>} : vector<256x8xbf16>, vector<8x8xbf16>, vector<256x8xf32> -> vector<256x8xf32>
    %76 = arith.addf %74, %75 : vector<256x8xf32>
    %c0_67 = arith.constant 0 : index
    %c0_68 = arith.constant 0 : index
    %77 = vector.load %arg7[%c0_67, %c0_68] : memref<256x8xf32, #tpu.memory_space<vmem>>, vector<256x8xf32>
    tpu.vector_store %arg7[%c0_67, %c0_68], %76 {strides = array<i32>} : memref<256x8xf32, #tpu.memory_space<vmem>>, vector<256x8xf32>,
    %c48_69 = arith.constant 48 : index
    %c0_70 = arith.constant 0 : index
    %78 = vector.load %arg5[%c48_69, %c0_70] : memref<320x8xbf16, #tpu.memory_space<vmem>>, vector<256x8xbf16>
    %c56 = arith.constant 56 : index
    %c0_71 = arith.constant 0 : index
    %79 = vector.load %arg2[%c56, %c0_71] : memref<72x8xbf16, #tpu.memory_space<vmem>>, vector<8x8xbf16>
    %c0_72 = arith.constant 0 : index
    %c0_73 = arith.constant 0 : index
    %80 = vector.load %arg7[%c0_72, %c0_73] : memref<256x8xf32, #tpu.memory_space<vmem>>, vector<256x8xf32>
    %cst_74 = arith.constant dense<0.000000e+00> : vector<256x8xf32>
    %81 = tpu.matmul %78, %79, %cst_74 {dimension_numbers = #tpu.dot_dimension_numbers<[1], [0], [0], [1], [0, 0, 1, 1], [], []>} : vector<256x8xbf16>, vector<8x8xbf16>, vector<256x8xf32> -> vector<256x8xf32>
    %82 = arith.addf %80, %81 : vector<256x8xf32>
    %c0_75 = arith.constant 0 : index
    %c0_76 = arith.constant 0 : index
    %83 = vector.load %arg7[%c0_75, %c0_76] : memref<256x8xf32, #tpu.memory_space<vmem>>, vector<256x8xf32>
    tpu.vector_store %arg7[%c0_75, %c0_76], %82 {strides = array<i32>} : memref<256x8xf32, #tpu.memory_space<vmem>>, vector<256x8xf32>,
    %c49 = arith.constant 49 : index
    %c0_77 = arith.constant 0 : index
    %84 = vector.load %arg5[%c49, %c0_77] : memref<320x8xbf16, #tpu.memory_space<vmem>>, vector<256x8xbf16>
    %85 = vector.broadcast %20 : vector<256x1xbf16> to vector<256x8xbf16>
    %86 = arith.mulf %84, %85 : vector<256x8xbf16>
    %c64 = arith.constant 64 : index
    %c0_78 = arith.constant 0 : index
    %87 = vector.load %arg2[%c64, %c0_78] : memref<72x8xbf16, #tpu.memory_space<vmem>>, vector<8x8xbf16>
    %c0_79 = arith.constant 0 : index
    %c0_80 = arith.constant 0 : index
    %88 = vector.load %arg7[%c0_79, %c0_80] : memref<256x8xf32, #tpu.memory_space<vmem>>, vector<256x8xf32>
    %cst_81 = arith.constant dense<0.000000e+00> : vector<256x8xf32>
    %89 = tpu.matmul %86, %87, %cst_81 {dimension_numbers = #tpu.dot_dimension_numbers<[1], [0], [0], [1], [0, 0, 1, 1], [], []>} : vector<256x8xbf16>, vector<8x8xbf16>, vector<256x8xf32> -> vector<256x8xf32>
    %90 = arith.addf %88, %89 : vector<256x8xf32>
    %c0_82 = arith.constant 0 : index
    %c0_83 = arith.constant 0 : index
    %91 = vector.load %arg7[%c0_82, %c0_83] : memref<256x8xf32, #tpu.memory_space<vmem>>, vector<256x8xf32>
    tpu.vector_store %arg7[%c0_82, %c0_83], %90 {strides = array<i32>} : memref<256x8xf32, #tpu.memory_space<vmem>>, vector<256x8xf32>,
    %c0_84 = arith.constant 0 : index
    %c0_85 = arith.constant 0 : index
    %92 = vector.load %arg7[%c0_84, %c0_85] : memref<256x8xf32, #tpu.memory_space<vmem>>, vector<256x8xf32>
    %cst_86 = arith.constant dense<0.000000e+00> : vector<8xf32>
    %93 = vector.multi_reduction <add>, %92, %cst_86 [0] : vector<256x8xf32> to vector<8xf32>
    %94 = vector.shape_cast %93 : vector<8xf32> to vector<1x8xf32>
    %cst_87 = arith.constant 3.906250e-03 : f32
    %95 = vector.broadcast %cst_87 : f32 to vector<1x8xf32>
    %96 = arith.mulf %94, %95 : vector<1x8xf32>
    %97 = arith.mulf %92, %92 : vector<256x8xf32>
    %cst_88 = arith.constant dense<0.000000e+00> : vector<8xf32>
    %98 = vector.multi_reduction <add>, %97, %cst_88 [0] : vector<256x8xf32> to vector<8xf32>
    %99 = vector.shape_cast %98 : vector<8xf32> to vector<1x8xf32>
    %cst_89 = arith.constant 3.906250e-03 : f32
    %100 = vector.broadcast %cst_89 : f32 to vector<1x8xf32>
    %101 = arith.mulf %99, %100 : vector<1x8xf32>
    %102 = arith.mulf %96, %96 : vector<1x8xf32>
    %103 = arith.subf %101, %102 : vector<1x8xf32>
    %cst_90 = arith.constant 0.000000e+00 : f32
    %104 = vector.broadcast %cst_90 : f32 to vector<1x8xf32>
    %105 = arith.maximumf %103, %104 : vector<1x8xf32>
    %106 = vector.broadcast %96 : vector<1x8xf32> to vector<256x8xf32>
    %107 = arith.subf %92, %106 : vector<256x8xf32>
    %cst_91 = arith.constant 9.99999974E-6 : f32
    %108 = vector.broadcast %cst_91 : f32 to vector<1x8xf32>
    %109 = arith.addf %105, %108 : vector<1x8xf32>
    %110 = math.rsqrt %109 : vector<1x8xf32>
    %111 = vector.broadcast %110 : vector<1x8xf32> to vector<256x8xf32>
    %112 = arith.mulf %107, %111 : vector<256x8xf32>
    %cst_92 = arith.constant 2.000000e-01 : f32
    %113 = vector.broadcast %cst_92 : f32 to vector<256x8xf32>
    %114 = arith.mulf %113, %112 : vector<256x8xf32>
    %115 = arith.maximumf %112, %114 : vector<256x8xf32>
    %116 = arith.truncf %115 : vector<256x8xf32> to vector<256x8xbf16>
    %c32_93 = arith.constant 32 : index
    %c0_94 = arith.constant 0 : index
    %117 = vector.load %arg6[%c32_93, %c0_94] : memref<320x8xbf16, #tpu.memory_space<vmem>>, vector<256x8xbf16>
    tpu.vector_store %arg6[%c32_93, %c0_94], %116 {strides = array<i32>} : memref<320x8xbf16, #tpu.memory_space<vmem>>, vector<256x8xbf16>,
    %cst_95 = arith.constant 0.000000e+00 : f32
    %118 = vector.broadcast %cst_95 : f32 to vector<256x8xf32>
    %c0_96 = arith.constant 0 : index
    %c0_97 = arith.constant 0 : index
    %119 = vector.load %arg7[%c0_96, %c0_97] : memref<256x8xf32, #tpu.memory_space<vmem>>, vector<256x8xf32>
    tpu.vector_store %arg7[%c0_96, %c0_97], %118 {strides = array<i32>} : memref<256x8xf32, #tpu.memory_space<vmem>>, vector<256x8xf32>,
    %c15_98 = arith.constant 15 : index
    %c0_99 = arith.constant 0 : index
    %120 = vector.load %arg6[%c15_98, %c0_99] : memref<320x8xbf16, #tpu.memory_space<vmem>>, vector<256x8xbf16>
    %121 = vector.broadcast %15 : vector<256x1xbf16> to vector<256x8xbf16>
    %122 = arith.mulf %120, %121 : vector<256x8xbf16>
    %c0_100 = arith.constant 0 : index
    %c0_101 = arith.constant 0 : index
    %123 = vector.load %arg3[%c0_100, %c0_101] : memref<72x8xbf16, #tpu.memory_space<vmem>>, vector<8x8xbf16>
    %c0_102 = arith.constant 0 : index
    %c0_103 = arith.constant 0 : index
    %124 = vector.load %arg7[%c0_102, %c0_103] : memref<256x8xf32, #tpu.memory_space<vmem>>, vector<256x8xf32>
    %cst_104 = arith.constant dense<0.000000e+00> : vector<256x8xf32>
    %125 = tpu.matmul %122, %123, %cst_104 {dimension_numbers = #tpu.dot_dimension_numbers<[1], [0], [0], [1], [0, 0, 1, 1], [], []>} : vector<256x8xbf16>, vector<8x8xbf16>, vector<256x8xf32> -> vector<256x8xf32>
    %126 = arith.addf %124, %125 : vector<256x8xf32>
    %c0_105 = arith.constant 0 : index
    %c0_106 = arith.constant 0 : index
    %127 = vector.load %arg7[%c0_105, %c0_106] : memref<256x8xf32, #tpu.memory_space<vmem>>, vector<256x8xf32>
    tpu.vector_store %arg7[%c0_105, %c0_106], %126 {strides = array<i32>} : memref<256x8xf32, #tpu.memory_space<vmem>>, vector<256x8xf32>,
    %c16_107 = arith.constant 16 : index
    %c0_108 = arith.constant 0 : index
    %128 = vector.load %arg6[%c16_107, %c0_108] : memref<320x8xbf16, #tpu.memory_space<vmem>>, vector<256x8xbf16>
    %c8_109 = arith.constant 8 : index
    %c0_110 = arith.constant 0 : index
    %129 = vector.load %arg3[%c8_109, %c0_110] : memref<72x8xbf16, #tpu.memory_space<vmem>>, vector<8x8xbf16>
    %c0_111 = arith.constant 0 : index
    %c0_112 = arith.constant 0 : index
    %130 = vector.load %arg7[%c0_111, %c0_112] : memref<256x8xf32, #tpu.memory_space<vmem>>, vector<256x8xf32>
    %cst_113 = arith.constant dense<0.000000e+00> : vector<256x8xf32>
    %131 = tpu.matmul %128, %129, %cst_113 {dimension_numbers = #tpu.dot_dimension_numbers<[1], [0], [0], [1], [0, 0, 1, 1], [], []>} : vector<256x8xbf16>, vector<8x8xbf16>, vector<256x8xf32> -> vector<256x8xf32>
    %132 = arith.addf %130, %131 : vector<256x8xf32>
    %c0_114 = arith.constant 0 : index
    %c0_115 = arith.constant 0 : index
    %133 = vector.load %arg7[%c0_114, %c0_115] : memref<256x8xf32, #tpu.memory_space<vmem>>, vector<256x8xf32>
    tpu.vector_store %arg7[%c0_114, %c0_115], %132 {strides = array<i32>} : memref<256x8xf32, #tpu.memory_space<vmem>>, vector<256x8xf32>,
    %c17_116 = arith.constant 17 : index
    %c0_117 = arith.constant 0 : index
    %134 = vector.load %arg6[%c17_116, %c0_117] : memref<320x8xbf16, #tpu.memory_space<vmem>>, vector<256x8xbf16>
    %135 = vector.broadcast %20 : vector<256x1xbf16> to vector<256x8xbf16>
    %136 = arith.mulf %134, %135 : vector<256x8xbf16>
    %c16_118 = arith.constant 16 : index
    %c0_119 = arith.constant 0 : index
    %137 = vector.load %arg3[%c16_118, %c0_119] : memref<72x8xbf16, #tpu.memory_space<vmem>>, vector<8x8xbf16>
    %c0_120 = arith.constant 0 : index
    %c0_121 = arith.constant 0 : index
    %138 = vector.load %arg7[%c0_120, %c0_121] : memref<256x8xf32, #tpu.memory_space<vmem>>, vector<256x8xf32>
    %cst_122 = arith.constant dense<0.000000e+00> : vector<256x8xf32>
    %139 = tpu.matmul %136, %137, %cst_122 {dimension_numbers = #tpu.dot_dimension_numbers<[1], [0], [0], [1], [0, 0, 1, 1], [], []>} : vector<256x8xbf16>, vector<8x8xbf16>, vector<256x8xf32> -> vector<256x8xf32>
    %140 = arith.addf %138, %139 : vector<256x8xf32>
    %c0_123 = arith.constant 0 : index
    %c0_124 = arith.constant 0 : index
    %141 = vector.load %arg7[%c0_123, %c0_124] : memref<256x8xf32, #tpu.memory_space<vmem>>, vector<256x8xf32>
    tpu.vector_store %arg7[%c0_123, %c0_124], %140 {strides = array<i32>} : memref<256x8xf32, #tpu.memory_space<vmem>>, vector<256x8xf32>,
    %c31_125 = arith.constant 31 : index
    %c0_126 = arith.constant 0 : index
    %142 = vector.load %arg6[%c31_125, %c0_126] : memref<320x8xbf16, #tpu.memory_space<vmem>>, vector<256x8xbf16>
    %143 = vector.broadcast %15 : vector<256x1xbf16> to vector<256x8xbf16>
    %144 = arith.mulf %142, %143 : vector<256x8xbf16>
    %c24_127 = arith.constant 24 : index
    %c0_128 = arith.constant 0 : index
    %145 = vector.load %arg3[%c24_127, %c0_128] : memref<72x8xbf16, #tpu.memory_space<vmem>>, vector<8x8xbf16>
    %c0_129 = arith.constant 0 : index
    %c0_130 = arith.constant 0 : index
    %146 = vector.load %arg7[%c0_129, %c0_130] : memref<256x8xf32, #tpu.memory_space<vmem>>, vector<256x8xf32>
    %cst_131 = arith.constant dense<0.000000e+00> : vector<256x8xf32>
    %147 = tpu.matmul %144, %145, %cst_131 {dimension_numbers = #tpu.dot_dimension_numbers<[1], [0], [0], [1], [0, 0, 1, 1], [], []>} : vector<256x8xbf16>, vector<8x8xbf16>, vector<256x8xf32> -> vector<256x8xf32>
    %148 = arith.addf %146, %147 : vector<256x8xf32>
    %c0_132 = arith.constant 0 : index
    %c0_133 = arith.constant 0 : index
    %149 = vector.load %arg7[%c0_132, %c0_133] : memref<256x8xf32, #tpu.memory_space<vmem>>, vector<256x8xf32>
    tpu.vector_store %arg7[%c0_132, %c0_133], %148 {strides = array<i32>} : memref<256x8xf32, #tpu.memory_space<vmem>>, vector<256x8xf32>,
    %c32_134 = arith.constant 32 : index
    %c0_135 = arith.constant 0 : index
    %150 = vector.load %arg6[%c32_134, %c0_135] : memref<320x8xbf16, #tpu.memory_space<vmem>>, vector<256x8xbf16>
    %c32_136 = arith.constant 32 : index
    %c0_137 = arith.constant 0 : index
    %151 = vector.load %arg3[%c32_136, %c0_137] : memref<72x8xbf16, #tpu.memory_space<vmem>>, vector<8x8xbf16>
    %c0_138 = arith.constant 0 : index
    %c0_139 = arith.constant 0 : index
    %152 = vector.load %arg7[%c0_138, %c0_139] : memref<256x8xf32, #tpu.memory_space<vmem>>, vector<256x8xf32>
    %cst_140 = arith.constant dense<0.000000e+00> : vector<256x8xf32>
    %153 = tpu.matmul %150, %151, %cst_140 {dimension_numbers = #tpu.dot_dimension_numbers<[1], [0], [0], [1], [0, 0, 1, 1], [], []>} : vector<256x8xbf16>, vector<8x8xbf16>, vector<256x8xf32> -> vector<256x8xf32>
    %154 = arith.addf %152, %153 : vector<256x8xf32>
    %c0_141 = arith.constant 0 : index
    %c0_142 = arith.constant 0 : index
    %155 = vector.load %arg7[%c0_141, %c0_142] : memref<256x8xf32, #tpu.memory_space<vmem>>, vector<256x8xf32>
    tpu.vector_store %arg7[%c0_141, %c0_142], %154 {strides = array<i32>} : memref<256x8xf32, #tpu.memory_space<vmem>>, vector<256x8xf32>,
    %c33_143 = arith.constant 33 : index
    %c0_144 = arith.constant 0 : index
    %156 = vector.load %arg6[%c33_143, %c0_144] : memref<320x8xbf16, #tpu.memory_space<vmem>>, vector<256x8xbf16>
    %157 = vector.broadcast %20 : vector<256x1xbf16> to vector<256x8xbf16>
    %158 = arith.mulf %156, %157 : vector<256x8xbf16>
    %c40_145 = arith.constant 40 : index
    %c0_146 = arith.constant 0 : index
    %159 = vector.load %arg3[%c40_145, %c0_146] : memref<72x8xbf16, #tpu.memory_space<vmem>>, vector<8x8xbf16>
    %c0_147 = arith.constant 0 : index
    %c0_148 = arith.constant 0 : index
    %160 = vector.load %arg7[%c0_147, %c0_148] : memref<256x8xf32, #tpu.memory_space<vmem>>, vector<256x8xf32>
    %cst_149 = arith.constant dense<0.000000e+00> : vector<256x8xf32>
    %161 = tpu.matmul %158, %159, %cst_149 {dimension_numbers = #tpu.dot_dimension_numbers<[1], [0], [0], [1], [0, 0, 1, 1], [], []>} : vector<256x8xbf16>, vector<8x8xbf16>, vector<256x8xf32> -> vector<256x8xf32>
    %162 = arith.addf %160, %161 : vector<256x8xf32>
    %c0_150 = arith.constant 0 : index
    %c0_151 = arith.constant 0 : index
    %163 = vector.load %arg7[%c0_150, %c0_151] : memref<256x8xf32, #tpu.memory_space<vmem>>, vector<256x8xf32>
    tpu.vector_store %arg7[%c0_150, %c0_151], %162 {strides = array<i32>} : memref<256x8xf32, #tpu.memory_space<vmem>>, vector<256x8xf32>,
    %c47_152 = arith.constant 47 : index
    %c0_153 = arith.constant 0 : index
    %164 = vector.load %arg6[%c47_152, %c0_153] : memref<320x8xbf16, #tpu.memory_space<vmem>>, vector<256x8xbf16>
    %165 = vector.broadcast %15 : vector<256x1xbf16> to vector<256x8xbf16>
    %166 = arith.mulf %164, %165 : vector<256x8xbf16>
    %c48_154 = arith.constant 48 : index
    %c0_155 = arith.constant 0 : index
    %167 = vector.load %arg3[%c48_154, %c0_155] : memref<72x8xbf16, #tpu.memory_space<vmem>>, vector<8x8xbf16>
    %c0_156 = arith.constant 0 : index
    %c0_157 = arith.constant 0 : index
    %168 = vector.load %arg7[%c0_156, %c0_157] : memref<256x8xf32, #tpu.memory_space<vmem>>, vector<256x8xf32>
    %cst_158 = arith.constant dense<0.000000e+00> : vector<256x8xf32>
    %169 = tpu.matmul %166, %167, %cst_158 {dimension_numbers = #tpu.dot_dimension_numbers<[1], [0], [0], [1], [0, 0, 1, 1], [], []>} : vector<256x8xbf16>, vector<8x8xbf16>, vector<256x8xf32> -> vector<256x8xf32>
    %170 = arith.addf %168, %169 : vector<256x8xf32>
    %c0_159 = arith.constant 0 : index
    %c0_160 = arith.constant 0 : index
    %171 = vector.load %arg7[%c0_159, %c0_160] : memref<256x8xf32, #tpu.memory_space<vmem>>, vector<256x8xf32>
    tpu.vector_store %arg7[%c0_159, %c0_160], %170 {strides = array<i32>} : memref<256x8xf32, #tpu.memory_space<vmem>>, vector<256x8xf32>,
    %c48_161 = arith.constant 48 : index
    %c0_162 = arith.constant 0 : index
    %172 = vector.load %arg6[%c48_161, %c0_162] : memref<320x8xbf16, #tpu.memory_space<vmem>>, vector<256x8xbf16>
    %c56_163 = arith.constant 56 : index
    %c0_164 = arith.constant 0 : index
    %173 = vector.load %arg3[%c56_163, %c0_164] : memref<72x8xbf16, #tpu.memory_space<vmem>>, vector<8x8xbf16>
    %c0_165 = arith.constant 0 : index
    %c0_166 = arith.constant 0 : index
    %174 = vector.load %arg7[%c0_165, %c0_166] : memref<256x8xf32, #tpu.memory_space<vmem>>, vector<256x8xf32>
    %cst_167 = arith.constant dense<0.000000e+00> : vector<256x8xf32>
    %175 = tpu.matmul %172, %173, %cst_167 {dimension_numbers = #tpu.dot_dimension_numbers<[1], [0], [0], [1], [0, 0, 1, 1], [], []>} : vector<256x8xbf16>, vector<8x8xbf16>, vector<256x8xf32> -> vector<256x8xf32>
    %176 = arith.addf %174, %175 : vector<256x8xf32>
    %c0_168 = arith.constant 0 : index
    %c0_169 = arith.constant 0 : index
    %177 = vector.load %arg7[%c0_168, %c0_169] : memref<256x8xf32, #tpu.memory_space<vmem>>, vector<256x8xf32>
    tpu.vector_store %arg7[%c0_168, %c0_169], %176 {strides = array<i32>} : memref<256x8xf32, #tpu.memory_space<vmem>>, vector<256x8xf32>,
    %c49_170 = arith.constant 49 : index
    %c0_171 = arith.constant 0 : index
    %178 = vector.load %arg6[%c49_170, %c0_171] : memref<320x8xbf16, #tpu.memory_space<vmem>>, vector<256x8xbf16>
    %179 = vector.broadcast %20 : vector<256x1xbf16> to vector<256x8xbf16>
    %180 = arith.mulf %178, %179 : vector<256x8xbf16>
    %c64_172 = arith.constant 64 : index
    %c0_173 = arith.constant 0 : index
    %181 = vector.load %arg3[%c64_172, %c0_173] : memref<72x8xbf16, #tpu.memory_space<vmem>>, vector<8x8xbf16>
    %c0_174 = arith.constant 0 : index
    %c0_175 = arith.constant 0 : index
    %182 = vector.load %arg7[%c0_174, %c0_175] : memref<256x8xf32, #tpu.memory_space<vmem>>, vector<256x8xf32>
    %cst_176 = arith.constant dense<0.000000e+00> : vector<256x8xf32>
    %183 = tpu.matmul %180, %181, %cst_176 {dimension_numbers = #tpu.dot_dimension_numbers<[1], [0], [0], [1], [0, 0, 1, 1], [], []>} : vector<256x8xbf16>, vector<8x8xbf16>, vector<256x8xf32> -> vector<256x8xf32>
    %184 = arith.addf %182, %183 : vector<256x8xf32>
    %c0_177 = arith.constant 0 : index
    %c0_178 = arith.constant 0 : index
    %185 = vector.load %arg7[%c0_177, %c0_178] : memref<256x8xf32, #tpu.memory_space<vmem>>, vector<256x8xf32>
    tpu.vector_store %arg7[%c0_177, %c0_178], %184 {strides = array<i32>} : memref<256x8xf32, #tpu.memory_space<vmem>>, vector<256x8xf32>,
    %c0_179 = arith.constant 0 : index
    %c0_180 = arith.constant 0 : index
    %186 = vector.load %arg7[%c0_179, %c0_180] : memref<256x8xf32, #tpu.memory_space<vmem>>, vector<256x8xf32>
    %cst_181 = arith.constant dense<0.000000e+00> : vector<8xf32>
    %187 = vector.multi_reduction <add>, %186, %cst_181 [0] : vector<256x8xf32> to vector<8xf32>
    %188 = vector.shape_cast %187 : vector<8xf32> to vector<1x8xf32>
    %cst_182 = arith.constant 3.906250e-03 : f32
    %189 = vector.broadcast %cst_182 : f32 to vector<1x8xf32>
    %190 = arith.mulf %188, %189 : vector<1x8xf32>
    %191 = arith.mulf %186, %186 : vector<256x8xf32>
    %cst_183 = arith.constant dense<0.000000e+00> : vector<8xf32>
    %192 = vector.multi_reduction <add>, %191, %cst_183 [0] : vector<256x8xf32> to vector<8xf32>
    %193 = vector.shape_cast %192 : vector<8xf32> to vector<1x8xf32>
    %cst_184 = arith.constant 3.906250e-03 : f32
    %194 = vector.broadcast %cst_184 : f32 to vector<1x8xf32>
    %195 = arith.mulf %193, %194 : vector<1x8xf32>
    %196 = arith.mulf %190, %190 : vector<1x8xf32>
    %197 = arith.subf %195, %196 : vector<1x8xf32>
    %cst_185 = arith.constant 0.000000e+00 : f32
    %198 = vector.broadcast %cst_185 : f32 to vector<1x8xf32>
    %199 = arith.maximumf %197, %198 : vector<1x8xf32>
    %200 = vector.broadcast %190 : vector<1x8xf32> to vector<256x8xf32>
    %201 = arith.subf %186, %200 : vector<256x8xf32>
    %cst_186 = arith.constant 9.99999974E-6 : f32
    %202 = vector.broadcast %cst_186 : f32 to vector<1x8xf32>
    %203 = arith.addf %199, %202 : vector<1x8xf32>
    %204 = math.rsqrt %203 : vector<1x8xf32>
    %205 = vector.broadcast %204 : vector<1x8xf32> to vector<256x8xf32>
    %206 = arith.mulf %201, %205 : vector<256x8xf32>
    %cst_187 = arith.constant 2.000000e-01 : f32
    %207 = vector.broadcast %cst_187 : f32 to vector<256x8xf32>
    %208 = arith.mulf %207, %206 : vector<256x8xf32>
    %209 = arith.maximumf %206, %208 : vector<256x8xf32>
    %c0_188 = arith.constant 0 : index
    %c0_189 = arith.constant 0 : index
    %c0_190 = arith.constant 0 : index
    %210 = vector.load %arg4[%c0_188, %c0_189, %c0_190] : memref<1x256x8xf32, #tpu.memory_space<vmem>>, vector<1x256x8xf32>
    %211 = vector.shape_cast %210 : vector<1x256x8xf32> to vector<256x8xf32>
    %212 = vector.shape_cast %209 : vector<256x8xf32> to vector<1x256x8xf32>
    tpu.vector_store %arg4[%c0_188, %c0_189, %c0_190], %212 {strides = array<i32>} : memref<1x256x8xf32, #tpu.memory_space<vmem>>, vector<1x256x8xf32>,
    return
  }
  func.func @transform_0(%arg0: i32) -> (i32, i32, i32) {
    %c0_i32 = arith.constant 0 : i32
    %c0_i32_0 = arith.constant 0 : i32
    %c0_i32_1 = arith.constant 0 : i32
    return %arg0, %c0_i32, %c0_i32_0 : i32, i32, i32
  }
  func.func @transform_1(%arg0: i32) -> (i32, i32) {
    %c0_i32 = arith.constant 0 : i32
    %c0_i32_0 = arith.constant 0 : i32
    %c0_i32_1 = arith.constant 0 : i32
    return %c0_i32, %c0_i32_0 : i32, i32
  }
  func.func @transform_2(%arg0: i32) -> (i32, i32) {
    %c0_i32 = arith.constant 0 : i32
    %c0_i32_0 = arith.constant 0 : i32
    %c0_i32_1 = arith.constant 0 : i32
    return %c0_i32, %c0_i32_0 : i32, i32
  }
  func.func @transform_3(%arg0: i32) -> (i32, i32, i32) {
    %c0_i32 = arith.constant 0 : i32
    %c0_i32_0 = arith.constant 0 : i32
    %c0_i32_1 = arith.constant 0 : i32
    return %arg0, %c0_i32, %c0_i32_0 : i32, i32, i32
  }
}

</mosaic_0001>

<llo_original>
// kernel: conv_block_forward.1
$region0: #{conv_block_forward.1}
  #allocation0 [shape = 'u32[]', space=smem, size = 0x4, offset = 0x4, fixed_abs, tag = 'smem constant byte address 0x4 - core index']
  #allocation1 [shape = 'u32[144,128]{1,0:T(1,128)}', space=vmem, size = 0x12000, scoped, tag = 'internal scratch']
  #allocation2 [shape = 'bf16[320,8]{1,0:T(16,128)(2,1)}', space=vmem, size = 0x14000, scoped, tag = 'scratch operand']
  #allocation3 [shape = 'bf16[320,8]{1,0:T(16,128)(2,1)}', space=vmem, size = 0x14000, scoped, tag = 'scratch operand']
  #allocation4 [shape = 'f32[256,8]{1,0:T(8,128)}', space=vmem, size = 0x20000, scoped, tag = 'scratch operand']
  %s0 = inlined_call_operand.vmem [shape: bf16[2,256,8], index: 0, kind: input, shape index: {}]
  %s1 = inlined_call_operand.vmem [shape: bf16[72,8], index: 1, kind: input, shape index: {}]
  %s2 = inlined_call_operand.vmem [shape: bf16[72,8], index: 2, kind: input, shape index: {}]
  %s3 = inlined_call_operand.vmem [shape: f32[2,256,8], index: 3, kind: output, shape index: {}]
  %s4 = sld [smem:[#allocation0]]
  $region45: #{conv_block_forward.1} parent=0
    _
  %s6 = ssub.s32 1, %s4
  %s7 = scalar_select 0, %s6, %s4
  loop: start=0, step=1, limit=4
  $region2: #{conv_block_forward.1} parent=0 // loop_pre_header
    _
  $region3: #{conv_block_forward.1} parent=0 // loop_header
    %s9 = sphi 0, %s13
    %p10 = scmp.ge.s32.totalorder %s9, 4
    %s19 = sphi 0, %s21
    %s22 = sphi 0, %s19
    %s23 = sphi 0, %s22
    %s39 = sphi 0, %s23
    %s43 = sphi 0, %s43
    %s45 = sphi 0, %s43
    %s46 = sphi 0, %s45
    %s60 = sphi 0, %s46
    %s64 = sphi 0, %s64
    %s66 = sphi 0, %s64
    %s67 = sphi 0, %s66
    %s81 = sphi 0, %s67
    %s87 = sphi 0, %s89
    %s90 = sphi 0, %s87
    %s91 = sphi 0, %s90
    %s107 = sphi 0, %s91
  $region4: #{conv_block_forward.1} parent=0 // loop_header_branch
    %12 = sbr.rel (%p10) target = $region8
  $region5: #{conv_block_forward.1} parent=0 // loop_body
    %s14 = ssub.s32 %s9, 1
    %s15 = ssub.s32 %s9, 2
    %s16 = sadd.s32 %s9, 1
    %s17 = ssub.s32 %s9, %s16
    %p18 = scmp.eq.s32.totalorder %s17, 0
    %s20 = sadd.s32 %s19, 1
    %s21 = scalar_select %p18, %s19, %s20
    %p24 = pneg %p18
    %p25 = scmp.eq.s32.totalorder %s9, 1
    %p26 = por %p24, %p25
    %p27 = scmp.ne.s32.totalorder %s19, %s22
    %p28 = scmp.eq.s32.totalorder %s9, 0
    %p29 = por %p27, %p28
    %p30 = scmp.ne.s32.totalorder %s19, %s22
    %p31 = scmp.eq.s32.totalorder %s14, 1
    %p32 = por %p30, %p31
    %p33 = scmp.ne.s32.totalorder %s22, %s23
    %p34 = scmp.eq.s32.totalorder %s14, 0
    %p35 = por %p33, %p34
    %p36 = scmp.ne.s32.totalorder %s22, %s23
    %p37 = scmp.eq.s32.totalorder %s15, 1
    %p38 = por %p36, %p37
    %p40 = scmp.ne.s32.totalorder %s23, %s39
    %p41 = scmp.eq.s32.totalorder %s15, 0
    %p42 = por %p40, %p41
    %s44 = sadd.s32 %s43, 1
    %p47 = scmp.eq.s32.totalorder %s9, 1
    %p48 = scmp.ne.s32.totalorder %s43, %s45
    %p49 = scmp.eq.s32.totalorder %s9, 0
    %p50 = por %p48, %p49
    %p51 = scmp.ne.s32.totalorder %s43, %s45
    %p52 = scmp.eq.s32.totalorder %s14, 1
    %p53 = por %p51, %p52
    %p54 = scmp.ne.s32.totalorder %s45, %s46
    %p55 = scmp.eq.s32.totalorder %s14, 0
    %p56 = por %p54, %p55
    %p57 = scmp.ne.s32.totalorder %s45, %s46
    %p58 = scmp.eq.s32.totalorder %s15, 1
    %p59 = por %p57, %p58
    %p61 = scmp.ne.s32.totalorder %s46, %s60
    %p62 = scmp.eq.s32.totalorder %s15, 0
    %p63 = por %p61, %p62
    %s65 = sadd.s32 %s64, 1
    %p68 = scmp.eq.s32.totalorder %s9, 1
    %p69 = scmp.ne.s32.totalorder %s64, %s66
    %p70 = scmp.eq.s32.totalorder %s9, 0
    %p71 = por %p69, %p70
    %p72 = scmp.ne.s32.totalorder %s64, %s66
    %p73 = scmp.eq.s32.totalorder %s14, 1
    %p74 = por %p72, %p73
    %p75 = scmp.ne.s32.totalorder %s66, %s67
    %p76 = scmp.eq.s32.totalorder %s14, 0
    %p77 = por %p75, %p76
    %p78 = scmp.ne.s32.totalorder %s66, %s67
    %p79 = scmp.eq.s32.totalorder %s15, 1
    %p80 = por %p78, %p79
    %p82 = scmp.ne.s32.totalorder %s67, %s81
    %p83 = scmp.eq.s32.totalorder %s15, 0
    %p84 = por %p82, %p83
    %s85 = ssub.s32 %s9, %s16
    %p86 = scmp.eq.s32.totalorder %s85, 0
    %s88 = sadd.s32 %s87, 1
    %s89 = scalar_select %p86, %s87, %s88
    %p92 = pneg %p86
    %p93 = scmp.eq.s32.totalorder %s9, 1
    %p94 = por %p92, %p93
    %p95 = scmp.ne.s32.totalorder %s87, %s90
    %p96 = scmp.eq.s32.totalorder %s9, 0
    %p97 = por %p95, %p96
    %p98 = scmp.ne.s32.totalorder %s87, %s90
    %p99 = scmp.eq.s32.totalorder %s14, 1
    %p100 = por %p98, %p99
    %p101 = scmp.ne.s32.totalorder %s90, %s91
    %p102 = scmp.eq.s32.totalorder %s14, 0
    %p103 = por %p101, %p102
    %p104 = scmp.ne.s32.totalorder %s90, %s91
    %p105 = scmp.eq.s32.totalorder %s15, 1
    %p106 = por %p104, %p105
    %p108 = scmp.ne.s32.totalorder %s91, %s107
    %p109 = scmp.eq.s32.totalorder %s15, 0
    %p110 = por %p108, %p109
    %p111 = scmp.le.s32.totalorder 1, %s9
    %p112 = scmp.lt.s32.totalorder %s9, 3
    %p113 = pnand %p111, %p112
    %p114 = pneg %p113
    // Predicated region
    $region9: #{conv_block_forward.1} parent=5 // pred_check
      _
    $region10: #{conv_block_forward.1} parent=5 // pred_check_branch
      %116 = sbr.rel (%p113) target = $region12
    $region11: #{conv_block_forward.1} parent=5 // pred_region
      %s117 = ssub.s32 %s9, 1
      // Predicated region
      $region13: #{conv_block_forward.1} parent=11 // pred_check
        %p118 = pneg %p56
      $region14: #{conv_block_forward.1} parent=11 // pred_check_branch
        %120 = sbr.rel (%p118) target = $region16
      $region15: #{conv_block_forward.1} parent=11 // pred_region
        _
      $region16: #{conv_block_forward.1} parent=11 // pred_fallthru
        _
      // Predicated region
      $region17: #{conv_block_forward.1} parent=11 // pred_check
        %p121 = pneg %p77
      $region18: #{conv_block_forward.1} parent=11 // pred_check_branch
        %123 = sbr.rel (%p121) target = $region20
      $region19: #{conv_block_forward.1} parent=11 // pred_region
        _
      $region20: #{conv_block_forward.1} parent=11 // pred_fallthru
        _
    $region12: #{conv_block_forward.1} parent=5 // pred_fallthru
      _
    %p124 = scmp.lt.s32.totalorder %s9, 2
    // Predicated region
    $region21: #{conv_block_forward.1} parent=5 // pred_check
      %p125 = pneg %p124
    $region22: #{conv_block_forward.1} parent=5 // pred_check_branch
      %127 = sbr.rel (%p125) target = $region24
    $region23: #{conv_block_forward.1} parent=5 // pred_region
      // Predicated region
      $region25: #{conv_block_forward.1} parent=23 // pred_check
        %p128 = pneg %p29
      $region26: #{conv_block_forward.1} parent=23 // pred_check_branch
        %130 = sbr.rel (%p128) target = $region28
      $region27: #{conv_block_forward.1} parent=23 // pred_region
        %p131 = scmp.lt.s32.totalorder %s9, 1
        %s132 = scalar_select %p131, %s9, 1
        %s133 = smul.addr %s132, 32
        %s134 = smul.addr %s133, 4
        %s135 = scalar_lea.vmem %s0, %s134
      $region28: #{conv_block_forward.1} parent=23 // pred_fallthru
        _
    $region24: #{conv_block_forward.1} parent=5 // pred_fallthru
      _
    %p136 = scmp.le.s32.totalorder 1, %s9
    %p137 = scmp.lt.s32.totalorder %s9, 3
    %p138 = pnand %p136, %p137
    %p139 = pneg %p138
    // Predicated region
    $region29: #{conv_block_forward.1} parent=5 // pred_check
      _
    $region30: #{conv_block_forward.1} parent=5 // pred_check_branch
      %141 = sbr.rel (%p138) target = $region32
    $region31: #{conv_block_forward.1} parent=5 // pred_region
      %s142 = ssub.s32 %s9, 1
      %p143 = scmp.lt.s32.totalorder %s14, 1
      %s144 = scalar_select %p143, %s14, 1
      %s145 = smul.addr %s144, 32
      %s146 = smul.addr %s145, 4
      %s147 = scalar_lea.vmem %s0, %s146
      %p148 = pneg %p35
      %p149 = pneg %p32
      %p150 = pneg %p56
      %p151 = pneg %p53
      %p152 = pneg %p77
      %p153 = pneg %p74
      %p154 = pneg %p103
      %p155 = pneg %p100
      %p156 = scmp.lt.s32.totalorder %s14, 1
      %s157 = scalar_select %p156, %s14, 1
      %s158 = smul.addr %s157, 32
      %s159 = smul.addr %s158, 8
      %s160 = scalar_lea.vmem %s3, %s159
      %p161 = scmp.lt.s32.totalorder %s14, 1
      %s162 = scalar_select %p161, %s14, 1
      %s163 = smul.addr %s162, 32
      %s164 = smul.addr %s163, 4
      %s165 = scalar_lea.vmem %s0, %s164
      %p166 = scmp.lt.s32.totalorder %s14, 1
      %s167 = scalar_select %p166, %s14, 1
      %s168 = smul.addr %s167, 32
      %s169 = smul.addr %s168, 8
      %s170 = scalar_lea.vmem %s3, %s169
      %vm172 = vcmask 64512
      %173 = vst.msk [vmem:[#allocation2] sm:$0xff] %vm172, 0
      %174 = vst.msk [vmem:[#allocation2 + $0x8] sm:$0xff] %vm172, 0
      %175 = vst.msk [vmem:[#allocation2 + $0x90] sm:$0xff] %vm172, 0
      %176 = vst.msk [vmem:[#allocation2 + $0x98] sm:$0xff] %vm172, 0
      %177 = vst.msk [vmem:[#allocation3] sm:$0xff] %vm172, 0
      %178 = vst.msk [vmem:[#allocation3 + $0x8] sm:$0xff] %vm172, 0
      %179 = vst.msk [vmem:[#allocation3 + $0x90] sm:$0xff] %vm172, 0
      %180 = vst.msk [vmem:[#allocation3 + $0x98] sm:$0xff] %vm172, 0
      %v181 = vlaneseq
      %v182 = vshrl.u32 %v181, 7
      %v183 = vadd.s32 %v182, 8
      %v184 = vadd.s32 %v182, 16
      %v185 = vadd.s32 %v182, 24
      %v186 = vadd.s32 %v182, 32
      %v187 = vadd.s32 %v182, 40
      %v188 = vadd.s32 %v182, 48
      %v189 = vadd.s32 %v182, 56
      %v190 = vadd.s32 %v182, 64
      %v191 = vadd.s32 %v182, 72
      %v192 = vadd.s32 %v182, 80
      %v193 = vadd.s32 %v182, 88
      %v194 = vadd.s32 %v182, 96
      %v195 = vadd.s32 %v182, 104
      %v196 = vadd.s32 %v182, 112
      %v197 = vadd.s32 %v182, 120
      %v198 = vadd.s32 %v182, 128
      %v199 = vadd.s32 %v182, 136
      %v200 = vadd.s32 %v182, 144
      %v201 = vadd.s32 %v182, 152
      %v202 = vadd.s32 %v182, 160
      %v203 = vadd.s32 %v182, 168
      %v204 = vadd.s32 %v182, 176
      %v205 = vadd.s32 %v182, 184
      %v206 = vadd.s32 %v182, 192
      %v207 = vadd.s32 %v182, 200
      %v208 = vadd.s32 %v182, 208
      %v209 = vadd.s32 %v182, 216
      %v210 = vadd.s32 %v182, 224
      %v211 = vadd.s32 %v182, 232
      %v212 = vadd.s32 %v182, 240
      %v213 = vadd.s32 %v182, 248
      %v214 = vand.u32 %v182, 15
      %v215 = vand.u32 %v183, 15
      %v216 = vand.u32 %v184, 15
      %v217 = vand.u32 %v185, 15
      %v218 = vand.u32 %v186, 15
      %v219 = vand.u32 %v187, 15
      %v220 = vand.u32 %v188, 15
      %v221 = vand.u32 %v189, 15
      %v222 = vand.u32 %v190, 15
      %v223 = vand.u32 %v191, 15
      %v224 = vand.u32 %v192, 15
      %v225 = vand.u32 %v193, 15
      %v226 = vand.u32 %v194, 15
      %v227 = vand.u32 %v195, 15
      %v228 = vand.u32 %v196, 15
      %v229 = vand.u32 %v197, 15
      %v230 = vand.u32 %v198, 15
      %v231 = vand.u32 %v199, 15
      %v232 = vand.u32 %v200, 15
      %v233 = vand.u32 %v201, 15
      %v234 = vand.u32 %v202, 15
      %v235 = vand.u32 %v203, 15
      %v236 = vand.u32 %v204, 15
      %v237 = vand.u32 %v205, 15
      %v238 = vand.u32 %v206, 15
      %v239 = vand.u32 %v207, 15
      %v240 = vand.u32 %v208, 15
      %v241 = vand.u32 %v209, 15
      %v242 = vand.u32 %v210, 15
      %v243 = vand.u32 %v211, 15
      %v244 = vand.u32 %v212, 15
      %v245 = vand.u32 %v213, 15
      %vm246 = vcmp.ge.s32.totalorder %v214, 1
      %vm247 = vcmp.ge.s32.totalorder %v215, 1
      %vm248 = vcmp.ge.s32.totalorder %v216, 1
      %vm249 = vcmp.ge.s32.totalorder %v217, 1
      %vm250 = vcmp.ge.s32.totalorder %v218, 1
      %vm251 = vcmp.ge.s32.totalorder %v219, 1
      %vm252 = vcmp.ge.s32.totalorder %v220, 1
      %vm253 = vcmp.ge.s32.totalorder %v221, 1
      %vm254 = vcmp.ge.s32.totalorder %v222, 1
      %vm255 = vcmp.ge.s32.totalorder %v223, 1
      %vm256 = vcmp.ge.s32.totalorder %v224, 1
      %vm257 = vcmp.ge.s32.totalorder %v225, 1
      %vm258 = vcmp.ge.s32.totalorder %v226, 1
      %vm259 = vcmp.ge.s32.totalorder %v227, 1
      %vm260 = vcmp.ge.s32.totalorder %v228, 1
      %vm261 = vcmp.ge.s32.totalorder %v229, 1
      %vm262 = vcmp.ge.s32.totalorder %v230, 1
      %vm263 = vcmp.ge.s32.totalorder %v231, 1
      %vm264 = vcmp.ge.s32.totalorder %v232, 1
      %vm265 = vcmp.ge.s32.totalorder %v233, 1
      %vm266 = vcmp.ge.s32.totalorder %v234, 1
      %vm267 = vcmp.ge.s32.totalorder %v235, 1
      %vm268 = vcmp.ge.s32.totalorder %v236, 1
      %vm269 = vcmp.ge.s32.totalorder %v237, 1
      %vm270 = vcmp.ge.s32.totalorder %v238, 1
      %vm271 = vcmp.ge.s32.totalorder %v239, 1
      %vm272 = vcmp.ge.s32.totalorder %v240, 1
      %vm273 = vcmp.ge.s32.totalorder %v241, 1
      %vm274 = vcmp.ge.s32.totalorder %v242, 1
      %vm275 = vcmp.ge.s32.totalorder %v243, 1
      %vm276 = vcmp.ge.s32.totalorder %v244, 1
      %vm277 = vcmp.ge.s32.totalorder %v245, 1
      %v278 = vsel %vm246, 1, 0
      %v279 = vsel %vm247, 1, 0
      %v280 = vsel %vm248, 1, 0
      %v281 = vsel %vm249, 1, 0
      %v282 = vsel %vm250, 1, 0
      %v283 = vsel %vm251, 1, 0
      %v284 = vsel %vm252, 1, 0
      %v285 = vsel %vm253, 1, 0
      %v286 = vsel %vm254, 1, 0
      %v287 = vsel %vm255, 1, 0
      %v288 = vsel %vm256, 1, 0
      %v289 = vsel %vm257, 1, 0
      %v290 = vsel %vm258, 1, 0
      %v291 = vsel %vm259, 1, 0
      %v292 = vsel %vm260, 1, 0
      %v293 = vsel %vm261, 1, 0
      %v294 = vsel %vm262, 1, 0
      %v295 = vsel %vm263, 1, 0
      %v296 = vsel %vm264, 1, 0
      %v297 = vsel %vm265, 1, 0
      %v298 = vsel %vm266, 1, 0
      %v299 = vsel %vm267, 1, 0
      %v300 = vsel %vm268, 1, 0
      %v301 = vsel %vm269, 1, 0
      %v302 = vsel %vm270, 1, 0
      %v303 = vsel %vm271, 1, 0
      %v304 = vsel %vm272, 1, 0
      %v305 = vsel %vm273, 1, 0
      %v306 = vsel %vm274, 1, 0
      %v307 = vsel %vm275, 1, 0
      %v308 = vsel %vm276, 1, 0
      %v309 = vsel %vm277, 1, 0
      %v310 = vcvt.s32.f32 %v278
      %v311 = vcvt.s32.f32 %v279
      %v312 = vcvt.s32.f32 %v280
      %v313 = vcvt.s32.f32 %v281
      %v314 = vcvt.s32.f32 %v282
      %v315 = vcvt.s32.f32 %v283
      %v316 = vcvt.s32.f32 %v284
      %v317 = vcvt.s32.f32 %v285
      %v318 = vcvt.s32.f32 %v286
      %v319 = vcvt.s32.f32 %v287
      %v320 = vcvt.s32.f32 %v288
      %v321 = vcvt.s32.f32 %v289
      %v322 = vcvt.s32.f32 %v290
      %v323 = vcvt.s32.f32 %v291
      %v324 = vcvt.s32.f32 %v292
      %v325 = vcvt.s32.f32 %v293
      %v326 = vcvt.s32.f32 %v294
      %v327 = vcvt.s32.f32 %v295
      %v328 = vcvt.s32.f32 %v296
      %v329 = vcvt.s32.f32 %v297
      %v330 = vcvt.s32.f32 %v298
      %v331 = vcvt.s32.f32 %v299
      %v332 = vcvt.s32.f32 %v300
      %v333 = vcvt.s32.f32 %v301
      %v334 = vcvt.s32.f32 %v302
      %v335 = vcvt.s32.f32 %v303
      %v336 = vcvt.s32.f32 %v304
      %v337 = vcvt.s32.f32 %v305
      %v338 = vcvt.s32.f32 %v306
      %v339 = vcvt.s32.f32 %v307
      %v340 = vcvt.s32.f32 %v308
      %v341 = vcvt.s32.f32 %v309
      %v342 = vpack.c.bf16 %v311, %v310
      %v343 = vpack.c.bf16 %v313, %v312
      %v344 = vpack.c.bf16 %v315, %v314
      %v345 = vpack.c.bf16 %v317, %v316
      %v346 = vpack.c.bf16 %v319, %v318
      %v347 = vpack.c.bf16 %v321, %v320
      %v348 = vpack.c.bf16 %v323, %v322
      %v349 = vpack.c.bf16 %v325, %v324
      %v350 = vpack.c.bf16 %v327, %v326
      %v351 = vpack.c.bf16 %v329, %v328
      %v352 = vpack.c.bf16 %v331, %v330
      %v353 = vpack.c.bf16 %v333, %v332
      %v354 = vpack.c.bf16 %v335, %v334
      %v355 = vpack.c.bf16 %v337, %v336
      %v356 = vpack.c.bf16 %v339, %v338
      %v357 = vpack.c.bf16 %v341, %v340
      %vm358 = vcmp.le.s32.totalorder %v214, 14
      %vm359 = vcmp.le.s32.totalorder %v215, 14
      %vm360 = vcmp.le.s32.totalorder %v216, 14
      %vm361 = vcmp.le.s32.totalorder %v217, 14
      %vm362 = vcmp.le.s32.totalorder %v218, 14
      %vm363 = vcmp.le.s32.totalorder %v219, 14
      %vm364 = vcmp.le.s32.totalorder %v220, 14
      %vm365 = vcmp.le.s32.totalorder %v221, 14
      %vm366 = vcmp.le.s32.totalorder %v222, 14
      %vm367 = vcmp.le.s32.totalorder %v223, 14
      %vm368 = vcmp.le.s32.totalorder %v224, 14
      %vm369 = vcmp.le.s32.totalorder %v225, 14
      %vm370 = vcmp.le.s32.totalorder %v226, 14
      %vm371 = vcmp.le.s32.totalorder %v227, 14
      %vm372 = vcmp.le.s32.totalorder %v228, 14
      %vm373 = vcmp.le.s32.totalorder %v229, 14
      %vm374 = vcmp.le.s32.totalorder %v230, 14
      %vm375 = vcmp.le.s32.totalorder %v231, 14
      %vm376 = vcmp.le.s32.totalorder %v232, 14
      %vm377 = vcmp.le.s32.totalorder %v233, 14
      %vm378 = vcmp.le.s32.totalorder %v234, 14
      %vm379 = vcmp.le.s32.totalorder %v235, 14
      %vm380 = vcmp.le.s32.totalorder %v236, 14
      %vm381 = vcmp.le.s32.totalorder %v237, 14
      %vm382 = vcmp.le.s32.totalorder %v238, 14
      %vm383 = vcmp.le.s32.totalorder %v239, 14
      %vm384 = vcmp.le.s32.totalorder %v240, 14
      %vm385 = vcmp.le.s32.totalorder %v241, 14
      %vm386 = vcmp.le.s32.totalorder %v242, 14
      %vm387 = vcmp.le.s32.totalorder %v243, 14
      %vm388 = vcmp.le.s32.totalorder %v244, 14
      %vm389 = vcmp.le.s32.totalorder %v245, 14
      %v390 = vsel %vm358, 1, 0
      %v391 = vsel %vm359, 1, 0
      %v392 = vsel %vm360, 1, 0
      %v393 = vsel %vm361, 1, 0
      %v394 = vsel %vm362, 1, 0
      %v395 = vsel %vm363, 1, 0
      %v396 = vsel %vm364, 1, 0
      %v397 = vsel %vm365, 1, 0
      %v398 = vsel %vm366, 1, 0
      %v399 = vsel %vm367, 1, 0
      %v400 = vsel %vm368, 1, 0
      %v401 = vsel %vm369, 1, 0
      %v402 = vsel %vm370, 1, 0
      %v403 = vsel %vm371, 1, 0
      %v404 = vsel %vm372, 1, 0
      %v405 = vsel %vm373, 1, 0
      %v406 = vsel %vm374, 1, 0
      %v407 = vsel %vm375, 1, 0
      %v408 = vsel %vm376, 1, 0
      %v409 = vsel %vm377, 1, 0
      %v410 = vsel %vm378, 1, 0
      %v411 = vsel %vm379, 1, 0
      %v412 = vsel %vm380, 1, 0
      %v413 = vsel %vm381, 1, 0
      %v414 = vsel %vm382, 1, 0
      %v415 = vsel %vm383, 1, 0
      %v416 = vsel %vm384, 1, 0
      %v417 = vsel %vm385, 1, 0
      %v418 = vsel %vm386, 1, 0
      %v419 = vsel %vm387, 1, 0
      %v420 = vsel %vm388, 1, 0
      %v421 = vsel %vm389, 1, 0
      %v422 = vcvt.s32.f32 %v390
      %v423 = vcvt.s32.f32 %v391
      %v424 = vcvt.s32.f32 %v392
      %v425 = vcvt.s32.f32 %v393
      %v426 = vcvt.s32.f32 %v394
      %v427 = vcvt.s32.f32 %v395
      %v428 = vcvt.s32.f32 %v396
      %v429 = vcvt.s32.f32 %v397
      %v430 = vcvt.s32.f32 %v398
      %v431 = vcvt.s32.f32 %v399
      %v432 = vcvt.s32.f32 %v400
      %v433 = vcvt.s32.f32 %v401
      %v434 = vcvt.s32.f32 %v402
      %v435 = vcvt.s32.f32 %v403
      %v436 = vcvt.s32.f32 %v404
      %v437 = vcvt.s32.f32 %v405
      %v438 = vcvt.s32.f32 %v406
      %v439 = vcvt.s32.f32 %v407
      %v440 = vcvt.s32.f32 %v408
      %v441 = vcvt.s32.f32 %v409
      %v442 = vcvt.s32.f32 %v410
      %v443 = vcvt.s32.f32 %v411
      %v444 = vcvt.s32.f32 %v412
      %v445 = vcvt.s32.f32 %v413
      %v446 = vcvt.s32.f32 %v414
      %v447 = vcvt.s32.f32 %v415
      %v448 = vcvt.s32.f32 %v416
      %v449 = vcvt.s32.f32 %v417
      %v450 = vcvt.s32.f32 %v418
      %v451 = vcvt.s32.f32 %v419
      %v452 = vcvt.s32.f32 %v420
      %v453 = vcvt.s32.f32 %v421
      %v454 = vpack.c.bf16 %v423, %v422
      %v455 = vpack.c.bf16 %v425, %v424
      %v456 = vpack.c.bf16 %v427, %v426
      %v457 = vpack.c.bf16 %v429, %v428
      %v458 = vpack.c.bf16 %v431, %v430
      %v459 = vpack.c.bf16 %v433, %v432
      %v460 = vpack.c.bf16 %v435, %v434
      %v461 = vpack.c.bf16 %v437, %v436
      %v462 = vpack.c.bf16 %v439, %v438
      %v463 = vpack.c.bf16 %v441, %v440
      %v464 = vpack.c.bf16 %v443, %v442
      %v465 = vpack.c.bf16 %v445, %v444
      %v466 = vpack.c.bf16 %v447, %v446
      %v467 = vpack.c.bf16 %v449, %v448
      %v468 = vpack.c.bf16 %v451, %v450
      %v469 = vpack.c.bf16 %v453, %v452
      %v470 = vld [vmem:[%s165] sm:$0xf]
      %v471 = vld [vmem:[%s165 + $0x4] sm:$0xf]
      %v472 = vld [vmem:[%s165 + $0x8] sm:$0xf]
      %v473 = vld [vmem:[%s165 + $0xc] sm:$0xf]
      %v474 = vld [vmem:[%s165 + $0x10] sm:$0xf]
      %v475 = vld [vmem:[%s165 + $0x14] sm:$0xf]
      %v476 = vld [vmem:[%s165 + $0x18] sm:$0xf]
      %v477 = vld [vmem:[%s165 + $0x1c] sm:$0xf]
      %v478 = vld [vmem:[%s165 + $0x20] sm:$0xf]
      %v479 = vld [vmem:[%s165 + $0x24] sm:$0xf]
      %v480 = vld [vmem:[%s165 + $0x28] sm:$0xf]
      %v481 = vld [vmem:[%s165 + $0x2c] sm:$0xf]
      %v482 = vld [vmem:[%s165 + $0x30] sm:$0xf]
      %v483 = vld [vmem:[%s165 + $0x34] sm:$0xf]
      %v484 = vld [vmem:[%s165 + $0x38] sm:$0xf]
      %v485 = vld [vmem:[%s165 + $0x3c] sm:$0xf]
      %v486 = vld [vmem:[%s165 + $0x40] sm:$0xf]
      %v487 = vld [vmem:[%s165 + $0x44] sm:$0xf]
      %v488 = vld [vmem:[%s165 + $0x48] sm:$0xf]
      %v489 = vld [vmem:[%s165 + $0x4c] sm:$0xf]
      %v490 = vld [vmem:[%s165 + $0x50] sm:$0xf]
      %v491 = vld [vmem:[%s165 + $0x54] sm:$0xf]
      %v492 = vld [vmem:[%s165 + $0x58] sm:$0xf]
      %v493 = vld [vmem:[%s165 + $0x5c] sm:$0xf]
      %v494 = vld [vmem:[%s165 + $0x60] sm:$0xf]
      %v495 = vld [vmem:[%s165 + $0x64] sm:$0xf]
      %v496 = vld [vmem:[%s165 + $0x68] sm:$0xf]
      %v497 = vld [vmem:[%s165 + $0x6c] sm:$0xf]
      %v498 = vld [vmem:[%s165 + $0x70] sm:$0xf]
      %v499 = vld [vmem:[%s165 + $0x74] sm:$0xf]
      %v500 = vld [vmem:[%s165 + $0x78] sm:$0xf]
      %v501 = vld [vmem:[%s165 + $0x7c] sm:$0xf]
      %v534 = vunpack.c.l.b16 %v470
      %v535 = vunpack.c.l.b16 %v471
      %v536 = vunpack.c.l.b16 %v472
      %v537 = vunpack.c.l.b16 %v473
      %v538 = vunpack.c.l.b16 %v474
      %v539 = vunpack.c.l.b16 %v475
      %v540 = vunpack.c.l.b16 %v476
      %v541 = vunpack.c.l.b16 %v477
      %v542 = vunpack.c.l.b16 %v478
      %v543 = vunpack.c.l.b16 %v479
      %v544 = vunpack.c.l.b16 %v480
      %v545 = vunpack.c.l.b16 %v481
      %v546 = vunpack.c.l.b16 %v482
      %v547 = vunpack.c.l.b16 %v483
      %v548 = vunpack.c.l.b16 %v484
      %v549 = vunpack.c.l.b16 %v485
      %v550 = vunpack.c.l.b16 %v486
      %v551 = vunpack.c.l.b16 %v487
      %v552 = vunpack.c.l.b16 %v488
      %v553 = vunpack.c.l.b16 %v489
      %v554 = vunpack.c.l.b16 %v490
      %v555 = vunpack.c.l.b16 %v491
      %v556 = vunpack.c.l.b16 %v492
      %v557 = vunpack.c.l.b16 %v493
      %v558 = vunpack.c.l.b16 %v494
      %v559 = vunpack.c.l.b16 %v495
      %v560 = vunpack.c.l.b16 %v496
      %v561 = vunpack.c.l.b16 %v497
      %v562 = vunpack.c.l.b16 %v498
      %v563 = vunpack.c.l.b16 %v499
      %v564 = vunpack.c.l.b16 %v500
      %v565 = vunpack.c.l.b16 %v501
      %v566 = vpack.c.b16 %v535, %v534
      %v567 = vpack.c.b16 %v537, %v536
      %v568 = vpack.c.b16 %v539, %v538
      %v569 = vpack.c.b16 %v541, %v540
      %v570 = vpack.c.b16 %v543, %v542
      %v571 = vpack.c.b16 %v545, %v544
      %v572 = vpack.c.b16 %v547, %v546
      %v573 = vpack.c.b16 %v549, %v548
      %v574 = vpack.c.b16 %v551, %v550
      %v575 = vpack.c.b16 %v553, %v552
      %v576 = vpack.c.b16 %v555, %v554
      %v577 = vpack.c.b16 %v557, %v556
      %v578 = vpack.c.b16 %v559, %v558
      %v579 = vpack.c.b16 %v561, %v560
      %v580 = vpack.c.b16 %v563, %v562
      %v581 = vpack.c.b16 %v565, %v564
      %598 = vst.msk [vmem:[#allocation2 + $0x10] sm:$0xff] %vm172, %v566
      %599 = vst.msk [vmem:[#allocation2 + $0x18] sm:$0xff] %vm172, %v567
      %600 = vst.msk [vmem:[#allocation2 + $0x20] sm:$0xff] %vm172, %v568
      %601 = vst.msk [vmem:[#allocation2 + $0x28] sm:$0xff] %vm172, %v569
      %602 = vst.msk [vmem:[#allocation2 + $0x30] sm:$0xff] %vm172, %v570
      %603 = vst.msk [vmem:[#allocation2 + $0x38] sm:$0xff] %vm172, %v571
      %604 = vst.msk [vmem:[#allocation2 + $0x40] sm:$0xff] %vm172, %v572
      %605 = vst.msk [vmem:[#allocation2 + $0x48] sm:$0xff] %vm172, %v573
      %606 = vst.msk [vmem:[#allocation2 + $0x50] sm:$0xff] %vm172, %v574
      %607 = vst.msk [vmem:[#allocation2 + $0x58] sm:$0xff] %vm172, %v575
      %608 = vst.msk [vmem:[#allocation2 + $0x60] sm:$0xff] %vm172, %v576
      %609 = vst.msk [vmem:[#allocation2 + $0x68] sm:$0xff] %vm172, %v577
      %610 = vst.msk [vmem:[#allocation2 + $0x70] sm:$0xff] %vm172, %v578
      %611 = vst.msk [vmem:[#allocation2 + $0x78] sm:$0xff] %vm172, %v579
      %612 = vst.msk [vmem:[#allocation2 + $0x80] sm:$0xff] %vm172, %v580
      %613 = vst.msk [vmem:[#allocation2 + $0x88] sm:$0xff] %vm172, %v581
      %614 = vst.msk [vmem:[#allocation4] sm:$0xff] %vm172, 0.0
      %615 = vst.msk [vmem:[#allocation4 + $0x8] sm:$0xff] %vm172, 0.0
      %616 = vst.msk [vmem:[#allocation4 + $0x10] sm:$0xff] %vm172, 0.0
      %617 = vst.msk [vmem:[#allocation4 + $0x18] sm:$0xff] %vm172, 0.0
      %618 = vst.msk [vmem:[#allocation4 + $0x20] sm:$0xff] %vm172, 0.0
      %619 = vst.msk [vmem:[#allocation4 + $0x28] sm:$0xff] %vm172, 0.0
      %620 = vst.msk [vmem:[#allocation4 + $0x30] sm:$0xff] %vm172, 0.0
      %621 = vst.msk [vmem:[#allocation4 + $0x38] sm:$0xff] %vm172, 0.0
      %622 = vst.msk [vmem:[#allocation4 + $0x40] sm:$0xff] %vm172, 0.0
      %623 = vst.msk [vmem:[#allocation4 + $0x48] sm:$0xff] %vm172, 0.0
      %624 = vst.msk [vmem:[#allocation4 + $0x50] sm:$0xff] %vm172, 0.0
      %625 = vst.msk [vmem:[#allocation4 + $0x58] sm:$0xff] %vm172, 0.0
      %626 = vst.msk [vmem:[#allocation4 + $0x60] sm:$0xff] %vm172, 0.0
      %627 = vst.msk [vmem:[#allocation4 + $0x68] sm:$0xff] %vm172, 0.0
      %628 = vst.msk [vmem:[#allocation4 + $0x70] sm:$0xff] %vm172, 0.0
      %629 = vst.msk [vmem:[#allocation4 + $0x78] sm:$0xff] %vm172, 0.0
      %630 = vst.msk [vmem:[#allocation4 + $0x80] sm:$0xff] %vm172, 0.0
      %631 = vst.msk [vmem:[#allocation4 + $0x88] sm:$0xff] %vm172, 0.0
      %632 = vst.msk [vmem:[#allocation4 + $0x90] sm:$0xff] %vm172, 0.0
      %633 = vst.msk [vmem:[#allocation4 + $0x98] sm:$0xff] %vm172, 0.0
      %634 = vst.msk [vmem:[#allocation4 + $0xa0] sm:$0xff] %vm172, 0.0
      %635 = vst.msk [vmem:[#allocation4 + $0xa8] sm:$0xff] %vm172, 0.0
      %636 = vst.msk [vmem:[#allocation4 + $0xb0] sm:$0xff] %vm172, 0.0
      %637 = vst.msk [vmem:[#allocation4 + $0xb8] sm:$0xff] %vm172, 0.0
      %638 = vst.msk [vmem:[#allocation4 + $0xc0] sm:$0xff] %vm172, 0.0
      %639 = vst.msk [vmem:[#allocation4 + $0xc8] sm:$0xff] %vm172, 0.0
      %640 = vst.msk [vmem:[#allocation4 + $0xd0] sm:$0xff] %vm172, 0.0
      %641 = vst.msk [vmem:[#allocation4 + $0xd8] sm:$0xff] %vm172, 0.0
      %642 = vst.msk [vmem:[#allocation4 + $0xe0] sm:$0xff] %vm172, 0.0
      %643 = vst.msk [vmem:[#allocation4 + $0xe8] sm:$0xff] %vm172, 0.0
      %644 = vst.msk [vmem:[#allocation4 + $0xf0] sm:$0xff] %vm172, 0.0
      %645 = vst.msk [vmem:[#allocation4 + $0xf8] sm:$0xff] %vm172, 0.0
      %v646 = vld [vmem:[#allocation2] sm:$0x80]
      %v647 = vld [vmem:[#allocation2 + $0x8] sm:$0xff]
      %v648 = vld [vmem:[#allocation2 + $0x10] sm:$0xff]
      %v649 = vld [vmem:[#allocation2 + $0x18] sm:$0xff]
      %v650 = vld [vmem:[#allocation2 + $0x20] sm:$0xff]
      %v651 = vld [vmem:[#allocation2 + $0x28] sm:$0xff]
      %v652 = vld [vmem:[#allocation2 + $0x30] sm:$0xff]
      %v653 = vld [vmem:[#allocation2 + $0x38] sm:$0xff]
      %v654 = vld [vmem:[#allocation2 + $0x40] sm:$0xff]
      %v655 = vld [vmem:[#allocation2 + $0x48] sm:$0xff]
      %v656 = vld [vmem:[#allocation2 + $0x50] sm:$0xff]
      %v657 = vld [vmem:[#allocation2 + $0x58] sm:$0xff]
      %v658 = vld [vmem:[#allocation2 + $0x60] sm:$0xff]
      %v659 = vld [vmem:[#allocation2 + $0x68] sm:$0xff]
      %v660 = vld [vmem:[#allocation2 + $0x70] sm:$0xff]
      %v661 = vld [vmem:[#allocation2 + $0x78] sm:$0xff]
      %v662 = vld [vmem:[#allocation2 + $0x80] sm:$0xff]
      %vm663 = vsmask.f32 7424
      %v665 = vshll.u32 %v342, 16
      %v667 = vrot.slane %v665, 1
      %v668 = vshrl.u32 %v342, 16
      %v670 = vor.u32 %v668, %v667
      %v672 = vshll.u32 %v343, 16
      %v674 = vrot.slane %v672, 1
      %v675 = vsel %vm663, %v670, %v674
      %v676 = vshrl.u32 %v343, 16
      %v678 = vor.u32 %v676, %v674
      %v680 = vshll.u32 %v344, 16
      %v682 = vrot.slane %v680, 1
      %v683 = vsel %vm663, %v678, %v682
      %v684 = vshrl.u32 %v344, 16
      %v686 = vor.u32 %v684, %v682
      %v688 = vshll.u32 %v345, 16
      %v690 = vrot.slane %v688, 1
      %v691 = vsel %vm663, %v686, %v690
      %v692 = vshrl.u32 %v345, 16
      %v694 = vor.u32 %v692, %v690
      %v696 = vshll.u32 %v346, 16
      %v698 = vrot.slane %v696, 1
      %v699 = vsel %vm663, %v694, %v698
      %v700 = vshrl.u32 %v346, 16
      %v702 = vor.u32 %v700, %v698
      %v704 = vshll.u32 %v347, 16
      %v706 = vrot.slane %v704, 1
      %v707 = vsel %vm663, %v702, %v706
      %v708 = vshrl.u32 %v347, 16
      %v710 = vor.u32 %v708, %v706
      %v712 = vshll.u32 %v348, 16
      %v714 = vrot.slane %v712, 1
      %v715 = vsel %vm663, %v710, %v714
      %v716 = vshrl.u32 %v348, 16
      %v718 = vor.u32 %v716, %v714
      %v720 = vshll.u32 %v349, 16
      %v722 = vrot.slane %v720, 1
      %v723 = vsel %vm663, %v718, %v722
      %v724 = vshrl.u32 %v349, 16
      %v726 = vor.u32 %v724, %v722
      %v728 = vshll.u32 %v350, 16
      %v730 = vrot.slane %v728, 1
      %v731 = vsel %vm663, %v726, %v730
      %v732 = vshrl.u32 %v350, 16
      %v734 = vor.u32 %v732, %v730
      %v736 = vshll.u32 %v351, 16
      %v738 = vrot.slane %v736, 1
      %v739 = vsel %vm663, %v734, %v738
      %v740 = vshrl.u32 %v351, 16
      %v742 = vor.u32 %v740, %v738
      %v744 = vshll.u32 %v352, 16
      %v746 = vrot.slane %v744, 1
      %v747 = vsel %vm663, %v742, %v746
      %v748 = vshrl.u32 %v352, 16
      %v750 = vor.u32 %v748, %v746
      %v752 = vshll.u32 %v353, 16
      %v754 = vrot.slane %v752, 1
      %v755 = vsel %vm663, %v750, %v754
      %v756 = vshrl.u32 %v353, 16
      %v758 = vor.u32 %v756, %v754
      %v760 = vshll.u32 %v354, 16
      %v762 = vrot.slane %v760, 1
      %v763 = vsel %vm663, %v758, %v762
      %v764 = vshrl.u32 %v354, 16
      %v766 = vor.u32 %v764, %v762
      %v768 = vshll.u32 %v355, 16
      %v770 = vrot.slane %v768, 1
      %v771 = vsel %vm663, %v766, %v770
      %v772 = vshrl.u32 %v355, 16
      %v774 = vor.u32 %v772, %v770
      %v776 = vshll.u32 %v356, 16
      %v778 = vrot.slane %v776, 1
      %v779 = vsel %vm663, %v774, %v778
      %v780 = vshrl.u32 %v356, 16
      %v782 = vor.u32 %v780, %v778
      %v784 = vshll.u32 %v357, 16
      %v786 = vrot.slane %v784, 1
      %v787 = vsel %vm663, %v782, %v786
      %v788 = vshrl.u32 %v357, 16
      %v790 = vor.u32 %v788, %v786
      %v808 = vmul.bf16 %v646, %v667
      %v809 = vmul.bf16 %v647, %v675
      %v810 = vmul.bf16 %v648, %v683
      %v811 = vmul.bf16 %v649, %v691
      %v812 = vmul.bf16 %v650, %v699
      %v813 = vmul.bf16 %v651, %v707
      %v814 = vmul.bf16 %v652, %v715
      %v815 = vmul.bf16 %v653, %v723
      %v816 = vmul.bf16 %v654, %v731
      %v817 = vmul.bf16 %v655, %v739
      %v818 = vmul.bf16 %v656, %v747
      %v819 = vmul.bf16 %v657, %v755
      %v820 = vmul.bf16 %v658, %v763
      %v821 = vmul.bf16 %v659, %v771
      %v822 = vmul.bf16 %v660, %v779
      %v823 = vmul.bf16 %v661, %v787
      %v824 = vmul.bf16 %v662, %v790
      %v825 = vld [vmem:[%s1] sm:$0xf]
      %v826 = vld [vmem:[#allocation4] sm:$0xff]
      %v827 = vld [vmem:[#allocation4 + $0x8] sm:$0xff]
      %v828 = vld [vmem:[#allocation4 + $0x10] sm:$0xff]
      %v829 = vld [vmem:[#allocation4 + $0x18] sm:$0xff]
      %v830 = vld [vmem:[#allocation4 + $0x20] sm:$0xff]
      %v831 = vld [vmem:[#allocation4 + $0x28] sm:$0xff]
      %v832 = vld [vmem:[#allocation4 + $0x30] sm:$0xff]
      %v833 = vld [vmem:[#allocation4 + $0x38] sm:$0xff]
      %v834 = vld [vmem:[#allocation4 + $0x40] sm:$0xff]
      %v835 = vld [vmem:[#allocation4 + $0x48] sm:$0xff]
      %v836 = vld [vmem:[#allocation4 + $0x50] sm:$0xff]
      %v837 = vld [vmem:[#allocation4 + $0x58] sm:$0xff]
      %v838 = vld [vmem:[#allocation4 + $0x60] sm:$0xff]
      %v839 = vld [vmem:[#allocation4 + $0x68] sm:$0xff]
      %v840 = vld [vmem:[#allocation4 + $0x70] sm:$0xff]
      %v841 = vld [vmem:[#allocation4 + $0x78] sm:$0xff]
      %v842 = vld [vmem:[#allocation4 + $0x80] sm:$0xff]
      %v843 = vld [vmem:[#allocation4 + $0x88] sm:$0xff]
      %v844 = vld [vmem:[#allocation4 + $0x90] sm:$0xff]
      %v845 = vld [vmem:[#allocation4 + $0x98] sm:$0xff]
      %v846 = vld [vmem:[#allocation4 + $0xa0] sm:$0xff]
      %v847 = vld [vmem:[#allocation4 + $0xa8] sm:$0xff]
      %v848 = vld [vmem:[#allocation4 + $0xb0] sm:$0xff]
      %v849 = vld [vmem:[#allocation4 + $0xb8] sm:$0xff]
      %v850 = vld [vmem:[#allocation4 + $0xc0] sm:$0xff]
      %v851 = vld [vmem:[#allocation4 + $0xc8] sm:$0xff]
      %v852 = vld [vmem:[#allocation4 + $0xd0] sm:$0xff]
      %v853 = vld [vmem:[#allocation4 + $0xd8] sm:$0xff]
      %v854 = vld [vmem:[#allocation4 + $0xe0] sm:$0xff]
      %v855 = vld [vmem:[#allocation4 + $0xe8] sm:$0xff]
      %v856 = vld [vmem:[#allocation4 + $0xf0] sm:$0xff]
      %v857 = vld [vmem:[#allocation4 + $0xf8] sm:$0xff]
      %vm858 = vsmask.f32 256
      %v860 = vshrl.u32 %v808, 16
      %v862 = vrot.slane %v860, 7
      %v864 = vshrl.u32 %v809, 16
      %v866 = vrot.slane %v864, 7
      %v867 = vshll.u32 %v809, 16
      %v869 = vor.u32 %v866, %v867
      %v870 = vsel %vm858, %v862, %v869
      %v872 = vshrl.u32 %v810, 16
      %v874 = vrot.slane %v872, 7
      %v875 = vshll.u32 %v810, 16
      %v877 = vor.u32 %v874, %v875
      %v878 = vsel %vm858, %v866, %v877
      %v880 = vshrl.u32 %v811, 16
      %v882 = vrot.slane %v880, 7
      %v883 = vshll.u32 %v811, 16
      %v885 = vor.u32 %v882, %v883
      %v886 = vsel %vm858, %v874, %v885
      %v888 = vshrl.u32 %v812, 16
      %v890 = vrot.slane %v888, 7
      %v891 = vshll.u32 %v812, 16
      %v893 = vor.u32 %v890, %v891
      %v894 = vsel %vm858, %v882, %v893
      %v896 = vshrl.u32 %v813, 16
      %v898 = vrot.slane %v896, 7
      %v899 = vshll.u32 %v813, 16
      %v901 = vor.u32 %v898, %v899
      %v902 = vsel %vm858, %v890, %v901
      %v904 = vshrl.u32 %v814, 16
      %v906 = vrot.slane %v904, 7
      %v907 = vshll.u32 %v814, 16
      %v909 = vor.u32 %v906, %v907
      %v910 = vsel %vm858, %v898, %v909
      %v912 = vshrl.u32 %v815, 16
      %v914 = vrot.slane %v912, 7
      %v915 = vshll.u32 %v815, 16
      %v917 = vor.u32 %v914, %v915
      %v918 = vsel %vm858, %v906, %v917
      %v920 = vshrl.u32 %v816, 16
      %v922 = vrot.slane %v920, 7
      %v923 = vshll.u32 %v816, 16
      %v925 = vor.u32 %v922, %v923
      %v926 = vsel %vm858, %v914, %v925
      %v928 = vshrl.u32 %v817, 16
      %v930 = vrot.slane %v928, 7
      %v931 = vshll.u32 %v817, 16
      %v933 = vor.u32 %v930, %v931
      %v934 = vsel %vm858, %v922, %v933
      %v936 = vshrl.u32 %v818, 16
      %v938 = vrot.slane %v936, 7
      %v939 = vshll.u32 %v818, 16
      %v941 = vor.u32 %v938, %v939
      %v942 = vsel %vm858, %v930, %v941
      %v944 = vshrl.u32 %v819, 16
      %v946 = vrot.slane %v944, 7
      %v947 = vshll.u32 %v819, 16
      %v949 = vor.u32 %v946, %v947
      %v950 = vsel %vm858, %v938, %v949
      %v952 = vshrl.u32 %v820, 16
      %v954 = vrot.slane %v952, 7
      %v955 = vshll.u32 %v820, 16
      %v957 = vor.u32 %v954, %v955
      %v958 = vsel %vm858, %v946, %v957
      %v960 = vshrl.u32 %v821, 16
      %v962 = vrot.slane %v960, 7
      %v963 = vshll.u32 %v821, 16
      %v965 = vor.u32 %v962, %v963
      %v966 = vsel %vm858, %v954, %v965
      %v968 = vshrl.u32 %v822, 16
      %v970 = vrot.slane %v968, 7
      %v971 = vshll.u32 %v822, 16
      %v973 = vor.u32 %v970, %v971
      %v974 = vsel %vm858, %v962, %v973
      %v976 = vshrl.u32 %v823, 16
      %v978 = vrot.slane %v976, 7
      %v979 = vshll.u32 %v823, 16
      %v981 = vor.u32 %v978, %v979
      %v982 = vsel %vm858, %v970, %v981
      %v984 = vshrl.u32 %v824, 16
      %v986 = vrot.slane %v984, 7
      %v987 = vshll.u32 %v824, 16
      %v989 = vor.u32 %v986, %v987
      %v990 = vsel %vm858, %v978, %v989
      %v992 = vsel %vm172, %v870, 0
      %v995 = vsel %vm172, %v878, 0
      %v998 = vsel %vm172, %v886, 0
      %v1001 = vsel %vm172, %v894, 0
      %v1004 = vsel %vm172, %v902, 0
      %v1007 = vsel %vm172, %v910, 0
      %v1010 = vsel %vm172, %v918, 0
      %v1013 = vsel %vm172, %v926, 0
      %v1016 = vsel %vm172, %v934, 0
      %v1019 = vsel %vm172, %v942, 0
      %v1022 = vsel %vm172, %v950, 0
      %v1025 = vsel %vm172, %v958, 0
      %v1028 = vsel %vm172, %v966, 0
      %v1031 = vsel %vm172, %v974, 0
      %v1034 = vsel %vm172, %v982, 0
      %v1037 = vsel %vm172, %v990, 0
      %vm1039 = vcmask 1043456
      %v1041 = vsel %vm1039, %v825, 0
      %1043 = vmatprep.subr.bf16.mxu0 0
      %1044 = vmatpush1.bf16.msra.mxu0 %v1041
      %1045 = vmatprep.subr.bf16.mxu0 0
      %1046 = vmatpush1.bf16.msra.mxu0 0
      %1047 = vmatprep.subr.bf16.mxu0 0
      %1048 = vmatpush1.bf16.msra.mxu0 0
      %1049 = vmatprep.subr.bf16.mxu0 0
      %1050 = vmatpush1.bf16.msra.mxu0 0
      %1051 = vmatprep.subr.bf16.mxu0 0
      %1052 = vmatpush1.bf16.msra.mxu0 0
      %1053 = vmatprep.subr.bf16.mxu0 0
      %1054 = vmatpush1.bf16.msra.mxu0 0
      %1055 = vmatprep.subr.bf16.mxu0 0
      %1056 = vmatpush1.bf16.msra.mxu0 0
      %1057 = vmatprep.subr.bf16.mxu0 0
      %1058 = vmatpush1.bf16.msra.mxu0 0
      %1059 = vmatprep.subr.bf16.mxu0 0
      %1060 = vmatpush1.bf16.msra.mxu0 0
      %1061 = vmatprep.subr.bf16.mxu0 0
      %1062 = vmatpush1.bf16.msra.mxu0 0
      %1063 = vmatprep.subr.bf16.mxu0 0
      %1064 = vmatpush1.bf16.msra.mxu0 0
      %1065 = vmatprep.subr.bf16.mxu0 0
      %1066 = vmatpush1.bf16.msra.mxu0 0
      %1067 = vmatprep.subr.bf16.mxu0 0
      %1068 = vmatpush1.bf16.msra.mxu0 0
      %1069 = vmatprep.subr.bf16.mxu0 0
      %1070 = vmatpush1.bf16.msra.mxu0 0
      %1071 = vmatprep.subr.bf16.mxu0 0
      %1072 = vmatpush1.bf16.msra.mxu0 0
      %1073 = vmatprep.subr.bf16.mxu0 0
      %1074 = vmatpush1.bf16.msra.mxu0 0
      %1075 = vmatprep.mubr.bf16.mxu0 0
      %1076 = vmatmul.mubr.bf16.gmra.mrb[0].mxu0 %v992
      %v1077 = vpop.f32.mrb[0].mxu0
      %v1078 = vadd.f32 0.0, %v1077
      %v1079 = vpop.f32.mrb[0].mxu0
      %v1080 = vpop.f32.mrb[0].mxu0
      %v1081 = vadd.f32 0.0, %v1080
      %v1082 = vpop.f32.mrb[0].mxu0
      %1083 = vmatprep.mubr.bf16.mxu0 0
      %1084 = vmatmul.mubr.bf16.gmra.mrb[0].mxu0 %v995
      %v1085 = vpop.f32.mrb[0].mxu0
      %v1086 = vadd.f32 0.0, %v1085
      %v1087 = vpop.f32.mrb[0].mxu0
      %v1088 = vpop.f32.mrb[0].mxu0
      %v1089 = vadd.f32 0.0, %v1088
      %v1090 = vpop.f32.mrb[0].mxu0
      %1091 = vmatprep.mubr.bf16.mxu0 0
      %1092 = vmatmul.mubr.bf16.gmra.mrb[0].mxu0 %v998
      %v1093 = vpop.f32.mrb[0].mxu0
      %v1094 = vadd.f32 0.0, %v1093
      %v1095 = vpop.f32.mrb[0].mxu0
      %v1096 = vpop.f32.mrb[0].mxu0
      %v1097 = vadd.f32 0.0, %v1096
      %v1098 = vpop.f32.mrb[0].mxu0
      %1099 = vmatprep.mubr.bf16.mxu0 0
      %1100 = vmatmul.mubr.bf16.gmra.mrb[0].mxu0 %v1001
      %v1101 = vpop.f32.mrb[0].mxu0
      %v1102 = vadd.f32 0.0, %v1101
      %v1103 = vpop.f32.mrb[0].mxu0
      %v1104 = vpop.f32.mrb[0].mxu0
      %v1105 = vadd.f32 0.0, %v1104
      %v1106 = vpop.f32.mrb[0].mxu0
      %1107 = vmatprep.mubr.bf16.mxu0 0
      %1108 = vmatmul.mubr.bf16.gmra.mrb[0].mxu0 %v1004
      %v1109 = vpop.f32.mrb[0].mxu0
      %v1110 = vadd.f32 0.0, %v1109
      %v1111 = vpop.f32.mrb[0].mxu0
      %v1112 = vpop.f32.mrb[0].mxu0
      %v1113 = vadd.f32 0.0, %v1112
      %v1114 = vpop.f32.mrb[0].mxu0
      %1115 = vmatprep.mubr.bf16.mxu0 0
      %1116 = vmatmul.mubr.bf16.gmra.mrb[0].mxu0 %v1007
      %v1117 = vpop.f32.mrb[0].mxu0
      %v1118 = vadd.f32 0.0, %v1117
      %v1119 = vpop.f32.mrb[0].mxu0
      %v1120 = vpop.f32.mrb[0].mxu0
      %v1121 = vadd.f32 0.0, %v1120
      %v1122 = vpop.f32.mrb[0].mxu0
      %1123 = vmatprep.mubr.bf16.mxu0 0
      %1124 = vmatmul.mubr.bf16.gmra.mrb[0].mxu0 %v1010
      %v1125 = vpop.f32.mrb[0].mxu0
      %v1126 = vadd.f32 0.0, %v1125
      %v1127 = vpop.f32.mrb[0].mxu0
      %v1128 = vpop.f32.mrb[0].mxu0
      %v1129 = vadd.f32 0.0, %v1128
      %v1130 = vpop.f32.mrb[0].mxu0
      %1131 = vmatprep.mubr.bf16.mxu0 0
      %1132 = vmatmul.mubr.bf16.gmra.mrb[0].mxu0 %v1013
      %v1133 = vpop.f32.mrb[0].mxu0
      %v1134 = vadd.f32 0.0, %v1133
      %v1135 = vpop.f32.mrb[0].mxu0
      %v1136 = vpop.f32.mrb[0].mxu0
      %v1137 = vadd.f32 0.0, %v1136
      %v1138 = vpop.f32.mrb[0].mxu0
      %1139 = vmatprep.mubr.bf16.mxu0 0
      %1140 = vmatmul.mubr.bf16.gmra.mrb[0].mxu0 %v1016
      %v1141 = vpop.f32.mrb[0].mxu0
      %v1142 = vadd.f32 0.0, %v1141
      %v1143 = vpop.f32.mrb[0].mxu0
      %v1144 = vpop.f32.mrb[0].mxu0
      %v1145 = vadd.f32 0.0, %v1144
      %v1146 = vpop.f32.mrb[0].mxu0
      %1147 = vmatprep.mubr.bf16.mxu0 0
      %1148 = vmatmul.mubr.bf16.gmra.mrb[0].mxu0 %v1019
      %v1149 = vpop.f32.mrb[0].mxu0
      %v1150 = vadd.f32 0.0, %v1149
      %v1151 = vpop.f32.mrb[0].mxu0
      %v1152 = vpop.f32.mrb[0].mxu0
      %v1153 = vadd.f32 0.0, %v1152
      %v1154 = vpop.f32.mrb[0].mxu0
      %1155 = vmatprep.mubr.bf16.mxu0 0
      %1156 = vmatmul.mubr.bf16.gmra.mrb[0].mxu0 %v1022
      %v1157 = vpop.f32.mrb[0].mxu0
      %v1158 = vadd.f32 0.0, %v1157
      %v1159 = vpop.f32.mrb[0].mxu0
      %v1160 = vpop.f32.mrb[0].mxu0
      %v1161 = vadd.f32 0.0, %v1160
      %v1162 = vpop.f32.mrb[0].mxu0
      %1163 = vmatprep.mubr.bf16.mxu0 0
      %1164 = vmatmul.mubr.bf16.gmra.mrb[0].mxu0 %v1025
      %v1165 = vpop.f32.mrb[0].mxu0
      %v1166 = vadd.f32 0.0, %v1165
      %v1167 = vpop.f32.mrb[0].mxu0
      %v1168 = vpop.f32.mrb[0].mxu0
      %v1169 = vadd.f32 0.0, %v1168
      %v1170 = vpop.f32.mrb[0].mxu0
      %1171 = vmatprep.mubr.bf16.mxu0 0
      %1172 = vmatmul.mubr.bf16.gmra.mrb[0].mxu0 %v1028
      %v1173 = vpop.f32.mrb[0].mxu0
      %v1174 = vadd.f32 0.0, %v1173
      %v1175 = vpop.f32.mrb[0].mxu0
      %v1176 = vpop.f32.mrb[0].mxu0
      %v1177 = vadd.f32 0.0, %v1176
      %v1178 = vpop.f32.mrb[0].mxu0
      %1179 = vmatprep.mubr.bf16.mxu0 0
      %1180 = vmatmul.mubr.bf16.gmra.mrb[0].mxu0 %v1031
      %v1181 = vpop.f32.mrb[0].mxu0
      %v1182 = vadd.f32 0.0, %v1181
      %v1183 = vpop.f32.mrb[0].mxu0
      %v1184 = vpop.f32.mrb[0].mxu0
      %v1185 = vadd.f32 0.0, %v1184
      %v1186 = vpop.f32.mrb[0].mxu0
      %1187 = vmatprep.mubr.bf16.mxu0 0
      %1188 = vmatmul.mubr.bf16.gmra.mrb[0].mxu0 %v1034
      %v1189 = vpop.f32.mrb[0].mxu0
      %v1190 = vadd.f32 0.0, %v1189
      %v1191 = vpop.f32.mrb[0].mxu0
      %v1192 = vpop.f32.mrb[0].mxu0
      %v1193 = vadd.f32 0.0, %v1192
      %v1194 = vpop.f32.mrb[0].mxu0
      %1195 = vmatprep.mubr.bf16.mxu0 0
      %1196 = vmatmul.mubr.bf16.gmra.mrb[0].mxu0 %v1037
      %v1197 = vpop.f32.mrb[0].mxu0
      %v1198 = vadd.f32 0.0, %v1197
      %v1199 = vpop.f32.mrb[0].mxu0
      %v1200 = vpop.f32.mrb[0].mxu0
      %v1201 = vadd.f32 0.0, %v1200
      %v1202 = vpop.f32.mrb[0].mxu0
      %1203 = vdwg.mxu0
      %v1204 = vadd.f32 %v826, %v1078
      %v1205 = vadd.f32 %v827, %v1081
      %v1206 = vadd.f32 %v828, %v1086
      %v1207 = vadd.f32 %v829, %v1089
      %v1208 = vadd.f32 %v830, %v1094
      %v1209 = vadd.f32 %v831, %v1097
      %v1210 = vadd.f32 %v832, %v1102
      %v1211 = vadd.f32 %v833, %v1105
      %v1212 = vadd.f32 %v834, %v1110
      %v1213 = vadd.f32 %v835, %v1113
      %v1214 = vadd.f32 %v836, %v1118
      %v1215 = vadd.f32 %v837, %v1121
      %v1216 = vadd.f32 %v838, %v1126
      %v1217 = vadd.f32 %v839, %v1129
      %v1218 = vadd.f32 %v840, %v1134
      %v1219 = vadd.f32 %v841, %v1137
      %v1220 = vadd.f32 %v842, %v1142
      %v1221 = vadd.f32 %v843, %v1145
      %v1222 = vadd.f32 %v844, %v1150
      %v1223 = vadd.f32 %v845, %v1153
      %v1224 = vadd.f32 %v846, %v1158
      %v1225 = vadd.f32 %v847, %v1161
      %v1226 = vadd.f32 %v848, %v1166
      %v1227 = vadd.f32 %v849, %v1169
      %v1228 = vadd.f32 %v850, %v1174
      %v1229 = vadd.f32 %v851, %v1177
      %v1230 = vadd.f32 %v852, %v1182
      %v1231 = vadd.f32 %v853, %v1185
      %v1232 = vadd.f32 %v854, %v1190
      %v1233 = vadd.f32 %v855, %v1193
      %v1234 = vadd.f32 %v856, %v1198
      %v1235 = vadd.f32 %v857, %v1201
      %1236 = vst.msk [vmem:[#allocation4] sm:$0xff] %vm172, %v1204
      %1237 = vst.msk [vmem:[#allocation4 + $0x8] sm:$0xff] %vm172, %v1205
      %1238 = vst.msk [vmem:[#allocation4 + $0x10] sm:$0xff] %vm172, %v1206
      %1239 = vst.msk [vmem:[#allocation4 + $0x18] sm:$0xff] %vm172, %v1207
      %1240 = vst.msk [vmem:[#allocation4 + $0x20] sm:$0xff] %vm172, %v1208
      %1241 = vst.msk [vmem:[#allocation4 + $0x28] sm:$0xff] %vm172, %v1209
      %1242 = vst.msk [vmem:[#allocation4 + $0x30] sm:$0xff] %vm172, %v1210
      %1243 = vst.msk [vmem:[#allocation4 + $0x38] sm:$0xff] %vm172, %v1211
      %1244 = vst.msk [vmem:[#allocation4 + $0x40] sm:$0xff] %vm172, %v1212
      %1245 = vst.msk [vmem:[#allocation4 + $0x48] sm:$0xff] %vm172, %v1213
      %1246 = vst.msk [vmem:[#allocation4 + $0x50] sm:$0xff] %vm172, %v1214
      %1247 = vst.msk [vmem:[#allocation4 + $0x58] sm:$0xff] %vm172, %v1215
      %1248 = vst.msk [vmem:[#allocation4 + $0x60] sm:$0xff] %vm172, %v1216
      %1249 = vst.msk [vmem:[#allocation4 + $0x68] sm:$0xff] %vm172, %v1217
      %1250 = vst.msk [vmem:[#allocation4 + $0x70] sm:$0xff] %vm172, %v1218
      %1251 = vst.msk [vmem:[#allocation4 + $0x78] sm:$0xff] %vm172, %v1219
      %1252 = vst.msk [vmem:[#allocation4 + $0x80] sm:$0xff] %vm172, %v1220
      %1253 = vst.msk [vmem:[#allocation4 + $0x88] sm:$0xff] %vm172, %v1221
      %1254 = vst.msk [vmem:[#allocation4 + $0x90] sm:$0xff] %vm172, %v1222
      %1255 = vst.msk [vmem:[#allocation4 + $0x98] sm:$0xff] %vm172, %v1223
      %1256 = vst.msk [vmem:[#allocation4 + $0xa0] sm:$0xff] %vm172, %v1224
      %1257 = vst.msk [vmem:[#allocation4 + $0xa8] sm:$0xff] %vm172, %v1225
      %1258 = vst.msk [vmem:[#allocation4 + $0xb0] sm:$0xff] %vm172, %v1226
      %1259 = vst.msk [vmem:[#allocation4 + $0xb8] sm:$0xff] %vm172, %v1227
      %1260 = vst.msk [vmem:[#allocation4 + $0xc0] sm:$0xff] %vm172, %v1228
      %1261 = vst.msk [vmem:[#allocation4 + $0xc8] sm:$0xff] %vm172, %v1229
      %1262 = vst.msk [vmem:[#allocation4 + $0xd0] sm:$0xff] %vm172, %v1230
      %1263 = vst.msk [vmem:[#allocation4 + $0xd8] sm:$0xff] %vm172, %v1231
      %1264 = vst.msk [vmem:[#allocation4 + $0xe0] sm:$0xff] %vm172, %v1232
      %1265 = vst.msk [vmem:[#allocation4 + $0xe8] sm:$0xff] %vm172, %v1233
      %1266 = vst.msk [vmem:[#allocation4 + $0xf0] sm:$0xff] %vm172, %v1234
      %1267 = vst.msk [vmem:[#allocation4 + $0xf8] sm:$0xff] %vm172, %v1235
      %v1268 = vld [vmem:[#allocation2 + $0x8] sm:$0xff]
      %v1269 = vld [vmem:[#allocation2 + $0x10] sm:$0xff]
      %v1270 = vld [vmem:[#allocation2 + $0x18] sm:$0xff]
      %v1271 = vld [vmem:[#allocation2 + $0x20] sm:$0xff]
      %v1272 = vld [vmem:[#allocation2 + $0x28] sm:$0xff]
      %v1273 = vld [vmem:[#allocation2 + $0x30] sm:$0xff]
      %v1274 = vld [vmem:[#allocation2 + $0x38] sm:$0xff]
      %v1275 = vld [vmem:[#allocation2 + $0x40] sm:$0xff]
      %v1276 = vld [vmem:[#allocation2 + $0x48] sm:$0xff]
      %v1277 = vld [vmem:[#allocation2 + $0x50] sm:$0xff]
      %v1278 = vld [vmem:[#allocation2 + $0x58] sm:$0xff]
      %v1279 = vld [vmem:[#allocation2 + $0x60] sm:$0xff]
      %v1280 = vld [vmem:[#allocation2 + $0x68] sm:$0xff]
      %v1281 = vld [vmem:[#allocation2 + $0x70] sm:$0xff]
      %v1282 = vld [vmem:[#allocation2 + $0x78] sm:$0xff]
      %v1283 = vld [vmem:[#allocation2 + $0x80] sm:$0xff]
      %v1284 = vld [vmem:[%s1 + $0x4] sm:$0xf]
      %v1285 = vld [vmem:[#allocation4] sm:$0xff]
      %v1286 = vld [vmem:[#allocation4 + $0x8] sm:$0xff]
      %v1287 = vld [vmem:[#allocation4 + $0x10] sm:$0xff]
      %v1288 = vld [vmem:[#allocation4 + $0x18] sm:$0xff]
      %v1289 = vld [vmem:[#allocation4 + $0x20] sm:$0xff]
      %v1290 = vld [vmem:[#allocation4 + $0x28] sm:$0xff]
      %v1291 = vld [vmem:[#allocation4 + $0x30] sm:$0xff]
      %v1292 = vld [vmem:[#allocation4 + $0x38] sm:$0xff]
      %v1293 = vld [vmem:[#allocation4 + $0x40] sm:$0xff]
      %v1294 = vld [vmem:[#allocation4 + $0x48] sm:$0xff]
      %v1295 = vld [vmem:[#allocation4 + $0x50] sm:$0xff]
      %v1296 = vld [vmem:[#allocation4 + $0x58] sm:$0xff]
      %v1297 = vld [vmem:[#allocation4 + $0x60] sm:$0xff]
      %v1298 = vld [vmem:[#allocation4 + $0x68] sm:$0xff]
      %v1299 = vld [vmem:[#allocation4 + $0x70] sm:$0xff]
      %v1300 = vld [vmem:[#allocation4 + $0x78] sm:$0xff]
      %v1301 = vld [vmem:[#allocation4 + $0x80] sm:$0xff]
      %v1302 = vld [vmem:[#allocation4 + $0x88] sm:$0xff]
      %v1303 = vld [vmem:[#allocation4 + $0x90] sm:$0xff]
      %v1304 = vld [vmem:[#allocation4 + $0x98] sm:$0xff]
      %v1305 = vld [vmem:[#allocation4 + $0xa0] sm:$0xff]
      %v1306 = vld [vmem:[#allocation4 + $0xa8] sm:$0xff]
      %v1307 = vld [vmem:[#allocation4 + $0xb0] sm:$0xff]
      %v1308 = vld [vmem:[#allocation4 + $0xb8] sm:$0xff]
      %v1309 = vld [vmem:[#allocation4 + $0xc0] sm:$0xff]
      %v1310 = vld [vmem:[#allocation4 + $0xc8] sm:$0xff]
      %v1311 = vld [vmem:[#allocation4 + $0xd0] sm:$0xff]
      %v1312 = vld [vmem:[#allocation4 + $0xd8] sm:$0xff]
      %v1313 = vld [vmem:[#allocation4 + $0xe0] sm:$0xff]
      %v1314 = vld [vmem:[#allocation4 + $0xe8] sm:$0xff]
      %v1315 = vld [vmem:[#allocation4 + $0xf0] sm:$0xff]
      %v1316 = vld [vmem:[#allocation4 + $0xf8] sm:$0xff]
      %v1318 = vsel %vm172, %v1268, 0
      %v1321 = vsel %vm172, %v1269, 0
      %v1324 = vsel %vm172, %v1270, 0
      %v1327 = vsel %vm172, %v1271, 0
      %v1330 = vsel %vm172, %v1272, 0
      %v1333 = vsel %vm172, %v1273, 0
      %v1336 = vsel %vm172, %v1274, 0
      %v1339 = vsel %vm172, %v1275, 0
      %v1342 = vsel %vm172, %v1276, 0
      %v1345 = vsel %vm172, %v1277, 0
      %v1348 = vsel %vm172, %v1278, 0
      %v1351 = vsel %vm172, %v1279, 0
      %v1354 = vsel %vm172, %v1280, 0
      %v1357 = vsel %vm172, %v1281, 0
      %v1360 = vsel %vm172, %v1282, 0
      %v1363 = vsel %vm172, %v1283, 0
      %v1366 = vsel %vm1039, %v1284, 0
      %1368 = vmatprep.subr.bf16.mxu0 0
      %1369 = vmatpush1.bf16.msra.mxu0 %v1366
      %1370 = vmatprep.subr.bf16.mxu0 0
      %1371 = vmatpush1.bf16.msra.mxu0 0
      %1372 = vmatprep.subr.bf16.mxu0 0
      %1373 = vmatpush1.bf16.msra.mxu0 0
      %1374 = vmatprep.subr.bf16.mxu0 0
      %1375 = vmatpush1.bf16.msra.mxu0 0
      %1376 = vmatprep.subr.bf16.mxu0 0
      %1377 = vmatpush1.bf16.msra.mxu0 0
      %1378 = vmatprep.subr.bf16.mxu0 0
      %1379 = vmatpush1.bf16.msra.mxu0 0
      %1380 = vmatprep.subr.bf16.mxu0 0
      %1381 = vmatpush1.bf16.msra.mxu0 0
      %1382 = vmatprep.subr.bf16.mxu0 0
      %1383 = vmatpush1.bf16.msra.mxu0 0
      %1384 = vmatprep.subr.bf16.mxu0 0
      %1385 = vmatpush1.bf16.msra.mxu0 0
      %1386 = vmatprep.subr.bf16.mxu0 0
      %1387 = vmatpush1.bf16.msra.mxu0 0
      %1388 = vmatprep.subr.bf16.mxu0 0
      %1389 = vmatpush1.bf16.msra.mxu0 0
      %1390 = vmatprep.subr.bf16.mxu0 0
      %1391 = vmatpush1.bf16.msra.mxu0 0
      %1392 = vmatprep.subr.bf16.mxu0 0
      %1393 = vmatpush1.bf16.msra.mxu0 0
      %1394 = vmatprep.subr.bf16.mxu0 0
      %1395 = vmatpush1.bf16.msra.mxu0 0
      %1396 = vmatprep.subr.bf16.mxu0 0
      %1397 = vmatpush1.bf16.msra.mxu0 0
      %1398 = vmatprep.subr.bf16.mxu0 0
      %1399 = vmatpush1.bf16.msra.mxu0 0
      %1400 = vmatprep.mubr.bf16.mxu0 0
      %1401 = vmatmul.mubr.bf16.gmra.mrb[0].mxu0 %v1318
      %v1402 = vpop.f32.mrb[0].mxu0
      %v1403 = vadd.f32 0.0, %v1402
      %v1404 = vpop.f32.mrb[0].mxu0
      %v1405 = vpop.f32.mrb[0].mxu0
      %v1406 = vadd.f32 0.0, %v1405
      %v1407 = vpop.f32.mrb[0].mxu0
      %1408 = vmatprep.mubr.bf16.mxu0 0
      %1409 = vmatmul.mubr.bf16.gmra.mrb[0].mxu0 %v1321
      %v1410 = vpop.f32.mrb[0].mxu0
      %v1411 = vadd.f32 0.0, %v1410
      %v1412 = vpop.f32.mrb[0].mxu0
      %v1413 = vpop.f32.mrb[0].mxu0
      %v1414 = vadd.f32 0.0, %v1413
      %v1415 = vpop.f32.mrb[0].mxu0
      %1416 = vmatprep.mubr.bf16.mxu0 0
      %1417 = vmatmul.mubr.bf16.gmra.mrb[0].mxu0 %v1324
      %v1418 = vpop.f32.mrb[0].mxu0
      %v1419 = vadd.f32 0.0, %v1418
      %v1420 = vpop.f32.mrb[0].mxu0
      %v1421 = vpop.f32.mrb[0].mxu0
      %v1422 = vadd.f32 0.0, %v1421
      %v1423 = vpop.f32.mrb[0].mxu0
      %1424 = vmatprep.mubr.bf16.mxu0 0
      %1425 = vmatmul.mubr.bf16.gmra.mrb[0].mxu0 %v1327
      %v1426 = vpop.f32.mrb[0].mxu0
      %v1427 = vadd.f32 0.0, %v1426
      %v1428 = vpop.f32.mrb[0].mxu0
      %v1429 = vpop.f32.mrb[0].mxu0
      %v1430 = vadd.f32 0.0, %v1429
      %v1431 = vpop.f32.mrb[0].mxu0
      %1432 = vmatprep.mubr.bf16.mxu0 0
      %1433 = vmatmul.mubr.bf16.gmra.mrb[0].mxu0 %v1330
      %v1434 = vpop.f32.mrb[0].mxu0
      %v1435 = vadd.f32 0.0, %v1434
      %v1436 = vpop.f32.mrb[0].mxu0
      %v1437 = vpop.f32.mrb[0].mxu0
      %v1438 = vadd.f32 0.0, %v1437
      %v1439 = vpop.f32.mrb[0].mxu0
      %1440 = vmatprep.mubr.bf16.mxu0 0
      %1441 = vmatmul.mubr.bf16.gmra.mrb[0].mxu0 %v1333
      %v1442 = vpop.f32.mrb[0].mxu0
      %v1443 = vadd.f32 0.0, %v1442
      %v1444 = vpop.f32.mrb[0].mxu0
      %v1445 = vpop.f32.mrb[0].mxu0
      %v1446 = vadd.f32 0.0, %v1445
      %v1447 = vpop.f32.mrb[0].mxu0
      %1448 = vmatprep.mubr.bf16.mxu0 0
      %1449 = vmatmul.mubr.bf16.gmra.mrb[0].mxu0 %v1336
      %v1450 = vpop.f32.mrb[0].mxu0
      %v1451 = vadd.f32 0.0, %v1450
      %v1452 = vpop.f32.mrb[0].mxu0
      %v1453 = vpop.f32.mrb[0].mxu0
      %v1454 = vadd.f32 0.0, %v1453
      %v1455 = vpop.f32.mrb[0].mxu0
      %1456 = vmatprep.mubr.bf16.mxu0 0
      %1457 = vmatmul.mubr.bf16.gmra.mrb[0].mxu0 %v1339
      %v1458 = vpop.f32.mrb[0].mxu0
      %v1459 = vadd.f32 0.0, %v1458
      %v1460 = vpop.f32.mrb[0].mxu0
      %v1461 = vpop.f32.mrb[0].mxu0
      %v1462 = vadd.f32 0.0, %v1461
      %v1463 = vpop.f32.mrb[0].mxu0
      %1464 = vmatprep.mubr.bf16.mxu0 0
      %1465 = vmatmul.mubr.bf16.gmra.mrb[0].mxu0 %v1342
      %v1466 = vpop.f32.mrb[0].mxu0
      %v1467 = vadd.f32 0.0, %v1466
      %v1468 = vpop.f32.mrb[0].mxu0
      %v1469 = vpop.f32.mrb[0].mxu0
      %v1470 = vadd.f32 0.0, %v1469
      %v1471 = vpop.f32.mrb[0].mxu0
      %1472 = vmatprep.mubr.bf16.mxu0 0
      %1473 = vmatmul.mubr.bf16.gmra.mrb[0].mxu0 %v1345
      %v1474 = vpop.f32.mrb[0].mxu0
      %v1475 = vadd.f32 0.0, %v1474
      %v1476 = vpop.f32.mrb[0].mxu0
      %v1477 = vpop.f32.mrb[0].mxu0
      %v1478 = vadd.f32 0.0, %v1477
      %v1479 = vpop.f32.mrb[0].mxu0
      %1480 = vmatprep.mubr.bf16.mxu0 0
      %1481 = vmatmul.mubr.bf16.gmra.mrb[0].mxu0 %v1348
      %v1482 = vpop.f32.mrb[0].mxu0
      %v1483 = vadd.f32 0.0, %v1482
      %v1484 = vpop.f32.mrb[0].mxu0
      %v1485 = vpop.f32.mrb[0].mxu0
      %v1486 = vadd.f32 0.0, %v1485
      %v1487 = vpop.f32.mrb[0].mxu0
      %1488 = vmatprep.mubr.bf16.mxu0 0
      %1489 = vmatmul.mubr.bf16.gmra.mrb[0].mxu0 %v1351
      %v1490 = vpop.f32.mrb[0].mxu0
      %v1491 = vadd.f32 0.0, %v1490
      %v1492 = vpop.f32.mrb[0].mxu0
      %v1493 = vpop.f32.mrb[0].mxu0
      %v1494 = vadd.f32 0.0, %v1493
      %v1495 = vpop.f32.mrb[0].mxu0
      %1496 = vmatprep.mubr.bf16.mxu0 0
      %1497 = vmatmul.mubr.bf16.gmra.mrb[0].mxu0 %v1354
      %v1498 = vpop.f32.mrb[0].mxu0
      %v1499 = vadd.f32 0.0, %v1498
      %v1500 = vpop.f32.mrb[0].mxu0
      %v1501 = vpop.f32.mrb[0].mxu0
      %v1502 = vadd.f32 0.0, %v1501
      %v1503 = vpop.f32.mrb[0].mxu0
      %1504 = vmatprep.mubr.bf16.mxu0 0
      %1505 = vmatmul.mubr.bf16.gmra.mrb[0].mxu0 %v1357
      %v1506 = vpop.f32.mrb[0].mxu0
      %v1507 = vadd.f32 0.0, %v1506
      %v1508 = vpop.f32.mrb[0].mxu0
      %v1509 = vpop.f32.mrb[0].mxu0
      %v1510 = vadd.f32 0.0, %v1509
      %v1511 = vpop.f32.mrb[0].mxu0
      %1512 = vmatprep.mubr.bf16.mxu0 0
      %1513 = vmatmul.mubr.bf16.gmra.mrb[0].mxu0 %v1360
      %v1514 = vpop.f32.mrb[0].mxu0
      %v1515 = vadd.f32 0.0, %v1514
      %v1516 = vpop.f32.mrb[0].mxu0
      %v1517 = vpop.f32.mrb[0].mxu0
      %v1518 = vadd.f32 0.0, %v1517
      %v1519 = vpop.f32.mrb[0].mxu0
      %1520 = vmatprep.mubr.bf16.mxu0 0
      %1521 = vmatmul.mubr.bf16.gmra.mrb[0].mxu0 %v1363
      %v1522 = vpop.f32.mrb[0].mxu0
      %v1523 = vadd.f32 0.0, %v1522
      %v1524 = vpop.f32.mrb[0].mxu0
      %v1525 = vpop.f32.mrb[0].mxu0
      %v1526 = vadd.f32 0.0, %v1525
      %v1527 = vpop.f32.mrb[0].mxu0
      %1528 = vdwg.mxu0
      %v1529 = vadd.f32 %v1285, %v1403
      %v1530 = vadd.f32 %v1286, %v1406
      %v1531 = vadd.f32 %v1287, %v1411
      %v1532 = vadd.f32 %v1288, %v1414
      %v1533 = vadd.f32 %v1289, %v1419
      %v1534 = vadd.f32 %v1290, %v1422
      %v1535 = vadd.f32 %v1291, %v1427
      %v1536 = vadd.f32 %v1292, %v1430
      %v1537 = vadd.f32 %v1293, %v1435
      %v1538 = vadd.f32 %v1294, %v1438
      %v1539 = vadd.f32 %v1295, %v1443
      %v1540 = vadd.f32 %v1296, %v1446
      %v1541 = vadd.f32 %v1297, %v1451
      %v1542 = vadd.f32 %v1298, %v1454
      %v1543 = vadd.f32 %v1299, %v1459
      %v1544 = vadd.f32 %v1300, %v1462
      %v1545 = vadd.f32 %v1301, %v1467
      %v1546 = vadd.f32 %v1302, %v1470
      %v1547 = vadd.f32 %v1303, %v1475
      %v1548 = vadd.f32 %v1304, %v1478
      %v1549 = vadd.f32 %v1305, %v1483
      %v1550 = vadd.f32 %v1306, %v1486
      %v1551 = vadd.f32 %v1307, %v1491
      %v1552 = vadd.f32 %v1308, %v1494
      %v1553 = vadd.f32 %v1309, %v1499
      %v1554 = vadd.f32 %v1310, %v1502
      %v1555 = vadd.f32 %v1311, %v1507
      %v1556 = vadd.f32 %v1312, %v1510
      %v1557 = vadd.f32 %v1313, %v1515
      %v1558 = vadd.f32 %v1314, %v1518
      %v1559 = vadd.f32 %v1315, %v1523
      %v1560 = vadd.f32 %v1316, %v1526
      %1561 = vst.msk [vmem:[#allocation4] sm:$0xff] %vm172, %v1529
      %1562 = vst.msk [vmem:[#allocation4 + $0x8] sm:$0xff] %vm172, %v1530
      %1563 = vst.msk [vmem:[#allocation4 + $0x10] sm:$0xff] %vm172, %v1531
      %1564 = vst.msk [vmem:[#allocation4 + $0x18] sm:$0xff] %vm172, %v1532
      %1565 = vst.msk [vmem:[#allocation4 + $0x20] sm:$0xff] %vm172, %v1533
      %1566 = vst.msk [vmem:[#allocation4 + $0x28] sm:$0xff] %vm172, %v1534
      %1567 = vst.msk [vmem:[#allocation4 + $0x30] sm:$0xff] %vm172, %v1535
      %1568 = vst.msk [vmem:[#allocation4 + $0x38] sm:$0xff] %vm172, %v1536
      %1569 = vst.msk [vmem:[#allocation4 + $0x40] sm:$0xff] %vm172, %v1537
      %1570 = vst.msk [vmem:[#allocation4 + $0x48] sm:$0xff] %vm172, %v1538
      %1571 = vst.msk [vmem:[#allocation4 + $0x50] sm:$0xff] %vm172, %v1539
      %1572 = vst.msk [vmem:[#allocation4 + $0x58] sm:$0xff] %vm172, %v1540
      %1573 = vst.msk [vmem:[#allocation4 + $0x60] sm:$0xff] %vm172, %v1541
      %1574 = vst.msk [vmem:[#allocation4 + $0x68] sm:$0xff] %vm172, %v1542
      %1575 = vst.msk [vmem:[#allocation4 + $0x70] sm:$0xff] %vm172, %v1543
      %1576 = vst.msk [vmem:[#allocation4 + $0x78] sm:$0xff] %vm172, %v1544
      %1577 = vst.msk [vmem:[#allocation4 + $0x80] sm:$0xff] %vm172, %v1545
      %1578 = vst.msk [vmem:[#allocation4 + $0x88] sm:$0xff] %vm172, %v1546
      %1579 = vst.msk [vmem:[#allocation4 + $0x90] sm:$0xff] %vm172, %v1547
      %1580 = vst.msk [vmem:[#allocation4 + $0x98] sm:$0xff] %vm172, %v1548
      %1581 = vst.msk [vmem:[#allocation4 + $0xa0] sm:$0xff] %vm172, %v1549
      %1582 = vst.msk [vmem:[#allocation4 + $0xa8] sm:$0xff] %vm172, %v1550
      %1583 = vst.msk [vmem:[#allocation4 + $0xb0] sm:$0xff] %vm172, %v1551
      %1584 = vst.msk [vmem:[#allocation4 + $0xb8] sm:$0xff] %vm172, %v1552
      %1585 = vst.msk [vmem:[#allocation4 + $0xc0] sm:$0xff] %vm172, %v1553
      %1586 = vst.msk [vmem:[#allocation4 + $0xc8] sm:$0xff] %vm172, %v1554
      %1587 = vst.msk [vmem:[#allocation4 + $0xd0] sm:$0xff] %vm172, %v1555
      %1588 = vst.msk [vmem:[#allocation4 + $0xd8] sm:$0xff] %vm172, %v1556
      %1589 = vst.msk [vmem:[#allocation4 + $0xe0] sm:$0xff] %vm172, %v1557
      %1590 = vst.msk [vmem:[#allocation4 + $0xe8] sm:$0xff] %vm172, %v1558
      %1591 = vst.msk [vmem:[#allocation4 + $0xf0] sm:$0xff] %vm172, %v1559
      %1592 = vst.msk [vmem:[#allocation4 + $0xf8] sm:$0xff] %vm172, %v1560
      %v1593 = vld [vmem:[#allocation2 + $0x8] sm:$0xff]
      %v1594 = vld [vmem:[#allocation2 + $0x10] sm:$0xff]
      %v1595 = vld [vmem:[#allocation2 + $0x18] sm:$0xff]
      %v1596 = vld [vmem:[#allocation2 + $0x20] sm:$0xff]
      %v1597 = vld [vmem:[#allocation2 + $0x28] sm:$0xff]
      %v1598 = vld [vmem:[#allocation2 + $0x30] sm:$0xff]
      %v1599 = vld [vmem:[#allocation2 + $0x38] sm:$0xff]
      %v1600 = vld [vmem:[#allocation2 + $0x40] sm:$0xff]
      %v1601 = vld [vmem:[#allocation2 + $0x48] sm:$0xff]
      %v1602 = vld [vmem:[#allocation2 + $0x50] sm:$0xff]
      %v1603 = vld [vmem:[#allocation2 + $0x58] sm:$0xff]
      %v1604 = vld [vmem:[#allocation2 + $0x60] sm:$0xff]
      %v1605 = vld [vmem:[#allocation2 + $0x68] sm:$0xff]
      %v1606 = vld [vmem:[#allocation2 + $0x70] sm:$0xff]
      %v1607 = vld [vmem:[#allocation2 + $0x78] sm:$0xff]
      %v1608 = vld [vmem:[#allocation2 + $0x80] sm:$0xff]
      %v1609 = vld [vmem:[#allocation2 + $0x88] sm:$0x1]
      %v1611 = vshrl.u32 %v454, 16
      %v1613 = vrot.slane %v1611, 7
      %v1614 = vshll.u32 %v454, 16
      %v1616 = vor.u32 %v1613, %v1614
      %v1618 = vshrl.u32 %v455, 16
      %v1620 = vrot.slane %v1618, 7
      %v1621 = vshll.u32 %v455, 16
      %v1623 = vor.u32 %v1620, %v1621
      %v1624 = vsel %vm858, %v1613, %v1623
      %v1626 = vshrl.u32 %v456, 16
      %v1628 = vrot.slane %v1626, 7
      %v1629 = vshll.u32 %v456, 16
      %v1631 = vor.u32 %v1628, %v1629
      %v1632 = vsel %vm858, %v1620, %v1631
      %v1634 = vshrl.u32 %v457, 16
      %v1636 = vrot.slane %v1634, 7
      %v1637 = vshll.u32 %v457, 16
      %v1639 = vor.u32 %v1636, %v1637
      %v1640 = vsel %vm858, %v1628, %v1639
      %v1642 = vshrl.u32 %v458, 16
      %v1644 = vrot.slane %v1642, 7
      %v1645 = vshll.u32 %v458, 16
      %v1647 = vor.u32 %v1644, %v1645
      %v1648 = vsel %vm858, %v1636, %v1647
      %v1650 = vshrl.u32 %v459, 16
      %v1652 = vrot.slane %v1650, 7
      %v1653 = vshll.u32 %v459, 16
      %v1655 = vor.u32 %v1652, %v1653
      %v1656 = vsel %vm858, %v1644, %v1655
      %v1658 = vshrl.u32 %v460, 16
      %v1660 = vrot.slane %v1658, 7
      %v1661 = vshll.u32 %v460, 16
      %v1663 = vor.u32 %v1660, %v1661
      %v1664 = vsel %vm858, %v1652, %v1663
      %v1666 = vshrl.u32 %v461, 16
      %v1668 = vrot.slane %v1666, 7
      %v1669 = vshll.u32 %v461, 16
      %v1671 = vor.u32 %v1668, %v1669
      %v1672 = vsel %vm858, %v1660, %v1671
      %v1674 = vshrl.u32 %v462, 16
      %v1676 = vrot.slane %v1674, 7
      %v1677 = vshll.u32 %v462, 16
      %v1679 = vor.u32 %v1676, %v1677
      %v1680 = vsel %vm858, %v1668, %v1679
      %v1682 = vshrl.u32 %v463, 16
      %v1684 = vrot.slane %v1682, 7
      %v1685 = vshll.u32 %v463, 16
      %v1687 = vor.u32 %v1684, %v1685
      %v1688 = vsel %vm858, %v1676, %v1687
      %v1690 = vshrl.u32 %v464, 16
      %v1692 = vrot.slane %v1690, 7
      %v1693 = vshll.u32 %v464, 16
      %v1695 = vor.u32 %v1692, %v1693
      %v1696 = vsel %vm858, %v1684, %v1695
      %v1698 = vshrl.u32 %v465, 16
      %v1700 = vrot.slane %v1698, 7
      %v1701 = vshll.u32 %v465, 16
      %v1703 = vor.u32 %v1700, %v1701
      %v1704 = vsel %vm858, %v1692, %v1703
      %v1706 = vshrl.u32 %v466, 16
      %v1708 = vrot.slane %v1706, 7
      %v1709 = vshll.u32 %v466, 16
      %v1711 = vor.u32 %v1708, %v1709
      %v1712 = vsel %vm858, %v1700, %v1711
      %v1714 = vshrl.u32 %v467, 16
      %v1716 = vrot.slane %v1714, 7
      %v1717 = vshll.u32 %v467, 16
      %v1719 = vor.u32 %v1716, %v1717
      %v1720 = vsel %vm858, %v1708, %v1719
      %v1722 = vshrl.u32 %v468, 16
      %v1724 = vrot.slane %v1722, 7
      %v1725 = vshll.u32 %v468, 16
      %v1727 = vor.u32 %v1724, %v1725
      %v1728 = vsel %vm858, %v1716, %v1727
      %v1730 = vshrl.u32 %v469, 16
      %v1732 = vrot.slane %v1730, 7
      %v1733 = vshll.u32 %v469, 16
      %v1735 = vor.u32 %v1732, %v1733
      %v1736 = vsel %vm858, %v1724, %v1735
      %v1754 = vmul.bf16 %v1593, %v1616
      %v1755 = vmul.bf16 %v1594, %v1624
      %v1756 = vmul.bf16 %v1595, %v1632
      %v1757 = vmul.bf16 %v1596, %v1640
      %v1758 = vmul.bf16 %v1597, %v1648
      %v1759 = vmul.bf16 %v1598, %v1656
      %v1760 = vmul.bf16 %v1599, %v1664
      %v1761 = vmul.bf16 %v1600, %v1672
      %v1762 = vmul.bf16 %v1601, %v1680
      %v1763 = vmul.bf16 %v1602, %v1688
      %v1764 = vmul.bf16 %v1603, %v1696
      %v1765 = vmul.bf16 %v1604, %v1704
      %v1766 = vmul.bf16 %v1605, %v1712
      %v1767 = vmul.bf16 %v1606, %v1720
      %v1768 = vmul.bf16 %v1607, %v1728
      %v1769 = vmul.bf16 %v1608, %v1736
      %v1770 = vmul.bf16 %v1609, %v1732
      %v1771 = vld [vmem:[%s1 + $0x8] sm:$0xf]
      %v1772 = vld [vmem:[#allocation4] sm:$0xff]
      %v1773 = vld [vmem:[#allocation4 + $0x8] sm:$0xff]
      %v1774 = vld [vmem:[#allocation4 + $0x10] sm:$0xff]
      %v1775 = vld [vmem:[#allocation4 + $0x18] sm:$0xff]
      %v1776 = vld [vmem:[#allocation4 + $0x20] sm:$0xff]
      %v1777 = vld [vmem:[#allocation4 + $0x28] sm:$0xff]
      %v1778 = vld [vmem:[#allocation4 + $0x30] sm:$0xff]
      %v1779 = vld [vmem:[#allocation4 + $0x38] sm:$0xff]
      %v1780 = vld [vmem:[#allocation4 + $0x40] sm:$0xff]
      %v1781 = vld [vmem:[#allocation4 + $0x48] sm:$0xff]
      %v1782 = vld [vmem:[#allocation4 + $0x50] sm:$0xff]
      %v1783 = vld [vmem:[#allocation4 + $0x58] sm:$0xff]
      %v1784 = vld [vmem:[#allocation4 + $0x60] sm:$0xff]
      %v1785 = vld [vmem:[#allocation4 + $0x68] sm:$0xff]
      %v1786 = vld [vmem:[#allocation4 + $0x70] sm:$0xff]
      %v1787 = vld [vmem:[#allocation4 + $0x78] sm:$0xff]
      %v1788 = vld [vmem:[#allocation4 + $0x80] sm:$0xff]
      %v1789 = vld [vmem:[#allocation4 + $0x88] sm:$0xff]
      %v1790 = vld [vmem:[#allocation4 + $0x90] sm:$0xff]
      %v1791 = vld [vmem:[#allocation4 + $0x98] sm:$0xff]
      %v1792 = vld [vmem:[#allocation4 + $0xa0] sm:$0xff]
      %v1793 = vld [vmem:[#allocation4 + $0xa8] sm:$0xff]
      %v1794 = vld [vmem:[#allocation4 + $0xb0] sm:$0xff]
      %v1795 = vld [vmem:[#allocation4 + $0xb8] sm:$0xff]
      %v1796 = vld [vmem:[#allocation4 + $0xc0] sm:$0xff]
      %v1797 = vld [vmem:[#allocation4 + $0xc8] sm:$0xff]
      %v1798 = vld [vmem:[#allocation4 + $0xd0] sm:$0xff]
      %v1799 = vld [vmem:[#allocation4 + $0xd8] sm:$0xff]
      %v1800 = vld [vmem:[#allocation4 + $0xe0] sm:$0xff]
      %v1801 = vld [vmem:[#allocation4 + $0xe8] sm:$0xff]
      %v1802 = vld [vmem:[#allocation4 + $0xf0] sm:$0xff]
      %v1803 = vld [vmem:[#allocation4 + $0xf8] sm:$0xff]
      %v1805 = vshrl.u32 %v1754, 16
      %v1807 = vshll.u32 %v1754, 16
      %v1809 = vrot.slane %v1807, 1
      %v1810 = vor.u32 %v1805, %v1809
      %v1812 = vshll.u32 %v1755, 16
      %v1814 = vrot.slane %v1812, 1
      %v1815 = vsel %vm663, %v1810, %v1814
      %v1816 = vshrl.u32 %v1755, 16
      %v1818 = vor.u32 %v1816, %v1814
      %v1820 = vshll.u32 %v1756, 16
      %v1822 = vrot.slane %v1820, 1
      %v1823 = vsel %vm663, %v1818, %v1822
      %v1824 = vshrl.u32 %v1756, 16
      %v1826 = vor.u32 %v1824, %v1822
      %v1828 = vshll.u32 %v1757, 16
      %v1830 = vrot.slane %v1828, 1
      %v1831 = vsel %vm663, %v1826, %v1830
      %v1832 = vshrl.u32 %v1757, 16
      %v1834 = vor.u32 %v1832, %v1830
      %v1836 = vshll.u32 %v1758, 16
      %v1838 = vrot.slane %v1836, 1
      %v1839 = vsel %vm663, %v1834, %v1838
      %v1840 = vshrl.u32 %v1758, 16
      %v1842 = vor.u32 %v1840, %v1838
      %v1844 = vshll.u32 %v1759, 16
      %v1846 = vrot.slane %v1844, 1
      %v1847 = vsel %vm663, %v1842, %v1846
      %v1848 = vshrl.u32 %v1759, 16
      %v1850 = vor.u32 %v1848, %v1846
      %v1852 = vshll.u32 %v1760, 16
      %v1854 = vrot.slane %v1852, 1
      %v1855 = vsel %vm663, %v1850, %v1854
      %v1856 = vshrl.u32 %v1760, 16
      %v1858 = vor.u32 %v1856, %v1854
      %v1860 = vshll.u32 %v1761, 16
      %v1862 = vrot.slane %v1860, 1
      %v1863 = vsel %vm663, %v1858, %v1862
      %v1864 = vshrl.u32 %v1761, 16
      %v1866 = vor.u32 %v1864, %v1862
      %v1868 = vshll.u32 %v1762, 16
      %v1870 = vrot.slane %v1868, 1
      %v1871 = vsel %vm663, %v1866, %v1870
      %v1872 = vshrl.u32 %v1762, 16
      %v1874 = vor.u32 %v1872, %v1870
      %v1876 = vshll.u32 %v1763, 16
      %v1878 = vrot.slane %v1876, 1
      %v1879 = vsel %vm663, %v1874, %v1878
      %v1880 = vshrl.u32 %v1763, 16
      %v1882 = vor.u32 %v1880, %v1878
      %v1884 = vshll.u32 %v1764, 16
      %v1886 = vrot.slane %v1884, 1
      %v1887 = vsel %vm663, %v1882, %v1886
      %v1888 = vshrl.u32 %v1764, 16
      %v1890 = vor.u32 %v1888, %v1886
      %v1892 = vshll.u32 %v1765, 16
      %v1894 = vrot.slane %v1892, 1
      %v1895 = vsel %vm663, %v1890, %v1894
      %v1896 = vshrl.u32 %v1765, 16
      %v1898 = vor.u32 %v1896, %v1894
      %v1900 = vshll.u32 %v1766, 16
      %v1902 = vrot.slane %v1900, 1
      %v1903 = vsel %vm663, %v1898, %v1902
      %v1904 = vshrl.u32 %v1766, 16
      %v1906 = vor.u32 %v1904, %v1902
      %v1908 = vshll.u32 %v1767, 16
      %v1910 = vrot.slane %v1908, 1
      %v1911 = vsel %vm663, %v1906, %v1910
      %v1912 = vshrl.u32 %v1767, 16
      %v1914 = vor.u32 %v1912, %v1910
      %v1916 = vshll.u32 %v1768, 16
      %v1918 = vrot.slane %v1916, 1
      %v1919 = vsel %vm663, %v1914, %v1918
      %v1920 = vshrl.u32 %v1768, 16
      %v1922 = vor.u32 %v1920, %v1918
      %v1924 = vshll.u32 %v1769, 16
      %v1926 = vrot.slane %v1924, 1
      %v1927 = vsel %vm663, %v1922, %v1926
      %v1928 = vshrl.u32 %v1769, 16
      %v1930 = vor.u32 %v1928, %v1926
      %v1932 = vshll.u32 %v1770, 16
      %v1934 = vrot.slane %v1932, 1
      %v1935 = vsel %vm663, %v1930, %v1934
      %v1937 = vsel %vm172, %v1815, 0
      %v1940 = vsel %vm172, %v1823, 0
      %v1943 = vsel %vm172, %v1831, 0
      %v1946 = vsel %vm172, %v1839, 0
      %v1949 = vsel %vm172, %v1847, 0
      %v1952 = vsel %vm172, %v1855, 0
      %v1955 = vsel %vm172, %v1863, 0
      %v1958 = vsel %vm172, %v1871, 0
      %v1961 = vsel %vm172, %v1879, 0
      %v1964 = vsel %vm172, %v1887, 0
      %v1967 = vsel %vm172, %v1895, 0
      %v1970 = vsel %vm172, %v1903, 0
      %v1973 = vsel %vm172, %v1911, 0
      %v1976 = vsel %vm172, %v1919, 0
      %v1979 = vsel %vm172, %v1927, 0
      %v1982 = vsel %vm172, %v1935, 0
      %v1985 = vsel %vm1039, %v1771, 0
      %1987 = vmatprep.subr.bf16.mxu0 0
      %1988 = vmatpush1.bf16.msra.mxu0 %v1985
      %1989 = vmatprep.subr.bf16.mxu0 0
      %1990 = vmatpush1.bf16.msra.mxu0 0
      %1991 = vmatprep.subr.bf16.mxu0 0
      %1992 = vmatpush1.bf16.msra.mxu0 0
      %1993 = vmatprep.subr.bf16.mxu0 0
      %1994 = vmatpush1.bf16.msra.mxu0 0
      %1995 = vmatprep.subr.bf16.mxu0 0
      %1996 = vmatpush1.bf16.msra.mxu0 0
      %1997 = vmatprep.subr.bf16.mxu0 0
      %1998 = vmatpush1.bf16.msra.mxu0 0
      %1999 = vmatprep.subr.bf16.mxu0 0
      %2000 = vmatpush1.bf16.msra.mxu0 0
      %2001 = vmatprep.subr.bf16.mxu0 0
      %2002 = vmatpush1.bf16.msra.mxu0 0
      %2003 = vmatprep.subr.bf16.mxu0 0
      %2004 = vmatpush1.bf16.msra.mxu0 0
      %2005 = vmatprep.subr.bf16.mxu0 0
      %2006 = vmatpush1.bf16.msra.mxu0 0
      %2007 = vmatprep.subr.bf16.mxu0 0
      %2008 = vmatpush1.bf16.msra.mxu0 0
      %2009 = vmatprep.subr.bf16.mxu0 0
      %2010 = vmatpush1.bf16.msra.mxu0 0
      %2011 = vmatprep.subr.bf16.mxu0 0
      %2012 = vmatpush1.bf16.msra.mxu0 0
      %2013 = vmatprep.subr.bf16.mxu0 0
      %2014 = vmatpush1.bf16.msra.mxu0 0
      %2015 = vmatprep.subr.bf16.mxu0 0
      %2016 = vmatpush1.bf16.msra.mxu0 0
      %2017 = vmatprep.subr.bf16.mxu0 0
      %2018 = vmatpush1.bf16.msra.mxu0 0
      %2019 = vmatprep.mubr.bf16.mxu0 0
      %2020 = vmatmul.mubr.bf16.gmra.mrb[0].mxu0 %v1937
      %v2021 = vpop.f32.mrb[0].mxu0
      %v2022 = vadd.f32 0.0, %v2021
      %v2023 = vpop.f32.mrb[0].mxu0
      %v2024 = vpop.f32.mrb[0].mxu0
      %v2025 = vadd.f32 0.0, %v2024
      %v2026 = vpop.f32.mrb[0].mxu0
      %2027 = vmatprep.mubr.bf16.mxu0 0
      %2028 = vmatmul.mubr.bf16.gmra.mrb[0].mxu0 %v1940
      %v2029 = vpop.f32.mrb[0].mxu0
      %v2030 = vadd.f32 0.0, %v2029
      %v2031 = vpop.f32.mrb[0].mxu0
      %v2032 = vpop.f32.mrb[0].mxu0
      %v2033 = vadd.f32 0.0, %v2032
      %v2034 = vpop.f32.mrb[0].mxu0
      %2035 = vmatprep.mubr.bf16.mxu0 0
      %2036 = vmatmul.mubr.bf16.gmra.mrb[0].mxu0 %v1943
      %v2037 = vpop.f32.mrb[0].mxu0
      %v2038 = vadd.f32 0.0, %v2037
      %v2039 = vpop.f32.mrb[0].mxu0
      %v2040 = vpop.f32.mrb[0].mxu0
      %v2041 = vadd.f32 0.0, %v2040
      %v2042 = vpop.f32.mrb[0].mxu0
      %2043 = vmatprep.mubr.bf16.mxu0 0
      %2044 = vmatmul.mubr.bf16.gmra.mrb[0].mxu0 %v1946
      %v2045 = vpop.f32.mrb[0].mxu0
      %v2046 = vadd.f32 0.0, %v2045
      %v2047 = vpop.f32.mrb[0].mxu0
      %v2048 = vpop.f32.mrb[0].mxu0
      %v2049 = vadd.f32 0.0, %v2048
      %v2050 = vpop.f32.mrb[0].mxu0
      %2051 = vmatprep.mubr.bf16.mxu0 0
      %2052 = vmatmul.mubr.bf16.gmra.mrb[0].mxu0 %v1949
      %v2053 = vpop.f32.mrb[0].mxu0
      %v2054 = vadd.f32 0.0, %v2053
      %v2055 = vpop.f32.mrb[0].mxu0
      %v2056 = vpop.f32.mrb[0].mxu0
      %v2057 = vadd.f32 0.0, %v2056
      %v2058 = vpop.f32.mrb[0].mxu0
      %2059 = vmatprep.mubr.bf16.mxu0 0
      %2060 = vmatmul.mubr.bf16.gmra.mrb[0].mxu0 %v1952
      %v2061 = vpop.f32.mrb[0].mxu0
      %v2062 = vadd.f32 0.0, %v2061
      %v2063 = vpop.f32.mrb[0].mxu0
      %v2064 = vpop.f32.mrb[0].mxu0
      %v2065 = vadd.f32 0.0, %v2064
      %v2066 = vpop.f32.mrb[0].mxu0
      %2067 = vmatprep.mubr.bf16.mxu0 0
      %2068 = vmatmul.mubr.bf16.gmra.mrb[0].mxu0 %v1955
      %v2069 = vpop.f32.mrb[0].mxu0
      %v2070 = vadd.f32 0.0, %v2069
      %v2071 = vpop.f32.mrb[0].mxu0
      %v2072 = vpop.f32.mrb[0].mxu0
      %v2073 = vadd.f32 0.0, %v2072
      %v2074 = vpop.f32.mrb[0].mxu0
      %2075 = vmatprep.mubr.bf16.mxu0 0
      %2076 = vmatmul.mubr.bf16.gmra.mrb[0].mxu0 %v1958
      %v2077 = vpop.f32.mrb[0].mxu0
      %v2078 = vadd.f32 0.0, %v2077
      %v2079 = vpop.f32.mrb[0].mxu0
      %v2080 = vpop.f32.mrb[0].mxu0
      %v2081 = vadd.f32 0.0, %v2080
      %v2082 = vpop.f32.mrb[0].mxu0
      %2083 = vmatprep.mubr.bf16.mxu0 0
      %2084 = vmatmul.mubr.bf16.gmra.mrb[0].mxu0 %v1961
      %v2085 = vpop.f32.mrb[0].mxu0
      %v2086 = vadd.f32 0.0, %v2085
      %v2087 = vpop.f32.mrb[0].mxu0
      %v2088 = vpop.f32.mrb[0].mxu0
      %v2089 = vadd.f32 0.0, %v2088
      %v2090 = vpop.f32.mrb[0].mxu0
      %2091 = vmatprep.mubr.bf16.mxu0 0
      %2092 = vmatmul.mubr.bf16.gmra.mrb[0].mxu0 %v1964
      %v2093 = vpop.f32.mrb[0].mxu0
      %v2094 = vadd.f32 0.0, %v2093
      %v2095 = vpop.f32.mrb[0].mxu0
      %v2096 = vpop.f32.mrb[0].mxu0
      %v2097 = vadd.f32 0.0, %v2096
      %v2098 = vpop.f32.mrb[0].mxu0
      %2099 = vmatprep.mubr.bf16.mxu0 0
      %2100 = vmatmul.mubr.bf16.gmra.mrb[0].mxu0 %v1967
      %v2101 = vpop.f32.mrb[0].mxu0
      %v2102 = vadd.f32 0.0, %v2101
      %v2103 = vpop.f32.mrb[0].mxu0
      %v2104 = vpop.f32.mrb[0].mxu0
      %v2105 = vadd.f32 0.0, %v2104
      %v2106 = vpop.f32.mrb[0].mxu0
      %2107 = vmatprep.mubr.bf16.mxu0 0
      %2108 = vmatmul.mubr.bf16.gmra.mrb[0].mxu0 %v1970
      %v2109 = vpop.f32.mrb[0].mxu0
      %v2110 = vadd.f32 0.0, %v2109
      %v2111 = vpop.f32.mrb[0].mxu0
      %v2112 = vpop.f32.mrb[0].mxu0
      %v2113 = vadd.f32 0.0, %v2112
      %v2114 = vpop.f32.mrb[0].mxu0
      %2115 = vmatprep.mubr.bf16.mxu0 0
      %2116 = vmatmul.mubr.bf16.gmra.mrb[0].mxu0 %v1973
      %v2117 = vpop.f32.mrb[0].mxu0
      %v2118 = vadd.f32 0.0, %v2117
      %v2119 = vpop.f32.mrb[0].mxu0
      %v2120 = vpop.f32.mrb[0].mxu0
      %v2121 = vadd.f32 0.0, %v2120
      %v2122 = vpop.f32.mrb[0].mxu0
      %2123 = vmatprep.mubr.bf16.mxu0 0
      %2124 = vmatmul.mubr.bf16.gmra.mrb[0].mxu0 %v1976
      %v2125 = vpop.f32.mrb[0].mxu0
      %v2126 = vadd.f32 0.0, %v2125
      %v2127 = vpop.f32.mrb[0].mxu0
      %v2128 = vpop.f32.mrb[0].mxu0
      %v2129 = vadd.f32 0.0, %v2128
      %v2130 = vpop.f32.mrb[0].mxu0
      %2131 = vmatprep.mubr.bf16.mxu0 0
      %2132 = vmatmul.mubr.bf16.gmra.mrb[0].mxu0 %v1979
      %v2133 = vpop.f32.mrb[0].mxu0
      %v2134 = vadd.f32 0.0, %v2133
      %v2135 = vpop.f32.mrb[0].mxu0
      %v2136 = vpop.f32.mrb[0].mxu0
      %v2137 = vadd.f32 0.0, %v2136
      %v2138 = vpop.f32.mrb[0].mxu0
      %2139 = vmatprep.mubr.bf16.mxu0 0
      %2140 = vmatmul.mubr.bf16.gmra.mrb[0].mxu0 %v1982
      %v2141 = vpop.f32.mrb[0].mxu0
      %v2142 = vadd.f32 0.0, %v2141
      %v2143 = vpop.f32.mrb[0].mxu0
      %v2144 = vpop.f32.mrb[0].mxu0
      %v2145 = vadd.f32 0.0, %v2144
      %v2146 = vpop.f32.mrb[0].mxu0
      %2147 = vdwg.mxu0
      %v2148 = vadd.f32 %v1772, %v2022
      %v2149 = vadd.f32 %v1773, %v2025
      %v2150 = vadd.f32 %v1774, %v2030
      %v2151 = vadd.f32 %v1775, %v2033
      %v2152 = vadd.f32 %v1776, %v2038
      %v2153 = vadd.f32 %v1777, %v2041
      %v2154 = vadd.f32 %v1778, %v2046
      %v2155 = vadd.f32 %v1779, %v2049
      %v2156 = vadd.f32 %v1780, %v2054
      %v2157 = vadd.f32 %v1781, %v2057
      %v2158 = vadd.f32 %v1782, %v2062
      %v2159 = vadd.f32 %v1783, %v2065
      %v2160 = vadd.f32 %v1784, %v2070
      %v2161 = vadd.f32 %v1785, %v2073
      %v2162 = vadd.f32 %v1786, %v2078
      %v2163 = vadd.f32 %v1787, %v2081
      %v2164 = vadd.f32 %v1788, %v2086
      %v2165 = vadd.f32 %v1789, %v2089
      %v2166 = vadd.f32 %v1790, %v2094
      %v2167 = vadd.f32 %v1791, %v2097
      %v2168 = vadd.f32 %v1792, %v2102
      %v2169 = vadd.f32 %v1793, %v2105
      %v2170 = vadd.f32 %v1794, %v2110
      %v2171 = vadd.f32 %v1795, %v2113
      %v2172 = vadd.f32 %v1796, %v2118
      %v2173 = vadd.f32 %v1797, %v2121
      %v2174 = vadd.f32 %v1798, %v2126
      %v2175 = vadd.f32 %v1799, %v2129
      %v2176 = vadd.f32 %v1800, %v2134
      %v2177 = vadd.f32 %v1801, %v2137
      %v2178 = vadd.f32 %v1802, %v2142
      %v2179 = vadd.f32 %v1803, %v2145
      %2180 = vst.msk [vmem:[#allocation4] sm:$0xff] %vm172, %v2148
      %2181 = vst.msk [vmem:[#allocation4 + $0x8] sm:$0xff] %vm172, %v2149
      %2182 = vst.msk [vmem:[#allocation4 + $0x10] sm:$0xff] %vm172, %v2150
      %2183 = vst.msk [vmem:[#allocation4 + $0x18] sm:$0xff] %vm172, %v2151
      %2184 = vst.msk [vmem:[#allocation4 + $0x20] sm:$0xff] %vm172, %v2152
      %2185 = vst.msk [vmem:[#allocation4 + $0x28] sm:$0xff] %vm172, %v2153
      %2186 = vst.msk [vmem:[#allocation4 + $0x30] sm:$0xff] %vm172, %v2154
      %2187 = vst.msk [vmem:[#allocation4 + $0x38] sm:$0xff] %vm172, %v2155
      %2188 = vst.msk [vmem:[#allocation4 + $0x40] sm:$0xff] %vm172, %v2156
      %2189 = vst.msk [vmem:[#allocation4 + $0x48] sm:$0xff] %vm172, %v2157
      %2190 = vst.msk [vmem:[#allocation4 + $0x50] sm:$0xff] %vm172, %v2158
      %2191 = vst.msk [vmem:[#allocation4 + $0x58] sm:$0xff] %vm172, %v2159
      %2192 = vst.msk [vmem:[#allocation4 + $0x60] sm:$0xff] %vm172, %v2160
      %2193 = vst.msk [vmem:[#allocation4 + $0x68] sm:$0xff] %vm172, %v2161
      %2194 = vst.msk [vmem:[#allocation4 + $0x70] sm:$0xff] %vm172, %v2162
      %2195 = vst.msk [vmem:[#allocation4 + $0x78] sm:$0xff] %vm172, %v2163
      %2196 = vst.msk [vmem:[#allocation4 + $0x80] sm:$0xff] %vm172, %v2164
      %2197 = vst.msk [vmem:[#allocation4 + $0x88] sm:$0xff] %vm172, %v2165
      %2198 = vst.msk [vmem:[#allocation4 + $0x90] sm:$0xff] %vm172, %v2166
      %2199 = vst.msk [vmem:[#allocation4 + $0x98] sm:$0xff] %vm172, %v2167
      %2200 = vst.msk [vmem:[#allocation4 + $0xa0] sm:$0xff] %vm172, %v2168
      %2201 = vst.msk [vmem:[#allocation4 + $0xa8] sm:$0xff] %vm172, %v2169
      %2202 = vst.msk [vmem:[#allocation4 + $0xb0] sm:$0xff] %vm172, %v2170
      %2203 = vst.msk [vmem:[#allocation4 + $0xb8] sm:$0xff] %vm172, %v2171
      %2204 = vst.msk [vmem:[#allocation4 + $0xc0] sm:$0xff] %vm172, %v2172
      %2205 = vst.msk [vmem:[#allocation4 + $0xc8] sm:$0xff] %vm172, %v2173
      %2206 = vst.msk [vmem:[#allocation4 + $0xd0] sm:$0xff] %vm172, %v2174
      %2207 = vst.msk [vmem:[#allocation4 + $0xd8] sm:$0xff] %vm172, %v2175
      %2208 = vst.msk [vmem:[#allocation4 + $0xe0] sm:$0xff] %vm172, %v2176
      %2209 = vst.msk [vmem:[#allocation4 + $0xe8] sm:$0xff] %vm172, %v2177
      %2210 = vst.msk [vmem:[#allocation4 + $0xf0] sm:$0xff] %vm172, %v2178
      %2211 = vst.msk [vmem:[#allocation4 + $0xf8] sm:$0xff] %vm172, %v2179
      %v2212 = vld [vmem:[#allocation2 + $0x8] sm:$0x80]
      %v2213 = vld [vmem:[#allocation2 + $0x10] sm:$0xff]
      %v2214 = vld [vmem:[#allocation2 + $0x18] sm:$0xff]
      %v2215 = vld [vmem:[#allocation2 + $0x20] sm:$0xff]
      %v2216 = vld [vmem:[#allocation2 + $0x28] sm:$0xff]
      %v2217 = vld [vmem:[#allocation2 + $0x30] sm:$0xff]
      %v2218 = vld [vmem:[#allocation2 + $0x38] sm:$0xff]
      %v2219 = vld [vmem:[#allocation2 + $0x40] sm:$0xff]
      %v2220 = vld [vmem:[#allocation2 + $0x48] sm:$0xff]
      %v2221 = vld [vmem:[#allocation2 + $0x50] sm:$0xff]
      %v2222 = vld [vmem:[#allocation2 + $0x58] sm:$0xff]
      %v2223 = vld [vmem:[#allocation2 + $0x60] sm:$0xff]
      %v2224 = vld [vmem:[#allocation2 + $0x68] sm:$0xff]
      %v2225 = vld [vmem:[#allocation2 + $0x70] sm:$0xff]
      %v2226 = vld [vmem:[#allocation2 + $0x78] sm:$0xff]
      %v2227 = vld [vmem:[#allocation2 + $0x80] sm:$0xff]
      %v2228 = vld [vmem:[#allocation2 + $0x88] sm:$0xff]
      %v2229 = vmul.bf16 %v2212, %v667
      %v2230 = vmul.bf16 %v2213, %v675
      %v2231 = vmul.bf16 %v2214, %v683
      %v2232 = vmul.bf16 %v2215, %v691
      %v2233 = vmul.bf16 %v2216, %v699
      %v2234 = vmul.bf16 %v2217, %v707
      %v2235 = vmul.bf16 %v2218, %v715
      %v2236 = vmul.bf16 %v2219, %v723
      %v2237 = vmul.bf16 %v2220, %v731
      %v2238 = vmul.bf16 %v2221, %v739
      %v2239 = vmul.bf16 %v2222, %v747
      %v2240 = vmul.bf16 %v2223, %v755
      %v2241 = vmul.bf16 %v2224, %v763
      %v2242 = vmul.bf16 %v2225, %v771
      %v2243 = vmul.bf16 %v2226, %v779
      %v2244 = vmul.bf16 %v2227, %v787
      %v2245 = vmul.bf16 %v2228, %v790
      %v2246 = vld [vmem:[%s1 + $0xc] sm:$0xf]
      %v2247 = vld [vmem:[#allocation4] sm:$0xff]
      %v2248 = vld [vmem:[#allocation4 + $0x8] sm:$0xff]
      %v2249 = vld [vmem:[#allocation4 + $0x10] sm:$0xff]
      %v2250 = vld [vmem:[#allocation4 + $0x18] sm:$0xff]
      %v2251 = vld [vmem:[#allocation4 + $0x20] sm:$0xff]
      %v2252 = vld [vmem:[#allocation4 + $0x28] sm:$0xff]
      %v2253 = vld [vmem:[#allocation4 + $0x30] sm:$0xff]
      %v2254 = vld [vmem:[#allocation4 + $0x38] sm:$0xff]
      %v2255 = vld [vmem:[#allocation4 + $0x40] sm:$0xff]
      %v2256 = vld [vmem:[#allocation4 + $0x48] sm:$0xff]
      %v2257 = vld [vmem:[#allocation4 + $0x50] sm:$0xff]
      %v2258 = vld [vmem:[#allocation4 + $0x58] sm:$0xff]
      %v2259 = vld [vmem:[#allocation4 + $0x60] sm:$0xff]
      %v2260 = vld [vmem:[#allocation4 + $0x68] sm:$0xff]
      %v2261 = vld [vmem:[#allocation4 + $0x70] sm:$0xff]
      %v2262 = vld [vmem:[#allocation4 + $0x78] sm:$0xff]
      %v2263 = vld [vmem:[#allocation4 + $0x80] sm:$0xff]
      %v2264 = vld [vmem:[#allocation4 + $0x88] sm:$0xff]
      %v2265 = vld [vmem:[#allocation4 + $0x90] sm:$0xff]
      %v2266 = vld [vmem:[#allocation4 + $0x98] sm:$0xff]
      %v2267 = vld [vmem:[#allocation4 + $0xa0] sm:$0xff]
      %v2268 = vld [vmem:[#allocation4 + $0xa8] sm:$0xff]
      %v2269 = vld [vmem:[#allocation4 + $0xb0] sm:$0xff]
      %v2270 = vld [vmem:[#allocation4 + $0xb8] sm:$0xff]
      %v2271 = vld [vmem:[#allocation4 + $0xc0] sm:$0xff]
      %v2272 = vld [vmem:[#allocation4 + $0xc8] sm:$0xff]
      %v2273 = vld [vmem:[#allocation4 + $0xd0] sm:$0xff]
      %v2274 = vld [vmem:[#allocation4 + $0xd8] sm:$0xff]
      %v2275 = vld [vmem:[#allocation4 + $0xe0] sm:$0xff]
      %v2276 = vld [vmem:[#allocation4 + $0xe8] sm:$0xff]
      %v2277 = vld [vmem:[#allocation4 + $0xf0] sm:$0xff]
      %v2278 = vld [vmem:[#allocation4 + $0xf8] sm:$0xff]
      %v2280 = vshrl.u32 %v2229, 16
      %v2282 = vrot.slane %v2280, 7
      %v2284 = vshrl.u32 %v2230, 16
      %v2286 = vrot.slane %v2284, 7
      %v2287 = vshll.u32 %v2230, 16
      %v2289 = vor.u32 %v2286, %v2287
      %v2290 = vsel %vm858, %v2282, %v2289
      %v2292 = vshrl.u32 %v2231, 16
      %v2294 = vrot.slane %v2292, 7
      %v2295 = vshll.u32 %v2231, 16
      %v2297 = vor.u32 %v2294, %v2295
      %v2298 = vsel %vm858, %v2286, %v2297
      %v2300 = vshrl.u32 %v2232, 16
      %v2302 = vrot.slane %v2300, 7
      %v2303 = vshll.u32 %v2232, 16
      %v2305 = vor.u32 %v2302, %v2303
      %v2306 = vsel %vm858, %v2294, %v2305
      %v2308 = vshrl.u32 %v2233, 16
      %v2310 = vrot.slane %v2308, 7
      %v2311 = vshll.u32 %v2233, 16
      %v2313 = vor.u32 %v2310, %v2311
      %v2314 = vsel %vm858, %v2302, %v2313
      %v2316 = vshrl.u32 %v2234, 16
      %v2318 = vrot.slane %v2316, 7
      %v2319 = vshll.u32 %v2234, 16
      %v2321 = vor.u32 %v2318, %v2319
      %v2322 = vsel %vm858, %v2310, %v2321
      %v2324 = vshrl.u32 %v2235, 16
      %v2326 = vrot.slane %v2324, 7
      %v2327 = vshll.u32 %v2235, 16
      %v2329 = vor.u32 %v2326, %v2327
      %v2330 = vsel %vm858, %v2318, %v2329
      %v2332 = vshrl.u32 %v2236, 16
      %v2334 = vrot.slane %v2332, 7
      %v2335 = vshll.u32 %v2236, 16
      %v2337 = vor.u32 %v2334, %v2335
      %v2338 = vsel %vm858, %v2326, %v2337
      %v2340 = vshrl.u32 %v2237, 16
      %v2342 = vrot.slane %v2340, 7
      %v2343 = vshll.u32 %v2237, 16
      %v2345 = vor.u32 %v2342, %v2343
      %v2346 = vsel %vm858, %v2334, %v2345
      %v2348 = vshrl.u32 %v2238, 16
      %v2350 = vrot.slane %v2348, 7
      %v2351 = vshll.u32 %v2238, 16
      %v2353 = vor.u32 %v2350, %v2351
      %v2354 = vsel %vm858, %v2342, %v2353
      %v2356 = vshrl.u32 %v2239, 16
      %v2358 = vrot.slane %v2356, 7
      %v2359 = vshll.u32 %v2239, 16
      %v2361 = vor.u32 %v2358, %v2359
      %v2362 = vsel %vm858, %v2350, %v2361
      %v2364 = vshrl.u32 %v2240, 16
      %v2366 = vrot.slane %v2364, 7
      %v2367 = vshll.u32 %v2240, 16
      %v2369 = vor.u32 %v2366, %v2367
      %v2370 = vsel %vm858, %v2358, %v2369
      %v2372 = vshrl.u32 %v2241, 16
      %v2374 = vrot.slane %v2372, 7
      %v2375 = vshll.u32 %v2241, 16
      %v2377 = vor.u32 %v2374, %v2375
      %v2378 = vsel %vm858, %v2366, %v2377
      %v2380 = vshrl.u32 %v2242, 16
      %v2382 = vrot.slane %v2380, 7
      %v2383 = vshll.u32 %v2242, 16
      %v2385 = vor.u32 %v2382, %v2383
      %v2386 = vsel %vm858, %v2374, %v2385
      %v2388 = vshrl.u32 %v2243, 16
      %v2390 = vrot.slane %v2388, 7
      %v2391 = vshll.u32 %v2243, 16
      %v2393 = vor.u32 %v2390, %v2391
      %v2394 = vsel %vm858, %v2382, %v2393
      %v2396 = vshrl.u32 %v2244, 16
      %v2398 = vrot.slane %v2396, 7
      %v2399 = vshll.u32 %v2244, 16
      %v2401 = vor.u32 %v2398, %v2399
      %v2402 = vsel %vm858, %v2390, %v2401
      %v2404 = vshrl.u32 %v2245, 16
      %v2406 = vrot.slane %v2404, 7
      %v2407 = vshll.u32 %v2245, 16
      %v2409 = vor.u32 %v2406, %v2407
      %v2410 = vsel %vm858, %v2398, %v2409
      %v2412 = vsel %vm172, %v2290, 0
      %v2415 = vsel %vm172, %v2298, 0
      %v2418 = vsel %vm172, %v2306, 0
      %v2421 = vsel %vm172, %v2314, 0
      %v2424 = vsel %vm172, %v2322, 0
      %v2427 = vsel %vm172, %v2330, 0
      %v2430 = vsel %vm172, %v2338, 0
      %v2433 = vsel %vm172, %v2346, 0
      %v2436 = vsel %vm172, %v2354, 0
      %v2439 = vsel %vm172, %v2362, 0
      %v2442 = vsel %vm172, %v2370, 0
      %v2445 = vsel %vm172, %v2378, 0
      %v2448 = vsel %vm172, %v2386, 0
      %v2451 = vsel %vm172, %v2394, 0
      %v2454 = vsel %vm172, %v2402, 0
      %v2457 = vsel %vm172, %v2410, 0
      %v2460 = vsel %vm1039, %v2246, 0
      %2462 = vmatprep.subr.bf16.mxu0 0
      %2463 = vmatpush1.bf16.msra.mxu0 %v2460
      %2464 = vmatprep.subr.bf16.mxu0 0
      %2465 = vmatpush1.bf16.msra.mxu0 0
      %2466 = vmatprep.subr.bf16.mxu0 0
      %2467 = vmatpush1.bf16.msra.mxu0 0
      %2468 = vmatprep.subr.bf16.mxu0 0
      %2469 = vmatpush1.bf16.msra.mxu0 0
      %2470 = vmatprep.subr.bf16.mxu0 0
      %2471 = vmatpush1.bf16.msra.mxu0 0
      %2472 = vmatprep.subr.bf16.mxu0 0
      %2473 = vmatpush1.bf16.msra.mxu0 0
      %2474 = vmatprep.subr.bf16.mxu0 0
      %2475 = vmatpush1.bf16.msra.mxu0 0
      %2476 = vmatprep.subr.bf16.mxu0 0
      %2477 = vmatpush1.bf16.msra.mxu0 0
      %2478 = vmatprep.subr.bf16.mxu0 0
      %2479 = vmatpush1.bf16.msra.mxu0 0
      %2480 = vmatprep.subr.bf16.mxu0 0
      %2481 = vmatpush1.bf16.msra.mxu0 0
      %2482 = vmatprep.subr.bf16.mxu0 0
      %2483 = vmatpush1.bf16.msra.mxu0 0
      %2484 = vmatprep.subr.bf16.mxu0 0
      %2485 = vmatpush1.bf16.msra.mxu0 0
      %2486 = vmatprep.subr.bf16.mxu0 0
      %2487 = vmatpush1.bf16.msra.mxu0 0
      %2488 = vmatprep.subr.bf16.mxu0 0
      %2489 = vmatpush1.bf16.msra.mxu0 0
      %2490 = vmatprep.subr.bf16.mxu0 0
      %2491 = vmatpush1.bf16.msra.mxu0 0
      %2492 = vmatprep.subr.bf16.mxu0 0
      %2493 = vmatpush1.bf16.msra.mxu0 0
      %2494 = vmatprep.mubr.bf16.mxu0 0
      %2495 = vmatmul.mubr.bf16.gmra.mrb[0].mxu0 %v2412
      %v2496 = vpop.f32.mrb[0].mxu0
      %v2497 = vadd.f32 0.0, %v2496
      %v2498 = vpop.f32.mrb[0].mxu0
      %v2499 = vpop.f32.mrb[0].mxu0
      %v2500 = vadd.f32 0.0, %v2499
      %v2501 = vpop.f32.mrb[0].mxu0
      %2502 = vmatprep.mubr.bf16.mxu0 0
      %2503 = vmatmul.mubr.bf16.gmra.mrb[0].mxu0 %v2415
      %v2504 = vpop.f32.mrb[0].mxu0
      %v2505 = vadd.f32 0.0, %v2504
      %v2506 = vpop.f32.mrb[0].mxu0
      %v2507 = vpop.f32.mrb[0].mxu0
      %v2508 = vadd.f32 0.0, %v2507
      %v2509 = vpop.f32.mrb[0].mxu0
      %2510 = vmatprep.mubr.bf16.mxu0 0
      %2511 = vmatmul.mubr.bf16.gmra.mrb[0].mxu0 %v2418
      %v2512 = vpop.f32.mrb[0].mxu0
      %v2513 = vadd.f32 0.0, %v2512
      %v2514 = vpop.f32.mrb[0].mxu0
      %v2515 = vpop.f32.mrb[0].mxu0
      %v2516 = vadd.f32 0.0, %v2515
      %v2517 = vpop.f32.mrb[0].mxu0
      %2518 = vmatprep.mubr.bf16.mxu0 0
      %2519 = vmatmul.mubr.bf16.gmra.mrb[0].mxu0 %v2421
      %v2520 = vpop.f32.mrb[0].mxu0
      %v2521 = vadd.f32 0.0, %v2520
      %v2522 = vpop.f32.mrb[0].mxu0
      %v2523 = vpop.f32.mrb[0].mxu0
      %v2524 = vadd.f32 0.0, %v2523
      %v2525 = vpop.f32.mrb[0].mxu0
      %2526 = vmatprep.mubr.bf16.mxu0 0
      %2527 = vmatmul.mubr.bf16.gmra.mrb[0].mxu0 %v2424
      %v2528 = vpop.f32.mrb[0].mxu0
      %v2529 = vadd.f32 0.0, %v2528
      %v2530 = vpop.f32.mrb[0].mxu0
      %v2531 = vpop.f32.mrb[0].mxu0
      %v2532 = vadd.f32 0.0, %v2531
      %v2533 = vpop.f32.mrb[0].mxu0
      %2534 = vmatprep.mubr.bf16.mxu0 0
      %2535 = vmatmul.mubr.bf16.gmra.mrb[0].mxu0 %v2427
      %v2536 = vpop.f32.mrb[0].mxu0
      %v2537 = vadd.f32 0.0, %v2536
      %v2538 = vpop.f32.mrb[0].mxu0
      %v2539 = vpop.f32.mrb[0].mxu0
      %v2540 = vadd.f32 0.0, %v2539
      %v2541 = vpop.f32.mrb[0].mxu0
      %2542 = vmatprep.mubr.bf16.mxu0 0
      %2543 = vmatmul.mubr.bf16.gmra.mrb[0].mxu0 %v2430
      %v2544 = vpop.f32.mrb[0].mxu0
      %v2545 = vadd.f32 0.0, %v2544
      %v2546 = vpop.f32.mrb[0].mxu0
      %v2547 = vpop.f32.mrb[0].mxu0
      %v2548 = vadd.f32 0.0, %v2547
      %v2549 = vpop.f32.mrb[0].mxu0
      %2550 = vmatprep.mubr.bf16.mxu0 0
      %2551 = vmatmul.mubr.bf16.gmra.mrb[0].mxu0 %v2433
      %v2552 = vpop.f32.mrb[0].mxu0
      %v2553 = vadd.f32 0.0, %v2552
      %v2554 = vpop.f32.mrb[0].mxu0
      %v2555 = vpop.f32.mrb[0].mxu0
      %v2556 = vadd.f32 0.0, %v2555
      %v2557 = vpop.f32.mrb[0].mxu0
      %2558 = vmatprep.mubr.bf16.mxu0 0
      %2559 = vmatmul.mubr.bf16.gmra.mrb[0].mxu0 %v2436
      %v2560 = vpop.f32.mrb[0].mxu0
      %v2561 = vadd.f32 0.0, %v2560
      %v2562 = vpop.f32.mrb[0].mxu0
      %v2563 = vpop.f32.mrb[0].mxu0
      %v2564 = vadd.f32 0.0, %v2563
      %v2565 = vpop.f32.mrb[0].mxu0
      %2566 = vmatprep.mubr.bf16.mxu0 0
      %2567 = vmatmul.mubr.bf16.gmra.mrb[0].mxu0 %v2439
      %v2568 = vpop.f32.mrb[0].mxu0
      %v2569 = vadd.f32 0.0, %v2568
      %v2570 = vpop.f32.mrb[0].mxu0
      %v2571 = vpop.f32.mrb[0].mxu0
      %v2572 = vadd.f32 0.0, %v2571
      %v2573 = vpop.f32.mrb[0].mxu0
      %2574 = vmatprep.mubr.bf16.mxu0 0
      %2575 = vmatmul.mubr.bf16.gmra.mrb[0].mxu0 %v2442
      %v2576 = vpop.f32.mrb[0].mxu0
      %v2577 = vadd.f32 0.0, %v2576
      %v2578 = vpop.f32.mrb[0].mxu0
      %v2579 = vpop.f32.mrb[0].mxu0
      %v2580 = vadd.f32 0.0, %v2579
      %v2581 = vpop.f32.mrb[0].mxu0
      %2582 = vmatprep.mubr.bf16.mxu0 0
      %2583 = vmatmul.mubr.bf16.gmra.mrb[0].mxu0 %v2445
      %v2584 = vpop.f32.mrb[0].mxu0
      %v2585 = vadd.f32 0.0, %v2584
      %v2586 = vpop.f32.mrb[0].mxu0
      %v2587 = vpop.f32.mrb[0].mxu0
      %v2588 = vadd.f32 0.0, %v2587
      %v2589 = vpop.f32.mrb[0].mxu0
      %2590 = vmatprep.mubr.bf16.mxu0 0
      %2591 = vmatmul.mubr.bf16.gmra.mrb[0].mxu0 %v2448
      %v2592 = vpop.f32.mrb[0].mxu0
      %v2593 = vadd.f32 0.0, %v2592
      %v2594 = vpop.f32.mrb[0].mxu0
      %v2595 = vpop.f32.mrb[0].mxu0
      %v2596 = vadd.f32 0.0, %v2595
      %v2597 = vpop.f32.mrb[0].mxu0
      %2598 = vmatprep.mubr.bf16.mxu0 0
      %2599 = vmatmul.mubr.bf16.gmra.mrb[0].mxu0 %v2451
      %v2600 = vpop.f32.mrb[0].mxu0
      %v2601 = vadd.f32 0.0, %v2600
      %v2602 = vpop.f32.mrb[0].mxu0
      %v2603 = vpop.f32.mrb[0].mxu0
      %v2604 = vadd.f32 0.0, %v2603
      %v2605 = vpop.f32.mrb[0].mxu0
      %2606 = vmatprep.mubr.bf16.mxu0 0
      %2607 = vmatmul.mubr.bf16.gmra.mrb[0].mxu0 %v2454
      %v2608 = vpop.f32.mrb[0].mxu0
      %v2609 = vadd.f32 0.0, %v2608
      %v2610 = vpop.f32.mrb[0].mxu0
      %v2611 = vpop.f32.mrb[0].mxu0
      %v2612 = vadd.f32 0.0, %v2611
      %v2613 = vpop.f32.mrb[0].mxu0
      %2614 = vmatprep.mubr.bf16.mxu0 0
      %2615 = vmatmul.mubr.bf16.gmra.mrb[0].mxu0 %v2457
      %v2616 = vpop.f32.mrb[0].mxu0
      %v2617 = vadd.f32 0.0, %v2616
      %v2618 = vpop.f32.mrb[0].mxu0
      %v2619 = vpop.f32.mrb[0].mxu0
      %v2620 = vadd.f32 0.0, %v2619
      %v2621 = vpop.f32.mrb[0].mxu0
      %2622 = vdwg.mxu0
      %v2623 = vadd.f32 %v2247, %v2497
      %v2624 = vadd.f32 %v2248, %v2500
      %v2625 = vadd.f32 %v2249, %v2505
      %v2626 = vadd.f32 %v2250, %v2508
      %v2627 = vadd.f32 %v2251, %v2513
      %v2628 = vadd.f32 %v2252, %v2516
      %v2629 = vadd.f32 %v2253, %v2521
      %v2630 = vadd.f32 %v2254, %v2524
      %v2631 = vadd.f32 %v2255, %v2529
      %v2632 = vadd.f32 %v2256, %v2532
      %v2633 = vadd.f32 %v2257, %v2537
      %v2634 = vadd.f32 %v2258, %v2540
      %v2635 = vadd.f32 %v2259, %v2545
      %v2636 = vadd.f32 %v2260, %v2548
      %v2637 = vadd.f32 %v2261, %v2553
      %v2638 = vadd.f32 %v2262, %v2556
      %v2639 = vadd.f32 %v2263, %v2561
      %v2640 = vadd.f32 %v2264, %v2564
      %v2641 = vadd.f32 %v2265, %v2569
      %v2642 = vadd.f32 %v2266, %v2572
      %v2643 = vadd.f32 %v2267, %v2577
      %v2644 = vadd.f32 %v2268, %v2580
      %v2645 = vadd.f32 %v2269, %v2585
      %v2646 = vadd.f32 %v2270, %v2588
      %v2647 = vadd.f32 %v2271, %v2593
      %v2648 = vadd.f32 %v2272, %v2596
      %v2649 = vadd.f32 %v2273, %v2601
      %v2650 = vadd.f32 %v2274, %v2604
      %v2651 = vadd.f32 %v2275, %v2609
      %v2652 = vadd.f32 %v2276, %v2612
      %v2653 = vadd.f32 %v2277, %v2617
      %v2654 = vadd.f32 %v2278, %v2620
      %2655 = vst.msk [vmem:[#allocation4] sm:$0xff] %vm172, %v2623
      %2656 = vst.msk [vmem:[#allocation4 + $0x8] sm:$0xff] %vm172, %v2624
      %2657 = vst.msk [vmem:[#allocation4 + $0x10] sm:$0xff] %vm172, %v2625
      %2658 = vst.msk [vmem:[#allocation4 + $0x18] sm:$0xff] %vm172, %v2626
      %2659 = vst.msk [vmem:[#allocation4 + $0x20] sm:$0xff] %vm172, %v2627
      %2660 = vst.msk [vmem:[#allocation4 + $0x28] sm:$0xff] %vm172, %v2628
      %2661 = vst.msk [vmem:[#allocation4 + $0x30] sm:$0xff] %vm172, %v2629
      %2662 = vst.msk [vmem:[#allocation4 + $0x38] sm:$0xff] %vm172, %v2630
      %2663 = vst.msk [vmem:[#allocation4 + $0x40] sm:$0xff] %vm172, %v2631
      %2664 = vst.msk [vmem:[#allocation4 + $0x48] sm:$0xff] %vm172, %v2632
      %2665 = vst.msk [vmem:[#allocation4 + $0x50] sm:$0xff] %vm172, %v2633
      %2666 = vst.msk [vmem:[#allocation4 + $0x58] sm:$0xff] %vm172, %v2634
      %2667 = vst.msk [vmem:[#allocation4 + $0x60] sm:$0xff] %vm172, %v2635
      %2668 = vst.msk [vmem:[#allocation4 + $0x68] sm:$0xff] %vm172, %v2636
      %2669 = vst.msk [vmem:[#allocation4 + $0x70] sm:$0xff] %vm172, %v2637
      %2670 = vst.msk [vmem:[#allocation4 + $0x78] sm:$0xff] %vm172, %v2638
      %2671 = vst.msk [vmem:[#allocation4 + $0x80] sm:$0xff] %vm172, %v2639
      %2672 = vst.msk [vmem:[#allocation4 + $0x88] sm:$0xff] %vm172, %v2640
      %2673 = vst.msk [vmem:[#allocation4 + $0x90] sm:$0xff] %vm172, %v2641
      %2674 = vst.msk [vmem:[#allocation4 + $0x98] sm:$0xff] %vm172, %v2642
      %2675 = vst.msk [vmem:[#allocation4 + $0xa0] sm:$0xff] %vm172, %v2643
      %2676 = vst.msk [vmem:[#allocation4 + $0xa8] sm:$0xff] %vm172, %v2644
      %2677 = vst.msk [vmem:[#allocation4 + $0xb0] sm:$0xff] %vm172, %v2645
      %2678 = vst.msk [vmem:[#allocation4 + $0xb8] sm:$0xff] %vm172, %v2646
      %2679 = vst.msk [vmem:[#allocation4 + $0xc0] sm:$0xff] %vm172, %v2647
      %2680 = vst.msk [vmem:[#allocation4 + $0xc8] sm:$0xff] %vm172, %v2648
      %2681 = vst.msk [vmem:[#allocation4 + $0xd0] sm:$0xff] %vm172, %v2649
      %2682 = vst.msk [vmem:[#allocation4 + $0xd8] sm:$0xff] %vm172, %v2650
      %2683 = vst.msk [vmem:[#allocation4 + $0xe0] sm:$0xff] %vm172, %v2651
      %2684 = vst.msk [vmem:[#allocation4 + $0xe8] sm:$0xff] %vm172, %v2652
      %2685 = vst.msk [vmem:[#allocation4 + $0xf0] sm:$0xff] %vm172, %v2653
      %2686 = vst.msk [vmem:[#allocation4 + $0xf8] sm:$0xff] %vm172, %v2654
      %v2687 = vld [vmem:[#allocation2 + $0x10] sm:$0xff]
      %v2688 = vld [vmem:[#allocation2 + $0x18] sm:$0xff]
      %v2689 = vld [vmem:[#allocation2 + $0x20] sm:$0xff]
      %v2690 = vld [vmem:[#allocation2 + $0x28] sm:$0xff]
      %v2691 = vld [vmem:[#allocation2 + $0x30] sm:$0xff]
      %v2692 = vld [vmem:[#allocation2 + $0x38] sm:$0xff]
      %v2693 = vld [vmem:[#allocation2 + $0x40] sm:$0xff]
      %v2694 = vld [vmem:[#allocation2 + $0x48] sm:$0xff]
      %v2695 = vld [vmem:[#allocation2 + $0x50] sm:$0xff]
      %v2696 = vld [vmem:[#allocation2 + $0x58] sm:$0xff]
      %v2697 = vld [vmem:[#allocation2 + $0x60] sm:$0xff]
      %v2698 = vld [vmem:[#allocation2 + $0x68] sm:$0xff]
      %v2699 = vld [vmem:[#allocation2 + $0x70] sm:$0xff]
      %v2700 = vld [vmem:[#allocation2 + $0x78] sm:$0xff]
      %v2701 = vld [vmem:[#allocation2 + $0x80] sm:$0xff]
      %v2702 = vld [vmem:[#allocation2 + $0x88] sm:$0xff]
      %v2703 = vld [vmem:[%s1 + $0x10] sm:$0xf]
      %v2704 = vld [vmem:[#allocation4] sm:$0xff]
      %v2705 = vld [vmem:[#allocation4 + $0x8] sm:$0xff]
      %v2706 = vld [vmem:[#allocation4 + $0x10] sm:$0xff]
      %v2707 = vld [vmem:[#allocation4 + $0x18] sm:$0xff]
      %v2708 = vld [vmem:[#allocation4 + $0x20] sm:$0xff]
      %v2709 = vld [vmem:[#allocation4 + $0x28] sm:$0xff]
      %v2710 = vld [vmem:[#allocation4 + $0x30] sm:$0xff]
      %v2711 = vld [vmem:[#allocation4 + $0x38] sm:$0xff]
      %v2712 = vld [vmem:[#allocation4 + $0x40] sm:$0xff]
      %v2713 = vld [vmem:[#allocation4 + $0x48] sm:$0xff]
      %v2714 = vld [vmem:[#allocation4 + $0x50] sm:$0xff]
      %v2715 = vld [vmem:[#allocation4 + $0x58] sm:$0xff]
      %v2716 = vld [vmem:[#allocation4 + $0x60] sm:$0xff]
      %v2717 = vld [vmem:[#allocation4 + $0x68] sm:$0xff]
      %v2718 = vld [vmem:[#allocation4 + $0x70] sm:$0xff]
      %v2719 = vld [vmem:[#allocation4 + $0x78] sm:$0xff]
      %v2720 = vld [vmem:[#allocation4 + $0x80] sm:$0xff]
      %v2721 = vld [vmem:[#allocation4 + $0x88] sm:$0xff]
      %v2722 = vld [vmem:[#allocation4 + $0x90] sm:$0xff]
      %v2723 = vld [vmem:[#allocation4 + $0x98] sm:$0xff]
      %v2724 = vld [vmem:[#allocation4 + $0xa0] sm:$0xff]
      %v2725 = vld [vmem:[#allocation4 + $0xa8] sm:$0xff]
      %v2726 = vld [vmem:[#allocation4 + $0xb0] sm:$0xff]
      %v2727 = vld [vmem:[#allocation4 + $0xb8] sm:$0xff]
      %v2728 = vld [vmem:[#allocation4 + $0xc0] sm:$0xff]
      %v2729 = vld [vmem:[#allocation4 + $0xc8] sm:$0xff]
      %v2730 = vld [vmem:[#allocation4 + $0xd0] sm:$0xff]
      %v2731 = vld [vmem:[#allocation4 + $0xd8] sm:$0xff]
      %v2732 = vld [vmem:[#allocation4 + $0xe0] sm:$0xff]
      %v2733 = vld [vmem:[#allocation4 + $0xe8] sm:$0xff]
      %v2734 = vld [vmem:[#allocation4 + $0xf0] sm:$0xff]
      %v2735 = vld [vmem:[#allocation4 + $0xf8] sm:$0xff]
      %v2737 = vsel %vm172, %v2687, 0
      %v2740 = vsel %vm172, %v2688, 0
      %v2743 = vsel %vm172, %v2689, 0
      %v2746 = vsel %vm172, %v2690, 0
      %v2749 = vsel %vm172, %v2691, 0
      %v2752 = vsel %vm172, %v2692, 0
      %v2755 = vsel %vm172, %v2693, 0
      %v2758 = vsel %vm172, %v2694, 0
      %v2761 = vsel %vm172, %v2695, 0
      %v2764 = vsel %vm172, %v2696, 0
      %v2767 = vsel %vm172, %v2697, 0
      %v2770 = vsel %vm172, %v2698, 0
      %v2773 = vsel %vm172, %v2699, 0
      %v2776 = vsel %vm172, %v2700, 0
      %v2779 = vsel %vm172, %v2701, 0
      %v2782 = vsel %vm172, %v2702, 0
      %v2785 = vsel %vm1039, %v2703, 0
      %2787 = vmatprep.subr.bf16.mxu0 0
      %2788 = vmatpush1.bf16.msra.mxu0 %v2785
      %2789 = vmatprep.subr.bf16.mxu0 0
      %2790 = vmatpush1.bf16.msra.mxu0 0
      %2791 = vmatprep.subr.bf16.mxu0 0
      %2792 = vmatpush1.bf16.msra.mxu0 0
      %2793 = vmatprep.subr.bf16.mxu0 0
      %2794 = vmatpush1.bf16.msra.mxu0 0
      %2795 = vmatprep.subr.bf16.mxu0 0
      %2796 = vmatpush1.bf16.msra.mxu0 0
      %2797 = vmatprep.subr.bf16.mxu0 0
      %2798 = vmatpush1.bf16.msra.mxu0 0
      %2799 = vmatprep.subr.bf16.mxu0 0
      %2800 = vmatpush1.bf16.msra.mxu0 0
      %2801 = vmatprep.subr.bf16.mxu0 0
      %2802 = vmatpush1.bf16.msra.mxu0 0
      %2803 = vmatprep.subr.bf16.mxu0 0
      %2804 = vmatpush1.bf16.msra.mxu0 0
      %2805 = vmatprep.subr.bf16.mxu0 0
      %2806 = vmatpush1.bf16.msra.mxu0 0
      %2807 = vmatprep.subr.bf16.mxu0 0
      %2808 = vmatpush1.bf16.msra.mxu0 0
      %2809 = vmatprep.subr.bf16.mxu0 0
      %2810 = vmatpush1.bf16.msra.mxu0 0
      %2811 = vmatprep.subr.bf16.mxu0 0
      %2812 = vmatpush1.bf16.msra.mxu0 0
      %2813 = vmatprep.subr.bf16.mxu0 0
      %2814 = vmatpush1.bf16.msra.mxu0 0
      %2815 = vmatprep.subr.bf16.mxu0 0
      %2816 = vmatpush1.bf16.msra.mxu0 0
      %2817 = vmatprep.subr.bf16.mxu0 0
      %2818 = vmatpush1.bf16.msra.mxu0 0
      %2819 = vmatprep.mubr.bf16.mxu0 0
      %2820 = vmatmul.mubr.bf16.gmra.mrb[0].mxu0 %v2737
      %v2821 = vpop.f32.mrb[0].mxu0
      %v2822 = vadd.f32 0.0, %v2821
      %v2823 = vpop.f32.mrb[0].mxu0
      %v2824 = vpop.f32.mrb[0].mxu0
      %v2825 = vadd.f32 0.0, %v2824
      %v2826 = vpop.f32.mrb[0].mxu0
      %2827 = vmatprep.mubr.bf16.mxu0 0
      %2828 = vmatmul.mubr.bf16.gmra.mrb[0].mxu0 %v2740
      %v2829 = vpop.f32.mrb[0].mxu0
      %v2830 = vadd.f32 0.0, %v2829
      %v2831 = vpop.f32.mrb[0].mxu0
      %v2832 = vpop.f32.mrb[0].mxu0
      %v2833 = vadd.f32 0.0, %v2832
      %v2834 = vpop.f32.mrb[0].mxu0
      %2835 = vmatprep.mubr.bf16.mxu0 0
      %2836 = vmatmul.mubr.bf16.gmra.mrb[0].mxu0 %v2743
      %v2837 = vpop.f32.mrb[0].mxu0
      %v2838 = vadd.f32 0.0, %v2837
      %v2839 = vpop.f32.mrb[0].mxu0
      %v2840 = vpop.f32.mrb[0].mxu0
      %v2841 = vadd.f32 0.0, %v2840
      %v2842 = vpop.f32.mrb[0].mxu0
      %2843 = vmatprep.mubr.bf16.mxu0 0
      %2844 = vmatmul.mubr.bf16.gmra.mrb[0].mxu0 %v2746
      %v2845 = vpop.f32.mrb[0].mxu0
      %v2846 = vadd.f32 0.0, %v2845
      %v2847 = vpop.f32.mrb[0].mxu0
      %v2848 = vpop.f32.mrb[0].mxu0
      %v2849 = vadd.f32 0.0, %v2848
      %v2850 = vpop.f32.mrb[0].mxu0
      %2851 = vmatprep.mubr.bf16.mxu0 0
      %2852 = vmatmul.mubr.bf16.gmra.mrb[0].mxu0 %v2749
      %v2853 = vpop.f32.mrb[0].mxu0
      %v2854 = vadd.f32 0.0, %v2853
      %v2855 = vpop.f32.mrb[0].mxu0
      %v2856 = vpop.f32.mrb[0].mxu0
      %v2857 = vadd.f32 0.0, %v2856
      %v2858 = vpop.f32.mrb[0].mxu0
      %2859 = vmatprep.mubr.bf16.mxu0 0
      %2860 = vmatmul.mubr.bf16.gmra.mrb[0].mxu0 %v2752
      %v2861 = vpop.f32.mrb[0].mxu0
      %v2862 = vadd.f32 0.0, %v2861
      %v2863 = vpop.f32.mrb[0].mxu0
      %v2864 = vpop.f32.mrb[0].mxu0
      %v2865 = vadd.f32 0.0, %v2864
      %v2866 = vpop.f32.mrb[0].mxu0
      %2867 = vmatprep.mubr.bf16.mxu0 0
      %2868 = vmatmul.mubr.bf16.gmra.mrb[0].mxu0 %v2755
      %v2869 = vpop.f32.mrb[0].mxu0
      %v2870 = vadd.f32 0.0, %v2869
      %v2871 = vpop.f32.mrb[0].mxu0
      %v2872 = vpop.f32.mrb[0].mxu0
      %v2873 = vadd.f32 0.0, %v2872
      %v2874 = vpop.f32.mrb[0].mxu0
      %2875 = vmatprep.mubr.bf16.mxu0 0
      %2876 = vmatmul.mubr.bf16.gmra.mrb[0].mxu0 %v2758
      %v2877 = vpop.f32.mrb[0].mxu0
      %v2878 = vadd.f32 0.0, %v2877
      %v2879 = vpop.f32.mrb[0].mxu0
      %v2880 = vpop.f32.mrb[0].mxu0
      %v2881 = vadd.f32 0.0, %v2880
      %v2882 = vpop.f32.mrb[0].mxu0
      %2883 = vmatprep.mubr.bf16.mxu0 0
      %2884 = vmatmul.mubr.bf16.gmra.mrb[0].mxu0 %v2761
      %v2885 = vpop.f32.mrb[0].mxu0
      %v2886 = vadd.f32 0.0, %v2885
      %v2887 = vpop.f32.mrb[0].mxu0
      %v2888 = vpop.f32.mrb[0].mxu0
      %v2889 = vadd.f32 0.0, %v2888
      %v2890 = vpop.f32.mrb[0].mxu0
      %2891 = vmatprep.mubr.bf16.mxu0 0
      %2892 = vmatmul.mubr.bf16.gmra.mrb[0].mxu0 %v2764
      %v2893 = vpop.f32.mrb[0].mxu0
      %v2894 = vadd.f32 0.0, %v2893
      %v2895 = vpop.f32.mrb[0].mxu0
      %v2896 = vpop.f32.mrb[0].mxu0
      %v2897 = vadd.f32 0.0, %v2896
      %v2898 = vpop.f32.mrb[0].mxu0
      %2899 = vmatprep.mubr.bf16.mxu0 0
      %2900 = vmatmul.mubr.bf16.gmra.mrb[0].mxu0 %v2767
      %v2901 = vpop.f32.mrb[0].mxu0
      %v2902 = vadd.f32 0.0, %v2901
      %v2903 = vpop.f32.mrb[0].mxu0
      %v2904 = vpop.f32.mrb[0].mxu0
      %v2905 = vadd.f32 0.0, %v2904
      %v2906 = vpop.f32.mrb[0].mxu0
      %2907 = vmatprep.mubr.bf16.mxu0 0
      %2908 = vmatmul.mubr.bf16.gmra.mrb[0].mxu0 %v2770
      %v2909 = vpop.f32.mrb[0].mxu0
      %v2910 = vadd.f32 0.0, %v2909
      %v2911 = vpop.f32.mrb[0].mxu0
      %v2912 = vpop.f32.mrb[0].mxu0
      %v2913 = vadd.f32 0.0, %v2912
      %v2914 = vpop.f32.mrb[0].mxu0
      %2915 = vmatprep.mubr.bf16.mxu0 0
      %2916 = vmatmul.mubr.bf16.gmra.mrb[0].mxu0 %v2773
      %v2917 = vpop.f32.mrb[0].mxu0
      %v2918 = vadd.f32 0.0, %v2917
      %v2919 = vpop.f32.mrb[0].mxu0
      %v2920 = vpop.f32.mrb[0].mxu0
      %v2921 = vadd.f32 0.0, %v2920
      %v2922 = vpop.f32.mrb[0].mxu0
      %2923 = vmatprep.mubr.bf16.mxu0 0
      %2924 = vmatmul.mubr.bf16.gmra.mrb[0].mxu0 %v2776
      %v2925 = vpop.f32.mrb[0].mxu0
      %v2926 = vadd.f32 0.0, %v2925
      %v2927 = vpop.f32.mrb[0].mxu0
      %v2928 = vpop.f32.mrb[0].mxu0
      %v2929 = vadd.f32 0.0, %v2928
      %v2930 = vpop.f32.mrb[0].mxu0
      %2931 = vmatprep.mubr.bf16.mxu0 0
      %2932 = vmatmul.mubr.bf16.gmra.mrb[0].mxu0 %v2779
      %v2933 = vpop.f32.mrb[0].mxu0
      %v2934 = vadd.f32 0.0, %v2933
      %v2935 = vpop.f32.mrb[0].mxu0
      %v2936 = vpop.f32.mrb[0].mxu0
      %v2937 = vadd.f32 0.0, %v2936
      %v2938 = vpop.f32.mrb[0].mxu0
      %2939 = vmatprep.mubr.bf16.mxu0 0
      %2940 = vmatmul.mubr.bf16.gmra.mrb[0].mxu0 %v2782
      %v2941 = vpop.f32.mrb[0].mxu0
      %v2942 = vadd.f32 0.0, %v2941
      %v2943 = vpop.f32.mrb[0].mxu0
      %v2944 = vpop.f32.mrb[0].mxu0
      %v2945 = vadd.f32 0.0, %v2944
      %v2946 = vpop.f32.mrb[0].mxu0
      %2947 = vdwg.mxu0
      %v2948 = vadd.f32 %v2704, %v2822
      %v2949 = vadd.f32 %v2705, %v2825
      %v2950 = vadd.f32 %v2706, %v2830
      %v2951 = vadd.f32 %v2707, %v2833
      %v2952 = vadd.f32 %v2708, %v2838
      %v2953 = vadd.f32 %v2709, %v2841
      %v2954 = vadd.f32 %v2710, %v2846
      %v2955 = vadd.f32 %v2711, %v2849
      %v2956 = vadd.f32 %v2712, %v2854
      %v2957 = vadd.f32 %v2713, %v2857
      %v2958 = vadd.f32 %v2714, %v2862
      %v2959 = vadd.f32 %v2715, %v2865
      %v2960 = vadd.f32 %v2716, %v2870
      %v2961 = vadd.f32 %v2717, %v2873
      %v2962 = vadd.f32 %v2718, %v2878
      %v2963 = vadd.f32 %v2719, %v2881
      %v2964 = vadd.f32 %v2720, %v2886
      %v2965 = vadd.f32 %v2721, %v2889
      %v2966 = vadd.f32 %v2722, %v2894
      %v2967 = vadd.f32 %v2723, %v2897
      %v2968 = vadd.f32 %v2724, %v2902
      %v2969 = vadd.f32 %v2725, %v2905
      %v2970 = vadd.f32 %v2726, %v2910
      %v2971 = vadd.f32 %v2727, %v2913
      %v2972 = vadd.f32 %v2728, %v2918
      %v2973 = vadd.f32 %v2729, %v2921
      %v2974 = vadd.f32 %v2730, %v2926
      %v2975 = vadd.f32 %v2731, %v2929
      %v2976 = vadd.f32 %v2732, %v2934
      %v2977 = vadd.f32 %v2733, %v2937
      %v2978 = vadd.f32 %v2734, %v2942
      %v2979 = vadd.f32 %v2735, %v2945
      %2980 = vst.msk [vmem:[#allocation4] sm:$0xff] %vm172, %v2948
      %2981 = vst.msk [vmem:[#allocation4 + $0x8] sm:$0xff] %vm172, %v2949
      %2982 = vst.msk [vmem:[#allocation4 + $0x10] sm:$0xff] %vm172, %v2950
      %2983 = vst.msk [vmem:[#allocation4 + $0x18] sm:$0xff] %vm172, %v2951
      %2984 = vst.msk [vmem:[#allocation4 + $0x20] sm:$0xff] %vm172, %v2952
      %2985 = vst.msk [vmem:[#allocation4 + $0x28] sm:$0xff] %vm172, %v2953
      %2986 = vst.msk [vmem:[#allocation4 + $0x30] sm:$0xff] %vm172, %v2954
      %2987 = vst.msk [vmem:[#allocation4 + $0x38] sm:$0xff] %vm172, %v2955
      %2988 = vst.msk [vmem:[#allocation4 + $0x40] sm:$0xff] %vm172, %v2956
      %2989 = vst.msk [vmem:[#allocation4 + $0x48] sm:$0xff] %vm172, %v2957
      %2990 = vst.msk [vmem:[#allocation4 + $0x50] sm:$0xff] %vm172, %v2958
      %2991 = vst.msk [vmem:[#allocation4 + $0x58] sm:$0xff] %vm172, %v2959
      %2992 = vst.msk [vmem:[#allocation4 + $0x60] sm:$0xff] %vm172, %v2960
      %2993 = vst.msk [vmem:[#allocation4 + $0x68] sm:$0xff] %vm172, %v2961
      %2994 = vst.msk [vmem:[#allocation4 + $0x70] sm:$0xff] %vm172, %v2962
      %2995 = vst.msk [vmem:[#allocation4 + $0x78] sm:$0xff] %vm172, %v2963
      %2996 = vst.msk [vmem:[#allocation4 + $0x80] sm:$0xff] %vm172, %v2964
      %2997 = vst.msk [vmem:[#allocation4 + $0x88] sm:$0xff] %vm172, %v2965
      %2998 = vst.msk [vmem:[#allocation4 + $0x90] sm:$0xff] %vm172, %v2966
      %2999 = vst.msk [vmem:[#allocation4 + $0x98] sm:$0xff] %vm172, %v2967
      %3000 = vst.msk [vmem:[#allocation4 + $0xa0] sm:$0xff] %vm172, %v2968
      %3001 = vst.msk [vmem:[#allocation4 + $0xa8] sm:$0xff] %vm172, %v2969
      %3002 = vst.msk [vmem:[#allocation4 + $0xb0] sm:$0xff] %vm172, %v2970
      %3003 = vst.msk [vmem:[#allocation4 + $0xb8] sm:$0xff] %vm172, %v2971
      %3004 = vst.msk [vmem:[#allocation4 + $0xc0] sm:$0xff] %vm172, %v2972
      %3005 = vst.msk [vmem:[#allocation4 + $0xc8] sm:$0xff] %vm172, %v2973
      %3006 = vst.msk [vmem:[#allocation4 + $0xd0] sm:$0xff] %vm172, %v2974
      %3007 = vst.msk [vmem:[#allocation4 + $0xd8] sm:$0xff] %vm172, %v2975
      %3008 = vst.msk [vmem:[#allocation4 + $0xe0] sm:$0xff] %vm172, %v2976
      %3009 = vst.msk [vmem:[#allocation4 + $0xe8] sm:$0xff] %vm172, %v2977
      %3010 = vst.msk [vmem:[#allocation4 + $0xf0] sm:$0xff] %vm172, %v2978
      %3011 = vst.msk [vmem:[#allocation4 + $0xf8] sm:$0xff] %vm172, %v2979
      %v3012 = vld [vmem:[#allocation2 + $0x10] sm:$0xff]
      %v3013 = vld [vmem:[#allocation2 + $0x18] sm:$0xff]
      %v3014 = vld [vmem:[#allocation2 + $0x20] sm:$0xff]
      %v3015 = vld [vmem:[#allocation2 + $0x28] sm:$0xff]
      %v3016 = vld [vmem:[#allocation2 + $0x30] sm:$0xff]
      %v3017 = vld [vmem:[#allocation2 + $0x38] sm:$0xff]
      %v3018 = vld [vmem:[#allocation2 + $0x40] sm:$0xff]
      %v3019 = vld [vmem:[#allocation2 + $0x48] sm:$0xff]
      %v3020 = vld [vmem:[#allocation2 + $0x50] sm:$0xff]
      %v3021 = vld [vmem:[#allocation2 + $0x58] sm:$0xff]
      %v3022 = vld [vmem:[#allocation2 + $0x60] sm:$0xff]
      %v3023 = vld [vmem:[#allocation2 + $0x68] sm:$0xff]
      %v3024 = vld [vmem:[#allocation2 + $0x70] sm:$0xff]
      %v3025 = vld [vmem:[#allocation2 + $0x78] sm:$0xff]
      %v3026 = vld [vmem:[#allocation2 + $0x80] sm:$0xff]
      %v3027 = vld [vmem:[#allocation2 + $0x88] sm:$0xff]
      %v3028 = vld [vmem:[#allocation2 + $0x90] sm:$0x1]
      %v3029 = vmul.bf16 %v3012, %v1616
      %v3030 = vmul.bf16 %v3013, %v1624
      %v3031 = vmul.bf16 %v3014, %v1632
      %v3032 = vmul.bf16 %v3015, %v1640
      %v3033 = vmul.bf16 %v3016, %v1648
      %v3034 = vmul.bf16 %v3017, %v1656
      %v3035 = vmul.bf16 %v3018, %v1664
      %v3036 = vmul.bf16 %v3019, %v1672
      %v3037 = vmul.bf16 %v3020, %v1680
      %v3038 = vmul.bf16 %v3021, %v1688
      %v3039 = vmul.bf16 %v3022, %v1696
      %v3040 = vmul.bf16 %v3023, %v1704
      %v3041 = vmul.bf16 %v3024, %v1712
      %v3042 = vmul.bf16 %v3025, %v1720
      %v3043 = vmul.bf16 %v3026, %v1728
      %v3044 = vmul.bf16 %v3027, %v1736
      %v3045 = vmul.bf16 %v3028, %v1732
      %v3046 = vld [vmem:[%s1 + $0x14] sm:$0xf]
      %v3047 = vld [vmem:[#allocation4] sm:$0xff]
      %v3048 = vld [vmem:[#allocation4 + $0x8] sm:$0xff]
      %v3049 = vld [vmem:[#allocation4 + $0x10] sm:$0xff]
      %v3050 = vld [vmem:[#allocation4 + $0x18] sm:$0xff]
      %v3051 = vld [vmem:[#allocation4 + $0x20] sm:$0xff]
      %v3052 = vld [vmem:[#allocation4 + $0x28] sm:$0xff]
      %v3053 = vld [vmem:[#allocation4 + $0x30] sm:$0xff]
      %v3054 = vld [vmem:[#allocation4 + $0x38] sm:$0xff]
      %v3055 = vld [vmem:[#allocation4 + $0x40] sm:$0xff]
      %v3056 = vld [vmem:[#allocation4 + $0x48] sm:$0xff]
      %v3057 = vld [vmem:[#allocation4 + $0x50] sm:$0xff]
      %v3058 = vld [vmem:[#allocation4 + $0x58] sm:$0xff]
      %v3059 = vld [vmem:[#allocation4 + $0x60] sm:$0xff]
      %v3060 = vld [vmem:[#allocation4 + $0x68] sm:$0xff]
      %v3061 = vld [vmem:[#allocation4 + $0x70] sm:$0xff]
      %v3062 = vld [vmem:[#allocation4 + $0x78] sm:$0xff]
      %v3063 = vld [vmem:[#allocation4 + $0x80] sm:$0xff]
      %v3064 = vld [vmem:[#allocation4 + $0x88] sm:$0xff]
      %v3065 = vld [vmem:[#allocation4 + $0x90] sm:$0xff]
      %v3066 = vld [vmem:[#allocation4 + $0x98] sm:$0xff]
      %v3067 = vld [vmem:[#allocation4 + $0xa0] sm:$0xff]
      %v3068 = vld [vmem:[#allocation4 + $0xa8] sm:$0xff]
      %v3069 = vld [vmem:[#allocation4 + $0xb0] sm:$0xff]
      %v3070 = vld [vmem:[#allocation4 + $0xb8] sm:$0xff]
      %v3071 = vld [vmem:[#allocation4 + $0xc0] sm:$0xff]
      %v3072 = vld [vmem:[#allocation4 + $0xc8] sm:$0xff]
      %v3073 = vld [vmem:[#allocation4 + $0xd0] sm:$0xff]
      %v3074 = vld [vmem:[#allocation4 + $0xd8] sm:$0xff]
      %v3075 = vld [vmem:[#allocation4 + $0xe0] sm:$0xff]
      %v3076 = vld [vmem:[#allocation4 + $0xe8] sm:$0xff]
      %v3077 = vld [vmem:[#allocation4 + $0xf0] sm:$0xff]
      %v3078 = vld [vmem:[#allocation4 + $0xf8] sm:$0xff]
      %v3080 = vshrl.u32 %v3029, 16
      %v3082 = vshll.u32 %v3029, 16
      %v3084 = vrot.slane %v3082, 1
      %v3085 = vor.u32 %v3080, %v3084
      %v3087 = vshll.u32 %v3030, 16
      %v3089 = vrot.slane %v3087, 1
      %v3090 = vsel %vm663, %v3085, %v3089
      %v3091 = vshrl.u32 %v3030, 16
      %v3093 = vor.u32 %v3091, %v3089
      %v3095 = vshll.u32 %v3031, 16
      %v3097 = vrot.slane %v3095, 1
      %v3098 = vsel %vm663, %v3093, %v3097
      %v3099 = vshrl.u32 %v3031, 16
      %v3101 = vor.u32 %v3099, %v3097
      %v3103 = vshll.u32 %v3032, 16
      %v3105 = vrot.slane %v3103, 1
      %v3106 = vsel %vm663, %v3101, %v3105
      %v3107 = vshrl.u32 %v3032, 16
      %v3109 = vor.u32 %v3107, %v3105
      %v3111 = vshll.u32 %v3033, 16
      %v3113 = vrot.slane %v3111, 1
      %v3114 = vsel %vm663, %v3109, %v3113
      %v3115 = vshrl.u32 %v3033, 16
      %v3117 = vor.u32 %v3115, %v3113
      %v3119 = vshll.u32 %v3034, 16
      %v3121 = vrot.slane %v3119, 1
      %v3122 = vsel %vm663, %v3117, %v3121
      %v3123 = vshrl.u32 %v3034, 16
      %v3125 = vor.u32 %v3123, %v3121
      %v3127 = vshll.u32 %v3035, 16
      %v3129 = vrot.slane %v3127, 1
      %v3130 = vsel %vm663, %v3125, %v3129
      %v3131 = vshrl.u32 %v3035, 16
      %v3133 = vor.u32 %v3131, %v3129
      %v3135 = vshll.u32 %v3036, 16
      %v3137 = vrot.slane %v3135, 1
      %v3138 = vsel %vm663, %v3133, %v3137
      %v3139 = vshrl.u32 %v3036, 16
      %v3141 = vor.u32 %v3139, %v3137
      %v3143 = vshll.u32 %v3037, 16
      %v3145 = vrot.slane %v3143, 1
      %v3146 = vsel %vm663, %v3141, %v3145
      %v3147 = vshrl.u32 %v3037, 16
      %v3149 = vor.u32 %v3147, %v3145
      %v3151 = vshll.u32 %v3038, 16
      %v3153 = vrot.slane %v3151, 1
      %v3154 = vsel %vm663, %v3149, %v3153
      %v3155 = vshrl.u32 %v3038, 16
      %v3157 = vor.u32 %v3155, %v3153
      %v3159 = vshll.u32 %v3039, 16
      %v3161 = vrot.slane %v3159, 1
      %v3162 = vsel %vm663, %v3157, %v3161
      %v3163 = vshrl.u32 %v3039, 16
      %v3165 = vor.u32 %v3163, %v3161
      %v3167 = vshll.u32 %v3040, 16
      %v3169 = vrot.slane %v3167, 1
      %v3170 = vsel %vm663, %v3165, %v3169
      %v3171 = vshrl.u32 %v3040, 16
      %v3173 = vor.u32 %v3171, %v3169
      %v3175 = vshll.u32 %v3041, 16
      %v3177 = vrot.slane %v3175, 1
      %v3178 = vsel %vm663, %v3173, %v3177
      %v3179 = vshrl.u32 %v3041, 16
      %v3181 = vor.u32 %v3179, %v3177
      %v3183 = vshll.u32 %v3042, 16
      %v3185 = vrot.slane %v3183, 1
      %v3186 = vsel %vm663, %v3181, %v3185
      %v3187 = vshrl.u32 %v3042, 16
      %v3189 = vor.u32 %v3187, %v3185
      %v3191 = vshll.u32 %v3043, 16
      %v3193 = vrot.slane %v3191, 1
      %v3194 = vsel %vm663, %v3189, %v3193
      %v3195 = vshrl.u32 %v3043, 16
      %v3197 = vor.u32 %v3195, %v3193
      %v3199 = vshll.u32 %v3044, 16
      %v3201 = vrot.slane %v3199, 1
      %v3202 = vsel %vm663, %v3197, %v3201
      %v3203 = vshrl.u32 %v3044, 16
      %v3205 = vor.u32 %v3203, %v3201
      %v3207 = vshll.u32 %v3045, 16
      %v3209 = vrot.slane %v3207, 1
      %v3210 = vsel %vm663, %v3205, %v3209
      %v3212 = vsel %vm172, %v3090, 0
      %v3215 = vsel %vm172, %v3098, 0
      %v3218 = vsel %vm172, %v3106, 0
      %v3221 = vsel %vm172, %v3114, 0
      %v3224 = vsel %vm172, %v3122, 0
      %v3227 = vsel %vm172, %v3130, 0
      %v3230 = vsel %vm172, %v3138, 0
      %v3233 = vsel %vm172, %v3146, 0
      %v3236 = vsel %vm172, %v3154, 0
      %v3239 = vsel %vm172, %v3162, 0
      %v3242 = vsel %vm172, %v3170, 0
      %v3245 = vsel %vm172, %v3178, 0
      %v3248 = vsel %vm172, %v3186, 0
      %v3251 = vsel %vm172, %v3194, 0
      %v3254 = vsel %vm172, %v3202, 0
      %v3257 = vsel %vm172, %v3210, 0
      %v3260 = vsel %vm1039, %v3046, 0
      %3262 = vmatprep.subr.bf16.mxu0 0
      %3263 = vmatpush1.bf16.msra.mxu0 %v3260
      %3264 = vmatprep.subr.bf16.mxu0 0
      %3265 = vmatpush1.bf16.msra.mxu0 0
      %3266 = vmatprep.subr.bf16.mxu0 0
      %3267 = vmatpush1.bf16.msra.mxu0 0
      %3268 = vmatprep.subr.bf16.mxu0 0
      %3269 = vmatpush1.bf16.msra.mxu0 0
      %3270 = vmatprep.subr.bf16.mxu0 0
      %3271 = vmatpush1.bf16.msra.mxu0 0
      %3272 = vmatprep.subr.bf16.mxu0 0
      %3273 = vmatpush1.bf16.msra.mxu0 0
      %3274 = vmatprep.subr.bf16.mxu0 0
      %3275 = vmatpush1.bf16.msra.mxu0 0
      %3276 = vmatprep.subr.bf16.mxu0 0
      %3277 = vmatpush1.bf16.msra.mxu0 0
      %3278 = vmatprep.subr.bf16.mxu0 0
      %3279 = vmatpush1.bf16.msra.mxu0 0
      %3280 = vmatprep.subr.bf16.mxu0 0
      %3281 = vmatpush1.bf16.msra.mxu0 0
      %3282 = vmatprep.subr.bf16.mxu0 0
      %3283 = vmatpush1.bf16.msra.mxu0 0
      %3284 = vmatprep.subr.bf16.mxu0 0
      %3285 = vmatpush1.bf16.msra.mxu0 0
      %3286 = vmatprep.subr.bf16.mxu0 0
      %3287 = vmatpush1.bf16.msra.mxu0 0
      %3288 = vmatprep.subr.bf16.mxu0 0
      %3289 = vmatpush1.bf16.msra.mxu0 0
      %3290 = vmatprep.subr.bf16.mxu0 0
      %3291 = vmatpush1.bf16.msra.mxu0 0
      %3292 = vmatprep.subr.bf16.mxu0 0
      %3293 = vmatpush1.bf16.msra.mxu0 0
      %3294 = vmatprep.mubr.bf16.mxu0 0
      %3295 = vmatmul.mubr.bf16.gmra.mrb[0].mxu0 %v3212
      %v3296 = vpop.f32.mrb[0].mxu0
      %v3297 = vadd.f32 0.0, %v3296
      %v3298 = vpop.f32.mrb[0].mxu0
      %v3299 = vpop.f32.mrb[0].mxu0
      %v3300 = vadd.f32 0.0, %v3299
      %v3301 = vpop.f32.mrb[0].mxu0
      %3302 = vmatprep.mubr.bf16.mxu0 0
      %3303 = vmatmul.mubr.bf16.gmra.mrb[0].mxu0 %v3215
      %v3304 = vpop.f32.mrb[0].mxu0
      %v3305 = vadd.f32 0.0, %v3304
      %v3306 = vpop.f32.mrb[0].mxu0
      %v3307 = vpop.f32.mrb[0].mxu0
      %v3308 = vadd.f32 0.0, %v3307
      %v3309 = vpop.f32.mrb[0].mxu0
      %3310 = vmatprep.mubr.bf16.mxu0 0
      %3311 = vmatmul.mubr.bf16.gmra.mrb[0].mxu0 %v3218
      %v3312 = vpop.f32.mrb[0].mxu0
      %v3313 = vadd.f32 0.0, %v3312
      %v3314 = vpop.f32.mrb[0].mxu0
      %v3315 = vpop.f32.mrb[0].mxu0
      %v3316 = vadd.f32 0.0, %v3315
      %v3317 = vpop.f32.mrb[0].mxu0
      %3318 = vmatprep.mubr.bf16.mxu0 0
      %3319 = vmatmul.mubr.bf16.gmra.mrb[0].mxu0 %v3221
      %v3320 = vpop.f32.mrb[0].mxu0
      %v3321 = vadd.f32 0.0, %v3320
      %v3322 = vpop.f32.mrb[0].mxu0
      %v3323 = vpop.f32.mrb[0].mxu0
      %v3324 = vadd.f32 0.0, %v3323
      %v3325 = vpop.f32.mrb[0].mxu0
      %3326 = vmatprep.mubr.bf16.mxu0 0
      %3327 = vmatmul.mubr.bf16.gmra.mrb[0].mxu0 %v3224
      %v3328 = vpop.f32.mrb[0].mxu0
      %v3329 = vadd.f32 0.0, %v3328
      %v3330 = vpop.f32.mrb[0].mxu0
      %v3331 = vpop.f32.mrb[0].mxu0
      %v3332 = vadd.f32 0.0, %v3331
      %v3333 = vpop.f32.mrb[0].mxu0
      %3334 = vmatprep.mubr.bf16.mxu0 0
      %3335 = vmatmul.mubr.bf16.gmra.mrb[0].mxu0 %v3227
      %v3336 = vpop.f32.mrb[0].mxu0
      %v3337 = vadd.f32 0.0, %v3336
      %v3338 = vpop.f32.mrb[0].mxu0
      %v3339 = vpop.f32.mrb[0].mxu0
      %v3340 = vadd.f32 0.0, %v3339
      %v3341 = vpop.f32.mrb[0].mxu0
      %3342 = vmatprep.mubr.bf16.mxu0 0
      %3343 = vmatmul.mubr.bf16.gmra.mrb[0].mxu0 %v3230
      %v3344 = vpop.f32.mrb[0].mxu0
      %v3345 = vadd.f32 0.0, %v3344
      %v3346 = vpop.f32.mrb[0].mxu0
      %v3347 = vpop.f32.mrb[0].mxu0
      %v3348 = vadd.f32 0.0, %v3347
      %v3349 = vpop.f32.mrb[0].mxu0
      %3350 = vmatprep.mubr.bf16.mxu0 0
      %3351 = vmatmul.mubr.bf16.gmra.mrb[0].mxu0 %v3233
      %v3352 = vpop.f32.mrb[0].mxu0
      %v3353 = vadd.f32 0.0, %v3352
      %v3354 = vpop.f32.mrb[0].mxu0
      %v3355 = vpop.f32.mrb[0].mxu0
      %v3356 = vadd.f32 0.0, %v3355
      %v3357 = vpop.f32.mrb[0].mxu0
      %3358 = vmatprep.mubr.bf16.mxu0 0
      %3359 = vmatmul.mubr.bf16.gmra.mrb[0].mxu0 %v3236
      %v3360 = vpop.f32.mrb[0].mxu0
      %v3361 = vadd.f32 0.0, %v3360
      %v3362 = vpop.f32.mrb[0].mxu0
      %v3363 = vpop.f32.mrb[0].mxu0
      %v3364 = vadd.f32 0.0, %v3363
      %v3365 = vpop.f32.mrb[0].mxu0
      %3366 = vmatprep.mubr.bf16.mxu0 0
      %3367 = vmatmul.mubr.bf16.gmra.mrb[0].mxu0 %v3239
      %v3368 = vpop.f32.mrb[0].mxu0
      %v3369 = vadd.f32 0.0, %v3368
      %v3370 = vpop.f32.mrb[0].mxu0
      %v3371 = vpop.f32.mrb[0].mxu0
      %v3372 = vadd.f32 0.0, %v3371
      %v3373 = vpop.f32.mrb[0].mxu0
      %3374 = vmatprep.mubr.bf16.mxu0 0
      %3375 = vmatmul.mubr.bf16.gmra.mrb[0].mxu0 %v3242
      %v3376 = vpop.f32.mrb[0].mxu0
      %v3377 = vadd.f32 0.0, %v3376
      %v3378 = vpop.f32.mrb[0].mxu0
      %v3379 = vpop.f32.mrb[0].mxu0
      %v3380 = vadd.f32 0.0, %v3379
      %v3381 = vpop.f32.mrb[0].mxu0
      %3382 = vmatprep.mubr.bf16.mxu0 0
      %3383 = vmatmul.mubr.bf16.gmra.mrb[0].mxu0 %v3245
      %v3384 = vpop.f32.mrb[0].mxu0
      %v3385 = vadd.f32 0.0, %v3384
      %v3386 = vpop.f32.mrb[0].mxu0
      %v3387 = vpop.f32.mrb[0].mxu0
      %v3388 = vadd.f32 0.0, %v3387
      %v3389 = vpop.f32.mrb[0].mxu0
      %3390 = vmatprep.mubr.bf16.mxu0 0
      %3391 = vmatmul.mubr.bf16.gmra.mrb[0].mxu0 %v3248
      %v3392 = vpop.f32.mrb[0].mxu0
      %v3393 = vadd.f32 0.0, %v3392
      %v3394 = vpop.f32.mrb[0].mxu0
      %v3395 = vpop.f32.mrb[0].mxu0
      %v3396 = vadd.f32 0.0, %v3395
      %v3397 = vpop.f32.mrb[0].mxu0
      %3398 = vmatprep.mubr.bf16.mxu0 0
      %3399 = vmatmul.mubr.bf16.gmra.mrb[0].mxu0 %v3251
      %v3400 = vpop.f32.mrb[0].mxu0
      %v3401 = vadd.f32 0.0, %v3400
      %v3402 = vpop.f32.mrb[0].mxu0
      %v3403 = vpop.f32.mrb[0].mxu0
      %v3404 = vadd.f32 0.0, %v3403
      %v3405 = vpop.f32.mrb[0].mxu0
      %3406 = vmatprep.mubr.bf16.mxu0 0
      %3407 = vmatmul.mubr.bf16.gmra.mrb[0].mxu0 %v3254
      %v3408 = vpop.f32.mrb[0].mxu0
      %v3409 = vadd.f32 0.0, %v3408
      %v3410 = vpop.f32.mrb[0].mxu0
      %v3411 = vpop.f32.mrb[0].mxu0
      %v3412 = vadd.f32 0.0, %v3411
      %v3413 = vpop.f32.mrb[0].mxu0
      %3414 = vmatprep.mubr.bf16.mxu0 0
      %3415 = vmatmul.mubr.bf16.gmra.mrb[0].mxu0 %v3257
      %v3416 = vpop.f32.mrb[0].mxu0
      %v3417 = vadd.f32 0.0, %v3416
      %v3418 = vpop.f32.mrb[0].mxu0
      %v3419 = vpop.f32.mrb[0].mxu0
      %v3420 = vadd.f32 0.0, %v3419
      %v3421 = vpop.f32.mrb[0].mxu0
      %3422 = vdwg.mxu0
      %v3423 = vadd.f32 %v3047, %v3297
      %v3424 = vadd.f32 %v3048, %v3300
      %v3425 = vadd.f32 %v3049, %v3305
      %v3426 = vadd.f32 %v3050, %v3308
      %v3427 = vadd.f32 %v3051, %v3313
      %v3428 = vadd.f32 %v3052, %v3316
      %v3429 = vadd.f32 %v3053, %v3321
      %v3430 = vadd.f32 %v3054, %v3324
      %v3431 = vadd.f32 %v3055, %v3329
      %v3432 = vadd.f32 %v3056, %v3332
      %v3433 = vadd.f32 %v3057, %v3337
      %v3434 = vadd.f32 %v3058, %v3340
      %v3435 = vadd.f32 %v3059, %v3345
      %v3436 = vadd.f32 %v3060, %v3348
      %v3437 = vadd.f32 %v3061, %v3353
      %v3438 = vadd.f32 %v3062, %v3356
      %v3439 = vadd.f32 %v3063, %v3361
      %v3440 = vadd.f32 %v3064, %v3364
      %v3441 = vadd.f32 %v3065, %v3369
      %v3442 = vadd.f32 %v3066, %v3372
      %v3443 = vadd.f32 %v3067, %v3377
      %v3444 = vadd.f32 %v3068, %v3380
      %v3445 = vadd.f32 %v3069, %v3385
      %v3446 = vadd.f32 %v3070, %v3388
      %v3447 = vadd.f32 %v3071, %v3393
      %v3448 = vadd.f32 %v3072, %v3396
      %v3449 = vadd.f32 %v3073, %v3401
      %v3450 = vadd.f32 %v3074, %v3404
      %v3451 = vadd.f32 %v3075, %v3409
      %v3452 = vadd.f32 %v3076, %v3412
      %v3453 = vadd.f32 %v3077, %v3417
      %v3454 = vadd.f32 %v3078, %v3420
      %3455 = vst.msk [vmem:[#allocation4] sm:$0xff] %vm172, %v3423
      %3456 = vst.msk [vmem:[#allocation4 + $0x8] sm:$0xff] %vm172, %v3424
      %3457 = vst.msk [vmem:[#allocation4 + $0x10] sm:$0xff] %vm172, %v3425
      %3458 = vst.msk [vmem:[#allocation4 + $0x18] sm:$0xff] %vm172, %v3426
      %3459 = vst.msk [vmem:[#allocation4 + $0x20] sm:$0xff] %vm172, %v3427
      %3460 = vst.msk [vmem:[#allocation4 + $0x28] sm:$0xff] %vm172, %v3428
      %3461 = vst.msk [vmem:[#allocation4 + $0x30] sm:$0xff] %vm172, %v3429
      %3462 = vst.msk [vmem:[#allocation4 + $0x38] sm:$0xff] %vm172, %v3430
      %3463 = vst.msk [vmem:[#allocation4 + $0x40] sm:$0xff] %vm172, %v3431
      %3464 = vst.msk [vmem:[#allocation4 + $0x48] sm:$0xff] %vm172, %v3432
      %3465 = vst.msk [vmem:[#allocation4 + $0x50] sm:$0xff] %vm172, %v3433
      %3466 = vst.msk [vmem:[#allocation4 + $0x58] sm:$0xff] %vm172, %v3434
      %3467 = vst.msk [vmem:[#allocation4 + $0x60] sm:$0xff] %vm172, %v3435
      %3468 = vst.msk [vmem:[#allocation4 + $0x68] sm:$0xff] %vm172, %v3436
      %3469 = vst.msk [vmem:[#allocation4 + $0x70] sm:$0xff] %vm172, %v3437
      %3470 = vst.msk [vmem:[#allocation4 + $0x78] sm:$0xff] %vm172, %v3438
      %3471 = vst.msk [vmem:[#allocation4 + $0x80] sm:$0xff] %vm172, %v3439
      %3472 = vst.msk [vmem:[#allocation4 + $0x88] sm:$0xff] %vm172, %v3440
      %3473 = vst.msk [vmem:[#allocation4 + $0x90] sm:$0xff] %vm172, %v3441
      %3474 = vst.msk [vmem:[#allocation4 + $0x98] sm:$0xff] %vm172, %v3442
      %3475 = vst.msk [vmem:[#allocation4 + $0xa0] sm:$0xff] %vm172, %v3443
      %3476 = vst.msk [vmem:[#allocation4 + $0xa8] sm:$0xff] %vm172, %v3444
      %3477 = vst.msk [vmem:[#allocation4 + $0xb0] sm:$0xff] %vm172, %v3445
      %3478 = vst.msk [vmem:[#allocation4 + $0xb8] sm:$0xff] %vm172, %v3446
      %3479 = vst.msk [vmem:[#allocation4 + $0xc0] sm:$0xff] %vm172, %v3447
      %3480 = vst.msk [vmem:[#allocation4 + $0xc8] sm:$0xff] %vm172, %v3448
      %3481 = vst.msk [vmem:[#allocation4 + $0xd0] sm:$0xff] %vm172, %v3449
      %3482 = vst.msk [vmem:[#allocation4 + $0xd8] sm:$0xff] %vm172, %v3450
      %3483 = vst.msk [vmem:[#allocation4 + $0xe0] sm:$0xff] %vm172, %v3451
      %3484 = vst.msk [vmem:[#allocation4 + $0xe8] sm:$0xff] %vm172, %v3452
      %3485 = vst.msk [vmem:[#allocation4 + $0xf0] sm:$0xff] %vm172, %v3453
      %3486 = vst.msk [vmem:[#allocation4 + $0xf8] sm:$0xff] %vm172, %v3454
      %v3487 = vld [vmem:[#allocation2 + $0x10] sm:$0x80]
      %v3488 = vld [vmem:[#allocation2 + $0x18] sm:$0xff]
      %v3489 = vld [vmem:[#allocation2 + $0x20] sm:$0xff]
      %v3490 = vld [vmem:[#allocation2 + $0x28] sm:$0xff]
      %v3491 = vld [vmem:[#allocation2 + $0x30] sm:$0xff]
      %v3492 = vld [vmem:[#allocation2 + $0x38] sm:$0xff]
      %v3493 = vld [vmem:[#allocation2 + $0x40] sm:$0xff]
      %v3494 = vld [vmem:[#allocation2 + $0x48] sm:$0xff]
      %v3495 = vld [vmem:[#allocation2 + $0x50] sm:$0xff]
      %v3496 = vld [vmem:[#allocation2 + $0x58] sm:$0xff]
      %v3497 = vld [vmem:[#allocation2 + $0x60] sm:$0xff]
      %v3498 = vld [vmem:[#allocation2 + $0x68] sm:$0xff]
      %v3499 = vld [vmem:[#allocation2 + $0x70] sm:$0xff]
      %v3500 = vld [vmem:[#allocation2 + $0x78] sm:$0xff]
      %v3501 = vld [vmem:[#allocation2 + $0x80] sm:$0xff]
      %v3502 = vld [vmem:[#allocation2 + $0x88] sm:$0xff]
      %v3503 = vld [vmem:[#allocation2 + $0x90] sm:$0xff]
      %v3504 = vmul.bf16 %v3487, %v667
      %v3505 = vmul.bf16 %v3488, %v675
      %v3506 = vmul.bf16 %v3489, %v683
      %v3507 = vmul.bf16 %v3490, %v691
      %v3508 = vmul.bf16 %v3491, %v699
      %v3509 = vmul.bf16 %v3492, %v707
      %v3510 = vmul.bf16 %v3493, %v715
      %v3511 = vmul.bf16 %v3494, %v723
      %v3512 = vmul.bf16 %v3495, %v731
      %v3513 = vmul.bf16 %v3496, %v739
      %v3514 = vmul.bf16 %v3497, %v747
      %v3515 = vmul.bf16 %v3498, %v755
      %v3516 = vmul.bf16 %v3499, %v763
      %v3517 = vmul.bf16 %v3500, %v771
      %v3518 = vmul.bf16 %v3501, %v779
      %v3519 = vmul.bf16 %v3502, %v787
      %v3520 = vmul.bf16 %v3503, %v790
      %v3521 = vld [vmem:[%s1 + $0x18] sm:$0xf]
      %v3522 = vld [vmem:[#allocation4] sm:$0xff]
      %v3523 = vld [vmem:[#allocation4 + $0x8] sm:$0xff]
      %v3524 = vld [vmem:[#allocation4 + $0x10] sm:$0xff]
      %v3525 = vld [vmem:[#allocation4 + $0x18] sm:$0xff]
      %v3526 = vld [vmem:[#allocation4 + $0x20] sm:$0xff]
      %v3527 = vld [vmem:[#allocation4 + $0x28] sm:$0xff]
      %v3528 = vld [vmem:[#allocation4 + $0x30] sm:$0xff]
      %v3529 = vld [vmem:[#allocation4 + $0x38] sm:$0xff]
      %v3530 = vld [vmem:[#allocation4 + $0x40] sm:$0xff]
      %v3531 = vld [vmem:[#allocation4 + $0x48] sm:$0xff]
      %v3532 = vld [vmem:[#allocation4 + $0x50] sm:$0xff]
      %v3533 = vld [vmem:[#allocation4 + $0x58] sm:$0xff]
      %v3534 = vld [vmem:[#allocation4 + $0x60] sm:$0xff]
      %v3535 = vld [vmem:[#allocation4 + $0x68] sm:$0xff]
      %v3536 = vld [vmem:[#allocation4 + $0x70] sm:$0xff]
      %v3537 = vld [vmem:[#allocation4 + $0x78] sm:$0xff]
      %v3538 = vld [vmem:[#allocation4 + $0x80] sm:$0xff]
      %v3539 = vld [vmem:[#allocation4 + $0x88] sm:$0xff]
      %v3540 = vld [vmem:[#allocation4 + $0x90] sm:$0xff]
      %v3541 = vld [vmem:[#allocation4 + $0x98] sm:$0xff]
      %v3542 = vld [vmem:[#allocation4 + $0xa0] sm:$0xff]
      %v3543 = vld [vmem:[#allocation4 + $0xa8] sm:$0xff]
      %v3544 = vld [vmem:[#allocation4 + $0xb0] sm:$0xff]
      %v3545 = vld [vmem:[#allocation4 + $0xb8] sm:$0xff]
      %v3546 = vld [vmem:[#allocation4 + $0xc0] sm:$0xff]
      %v3547 = vld [vmem:[#allocation4 + $0xc8] sm:$0xff]
      %v3548 = vld [vmem:[#allocation4 + $0xd0] sm:$0xff]
      %v3549 = vld [vmem:[#allocation4 + $0xd8] sm:$0xff]
      %v3550 = vld [vmem:[#allocation4 + $0xe0] sm:$0xff]
      %v3551 = vld [vmem:[#allocation4 + $0xe8] sm:$0xff]
      %v3552 = vld [vmem:[#allocation4 + $0xf0] sm:$0xff]
      %v3553 = vld [vmem:[#allocation4 + $0xf8] sm:$0xff]
      %v3555 = vshrl.u32 %v3504, 16
      %v3557 = vrot.slane %v3555, 7
      %v3559 = vshrl.u32 %v3505, 16
      %v3561 = vrot.slane %v3559, 7
      %v3562 = vshll.u32 %v3505, 16
      %v3564 = vor.u32 %v3561, %v3562
      %v3565 = vsel %vm858, %v3557, %v3564
      %v3567 = vshrl.u32 %v3506, 16
      %v3569 = vrot.slane %v3567, 7
      %v3570 = vshll.u32 %v3506, 16
      %v3572 = vor.u32 %v3569, %v3570
      %v3573 = vsel %vm858, %v3561, %v3572
      %v3575 = vshrl.u32 %v3507, 16
      %v3577 = vrot.slane %v3575, 7
      %v3578 = vshll.u32 %v3507, 16
      %v3580 = vor.u32 %v3577, %v3578
      %v3581 = vsel %vm858, %v3569, %v3580
      %v3583 = vshrl.u32 %v3508, 16
      %v3585 = vrot.slane %v3583, 7
      %v3586 = vshll.u32 %v3508, 16
      %v3588 = vor.u32 %v3585, %v3586
      %v3589 = vsel %vm858, %v3577, %v3588
      %v3591 = vshrl.u32 %v3509, 16
      %v3593 = vrot.slane %v3591, 7
      %v3594 = vshll.u32 %v3509, 16
      %v3596 = vor.u32 %v3593, %v3594
      %v3597 = vsel %vm858, %v3585, %v3596
      %v3599 = vshrl.u32 %v3510, 16
      %v3601 = vrot.slane %v3599, 7
      %v3602 = vshll.u32 %v3510, 16
      %v3604 = vor.u32 %v3601, %v3602
      %v3605 = vsel %vm858, %v3593, %v3604
      %v3607 = vshrl.u32 %v3511, 16
      %v3609 = vrot.slane %v3607, 7
      %v3610 = vshll.u32 %v3511, 16
      %v3612 = vor.u32 %v3609, %v3610
      %v3613 = vsel %vm858, %v3601, %v3612
      %v3615 = vshrl.u32 %v3512, 16
      %v3617 = vrot.slane %v3615, 7
      %v3618 = vshll.u32 %v3512, 16
      %v3620 = vor.u32 %v3617, %v3618
      %v3621 = vsel %vm858, %v3609, %v3620
      %v3623 = vshrl.u32 %v3513, 16
      %v3625 = vrot.slane %v3623, 7
      %v3626 = vshll.u32 %v3513, 16
      %v3628 = vor.u32 %v3625, %v3626
      %v3629 = vsel %vm858, %v3617, %v3628
      %v3631 = vshrl.u32 %v3514, 16
      %v3633 = vrot.slane %v3631, 7
      %v3634 = vshll.u32 %v3514, 16
      %v3636 = vor.u32 %v3633, %v3634
      %v3637 = vsel %vm858, %v3625, %v3636
      %v3639 = vshrl.u32 %v3515, 16
      %v3641 = vrot.slane %v3639, 7
      %v3642 = vshll.u32 %v3515, 16
      %v3644 = vor.u32 %v3641, %v3642
      %v3645 = vsel %vm858, %v3633, %v3644
      %v3647 = vshrl.u32 %v3516, 16
      %v3649 = vrot.slane %v3647, 7
      %v3650 = vshll.u32 %v3516, 16
      %v3652 = vor.u32 %v3649, %v3650
      %v3653 = vsel %vm858, %v3641, %v3652
      %v3655 = vshrl.u32 %v3517, 16
      %v3657 = vrot.slane %v3655, 7
      %v3658 = vshll.u32 %v3517, 16
      %v3660 = vor.u32 %v3657, %v3658
      %v3661 = vsel %vm858, %v3649, %v3660
      %v3663 = vshrl.u32 %v3518, 16
      %v3665 = vrot.slane %v3663, 7
      %v3666 = vshll.u32 %v3518, 16
      %v3668 = vor.u32 %v3665, %v3666
      %v3669 = vsel %vm858, %v3657, %v3668
      %v3671 = vshrl.u32 %v3519, 16
      %v3673 = vrot.slane %v3671, 7
      %v3674 = vshll.u32 %v3519, 16
      %v3676 = vor.u32 %v3673, %v3674
      %v3677 = vsel %vm858, %v3665, %v3676
      %v3679 = vshrl.u32 %v3520, 16
      %v3681 = vrot.slane %v3679, 7
      %v3682 = vshll.u32 %v3520, 16
      %v3684 = vor.u32 %v3681, %v3682
      %v3685 = vsel %vm858, %v3673, %v3684
      %v3687 = vsel %vm172, %v3565, 0
      %v3690 = vsel %vm172, %v3573, 0
      %v3693 = vsel %vm172, %v3581, 0
      %v3696 = vsel %vm172, %v3589, 0
      %v3699 = vsel %vm172, %v3597, 0
      %v3702 = vsel %vm172, %v3605, 0
      %v3705 = vsel %vm172, %v3613, 0
      %v3708 = vsel %vm172, %v3621, 0
      %v3711 = vsel %vm172, %v3629, 0
      %v3714 = vsel %vm172, %v3637, 0
      %v3717 = vsel %vm172, %v3645, 0
      %v3720 = vsel %vm172, %v3653, 0
      %v3723 = vsel %vm172, %v3661, 0
      %v3726 = vsel %vm172, %v3669, 0
      %v3729 = vsel %vm172, %v3677, 0
      %v3732 = vsel %vm172, %v3685, 0
      %v3735 = vsel %vm1039, %v3521, 0
      %3737 = vmatprep.subr.bf16.mxu0 0
      %3738 = vmatpush1.bf16.msra.mxu0 %v3735
      %3739 = vmatprep.subr.bf16.mxu0 0
      %3740 = vmatpush1.bf16.msra.mxu0 0
      %3741 = vmatprep.subr.bf16.mxu0 0
      %3742 = vmatpush1.bf16.msra.mxu0 0
      %3743 = vmatprep.subr.bf16.mxu0 0
      %3744 = vmatpush1.bf16.msra.mxu0 0
      %3745 = vmatprep.subr.bf16.mxu0 0
      %3746 = vmatpush1.bf16.msra.mxu0 0
      %3747 = vmatprep.subr.bf16.mxu0 0
      %3748 = vmatpush1.bf16.msra.mxu0 0
      %3749 = vmatprep.subr.bf16.mxu0 0
      %3750 = vmatpush1.bf16.msra.mxu0 0
      %3751 = vmatprep.subr.bf16.mxu0 0
      %3752 = vmatpush1.bf16.msra.mxu0 0
      %3753 = vmatprep.subr.bf16.mxu0 0
      %3754 = vmatpush1.bf16.msra.mxu0 0
      %3755 = vmatprep.subr.bf16.mxu0 0
      %3756 = vmatpush1.bf16.msra.mxu0 0
      %3757 = vmatprep.subr.bf16.mxu0 0
      %3758 = vmatpush1.bf16.msra.mxu0 0
      %3759 = vmatprep.subr.bf16.mxu0 0
      %3760 = vmatpush1.bf16.msra.mxu0 0
      %3761 = vmatprep.subr.bf16.mxu0 0
      %3762 = vmatpush1.bf16.msra.mxu0 0
      %3763 = vmatprep.subr.bf16.mxu0 0
      %3764 = vmatpush1.bf16.msra.mxu0 0
      %3765 = vmatprep.subr.bf16.mxu0 0
      %3766 = vmatpush1.bf16.msra.mxu0 0
      %3767 = vmatprep.subr.bf16.mxu0 0
      %3768 = vmatpush1.bf16.msra.mxu0 0
      %3769 = vmatprep.mubr.bf16.mxu0 0
      %3770 = vmatmul.mubr.bf16.gmra.mrb[0].mxu0 %v3687
      %v3771 = vpop.f32.mrb[0].mxu0
      %v3772 = vadd.f32 0.0, %v3771
      %v3773 = vpop.f32.mrb[0].mxu0
      %v3774 = vpop.f32.mrb[0].mxu0
      %v3775 = vadd.f32 0.0, %v3774
      %v3776 = vpop.f32.mrb[0].mxu0
      %3777 = vmatprep.mubr.bf16.mxu0 0
      %3778 = vmatmul.mubr.bf16.gmra.mrb[0].mxu0 %v3690
      %v3779 = vpop.f32.mrb[0].mxu0
      %v3780 = vadd.f32 0.0, %v3779
      %v3781 = vpop.f32.mrb[0].mxu0
      %v3782 = vpop.f32.mrb[0].mxu0
      %v3783 = vadd.f32 0.0, %v3782
      %v3784 = vpop.f32.mrb[0].mxu0
      %3785 = vmatprep.mubr.bf16.mxu0 0
      %3786 = vmatmul.mubr.bf16.gmra.mrb[0].mxu0 %v3693
      %v3787 = vpop.f32.mrb[0].mxu0
      %v3788 = vadd.f32 0.0, %v3787
      %v3789 = vpop.f32.mrb[0].mxu0
      %v3790 = vpop.f32.mrb[0].mxu0
      %v3791 = vadd.f32 0.0, %v3790
      %v3792 = vpop.f32.mrb[0].mxu0
      %3793 = vmatprep.mubr.bf16.mxu0 0
      %3794 = vmatmul.mubr.bf16.gmra.mrb[0].mxu0 %v3696
      %v3795 = vpop.f32.mrb[0].mxu0
      %v3796 = vadd.f32 0.0, %v3795
      %v3797 = vpop.f32.mrb[0].mxu0
      %v3798 = vpop.f32.mrb[0].mxu0
      %v3799 = vadd.f32 0.0, %v3798
      %v3800 = vpop.f32.mrb[0].mxu0
      %3801 = vmatprep.mubr.bf16.mxu0 0
      %3802 = vmatmul.mubr.bf16.gmra.mrb[0].mxu0 %v3699
      %v3803 = vpop.f32.mrb[0].mxu0
      %v3804 = vadd.f32 0.0, %v3803
      %v3805 = vpop.f32.mrb[0].mxu0
      %v3806 = vpop.f32.mrb[0].mxu0
      %v3807 = vadd.f32 0.0, %v3806
      %v3808 = vpop.f32.mrb[0].mxu0
      %3809 = vmatprep.mubr.bf16.mxu0 0
      %3810 = vmatmul.mubr.bf16.gmra.mrb[0].mxu0 %v3702
      %v3811 = vpop.f32.mrb[0].mxu0
      %v3812 = vadd.f32 0.0, %v3811
      %v3813 = vpop.f32.mrb[0].mxu0
      %v3814 = vpop.f32.mrb[0].mxu0
      %v3815 = vadd.f32 0.0, %v3814
      %v3816 = vpop.f32.mrb[0].mxu0
      %3817 = vmatprep.mubr.bf16.mxu0 0
      %3818 = vmatmul.mubr.bf16.gmra.mrb[0].mxu0 %v3705
      %v3819 = vpop.f32.mrb[0].mxu0
      %v3820 = vadd.f32 0.0, %v3819
      %v3821 = vpop.f32.mrb[0].mxu0
      %v3822 = vpop.f32.mrb[0].mxu0
      %v3823 = vadd.f32 0.0, %v3822
      %v3824 = vpop.f32.mrb[0].mxu0
      %3825 = vmatprep.mubr.bf16.mxu0 0
      %3826 = vmatmul.mubr.bf16.gmra.mrb[0].mxu0 %v3708
      %v3827 = vpop.f32.mrb[0].mxu0
      %v3828 = vadd.f32 0.0, %v3827
      %v3829 = vpop.f32.mrb[0].mxu0
      %v3830 = vpop.f32.mrb[0].mxu0
      %v3831 = vadd.f32 0.0, %v3830
      %v3832 = vpop.f32.mrb[0].mxu0
      %3833 = vmatprep.mubr.bf16.mxu0 0
      %3834 = vmatmul.mubr.bf16.gmra.mrb[0].mxu0 %v3711
      %v3835 = vpop.f32.mrb[0].mxu0
      %v3836 = vadd.f32 0.0, %v3835
      %v3837 = vpop.f32.mrb[0].mxu0
      %v3838 = vpop.f32.mrb[0].mxu0
      %v3839 = vadd.f32 0.0, %v3838
      %v3840 = vpop.f32.mrb[0].mxu0
      %3841 = vmatprep.mubr.bf16.mxu0 0
      %3842 = vmatmul.mubr.bf16.gmra.mrb[0].mxu0 %v3714
      %v3843 = vpop.f32.mrb[0].mxu0
      %v3844 = vadd.f32 0.0, %v3843
      %v3845 = vpop.f32.mrb[0].mxu0
      %v3846 = vpop.f32.mrb[0].mxu0
      %v3847 = vadd.f32 0.0, %v3846
      %v3848 = vpop.f32.mrb[0].mxu0
      %3849 = vmatprep.mubr.bf16.mxu0 0
      %3850 = vmatmul.mubr.bf16.gmra.mrb[0].mxu0 %v3717
      %v3851 = vpop.f32.mrb[0].mxu0
      %v3852 = vadd.f32 0.0, %v3851
      %v3853 = vpop.f32.mrb[0].mxu0
      %v3854 = vpop.f32.mrb[0].mxu0
      %v3855 = vadd.f32 0.0, %v3854
      %v3856 = vpop.f32.mrb[0].mxu0
      %3857 = vmatprep.mubr.bf16.mxu0 0
      %3858 = vmatmul.mubr.bf16.gmra.mrb[0].mxu0 %v3720
      %v3859 = vpop.f32.mrb[0].mxu0
      %v3860 = vadd.f32 0.0, %v3859
      %v3861 = vpop.f32.mrb[0].mxu0
      %v3862 = vpop.f32.mrb[0].mxu0
      %v3863 = vadd.f32 0.0, %v3862
      %v3864 = vpop.f32.mrb[0].mxu0
      %3865 = vmatprep.mubr.bf16.mxu0 0
      %3866 = vmatmul.mubr.bf16.gmra.mrb[0].mxu0 %v3723
      %v3867 = vpop.f32.mrb[0].mxu0
      %v3868 = vadd.f32 0.0, %v3867
      %v3869 = vpop.f32.mrb[0].mxu0
      %v3870 = vpop.f32.mrb[0].mxu0
      %v3871 = vadd.f32 0.0, %v3870
      %v3872 = vpop.f32.mrb[0].mxu0
      %3873 = vmatprep.mubr.bf16.mxu0 0
      %3874 = vmatmul.mubr.bf16.gmra.mrb[0].mxu0 %v3726
      %v3875 = vpop.f32.mrb[0].mxu0
      %v3876 = vadd.f32 0.0, %v3875
      %v3877 = vpop.f32.mrb[0].mxu0
      %v3878 = vpop.f32.mrb[0].mxu0
      %v3879 = vadd.f32 0.0, %v3878
      %v3880 = vpop.f32.mrb[0].mxu0
      %3881 = vmatprep.mubr.bf16.mxu0 0
      %3882 = vmatmul.mubr.bf16.gmra.mrb[0].mxu0 %v3729
      %v3883 = vpop.f32.mrb[0].mxu0
      %v3884 = vadd.f32 0.0, %v3883
      %v3885 = vpop.f32.mrb[0].mxu0
      %v3886 = vpop.f32.mrb[0].mxu0
      %v3887 = vadd.f32 0.0, %v3886
      %v3888 = vpop.f32.mrb[0].mxu0
      %3889 = vmatprep.mubr.bf16.mxu0 0
      %3890 = vmatmul.mubr.bf16.gmra.mrb[0].mxu0 %v3732
      %v3891 = vpop.f32.mrb[0].mxu0
      %v3892 = vadd.f32 0.0, %v3891
      %v3893 = vpop.f32.mrb[0].mxu0
      %v3894 = vpop.f32.mrb[0].mxu0
      %v3895 = vadd.f32 0.0, %v3894
      %v3896 = vpop.f32.mrb[0].mxu0
      %3897 = vdwg.mxu0
      %v3898 = vadd.f32 %v3522, %v3772
      %v3899 = vadd.f32 %v3523, %v3775
      %v3900 = vadd.f32 %v3524, %v3780
      %v3901 = vadd.f32 %v3525, %v3783
      %v3902 = vadd.f32 %v3526, %v3788
      %v3903 = vadd.f32 %v3527, %v3791
      %v3904 = vadd.f32 %v3528, %v3796
      %v3905 = vadd.f32 %v3529, %v3799
      %v3906 = vadd.f32 %v3530, %v3804
      %v3907 = vadd.f32 %v3531, %v3807
      %v3908 = vadd.f32 %v3532, %v3812
      %v3909 = vadd.f32 %v3533, %v3815
      %v3910 = vadd.f32 %v3534, %v3820
      %v3911 = vadd.f32 %v3535, %v3823
      %v3912 = vadd.f32 %v3536, %v3828
      %v3913 = vadd.f32 %v3537, %v3831
      %v3914 = vadd.f32 %v3538, %v3836
      %v3915 = vadd.f32 %v3539, %v3839
      %v3916 = vadd.f32 %v3540, %v3844
      %v3917 = vadd.f32 %v3541, %v3847
      %v3918 = vadd.f32 %v3542, %v3852
      %v3919 = vadd.f32 %v3543, %v3855
      %v3920 = vadd.f32 %v3544, %v3860
      %v3921 = vadd.f32 %v3545, %v3863
      %v3922 = vadd.f32 %v3546, %v3868
      %v3923 = vadd.f32 %v3547, %v3871
      %v3924 = vadd.f32 %v3548, %v3876
      %v3925 = vadd.f32 %v3549, %v3879
      %v3926 = vadd.f32 %v3550, %v3884
      %v3927 = vadd.f32 %v3551, %v3887
      %v3928 = vadd.f32 %v3552, %v3892
      %v3929 = vadd.f32 %v3553, %v3895
      %3930 = vst.msk [vmem:[#allocation4] sm:$0xff] %vm172, %v3898
      %3931 = vst.msk [vmem:[#allocation4 + $0x8] sm:$0xff] %vm172, %v3899
      %3932 = vst.msk [vmem:[#allocation4 + $0x10] sm:$0xff] %vm172, %v3900
      %3933 = vst.msk [vmem:[#allocation4 + $0x18] sm:$0xff] %vm172, %v3901
      %3934 = vst.msk [vmem:[#allocation4 + $0x20] sm:$0xff] %vm172, %v3902
      %3935 = vst.msk [vmem:[#allocation4 + $0x28] sm:$0xff] %vm172, %v3903
      %3936 = vst.msk [vmem:[#allocation4 + $0x30] sm:$0xff] %vm172, %v3904
      %3937 = vst.msk [vmem:[#allocation4 + $0x38] sm:$0xff] %vm172, %v3905
      %3938 = vst.msk [vmem:[#allocation4 + $0x40] sm:$0xff] %vm172, %v3906
      %3939 = vst.msk [vmem:[#allocation4 + $0x48] sm:$0xff] %vm172, %v3907
      %3940 = vst.msk [vmem:[#allocation4 + $0x50] sm:$0xff] %vm172, %v3908
      %3941 = vst.msk [vmem:[#allocation4 + $0x58] sm:$0xff] %vm172, %v3909
      %3942 = vst.msk [vmem:[#allocation4 + $0x60] sm:$0xff] %vm172, %v3910
      %3943 = vst.msk [vmem:[#allocation4 + $0x68] sm:$0xff] %vm172, %v3911
      %3944 = vst.msk [vmem:[#allocation4 + $0x70] sm:$0xff] %vm172, %v3912
      %3945 = vst.msk [vmem:[#allocation4 + $0x78] sm:$0xff] %vm172, %v3913
      %3946 = vst.msk [vmem:[#allocation4 + $0x80] sm:$0xff] %vm172, %v3914
      %3947 = vst.msk [vmem:[#allocation4 + $0x88] sm:$0xff] %vm172, %v3915
      %3948 = vst.msk [vmem:[#allocation4 + $0x90] sm:$0xff] %vm172, %v3916
      %3949 = vst.msk [vmem:[#allocation4 + $0x98] sm:$0xff] %vm172, %v3917
      %3950 = vst.msk [vmem:[#allocation4 + $0xa0] sm:$0xff] %vm172, %v3918
      %3951 = vst.msk [vmem:[#allocation4 + $0xa8] sm:$0xff] %vm172, %v3919
      %3952 = vst.msk [vmem:[#allocation4 + $0xb0] sm:$0xff] %vm172, %v3920
      %3953 = vst.msk [vmem:[#allocation4 + $0xb8] sm:$0xff] %vm172, %v3921
      %3954 = vst.msk [vmem:[#allocation4 + $0xc0] sm:$0xff] %vm172, %v3922
      %3955 = vst.msk [vmem:[#allocation4 + $0xc8] sm:$0xff] %vm172, %v3923
      %3956 = vst.msk [vmem:[#allocation4 + $0xd0] sm:$0xff] %vm172, %v3924
      %3957 = vst.msk [vmem:[#allocation4 + $0xd8] sm:$0xff] %vm172, %v3925
      %3958 = vst.msk [vmem:[#allocation4 + $0xe0] sm:$0xff] %vm172, %v3926
      %3959 = vst.msk [vmem:[#allocation4 + $0xe8] sm:$0xff] %vm172, %v3927
      %3960 = vst.msk [vmem:[#allocation4 + $0xf0] sm:$0xff] %vm172, %v3928
      %3961 = vst.msk [vmem:[#allocation4 + $0xf8] sm:$0xff] %vm172, %v3929
      %v3962 = vld [vmem:[#allocation2 + $0x18] sm:$0xff]
      %v3963 = vld [vmem:[#allocation2 + $0x20] sm:$0xff]
      %v3964 = vld [vmem:[#allocation2 + $0x28] sm:$0xff]
      %v3965 = vld [vmem:[#allocation2 + $0x30] sm:$0xff]
      %v3966 = vld [vmem:[#allocation2 + $0x38] sm:$0xff]
      %v3967 = vld [vmem:[#allocation2 + $0x40] sm:$0xff]
      %v3968 = vld [vmem:[#allocation2 + $0x48] sm:$0xff]
      %v3969 = vld [vmem:[#allocation2 + $0x50] sm:$0xff]
      %v3970 = vld [vmem:[#allocation2 + $0x58] sm:$0xff]
      %v3971 = vld [vmem:[#allocation2 + $0x60] sm:$0xff]
      %v3972 = vld [vmem:[#allocation2 + $0x68] sm:$0xff]
      %v3973 = vld [vmem:[#allocation2 + $0x70] sm:$0xff]
      %v3974 = vld [vmem:[#allocation2 + $0x78] sm:$0xff]
      %v3975 = vld [vmem:[#allocation2 + $0x80] sm:$0xff]
      %v3976 = vld [vmem:[#allocation2 + $0x88] sm:$0xff]
      %v3977 = vld [vmem:[#allocation2 + $0x90] sm:$0xff]
      %v3978 = vld [vmem:[%s1 + $0x1c] sm:$0xf]
      %v3979 = vld [vmem:[#allocation4] sm:$0xff]
      %v3980 = vld [vmem:[#allocation4 + $0x8] sm:$0xff]
      %v3981 = vld [vmem:[#allocation4 + $0x10] sm:$0xff]
      %v3982 = vld [vmem:[#allocation4 + $0x18] sm:$0xff]
      %v3983 = vld [vmem:[#allocation4 + $0x20] sm:$0xff]
      %v3984 = vld [vmem:[#allocation4 + $0x28] sm:$0xff]
      %v3985 = vld [vmem:[#allocation4 + $0x30] sm:$0xff]
      %v3986 = vld [vmem:[#allocation4 + $0x38] sm:$0xff]
      %v3987 = vld [vmem:[#allocation4 + $0x40] sm:$0xff]
      %v3988 = vld [vmem:[#allocation4 + $0x48] sm:$0xff]
      %v3989 = vld [vmem:[#allocation4 + $0x50] sm:$0xff]
      %v3990 = vld [vmem:[#allocation4 + $0x58] sm:$0xff]
      %v3991 = vld [vmem:[#allocation4 + $0x60] sm:$0xff]
      %v3992 = vld [vmem:[#allocation4 + $0x68] sm:$0xff]
      %v3993 = vld [vmem:[#allocation4 + $0x70] sm:$0xff]
      %v3994 = vld [vmem:[#allocation4 + $0x78] sm:$0xff]
      %v3995 = vld [vmem:[#allocation4 + $0x80] sm:$0xff]
      %v3996 = vld [vmem:[#allocation4 + $0x88] sm:$0xff]
      %v3997 = vld [vmem:[#allocation4 + $0x90] sm:$0xff]
      %v3998 = vld [vmem:[#allocation4 + $0x98] sm:$0xff]
      %v3999 = vld [vmem:[#allocation4 + $0xa0] sm:$0xff]
      %v4000 = vld [vmem:[#allocation4 + $0xa8] sm:$0xff]
      %v4001 = vld [vmem:[#allocation4 + $0xb0] sm:$0xff]
      %v4002 = vld [vmem:[#allocation4 + $0xb8] sm:$0xff]
      %v4003 = vld [vmem:[#allocation4 + $0xc0] sm:$0xff]
      %v4004 = vld [vmem:[#allocation4 + $0xc8] sm:$0xff]
      %v4005 = vld [vmem:[#allocation4 + $0xd0] sm:$0xff]
      %v4006 = vld [vmem:[#allocation4 + $0xd8] sm:$0xff]
      %v4007 = vld [vmem:[#allocation4 + $0xe0] sm:$0xff]
      %v4008 = vld [vmem:[#allocation4 + $0xe8] sm:$0xff]
      %v4009 = vld [vmem:[#allocation4 + $0xf0] sm:$0xff]
      %v4010 = vld [vmem:[#allocation4 + $0xf8] sm:$0xff]
      %v4012 = vsel %vm172, %v3962, 0
      %v4015 = vsel %vm172, %v3963, 0
      %v4018 = vsel %vm172, %v3964, 0
      %v4021 = vsel %vm172, %v3965, 0
      %v4024 = vsel %vm172, %v3966, 0
      %v4027 = vsel %vm172, %v3967, 0
      %v4030 = vsel %vm172, %v3968, 0
      %v4033 = vsel %vm172, %v3969, 0
      %v4036 = vsel %vm172, %v3970, 0
      %v4039 = vsel %vm172, %v3971, 0
      %v4042 = vsel %vm172, %v3972, 0
      %v4045 = vsel %vm172, %v3973, 0
      %v4048 = vsel %vm172, %v3974, 0
      %v4051 = vsel %vm172, %v3975, 0
      %v4054 = vsel %vm172, %v3976, 0
      %v4057 = vsel %vm172, %v3977, 0
      %v4060 = vsel %vm1039, %v3978, 0
      %4062 = vmatprep.subr.bf16.mxu0 0
      %4063 = vmatpush1.bf16.msra.mxu0 %v4060
      %4064 = vmatprep.subr.bf16.mxu0 0
      %4065 = vmatpush1.bf16.msra.mxu0 0
      %4066 = vmatprep.subr.bf16.mxu0 0
      %4067 = vmatpush1.bf16.msra.mxu0 0
      %4068 = vmatprep.subr.bf16.mxu0 0
      %4069 = vmatpush1.bf16.msra.mxu0 0
      %4070 = vmatprep.subr.bf16.mxu0 0
      %4071 = vmatpush1.bf16.msra.mxu0 0
      %4072 = vmatprep.subr.bf16.mxu0 0
      %4073 = vmatpush1.bf16.msra.mxu0 0
      %4074 = vmatprep.subr.bf16.mxu0 0
      %4075 = vmatpush1.bf16.msra.mxu0 0
      %4076 = vmatprep.subr.bf16.mxu0 0
      %4077 = vmatpush1.bf16.msra.mxu0 0
      %4078 = vmatprep.subr.bf16.mxu0 0
      %4079 = vmatpush1.bf16.msra.mxu0 0
      %4080 = vmatprep.subr.bf16.mxu0 0
      %4081 = vmatpush1.bf16.msra.mxu0 0
      %4082 = vmatprep.subr.bf16.mxu0 0
      %4083 = vmatpush1.bf16.msra.mxu0 0
      %4084 = vmatprep.subr.bf16.mxu0 0
      %4085 = vmatpush1.bf16.msra.mxu0 0
      %4086 = vmatprep.subr.bf16.mxu0 0
      %4087 = vmatpush1.bf16.msra.mxu0 0
      %4088 = vmatprep.subr.bf16.mxu0 0
      %4089 = vmatpush1.bf16.msra.mxu0 0
      %4090 = vmatprep.subr.bf16.mxu0 0
      %4091 = vmatpush1.bf16.msra.mxu0 0
      %4092 = vmatprep.subr.bf16.mxu0 0
      %4093 = vmatpush1.bf16.msra.mxu0 0
      %4094 = vmatprep.mubr.bf16.mxu0 0
      %4095 = vmatmul.mubr.bf16.gmra.mrb[0].mxu0 %v4012
      %v4096 = vpop.f32.mrb[0].mxu0
      %v4097 = vadd.f32 0.0, %v4096
      %v4098 = vpop.f32.mrb[0].mxu0
      %v4099 = vpop.f32.mrb[0].mxu0
      %v4100 = vadd.f32 0.0, %v4099
      %v4101 = vpop.f32.mrb[0].mxu0
      %4102 = vmatprep.mubr.bf16.mxu0 0
      %4103 = vmatmul.mubr.bf16.gmra.mrb[0].mxu0 %v4015
      %v4104 = vpop.f32.mrb[0].mxu0
      %v4105 = vadd.f32 0.0, %v4104
      %v4106 = vpop.f32.mrb[0].mxu0
      %v4107 = vpop.f32.mrb[0].mxu0
      %v4108 = vadd.f32 0.0, %v4107
      %v4109 = vpop.f32.mrb[0].mxu0
      %4110 = vmatprep.mubr.bf16.mxu0 0
      %4111 = vmatmul.mubr.bf16.gmra.mrb[0].mxu0 %v4018
      %v4112 = vpop.f32.mrb[0].mxu0
      %v4113 = vadd.f32 0.0, %v4112
      %v4114 = vpop.f32.mrb[0].mxu0
      %v4115 = vpop.f32.mrb[0].mxu0
      %v4116 = vadd.f32 0.0, %v4115
      %v4117 = vpop.f32.mrb[0].mxu0
      %4118 = vmatprep.mubr.bf16.mxu0 0
      %4119 = vmatmul.mubr.bf16.gmra.mrb[0].mxu0 %v4021
      %v4120 = vpop.f32.mrb[0].mxu0
      %v4121 = vadd.f32 0.0, %v4120
      %v4122 = vpop.f32.mrb[0].mxu0
      %v4123 = vpop.f32.mrb[0].mxu0
      %v4124 = vadd.f32 0.0, %v4123
      %v4125 = vpop.f32.mrb[0].mxu0
      %4126 = vmatprep.mubr.bf16.mxu0 0
      %4127 = vmatmul.mubr.bf16.gmra.mrb[0].mxu0 %v4024
      %v4128 = vpop.f32.mrb[0].mxu0
      %v4129 = vadd.f32 0.0, %v4128
      %v4130 = vpop.f32.mrb[0].mxu0
      %v4131 = vpop.f32.mrb[0].mxu0
      %v4132 = vadd.f32 0.0, %v4131
      %v4133 = vpop.f32.mrb[0].mxu0
      %4134 = vmatprep.mubr.bf16.mxu0 0
      %4135 = vmatmul.mubr.bf16.gmra.mrb[0].mxu0 %v4027
      %v4136 = vpop.f32.mrb[0].mxu0
      %v4137 = vadd.f32 0.0, %v4136
      %v4138 = vpop.f32.mrb[0].mxu0
      %v4139 = vpop.f32.mrb[0].mxu0
      %v4140 = vadd.f32 0.0, %v4139
      %v4141 = vpop.f32.mrb[0].mxu0
      %4142 = vmatprep.mubr.bf16.mxu0 0
      %4143 = vmatmul.mubr.bf16.gmra.mrb[0].mxu0 %v4030
      %v4144 = vpop.f32.mrb[0].mxu0
      %v4145 = vadd.f32 0.0, %v4144
      %v4146 = vpop.f32.mrb[0].mxu0
      %v4147 = vpop.f32.mrb[0].mxu0
      %v4148 = vadd.f32 0.0, %v4147
      %v4149 = vpop.f32.mrb[0].mxu0
      %4150 = vmatprep.mubr.bf16.mxu0 0
      %4151 = vmatmul.mubr.bf16.gmra.mrb[0].mxu0 %v4033
      %v4152 = vpop.f32.mrb[0].mxu0
      %v4153 = vadd.f32 0.0, %v4152
      %v4154 = vpop.f32.mrb[0].mxu0
      %v4155 = vpop.f32.mrb[0].mxu0
      %v4156 = vadd.f32 0.0, %v4155
      %v4157 = vpop.f32.mrb[0].mxu0
      %4158 = vmatprep.mubr.bf16.mxu0 0
      %4159 = vmatmul.mubr.bf16.gmra.mrb[0].mxu0 %v4036
      %v4160 = vpop.f32.mrb[0].mxu0
      %v4161 = vadd.f32 0.0, %v4160
      %v4162 = vpop.f32.mrb[0].mxu0
      %v4163 = vpop.f32.mrb[0].mxu0
      %v4164 = vadd.f32 0.0, %v4163
      %v4165 = vpop.f32.mrb[0].mxu0
      %4166 = vmatprep.mubr.bf16.mxu0 0
      %4167 = vmatmul.mubr.bf16.gmra.mrb[0].mxu0 %v4039
      %v4168 = vpop.f32.mrb[0].mxu0
      %v4169 = vadd.f32 0.0, %v4168
      %v4170 = vpop.f32.mrb[0].mxu0
      %v4171 = vpop.f32.mrb[0].mxu0
      %v4172 = vadd.f32 0.0, %v4171
      %v4173 = vpop.f32.mrb[0].mxu0
      %4174 = vmatprep.mubr.bf16.mxu0 0
      %4175 = vmatmul.mubr.bf16.gmra.mrb[0].mxu0 %v4042
      %v4176 = vpop.f32.mrb[0].mxu0
      %v4177 = vadd.f32 0.0, %v4176
      %v4178 = vpop.f32.mrb[0].mxu0
      %v4179 = vpop.f32.mrb[0].mxu0
      %v4180 = vadd.f32 0.0, %v4179
      %v4181 = vpop.f32.mrb[0].mxu0
      %4182 = vmatprep.mubr.bf16.mxu0 0
      %4183 = vmatmul.mubr.bf16.gmra.mrb[0].mxu0 %v4045
      %v4184 = vpop.f32.mrb[0].mxu0
      %v4185 = vadd.f32 0.0, %v4184
      %v4186 = vpop.f32.mrb[0].mxu0
      %v4187 = vpop.f32.mrb[0].mxu0
      %v4188 = vadd.f32 0.0, %v4187
      %v4189 = vpop.f32.mrb[0].mxu0
      %4190 = vmatprep.mubr.bf16.mxu0 0
      %4191 = vmatmul.mubr.bf16.gmra.mrb[0].mxu0 %v4048
      %v4192 = vpop.f32.mrb[0].mxu0
      %v4193 = vadd.f32 0.0, %v4192
      %v4194 = vpop.f32.mrb[0].mxu0
      %v4195 = vpop.f32.mrb[0].mxu0
      %v4196 = vadd.f32 0.0, %v4195
      %v4197 = vpop.f32.mrb[0].mxu0
      %4198 = vmatprep.mubr.bf16.mxu0 0
      %4199 = vmatmul.mubr.bf16.gmra.mrb[0].mxu0 %v4051
      %v4200 = vpop.f32.mrb[0].mxu0
      %v4201 = vadd.f32 0.0, %v4200
      %v4202 = vpop.f32.mrb[0].mxu0
      %v4203 = vpop.f32.mrb[0].mxu0
      %v4204 = vadd.f32 0.0, %v4203
      %v4205 = vpop.f32.mrb[0].mxu0
      %4206 = vmatprep.mubr.bf16.mxu0 0
      %4207 = vmatmul.mubr.bf16.gmra.mrb[0].mxu0 %v4054
      %v4208 = vpop.f32.mrb[0].mxu0
      %v4209 = vadd.f32 0.0, %v4208
      %v4210 = vpop.f32.mrb[0].mxu0
      %v4211 = vpop.f32.mrb[0].mxu0
      %v4212 = vadd.f32 0.0, %v4211
      %v4213 = vpop.f32.mrb[0].mxu0
      %4214 = vmatprep.mubr.bf16.mxu0 0
      %4215 = vmatmul.mubr.bf16.gmra.mrb[0].mxu0 %v4057
      %v4216 = vpop.f32.mrb[0].mxu0
      %v4217 = vadd.f32 0.0, %v4216
      %v4218 = vpop.f32.mrb[0].mxu0
      %v4219 = vpop.f32.mrb[0].mxu0
      %v4220 = vadd.f32 0.0, %v4219
      %v4221 = vpop.f32.mrb[0].mxu0
      %4222 = vdwg.mxu0
      %v4223 = vadd.f32 %v3979, %v4097
      %v4224 = vadd.f32 %v3980, %v4100
      %v4225 = vadd.f32 %v3981, %v4105
      %v4226 = vadd.f32 %v3982, %v4108
      %v4227 = vadd.f32 %v3983, %v4113
      %v4228 = vadd.f32 %v3984, %v4116
      %v4229 = vadd.f32 %v3985, %v4121
      %v4230 = vadd.f32 %v3986, %v4124
      %v4231 = vadd.f32 %v3987, %v4129
      %v4232 = vadd.f32 %v3988, %v4132
      %v4233 = vadd.f32 %v3989, %v4137
      %v4234 = vadd.f32 %v3990, %v4140
      %v4235 = vadd.f32 %v3991, %v4145
      %v4236 = vadd.f32 %v3992, %v4148
      %v4237 = vadd.f32 %v3993, %v4153
      %v4238 = vadd.f32 %v3994, %v4156
      %v4239 = vadd.f32 %v3995, %v4161
      %v4240 = vadd.f32 %v3996, %v4164
      %v4241 = vadd.f32 %v3997, %v4169
      %v4242 = vadd.f32 %v3998, %v4172
      %v4243 = vadd.f32 %v3999, %v4177
      %v4244 = vadd.f32 %v4000, %v4180
      %v4245 = vadd.f32 %v4001, %v4185
      %v4246 = vadd.f32 %v4002, %v4188
      %v4247 = vadd.f32 %v4003, %v4193
      %v4248 = vadd.f32 %v4004, %v4196
      %v4249 = vadd.f32 %v4005, %v4201
      %v4250 = vadd.f32 %v4006, %v4204
      %v4251 = vadd.f32 %v4007, %v4209
      %v4252 = vadd.f32 %v4008, %v4212
      %v4253 = vadd.f32 %v4009, %v4217
      %v4254 = vadd.f32 %v4010, %v4220
      %4255 = vst.msk [vmem:[#allocation4] sm:$0xff] %vm172, %v4223
      %4256 = vst.msk [vmem:[#allocation4 + $0x8] sm:$0xff] %vm172, %v4224
      %4257 = vst.msk [vmem:[#allocation4 + $0x10] sm:$0xff] %vm172, %v4225
      %4258 = vst.msk [vmem:[#allocation4 + $0x18] sm:$0xff] %vm172, %v4226
      %4259 = vst.msk [vmem:[#allocation4 + $0x20] sm:$0xff] %vm172, %v4227
      %4260 = vst.msk [vmem:[#allocation4 + $0x28] sm:$0xff] %vm172, %v4228
      %4261 = vst.msk [vmem:[#allocation4 + $0x30] sm:$0xff] %vm172, %v4229
      %4262 = vst.msk [vmem:[#allocation4 + $0x38] sm:$0xff] %vm172, %v4230
      %4263 = vst.msk [vmem:[#allocation4 + $0x40] sm:$0xff] %vm172, %v4231
      %4264 = vst.msk [vmem:[#allocation4 + $0x48] sm:$0xff] %vm172, %v4232
      %4265 = vst.msk [vmem:[#allocation4 + $0x50] sm:$0xff] %vm172, %v4233
      %4266 = vst.msk [vmem:[#allocation4 + $0x58] sm:$0xff] %vm172, %v4234
      %4267 = vst.msk [vmem:[#allocation4 + $0x60] sm:$0xff] %vm172, %v4235
      %4268 = vst.msk [vmem:[#allocation4 + $0x68] sm:$0xff] %vm172, %v4236
      %4269 = vst.msk [vmem:[#allocation4 + $0x70] sm:$0xff] %vm172, %v4237
      %4270 = vst.msk [vmem:[#allocation4 + $0x78] sm:$0xff] %vm172, %v4238
      %4271 = vst.msk [vmem:[#allocation4 + $0x80] sm:$0xff] %vm172, %v4239
      %4272 = vst.msk [vmem:[#allocation4 + $0x88] sm:$0xff] %vm172, %v4240
      %4273 = vst.msk [vmem:[#allocation4 + $0x90] sm:$0xff] %vm172, %v4241
      %4274 = vst.msk [vmem:[#allocation4 + $0x98] sm:$0xff] %vm172, %v4242
      %4275 = vst.msk [vmem:[#allocation4 + $0xa0] sm:$0xff] %vm172, %v4243
      %4276 = vst.msk [vmem:[#allocation4 + $0xa8] sm:$0xff] %vm172, %v4244
      %4277 = vst.msk [vmem:[#allocation4 + $0xb0] sm:$0xff] %vm172, %v4245
      %4278 = vst.msk [vmem:[#allocation4 + $0xb8] sm:$0xff] %vm172, %v4246
      %4279 = vst.msk [vmem:[#allocation4 + $0xc0] sm:$0xff] %vm172, %v4247
      %4280 = vst.msk [vmem:[#allocation4 + $0xc8] sm:$0xff] %vm172, %v4248
      %4281 = vst.msk [vmem:[#allocation4 + $0xd0] sm:$0xff] %vm172, %v4249
      %4282 = vst.msk [vmem:[#allocation4 + $0xd8] sm:$0xff] %vm172, %v4250
      %4283 = vst.msk [vmem:[#allocation4 + $0xe0] sm:$0xff] %vm172, %v4251
      %4284 = vst.msk [vmem:[#allocation4 + $0xe8] sm:$0xff] %vm172, %v4252
      %4285 = vst.msk [vmem:[#allocation4 + $0xf0] sm:$0xff] %vm172, %v4253
      %4286 = vst.msk [vmem:[#allocation4 + $0xf8] sm:$0xff] %vm172, %v4254
      %v4287 = vld [vmem:[#allocation2 + $0x18] sm:$0xff]
      %v4288 = vld [vmem:[#allocation2 + $0x20] sm:$0xff]
      %v4289 = vld [vmem:[#allocation2 + $0x28] sm:$0xff]
      %v4290 = vld [vmem:[#allocation2 + $0x30] sm:$0xff]
      %v4291 = vld [vmem:[#allocation2 + $0x38] sm:$0xff]
      %v4292 = vld [vmem:[#allocation2 + $0x40] sm:$0xff]
      %v4293 = vld [vmem:[#allocation2 + $0x48] sm:$0xff]
      %v4294 = vld [vmem:[#allocation2 + $0x50] sm:$0xff]
      %v4295 = vld [vmem:[#allocation2 + $0x58] sm:$0xff]
      %v4296 = vld [vmem:[#allocation2 + $0x60] sm:$0xff]
      %v4297 = vld [vmem:[#allocation2 + $0x68] sm:$0xff]
      %v4298 = vld [vmem:[#allocation2 + $0x70] sm:$0xff]
      %v4299 = vld [vmem:[#allocation2 + $0x78] sm:$0xff]
      %v4300 = vld [vmem:[#allocation2 + $0x80] sm:$0xff]
      %v4301 = vld [vmem:[#allocation2 + $0x88] sm:$0xff]
      %v4302 = vld [vmem:[#allocation2 + $0x90] sm:$0xff]
      %v4303 = vld [vmem:[#allocation2 + $0x98] sm:$0x1]
      %v4304 = vmul.bf16 %v4287, %v1616
      %v4305 = vmul.bf16 %v4288, %v1624
      %v4306 = vmul.bf16 %v4289, %v1632
      %v4307 = vmul.bf16 %v4290, %v1640
      %v4308 = vmul.bf16 %v4291, %v1648
      %v4309 = vmul.bf16 %v4292, %v1656
      %v4310 = vmul.bf16 %v4293, %v1664
      %v4311 = vmul.bf16 %v4294, %v1672
      %v4312 = vmul.bf16 %v4295, %v1680
      %v4313 = vmul.bf16 %v4296, %v1688
      %v4314 = vmul.bf16 %v4297, %v1696
      %v4315 = vmul.bf16 %v4298, %v1704
      %v4316 = vmul.bf16 %v4299, %v1712
      %v4317 = vmul.bf16 %v4300, %v1720
      %v4318 = vmul.bf16 %v4301, %v1728
      %v4319 = vmul.bf16 %v4302, %v1736
      %v4320 = vmul.bf16 %v4303, %v1732
      %v4321 = vld [vmem:[%s1 + $0x20] sm:$0xf]
      %v4322 = vld [vmem:[#allocation4] sm:$0xff]
      %v4323 = vld [vmem:[#allocation4 + $0x8] sm:$0xff]
      %v4324 = vld [vmem:[#allocation4 + $0x10] sm:$0xff]
      %v4325 = vld [vmem:[#allocation4 + $0x18] sm:$0xff]
      %v4326 = vld [vmem:[#allocation4 + $0x20] sm:$0xff]
      %v4327 = vld [vmem:[#allocation4 + $0x28] sm:$0xff]
      %v4328 = vld [vmem:[#allocation4 + $0x30] sm:$0xff]
      %v4329 = vld [vmem:[#allocation4 + $0x38] sm:$0xff]
      %v4330 = vld [vmem:[#allocation4 + $0x40] sm:$0xff]
      %v4331 = vld [vmem:[#allocation4 + $0x48] sm:$0xff]
      %v4332 = vld [vmem:[#allocation4 + $0x50] sm:$0xff]
      %v4333 = vld [vmem:[#allocation4 + $0x58] sm:$0xff]
      %v4334 = vld [vmem:[#allocation4 + $0x60] sm:$0xff]
      %v4335 = vld [vmem:[#allocation4 + $0x68] sm:$0xff]
      %v4336 = vld [vmem:[#allocation4 + $0x70] sm:$0xff]
      %v4337 = vld [vmem:[#allocation4 + $0x78] sm:$0xff]
      %v4338 = vld [vmem:[#allocation4 + $0x80] sm:$0xff]
      %v4339 = vld [vmem:[#allocation4 + $0x88] sm:$0xff]
      %v4340 = vld [vmem:[#allocation4 + $0x90] sm:$0xff]
      %v4341 = vld [vmem:[#allocation4 + $0x98] sm:$0xff]
      %v4342 = vld [vmem:[#allocation4 + $0xa0] sm:$0xff]
      %v4343 = vld [vmem:[#allocation4 + $0xa8] sm:$0xff]
      %v4344 = vld [vmem:[#allocation4 + $0xb0] sm:$0xff]
      %v4345 = vld [vmem:[#allocation4 + $0xb8] sm:$0xff]
      %v4346 = vld [vmem:[#allocation4 + $0xc0] sm:$0xff]
      %v4347 = vld [vmem:[#allocation4 + $0xc8] sm:$0xff]
      %v4348 = vld [vmem:[#allocation4 + $0xd0] sm:$0xff]
      %v4349 = vld [vmem:[#allocation4 + $0xd8] sm:$0xff]
      %v4350 = vld [vmem:[#allocation4 + $0xe0] sm:$0xff]
      %v4351 = vld [vmem:[#allocation4 + $0xe8] sm:$0xff]
      %v4352 = vld [vmem:[#allocation4 + $0xf0] sm:$0xff]
      %v4353 = vld [vmem:[#allocation4 + $0xf8] sm:$0xff]
      %v4355 = vshrl.u32 %v4304, 16
      %v4357 = vshll.u32 %v4304, 16
      %v4359 = vrot.slane %v4357, 1
      %v4360 = vor.u32 %v4355, %v4359
      %v4362 = vshll.u32 %v4305, 16
      %v4364 = vrot.slane %v4362, 1
      %v4365 = vsel %vm663, %v4360, %v4364
      %v4366 = vshrl.u32 %v4305, 16
      %v4368 = vor.u32 %v4366, %v4364
      %v4370 = vshll.u32 %v4306, 16
      %v4372 = vrot.slane %v4370, 1
      %v4373 = vsel %vm663, %v4368, %v4372
      %v4374 = vshrl.u32 %v4306, 16
      %v4376 = vor.u32 %v4374, %v4372
      %v4378 = vshll.u32 %v4307, 16
      %v4380 = vrot.slane %v4378, 1
      %v4381 = vsel %vm663, %v4376, %v4380
      %v4382 = vshrl.u32 %v4307, 16
      %v4384 = vor.u32 %v4382, %v4380
      %v4386 = vshll.u32 %v4308, 16
      %v4388 = vrot.slane %v4386, 1
      %v4389 = vsel %vm663, %v4384, %v4388
      %v4390 = vshrl.u32 %v4308, 16
      %v4392 = vor.u32 %v4390, %v4388
      %v4394 = vshll.u32 %v4309, 16
      %v4396 = vrot.slane %v4394, 1
      %v4397 = vsel %vm663, %v4392, %v4396
      %v4398 = vshrl.u32 %v4309, 16
      %v4400 = vor.u32 %v4398, %v4396
      %v4402 = vshll.u32 %v4310, 16
      %v4404 = vrot.slane %v4402, 1
      %v4405 = vsel %vm663, %v4400, %v4404
      %v4406 = vshrl.u32 %v4310, 16
      %v4408 = vor.u32 %v4406, %v4404
      %v4410 = vshll.u32 %v4311, 16
      %v4412 = vrot.slane %v4410, 1
      %v4413 = vsel %vm663, %v4408, %v4412
      %v4414 = vshrl.u32 %v4311, 16
      %v4416 = vor.u32 %v4414, %v4412
      %v4418 = vshll.u32 %v4312, 16
      %v4420 = vrot.slane %v4418, 1
      %v4421 = vsel %vm663, %v4416, %v4420
      %v4422 = vshrl.u32 %v4312, 16
      %v4424 = vor.u32 %v4422, %v4420
      %v4426 = vshll.u32 %v4313, 16
      %v4428 = vrot.slane %v4426, 1
      %v4429 = vsel %vm663, %v4424, %v4428
      %v4430 = vshrl.u32 %v4313, 16
      %v4432 = vor.u32 %v4430, %v4428
      %v4434 = vshll.u32 %v4314, 16
      %v4436 = vrot.slane %v4434, 1
      %v4437 = vsel %vm663, %v4432, %v4436
      %v4438 = vshrl.u32 %v4314, 16
      %v4440 = vor.u32 %v4438, %v4436
      %v4442 = vshll.u32 %v4315, 16
      %v4444 = vrot.slane %v4442, 1
      %v4445 = vsel %vm663, %v4440, %v4444
      %v4446 = vshrl.u32 %v4315, 16
      %v4448 = vor.u32 %v4446, %v4444
      %v4450 = vshll.u32 %v4316, 16
      %v4452 = vrot.slane %v4450, 1
      %v4453 = vsel %vm663, %v4448, %v4452
      %v4454 = vshrl.u32 %v4316, 16
      %v4456 = vor.u32 %v4454, %v4452
      %v4458 = vshll.u32 %v4317, 16
      %v4460 = vrot.slane %v4458, 1
      %v4461 = vsel %vm663, %v4456, %v4460
      %v4462 = vshrl.u32 %v4317, 16
      %v4464 = vor.u32 %v4462, %v4460
      %v4466 = vshll.u32 %v4318, 16
      %v4468 = vrot.slane %v4466, 1
      %v4469 = vsel %vm663, %v4464, %v4468
      %v4470 = vshrl.u32 %v4318, 16
      %v4472 = vor.u32 %v4470, %v4468
      %v4474 = vshll.u32 %v4319, 16
      %v4476 = vrot.slane %v4474, 1
      %v4477 = vsel %vm663, %v4472, %v4476
      %v4478 = vshrl.u32 %v4319, 16
      %v4480 = vor.u32 %v4478, %v4476
      %v4482 = vshll.u32 %v4320, 16
      %v4484 = vrot.slane %v4482, 1
      %v4485 = vsel %vm663, %v4480, %v4484
      %v4487 = vsel %vm172, %v4365, 0
      %v4490 = vsel %vm172, %v4373, 0
      %v4493 = vsel %vm172, %v4381, 0
      %v4496 = vsel %vm172, %v4389, 0
      %v4499 = vsel %vm172, %v4397, 0
      %v4502 = vsel %vm172, %v4405, 0
      %v4505 = vsel %vm172, %v4413, 0
      %v4508 = vsel %vm172, %v4421, 0
      %v4511 = vsel %vm172, %v4429, 0
      %v4514 = vsel %vm172, %v4437, 0
      %v4517 = vsel %vm172, %v4445, 0
      %v4520 = vsel %vm172, %v4453, 0
      %v4523 = vsel %vm172, %v4461, 0
      %v4526 = vsel %vm172, %v4469, 0
      %v4529 = vsel %vm172, %v4477, 0
      %v4532 = vsel %vm172, %v4485, 0
      %v4535 = vsel %vm1039, %v4321, 0
      %4537 = vmatprep.subr.bf16.mxu0 0
      %4538 = vmatpush1.bf16.msra.mxu0 %v4535
      %4539 = vmatprep.subr.bf16.mxu0 0
      %4540 = vmatpush1.bf16.msra.mxu0 0
      %4541 = vmatprep.subr.bf16.mxu0 0
      %4542 = vmatpush1.bf16.msra.mxu0 0
      %4543 = vmatprep.subr.bf16.mxu0 0
      %4544 = vmatpush1.bf16.msra.mxu0 0
      %4545 = vmatprep.subr.bf16.mxu0 0
      %4546 = vmatpush1.bf16.msra.mxu0 0
      %4547 = vmatprep.subr.bf16.mxu0 0
      %4548 = vmatpush1.bf16.msra.mxu0 0
      %4549 = vmatprep.subr.bf16.mxu0 0
      %4550 = vmatpush1.bf16.msra.mxu0 0
      %4551 = vmatprep.subr.bf16.mxu0 0
      %4552 = vmatpush1.bf16.msra.mxu0 0
      %4553 = vmatprep.subr.bf16.mxu0 0
      %4554 = vmatpush1.bf16.msra.mxu0 0
      %4555 = vmatprep.subr.bf16.mxu0 0
      %4556 = vmatpush1.bf16.msra.mxu0 0
      %4557 = vmatprep.subr.bf16.mxu0 0
      %4558 = vmatpush1.bf16.msra.mxu0 0
      %4559 = vmatprep.subr.bf16.mxu0 0
      %4560 = vmatpush1.bf16.msra.mxu0 0
      %4561 = vmatprep.subr.bf16.mxu0 0
      %4562 = vmatpush1.bf16.msra.mxu0 0
      %4563 = vmatprep.subr.bf16.mxu0 0
      %4564 = vmatpush1.bf16.msra.mxu0 0
      %4565 = vmatprep.subr.bf16.mxu0 0
      %4566 = vmatpush1.bf16.msra.mxu0 0
      %4567 = vmatprep.subr.bf16.mxu0 0
      %4568 = vmatpush1.bf16.msra.mxu0 0
      %4569 = vmatprep.mubr.bf16.mxu0 0
      %4570 = vmatmul.mubr.bf16.gmra.mrb[0].mxu0 %v4487
      %v4571 = vpop.f32.mrb[0].mxu0
      %v4572 = vadd.f32 0.0, %v4571
      %v4573 = vpop.f32.mrb[0].mxu0
      %v4574 = vpop.f32.mrb[0].mxu0
      %v4575 = vadd.f32 0.0, %v4574
      %v4576 = vpop.f32.mrb[0].mxu0
      %4577 = vmatprep.mubr.bf16.mxu0 0
      %4578 = vmatmul.mubr.bf16.gmra.mrb[0].mxu0 %v4490
      %v4579 = vpop.f32.mrb[0].mxu0
      %v4580 = vadd.f32 0.0, %v4579
      %v4581 = vpop.f32.mrb[0].mxu0
      %v4582 = vpop.f32.mrb[0].mxu0
      %v4583 = vadd.f32 0.0, %v4582
      %v4584 = vpop.f32.mrb[0].mxu0
      %4585 = vmatprep.mubr.bf16.mxu0 0
      %4586 = vmatmul.mubr.bf16.gmra.mrb[0].mxu0 %v4493
      %v4587 = vpop.f32.mrb[0].mxu0
      %v4588 = vadd.f32 0.0, %v4587
      %v4589 = vpop.f32.mrb[0].mxu0
      %v4590 = vpop.f32.mrb[0].mxu0
      %v4591 = vadd.f32 0.0, %v4590
      %v4592 = vpop.f32.mrb[0].mxu0
      %4593 = vmatprep.mubr.bf16.mxu0 0
      %4594 = vmatmul.mubr.bf16.gmra.mrb[0].mxu0 %v4496
      %v4595 = vpop.f32.mrb[0].mxu0
      %v4596 = vadd.f32 0.0, %v4595
      %v4597 = vpop.f32.mrb[0].mxu0
      %v4598 = vpop.f32.mrb[0].mxu0
      %v4599 = vadd.f32 0.0, %v4598
      %v4600 = vpop.f32.mrb[0].mxu0
      %4601 = vmatprep.mubr.bf16.mxu0 0
      %4602 = vmatmul.mubr.bf16.gmra.mrb[0].mxu0 %v4499
      %v4603 = vpop.f32.mrb[0].mxu0
      %v4604 = vadd.f32 0.0, %v4603
      %v4605 = vpop.f32.mrb[0].mxu0
      %v4606 = vpop.f32.mrb[0].mxu0
      %v4607 = vadd.f32 0.0, %v4606
      %v4608 = vpop.f32.mrb[0].mxu0
      %4609 = vmatprep.mubr.bf16.mxu0 0
      %4610 = vmatmul.mubr.bf16.gmra.mrb[0].mxu0 %v4502
      %v4611 = vpop.f32.mrb[0].mxu0
      %v4612 = vadd.f32 0.0, %v4611
      %v4613 = vpop.f32.mrb[0].mxu0
      %v4614 = vpop.f32.mrb[0].mxu0
      %v4615 = vadd.f32 0.0, %v4614
      %v4616 = vpop.f32.mrb[0].mxu0
      %4617 = vmatprep.mubr.bf16.mxu0 0
      %4618 = vmatmul.mubr.bf16.gmra.mrb[0].mxu0 %v4505
      %v4619 = vpop.f32.mrb[0].mxu0
      %v4620 = vadd.f32 0.0, %v4619
      %v4621 = vpop.f32.mrb[0].mxu0
      %v4622 = vpop.f32.mrb[0].mxu0
      %v4623 = vadd.f32 0.0, %v4622
      %v4624 = vpop.f32.mrb[0].mxu0
      %4625 = vmatprep.mubr.bf16.mxu0 0
      %4626 = vmatmul.mubr.bf16.gmra.mrb[0].mxu0 %v4508
      %v4627 = vpop.f32.mrb[0].mxu0
      %v4628 = vadd.f32 0.0, %v4627
      %v4629 = vpop.f32.mrb[0].mxu0
      %v4630 = vpop.f32.mrb[0].mxu0
      %v4631 = vadd.f32 0.0, %v4630
      %v4632 = vpop.f32.mrb[0].mxu0
      %4633 = vmatprep.mubr.bf16.mxu0 0
      %4634 = vmatmul.mubr.bf16.gmra.mrb[0].mxu0 %v4511
      %v4635 = vpop.f32.mrb[0].mxu0
      %v4636 = vadd.f32 0.0, %v4635
      %v4637 = vpop.f32.mrb[0].mxu0
      %v4638 = vpop.f32.mrb[0].mxu0
      %v4639 = vadd.f32 0.0, %v4638
      %v4640 = vpop.f32.mrb[0].mxu0
      %4641 = vmatprep.mubr.bf16.mxu0 0
      %4642 = vmatmul.mubr.bf16.gmra.mrb[0].mxu0 %v4514
      %v4643 = vpop.f32.mrb[0].mxu0
      %v4644 = vadd.f32 0.0, %v4643
      %v4645 = vpop.f32.mrb[0].mxu0
      %v4646 = vpop.f32.mrb[0].mxu0
      %v4647 = vadd.f32 0.0, %v4646
      %v4648 = vpop.f32.mrb[0].mxu0
      %4649 = vmatprep.mubr.bf16.mxu0 0
      %4650 = vmatmul.mubr.bf16.gmra.mrb[0].mxu0 %v4517
      %v4651 = vpop.f32.mrb[0].mxu0
      %v4652 = vadd.f32 0.0, %v4651
      %v4653 = vpop.f32.mrb[0].mxu0
      %v4654 = vpop.f32.mrb[0].mxu0
      %v4655 = vadd.f32 0.0, %v4654
      %v4656 = vpop.f32.mrb[0].mxu0
      %4657 = vmatprep.mubr.bf16.mxu0 0
      %4658 = vmatmul.mubr.bf16.gmra.mrb[0].mxu0 %v4520
      %v4659 = vpop.f32.mrb[0].mxu0
      %v4660 = vadd.f32 0.0, %v4659
      %v4661 = vpop.f32.mrb[0].mxu0
      %v4662 = vpop.f32.mrb[0].mxu0
      %v4663 = vadd.f32 0.0, %v4662
      %v4664 = vpop.f32.mrb[0].mxu0
      %4665 = vmatprep.mubr.bf16.mxu0 0
      %4666 = vmatmul.mubr.bf16.gmra.mrb[0].mxu0 %v4523
      %v4667 = vpop.f32.mrb[0].mxu0
      %v4668 = vadd.f32 0.0, %v4667
      %v4669 = vpop.f32.mrb[0].mxu0
      %v4670 = vpop.f32.mrb[0].mxu0
      %v4671 = vadd.f32 0.0, %v4670
      %v4672 = vpop.f32.mrb[0].mxu0
      %4673 = vmatprep.mubr.bf16.mxu0 0
      %4674 = vmatmul.mubr.bf16.gmra.mrb[0].mxu0 %v4526
      %v4675 = vpop.f32.mrb[0].mxu0
      %v4676 = vadd.f32 0.0, %v4675
      %v4677 = vpop.f32.mrb[0].mxu0
      %v4678 = vpop.f32.mrb[0].mxu0
      %v4679 = vadd.f32 0.0, %v4678
      %v4680 = vpop.f32.mrb[0].mxu0
      %4681 = vmatprep.mubr.bf16.mxu0 0
      %4682 = vmatmul.mubr.bf16.gmra.mrb[0].mxu0 %v4529
      %v4683 = vpop.f32.mrb[0].mxu0
      %v4684 = vadd.f32 0.0, %v4683
      %v4685 = vpop.f32.mrb[0].mxu0
      %v4686 = vpop.f32.mrb[0].mxu0
      %v4687 = vadd.f32 0.0, %v4686
      %v4688 = vpop.f32.mrb[0].mxu0
      %4689 = vmatprep.mubr.bf16.mxu0 0
      %4690 = vmatmul.mubr.bf16.gmra.mrb[0].mxu0 %v4532
      %v4691 = vpop.f32.mrb[0].mxu0
      %v4692 = vadd.f32 0.0, %v4691
      %v4693 = vpop.f32.mrb[0].mxu0
      %v4694 = vpop.f32.mrb[0].mxu0
      %v4695 = vadd.f32 0.0, %v4694
      %v4696 = vpop.f32.mrb[0].mxu0
      %4697 = vdwg.mxu0
      %v4698 = vadd.f32 %v4322, %v4572
      %v4699 = vadd.f32 %v4323, %v4575
      %v4700 = vadd.f32 %v4324, %v4580
      %v4701 = vadd.f32 %v4325, %v4583
      %v4702 = vadd.f32 %v4326, %v4588
      %v4703 = vadd.f32 %v4327, %v4591
      %v4704 = vadd.f32 %v4328, %v4596
      %v4705 = vadd.f32 %v4329, %v4599
      %v4706 = vadd.f32 %v4330, %v4604
      %v4707 = vadd.f32 %v4331, %v4607
      %v4708 = vadd.f32 %v4332, %v4612
      %v4709 = vadd.f32 %v4333, %v4615
      %v4710 = vadd.f32 %v4334, %v4620
      %v4711 = vadd.f32 %v4335, %v4623
      %v4712 = vadd.f32 %v4336, %v4628
      %v4713 = vadd.f32 %v4337, %v4631
      %v4714 = vadd.f32 %v4338, %v4636
      %v4715 = vadd.f32 %v4339, %v4639
      %v4716 = vadd.f32 %v4340, %v4644
      %v4717 = vadd.f32 %v4341, %v4647
      %v4718 = vadd.f32 %v4342, %v4652
      %v4719 = vadd.f32 %v4343, %v4655
      %v4720 = vadd.f32 %v4344, %v4660
      %v4721 = vadd.f32 %v4345, %v4663
      %v4722 = vadd.f32 %v4346, %v4668
      %v4723 = vadd.f32 %v4347, %v4671
      %v4724 = vadd.f32 %v4348, %v4676
      %v4725 = vadd.f32 %v4349, %v4679
      %v4726 = vadd.f32 %v4350, %v4684
      %v4727 = vadd.f32 %v4351, %v4687
      %v4728 = vadd.f32 %v4352, %v4692
      %v4729 = vadd.f32 %v4353, %v4695
      %4730 = vst.msk [vmem:[#allocation4] sm:$0xff] %vm172, %v4698
      %4731 = vst.msk [vmem:[#allocation4 + $0x8] sm:$0xff] %vm172, %v4699
      %4732 = vst.msk [vmem:[#allocation4 + $0x10] sm:$0xff] %vm172, %v4700
      %4733 = vst.msk [vmem:[#allocation4 + $0x18] sm:$0xff] %vm172, %v4701
      %4734 = vst.msk [vmem:[#allocation4 + $0x20] sm:$0xff] %vm172, %v4702
      %4735 = vst.msk [vmem:[#allocation4 + $0x28] sm:$0xff] %vm172, %v4703
      %4736 = vst.msk [vmem:[#allocation4 + $0x30] sm:$0xff] %vm172, %v4704
      %4737 = vst.msk [vmem:[#allocation4 + $0x38] sm:$0xff] %vm172, %v4705
      %4738 = vst.msk [vmem:[#allocation4 + $0x40] sm:$0xff] %vm172, %v4706
      %4739 = vst.msk [vmem:[#allocation4 + $0x48] sm:$0xff] %vm172, %v4707
      %4740 = vst.msk [vmem:[#allocation4 + $0x50] sm:$0xff] %vm172, %v4708
      %4741 = vst.msk [vmem:[#allocation4 + $0x58] sm:$0xff] %vm172, %v4709
      %4742 = vst.msk [vmem:[#allocation4 + $0x60] sm:$0xff] %vm172, %v4710
      %4743 = vst.msk [vmem:[#allocation4 + $0x68] sm:$0xff] %vm172, %v4711
      %4744 = vst.msk [vmem:[#allocation4 + $0x70] sm:$0xff] %vm172, %v4712
      %4745 = vst.msk [vmem:[#allocation4 + $0x78] sm:$0xff] %vm172, %v4713
      %4746 = vst.msk [vmem:[#allocation4 + $0x80] sm:$0xff] %vm172, %v4714
      %4747 = vst.msk [vmem:[#allocation4 + $0x88] sm:$0xff] %vm172, %v4715
      %4748 = vst.msk [vmem:[#allocation4 + $0x90] sm:$0xff] %vm172, %v4716
      %4749 = vst.msk [vmem:[#allocation4 + $0x98] sm:$0xff] %vm172, %v4717
      %4750 = vst.msk [vmem:[#allocation4 + $0xa0] sm:$0xff] %vm172, %v4718
      %4751 = vst.msk [vmem:[#allocation4 + $0xa8] sm:$0xff] %vm172, %v4719
      %4752 = vst.msk [vmem:[#allocation4 + $0xb0] sm:$0xff] %vm172, %v4720
      %4753 = vst.msk [vmem:[#allocation4 + $0xb8] sm:$0xff] %vm172, %v4721
      %4754 = vst.msk [vmem:[#allocation4 + $0xc0] sm:$0xff] %vm172, %v4722
      %4755 = vst.msk [vmem:[#allocation4 + $0xc8] sm:$0xff] %vm172, %v4723
      %4756 = vst.msk [vmem:[#allocation4 + $0xd0] sm:$0xff] %vm172, %v4724
      %4757 = vst.msk [vmem:[#allocation4 + $0xd8] sm:$0xff] %vm172, %v4725
      %4758 = vst.msk [vmem:[#allocation4 + $0xe0] sm:$0xff] %vm172, %v4726
      %4759 = vst.msk [vmem:[#allocation4 + $0xe8] sm:$0xff] %vm172, %v4727
      %4760 = vst.msk [vmem:[#allocation4 + $0xf0] sm:$0xff] %vm172, %v4728
      %4761 = vst.msk [vmem:[#allocation4 + $0xf8] sm:$0xff] %vm172, %v4729
      %v4762 = vld [vmem:[#allocation4] sm:$0xff]
      %v4763 = vld [vmem:[#allocation4 + $0x8] sm:$0xff]
      %v4764 = vld [vmem:[#allocation4 + $0x10] sm:$0xff]
      %v4765 = vld [vmem:[#allocation4 + $0x18] sm:$0xff]
      %v4766 = vld [vmem:[#allocation4 + $0x20] sm:$0xff]
      %v4767 = vld [vmem:[#allocation4 + $0x28] sm:$0xff]
      %v4768 = vld [vmem:[#allocation4 + $0x30] sm:$0xff]
      %v4769 = vld [vmem:[#allocation4 + $0x38] sm:$0xff]
      %v4770 = vld [vmem:[#allocation4 + $0x40] sm:$0xff]
      %v4771 = vld [vmem:[#allocation4 + $0x48] sm:$0xff]
      %v4772 = vld [vmem:[#allocation4 + $0x50] sm:$0xff]
      %v4773 = vld [vmem:[#allocation4 + $0x58] sm:$0xff]
      %v4774 = vld [vmem:[#allocation4 + $0x60] sm:$0xff]
      %v4775 = vld [vmem:[#allocation4 + $0x68] sm:$0xff]
      %v4776 = vld [vmem:[#allocation4 + $0x70] sm:$0xff]
      %v4777 = vld [vmem:[#allocation4 + $0x78] sm:$0xff]
      %v4778 = vld [vmem:[#allocation4 + $0x80] sm:$0xff]
      %v4779 = vld [vmem:[#allocation4 + $0x88] sm:$0xff]
      %v4780 = vld [vmem:[#allocation4 + $0x90] sm:$0xff]
      %v4781 = vld [vmem:[#allocation4 + $0x98] sm:$0xff]
      %v4782 = vld [vmem:[#allocation4 + $0xa0] sm:$0xff]
      %v4783 = vld [vmem:[#allocation4 + $0xa8] sm:$0xff]
      %v4784 = vld [vmem:[#allocation4 + $0xb0] sm:$0xff]
      %v4785 = vld [vmem:[#allocation4 + $0xb8] sm:$0xff]
      %v4786 = vld [vmem:[#allocation4 + $0xc0] sm:$0xff]
      %v4787 = vld [vmem:[#allocation4 + $0xc8] sm:$0xff]
      %v4788 = vld [vmem:[#allocation4 + $0xd0] sm:$0xff]
      %v4789 = vld [vmem:[#allocation4 + $0xd8] sm:$0xff]
      %v4790 = vld [vmem:[#allocation4 + $0xe0] sm:$0xff]
      %v4791 = vld [vmem:[#allocation4 + $0xe8] sm:$0xff]
      %v4792 = vld [vmem:[#allocation4 + $0xf0] sm:$0xff]
      %v4793 = vld [vmem:[#allocation4 + $0xf8] sm:$0xff]
      %v4794 = vsel %vm172, %v4762, 0.0
      %v4795 = vsel %vm172, %v4763, 0.0
      %v4796 = vadd.f32 %v4794, %v4795
      %v4797 = vsel %vm172, %v4764, 0.0
      %v4798 = vadd.f32 %v4796, %v4797
      %v4799 = vsel %vm172, %v4765, 0.0
      %v4800 = vadd.f32 %v4798, %v4799
      %v4801 = vsel %vm172, %v4766, 0.0
      %v4802 = vadd.f32 %v4800, %v4801
      %v4803 = vsel %vm172, %v4767, 0.0
      %v4804 = vadd.f32 %v4802, %v4803
      %v4805 = vsel %vm172, %v4768, 0.0
      %v4806 = vadd.f32 %v4804, %v4805
      %v4807 = vsel %vm172, %v4769, 0.0
      %v4808 = vadd.f32 %v4806, %v4807
      %v4809 = vsel %vm172, %v4770, 0.0
      %v4810 = vadd.f32 %v4808, %v4809
      %v4811 = vsel %vm172, %v4771, 0.0
      %v4812 = vadd.f32 %v4810, %v4811
      %v4813 = vsel %vm172, %v4772, 0.0
      %v4814 = vadd.f32 %v4812, %v4813
      %v4815 = vsel %vm172, %v4773, 0.0
      %v4816 = vadd.f32 %v4814, %v4815
      %v4817 = vsel %vm172, %v4774, 0.0
      %v4818 = vadd.f32 %v4816, %v4817
      %v4819 = vsel %vm172, %v4775, 0.0
      %v4820 = vadd.f32 %v4818, %v4819
      %v4821 = vsel %vm172, %v4776, 0.0
      %v4822 = vadd.f32 %v4820, %v4821
      %v4823 = vsel %vm172, %v4777, 0.0
      %v4824 = vadd.f32 %v4822, %v4823
      %v4825 = vsel %vm172, %v4778, 0.0
      %v4826 = vadd.f32 %v4824, %v4825
      %v4827 = vsel %vm172, %v4779, 0.0
      %v4828 = vadd.f32 %v4826, %v4827
      %v4829 = vsel %vm172, %v4780, 0.0
      %v4830 = vadd.f32 %v4828, %v4829
      %v4831 = vsel %vm172, %v4781, 0.0
      %v4832 = vadd.f32 %v4830, %v4831
      %v4833 = vsel %vm172, %v4782, 0.0
      %v4834 = vadd.f32 %v4832, %v4833
      %v4835 = vsel %vm172, %v4783, 0.0
      %v4836 = vadd.f32 %v4834, %v4835
      %v4837 = vsel %vm172, %v4784, 0.0
      %v4838 = vadd.f32 %v4836, %v4837
      %v4839 = vsel %vm172, %v4785, 0.0
      %v4840 = vadd.f32 %v4838, %v4839
      %v4841 = vsel %vm172, %v4786, 0.0
      %v4842 = vadd.f32 %v4840, %v4841
      %v4843 = vsel %vm172, %v4787, 0.0
      %v4844 = vadd.f32 %v4842, %v4843
      %v4845 = vsel %vm172, %v4788, 0.0
      %v4846 = vadd.f32 %v4844, %v4845
      %v4847 = vsel %vm172, %v4789, 0.0
      %v4848 = vadd.f32 %v4846, %v4847
      %v4849 = vsel %vm172, %v4790, 0.0
      %v4850 = vadd.f32 %v4848, %v4849
      %v4851 = vsel %vm172, %v4791, 0.0
      %v4852 = vadd.f32 %v4850, %v4851
      %v4853 = vsel %vm172, %v4792, 0.0
      %v4854 = vadd.f32 %v4852, %v4853
      %v4855 = vsel %vm172, %v4793, 0.0
      %v4856 = vadd.f32 %v4854, %v4855
      %v4857 = vrot.slane %v4856, 4
      %v4858 = vadd.f32 %v4856, %v4857
      %v4859 = vrot.slane %v4858, 2
      %v4860 = vadd.f32 %v4858, %v4859
      %v4861 = vrot.slane %v4860, 1
      %v4862 = vadd.f32 %v4860, %v4861
      %v4863 = vmul.f32 %v4862, 0.00390625
      %v4864 = vmul.f32 %v4762, %v4762
      %v4865 = vmul.f32 %v4763, %v4763
      %v4866 = vmul.f32 %v4764, %v4764
      %v4867 = vmul.f32 %v4765, %v4765
      %v4868 = vmul.f32 %v4766, %v4766
      %v4869 = vmul.f32 %v4767, %v4767
      %v4870 = vmul.f32 %v4768, %v4768
      %v4871 = vmul.f32 %v4769, %v4769
      %v4872 = vmul.f32 %v4770, %v4770
      %v4873 = vmul.f32 %v4771, %v4771
      %v4874 = vmul.f32 %v4772, %v4772
      %v4875 = vmul.f32 %v4773, %v4773
      %v4876 = vmul.f32 %v4774, %v4774
      %v4877 = vmul.f32 %v4775, %v4775
      %v4878 = vmul.f32 %v4776, %v4776
      %v4879 = vmul.f32 %v4777, %v4777
      %v4880 = vmul.f32 %v4778, %v4778
      %v4881 = vmul.f32 %v4779, %v4779
      %v4882 = vmul.f32 %v4780, %v4780
      %v4883 = vmul.f32 %v4781, %v4781
      %v4884 = vmul.f32 %v4782, %v4782
      %v4885 = vmul.f32 %v4783, %v4783
      %v4886 = vmul.f32 %v4784, %v4784
      %v4887 = vmul.f32 %v4785, %v4785
      %v4888 = vmul.f32 %v4786, %v4786
      %v4889 = vmul.f32 %v4787, %v4787
      %v4890 = vmul.f32 %v4788, %v4788
      %v4891 = vmul.f32 %v4789, %v4789
      %v4892 = vmul.f32 %v4790, %v4790
      %v4893 = vmul.f32 %v4791, %v4791
      %v4894 = vmul.f32 %v4792, %v4792
      %v4895 = vmul.f32 %v4793, %v4793
      %v4896 = vsel %vm172, %v4864, 0.0
      %v4897 = vsel %vm172, %v4865, 0.0
      %v4898 = vadd.f32 %v4896, %v4897
      %v4899 = vsel %vm172, %v4866, 0.0
      %v4900 = vadd.f32 %v4898, %v4899
      %v4901 = vsel %vm172, %v4867, 0.0
      %v4902 = vadd.f32 %v4900, %v4901
      %v4903 = vsel %vm172, %v4868, 0.0
      %v4904 = vadd.f32 %v4902, %v4903
      %v4905 = vsel %vm172, %v4869, 0.0
      %v4906 = vadd.f32 %v4904, %v4905
      %v4907 = vsel %vm172, %v4870, 0.0
      %v4908 = vadd.f32 %v4906, %v4907
      %v4909 = vsel %vm172, %v4871, 0.0
      %v4910 = vadd.f32 %v4908, %v4909
      %v4911 = vsel %vm172, %v4872, 0.0
      %v4912 = vadd.f32 %v4910, %v4911
      %v4913 = vsel %vm172, %v4873, 0.0
      %v4914 = vadd.f32 %v4912, %v4913
      %v4915 = vsel %vm172, %v4874, 0.0
      %v4916 = vadd.f32 %v4914, %v4915
      %v4917 = vsel %vm172, %v4875, 0.0
      %v4918 = vadd.f32 %v4916, %v4917
      %v4919 = vsel %vm172, %v4876, 0.0
      %v4920 = vadd.f32 %v4918, %v4919
      %v4921 = vsel %vm172, %v4877, 0.0
      %v4922 = vadd.f32 %v4920, %v4921
      %v4923 = vsel %vm172, %v4878, 0.0
      %v4924 = vadd.f32 %v4922, %v4923
      %v4925 = vsel %vm172, %v4879, 0.0
      %v4926 = vadd.f32 %v4924, %v4925
      %v4927 = vsel %vm172, %v4880, 0.0
      %v4928 = vadd.f32 %v4926, %v4927
      %v4929 = vsel %vm172, %v4881, 0.0
      %v4930 = vadd.f32 %v4928, %v4929
      %v4931 = vsel %vm172, %v4882, 0.0
      %v4932 = vadd.f32 %v4930, %v4931
      %v4933 = vsel %vm172, %v4883, 0.0
      %v4934 = vadd.f32 %v4932, %v4933
      %v4935 = vsel %vm172, %v4884, 0.0
      %v4936 = vadd.f32 %v4934, %v4935
      %v4937 = vsel %vm172, %v4885, 0.0
      %v4938 = vadd.f32 %v4936, %v4937
      %v4939 = vsel %vm172, %v4886, 0.0
      %v4940 = vadd.f32 %v4938, %v4939
      %v4941 = vsel %vm172, %v4887, 0.0
      %v4942 = vadd.f32 %v4940, %v4941
      %v4943 = vsel %vm172, %v4888, 0.0
      %v4944 = vadd.f32 %v4942, %v4943
      %v4945 = vsel %vm172, %v4889, 0.0
      %v4946 = vadd.f32 %v4944, %v4945
      %v4947 = vsel %vm172, %v4890, 0.0
      %v4948 = vadd.f32 %v4946, %v4947
      %v4949 = vsel %vm172, %v4891, 0.0
      %v4950 = vadd.f32 %v4948, %v4949
      %v4951 = vsel %vm172, %v4892, 0.0
      %v4952 = vadd.f32 %v4950, %v4951
      %v4953 = vsel %vm172, %v4893, 0.0
      %v4954 = vadd.f32 %v4952, %v4953
      %v4955 = vsel %vm172, %v4894, 0.0
      %v4956 = vadd.f32 %v4954, %v4955
      %v4957 = vsel %vm172, %v4895, 0.0
      %v4958 = vadd.f32 %v4956, %v4957
      %v4959 = vrot.slane %v4958, 4
      %v4960 = vadd.f32 %v4958, %v4959
      %v4961 = vrot.slane %v4960, 2
      %v4962 = vadd.f32 %v4960, %v4961
      %v4963 = vrot.slane %v4962, 1
      %v4964 = vadd.f32 %v4962, %v4963
      %v4965 = vmul.f32 %v4964, 0.00390625
      %v4966 = vmul.f32 %v4863, %v4863
      %v4967 = vsub.f32 %v4965, %v4966
      %v4968 = vmax.f32 %v4967, 0.0
      %v4969 = vsub.f32 %v4762, %v4863
      %v4970 = vsub.f32 %v4763, %v4863
      %v4971 = vsub.f32 %v4764, %v4863
      %v4972 = vsub.f32 %v4765, %v4863
      %v4973 = vsub.f32 %v4766, %v4863
      %v4974 = vsub.f32 %v4767, %v4863
      %v4975 = vsub.f32 %v4768, %v4863
      %v4976 = vsub.f32 %v4769, %v4863
      %v4977 = vsub.f32 %v4770, %v4863
      %v4978 = vsub.f32 %v4771, %v4863
      %v4979 = vsub.f32 %v4772, %v4863
      %v4980 = vsub.f32 %v4773, %v4863
      %v4981 = vsub.f32 %v4774, %v4863
      %v4982 = vsub.f32 %v4775, %v4863
      %v4983 = vsub.f32 %v4776, %v4863
      %v4984 = vsub.f32 %v4777, %v4863
      %v4985 = vsub.f32 %v4778, %v4863
      %v4986 = vsub.f32 %v4779, %v4863
      %v4987 = vsub.f32 %v4780, %v4863
      %v4988 = vsub.f32 %v4781, %v4863
      %v4989 = vsub.f32 %v4782, %v4863
      %v4990 = vsub.f32 %v4783, %v4863
      %v4991 = vsub.f32 %v4784, %v4863
      %v4992 = vsub.f32 %v4785, %v4863
      %v4993 = vsub.f32 %v4786, %v4863
      %v4994 = vsub.f32 %v4787, %v4863
      %v4995 = vsub.f32 %v4788, %v4863
      %v4996 = vsub.f32 %v4789, %v4863
      %v4997 = vsub.f32 %v4790, %v4863
      %v4998 = vsub.f32 %v4791, %v4863
      %v4999 = vsub.f32 %v4792, %v4863
      %v5000 = vsub.f32 %v4793, %v4863
      %v5001 = vadd.f32 %v4968, 1e-05
      %v5002 = vrsqrt.pop %v5001
      %v5003 = vmul.f32 %v4969, %v5002
      %v5004 = vmul.f32 %v4970, %v5002
      %v5005 = vmul.f32 %v4971, %v5002
      %v5006 = vmul.f32 %v4972, %v5002
      %v5007 = vmul.f32 %v4973, %v5002
      %v5008 = vmul.f32 %v4974, %v5002
      %v5009 = vmul.f32 %v4975, %v5002
      %v5010 = vmul.f32 %v4976, %v5002
      %v5011 = vmul.f32 %v4977, %v5002
      %v5012 = vmul.f32 %v4978, %v5002
      %v5013 = vmul.f32 %v4979, %v5002
      %v5014 = vmul.f32 %v4980, %v5002
      %v5015 = vmul.f32 %v4981, %v5002
      %v5016 = vmul.f32 %v4982, %v5002
      %v5017 = vmul.f32 %v4983, %v5002
      %v5018 = vmul.f32 %v4984, %v5002
      %v5019 = vmul.f32 %v4985, %v5002
      %v5020 = vmul.f32 %v4986, %v5002
      %v5021 = vmul.f32 %v4987, %v5002
      %v5022 = vmul.f32 %v4988, %v5002
      %v5023 = vmul.f32 %v4989, %v5002
      %v5024 = vmul.f32 %v4990, %v5002
      %v5025 = vmul.f32 %v4991, %v5002
      %v5026 = vmul.f32 %v4992, %v5002
      %v5027 = vmul.f32 %v4993, %v5002
      %v5028 = vmul.f32 %v4994, %v5002
      %v5029 = vmul.f32 %v4995, %v5002
      %v5030 = vmul.f32 %v4996, %v5002
      %v5031 = vmul.f32 %v4997, %v5002
      %v5032 = vmul.f32 %v4998, %v5002
      %v5033 = vmul.f32 %v4999, %v5002
      %v5034 = vmul.f32 %v5000, %v5002
      %v5035 = vmul.f32 %v5003, 0.2
      %v5036 = vmul.f32 %v5004, 0.2
      %v5037 = vmul.f32 %v5005, 0.2
      %v5038 = vmul.f32 %v5006, 0.2
      %v5039 = vmul.f32 %v5007, 0.2
      %v5040 = vmul.f32 %v5008, 0.2
      %v5041 = vmul.f32 %v5009, 0.2
      %v5042 = vmul.f32 %v5010, 0.2
      %v5043 = vmul.f32 %v5011, 0.2
      %v5044 = vmul.f32 %v5012, 0.2
      %v5045 = vmul.f32 %v5013, 0.2
      %v5046 = vmul.f32 %v5014, 0.2
      %v5047 = vmul.f32 %v5015, 0.2
      %v5048 = vmul.f32 %v5016, 0.2
      %v5049 = vmul.f32 %v5017, 0.2
      %v5050 = vmul.f32 %v5018, 0.2
      %v5051 = vmul.f32 %v5019, 0.2
      %v5052 = vmul.f32 %v5020, 0.2
      %v5053 = vmul.f32 %v5021, 0.2
      %v5054 = vmul.f32 %v5022, 0.2
      %v5055 = vmul.f32 %v5023, 0.2
      %v5056 = vmul.f32 %v5024, 0.2
      %v5057 = vmul.f32 %v5025, 0.2
      %v5058 = vmul.f32 %v5026, 0.2
      %v5059 = vmul.f32 %v5027, 0.2
      %v5060 = vmul.f32 %v5028, 0.2
      %v5061 = vmul.f32 %v5029, 0.2
      %v5062 = vmul.f32 %v5030, 0.2
      %v5063 = vmul.f32 %v5031, 0.2
      %v5064 = vmul.f32 %v5032, 0.2
      %v5065 = vmul.f32 %v5033, 0.2
      %v5066 = vmul.f32 %v5034, 0.2
      %v5067 = vmax.f32 %v5003, %v5035
      %v5068 = vmax.f32 %v5004, %v5036
      %v5069 = vmax.f32 %v5005, %v5037
      %v5070 = vmax.f32 %v5006, %v5038
      %v5071 = vmax.f32 %v5007, %v5039
      %v5072 = vmax.f32 %v5008, %v5040
      %v5073 = vmax.f32 %v5009, %v5041
      %v5074 = vmax.f32 %v5010, %v5042
      %v5075 = vmax.f32 %v5011, %v5043
      %v5076 = vmax.f32 %v5012, %v5044
      %v5077 = vmax.f32 %v5013, %v5045
      %v5078 = vmax.f32 %v5014, %v5046
      %v5079 = vmax.f32 %v5015, %v5047
      %v5080 = vmax.f32 %v5016, %v5048
      %v5081 = vmax.f32 %v5017, %v5049
      %v5082 = vmax.f32 %v5018, %v5050
      %v5083 = vmax.f32 %v5019, %v5051
      %v5084 = vmax.f32 %v5020, %v5052
      %v5085 = vmax.f32 %v5021, %v5053
      %v5086 = vmax.f32 %v5022, %v5054
      %v5087 = vmax.f32 %v5023, %v5055
      %v5088 = vmax.f32 %v5024, %v5056
      %v5089 = vmax.f32 %v5025, %v5057
      %v5090 = vmax.f32 %v5026, %v5058
      %v5091 = vmax.f32 %v5027, %v5059
      %v5092 = vmax.f32 %v5028, %v5060
      %v5093 = vmax.f32 %v5029, %v5061
      %v5094 = vmax.f32 %v5030, %v5062
      %v5095 = vmax.f32 %v5031, %v5063
      %v5096 = vmax.f32 %v5032, %v5064
      %v5097 = vmax.f32 %v5033, %v5065
      %v5098 = vmax.f32 %v5034, %v5066
      %v5099 = vpack.c.bf16 %v5068, %v5067
      %v5100 = vpack.c.bf16 %v5070, %v5069
      %v5101 = vpack.c.bf16 %v5072, %v5071
      %v5102 = vpack.c.bf16 %v5074, %v5073
      %v5103 = vpack.c.bf16 %v5076, %v5075
      %v5104 = vpack.c.bf16 %v5078, %v5077
      %v5105 = vpack.c.bf16 %v5080, %v5079
      %v5106 = vpack.c.bf16 %v5082, %v5081
      %v5107 = vpack.c.bf16 %v5084, %v5083
      %v5108 = vpack.c.bf16 %v5086, %v5085
      %v5109 = vpack.c.bf16 %v5088, %v5087
      %v5110 = vpack.c.bf16 %v5090, %v5089
      %v5111 = vpack.c.bf16 %v5092, %v5091
      %v5112 = vpack.c.bf16 %v5094, %v5093
      %v5113 = vpack.c.bf16 %v5096, %v5095
      %v5114 = vpack.c.bf16 %v5098, %v5097
      %5115 = vst.msk [vmem:[#allocation3 + $0x10] sm:$0xff] %vm172, %v5099
      %5116 = vst.msk [vmem:[#allocation3 + $0x18] sm:$0xff] %vm172, %v5100
      %5117 = vst.msk [vmem:[#allocation3 + $0x20] sm:$0xff] %vm172, %v5101
      %5118 = vst.msk [vmem:[#allocation3 + $0x28] sm:$0xff] %vm172, %v5102
      %5119 = vst.msk [vmem:[#allocation3 + $0x30] sm:$0xff] %vm172, %v5103
      %5120 = vst.msk [vmem:[#allocation3 + $0x38] sm:$0xff] %vm172, %v5104
      %5121 = vst.msk [vmem:[#allocation3 + $0x40] sm:$0xff] %vm172, %v5105
      %5122 = vst.msk [vmem:[#allocation3 + $0x48] sm:$0xff] %vm172, %v5106
      %5123 = vst.msk [vmem:[#allocation3 + $0x50] sm:$0xff] %vm172, %v5107
      %5124 = vst.msk [vmem:[#allocation3 + $0x58] sm:$0xff] %vm172, %v5108
      %5125 = vst.msk [vmem:[#allocation3 + $0x60] sm:$0xff] %vm172, %v5109
      %5126 = vst.msk [vmem:[#allocation3 + $0x68] sm:$0xff] %vm172, %v5110
      %5127 = vst.msk [vmem:[#allocation3 + $0x70] sm:$0xff] %vm172, %v5111
      %5128 = vst.msk [vmem:[#allocation3 + $0x78] sm:$0xff] %vm172, %v5112
      %5129 = vst.msk [vmem:[#allocation3 + $0x80] sm:$0xff] %vm172, %v5113
      %5130 = vst.msk [vmem:[#allocation3 + $0x88] sm:$0xff] %vm172, %v5114
      %5131 = vst.msk [vmem:[#allocation4] sm:$0xff] %vm172, 0.0
      %5132 = vst.msk [vmem:[#allocation4 + $0x8] sm:$0xff] %vm172, 0.0
      %5133 = vst.msk [vmem:[#allocation4 + $0x10] sm:$0xff] %vm172, 0.0
      %5134 = vst.msk [vmem:[#allocation4 + $0x18] sm:$0xff] %vm172, 0.0
      %5135 = vst.msk [vmem:[#allocation4 + $0x20] sm:$0xff] %vm172, 0.0
      %5136 = vst.msk [vmem:[#allocation4 + $0x28] sm:$0xff] %vm172, 0.0
      %5137 = vst.msk [vmem:[#allocation4 + $0x30] sm:$0xff] %vm172, 0.0
      %5138 = vst.msk [vmem:[#allocation4 + $0x38] sm:$0xff] %vm172, 0.0
      %5139 = vst.msk [vmem:[#allocation4 + $0x40] sm:$0xff] %vm172, 0.0
      %5140 = vst.msk [vmem:[#allocation4 + $0x48] sm:$0xff] %vm172, 0.0
      %5141 = vst.msk [vmem:[#allocation4 + $0x50] sm:$0xff] %vm172, 0.0
      %5142 = vst.msk [vmem:[#allocation4 + $0x58] sm:$0xff] %vm172, 0.0
      %5143 = vst.msk [vmem:[#allocation4 + $0x60] sm:$0xff] %vm172, 0.0
      %5144 = vst.msk [vmem:[#allocation4 + $0x68] sm:$0xff] %vm172, 0.0
      %5145 = vst.msk [vmem:[#allocation4 + $0x70] sm:$0xff] %vm172, 0.0
      %5146 = vst.msk [vmem:[#allocation4 + $0x78] sm:$0xff] %vm172, 0.0
      %5147 = vst.msk [vmem:[#allocation4 + $0x80] sm:$0xff] %vm172, 0.0
      %5148 = vst.msk [vmem:[#allocation4 + $0x88] sm:$0xff] %vm172, 0.0
      %5149 = vst.msk [vmem:[#allocation4 + $0x90] sm:$0xff] %vm172, 0.0
      %5150 = vst.msk [vmem:[#allocation4 + $0x98] sm:$0xff] %vm172, 0.0
      %5151 = vst.msk [vmem:[#allocation4 + $0xa0] sm:$0xff] %vm172, 0.0
      %5152 = vst.msk [vmem:[#allocation4 + $0xa8] sm:$0xff] %vm172, 0.0
      %5153 = vst.msk [vmem:[#allocation4 + $0xb0] sm:$0xff] %vm172, 0.0
      %5154 = vst.msk [vmem:[#allocation4 + $0xb8] sm:$0xff] %vm172, 0.0
      %5155 = vst.msk [vmem:[#allocation4 + $0xc0] sm:$0xff] %vm172, 0.0
      %5156 = vst.msk [vmem:[#allocation4 + $0xc8] sm:$0xff] %vm172, 0.0
      %5157 = vst.msk [vmem:[#allocation4 + $0xd0] sm:$0xff] %vm172, 0.0
      %5158 = vst.msk [vmem:[#allocation4 + $0xd8] sm:$0xff] %vm172, 0.0
      %5159 = vst.msk [vmem:[#allocation4 + $0xe0] sm:$0xff] %vm172, 0.0
      %5160 = vst.msk [vmem:[#allocation4 + $0xe8] sm:$0xff] %vm172, 0.0
      %5161 = vst.msk [vmem:[#allocation4 + $0xf0] sm:$0xff] %vm172, 0.0
      %5162 = vst.msk [vmem:[#allocation4 + $0xf8] sm:$0xff] %vm172, 0.0
      %v5163 = vld [vmem:[#allocation3] sm:$0x80]
      %v5164 = vld [vmem:[#allocation3 + $0x8] sm:$0xff]
      %v5165 = vld [vmem:[#allocation3 + $0x10] sm:$0xff]
      %v5166 = vld [vmem:[#allocation3 + $0x18] sm:$0xff]
      %v5167 = vld [vmem:[#allocation3 + $0x20] sm:$0xff]
      %v5168 = vld [vmem:[#allocation3 + $0x28] sm:$0xff]
      %v5169 = vld [vmem:[#allocation3 + $0x30] sm:$0xff]
      %v5170 = vld [vmem:[#allocation3 + $0x38] sm:$0xff]
      %v5171 = vld [vmem:[#allocation3 + $0x40] sm:$0xff]
      %v5172 = vld [vmem:[#allocation3 + $0x48] sm:$0xff]
      %v5173 = vld [vmem:[#allocation3 + $0x50] sm:$0xff]
      %v5174 = vld [vmem:[#allocation3 + $0x58] sm:$0xff]
      %v5175 = vld [vmem:[#allocation3 + $0x60] sm:$0xff]
      %v5176 = vld [vmem:[#allocation3 + $0x68] sm:$0xff]
      %v5177 = vld [vmem:[#allocation3 + $0x70] sm:$0xff]
      %v5178 = vld [vmem:[#allocation3 + $0x78] sm:$0xff]
      %v5179 = vld [vmem:[#allocation3 + $0x80] sm:$0xff]
      %v5180 = vmul.bf16 %v5163, %v667
      %v5181 = vmul.bf16 %v5164, %v675
      %v5182 = vmul.bf16 %v5165, %v683
      %v5183 = vmul.bf16 %v5166, %v691
      %v5184 = vmul.bf16 %v5167, %v699
      %v5185 = vmul.bf16 %v5168, %v707
      %v5186 = vmul.bf16 %v5169, %v715
      %v5187 = vmul.bf16 %v5170, %v723
      %v5188 = vmul.bf16 %v5171, %v731
      %v5189 = vmul.bf16 %v5172, %v739
      %v5190 = vmul.bf16 %v5173, %v747
      %v5191 = vmul.bf16 %v5174, %v755
      %v5192 = vmul.bf16 %v5175, %v763
      %v5193 = vmul.bf16 %v5176, %v771
      %v5194 = vmul.bf16 %v5177, %v779
      %v5195 = vmul.bf16 %v5178, %v787
      %v5196 = vmul.bf16 %v5179, %v790
      %v5197 = vld [vmem:[%s2] sm:$0xf]
      %v5198 = vld [vmem:[#allocation4] sm:$0xff]
      %v5199 = vld [vmem:[#allocation4 + $0x8] sm:$0xff]
      %v5200 = vld [vmem:[#allocation4 + $0x10] sm:$0xff]
      %v5201 = vld [vmem:[#allocation4 + $0x18] sm:$0xff]
      %v5202 = vld [vmem:[#allocation4 + $0x20] sm:$0xff]
      %v5203 = vld [vmem:[#allocation4 + $0x28] sm:$0xff]
      %v5204 = vld [vmem:[#allocation4 + $0x30] sm:$0xff]
      %v5205 = vld [vmem:[#allocation4 + $0x38] sm:$0xff]
      %v5206 = vld [vmem:[#allocation4 + $0x40] sm:$0xff]
      %v5207 = vld [vmem:[#allocation4 + $0x48] sm:$0xff]
      %v5208 = vld [vmem:[#allocation4 + $0x50] sm:$0xff]
      %v5209 = vld [vmem:[#allocation4 + $0x58] sm:$0xff]
      %v5210 = vld [vmem:[#allocation4 + $0x60] sm:$0xff]
      %v5211 = vld [vmem:[#allocation4 + $0x68] sm:$0xff]
      %v5212 = vld [vmem:[#allocation4 + $0x70] sm:$0xff]
      %v5213 = vld [vmem:[#allocation4 + $0x78] sm:$0xff]
      %v5214 = vld [vmem:[#allocation4 + $0x80] sm:$0xff]
      %v5215 = vld [vmem:[#allocation4 + $0x88] sm:$0xff]
      %v5216 = vld [vmem:[#allocation4 + $0x90] sm:$0xff]
      %v5217 = vld [vmem:[#allocation4 + $0x98] sm:$0xff]
      %v5218 = vld [vmem:[#allocation4 + $0xa0] sm:$0xff]
      %v5219 = vld [vmem:[#allocation4 + $0xa8] sm:$0xff]
      %v5220 = vld [vmem:[#allocation4 + $0xb0] sm:$0xff]
      %v5221 = vld [vmem:[#allocation4 + $0xb8] sm:$0xff]
      %v5222 = vld [vmem:[#allocation4 + $0xc0] sm:$0xff]
      %v5223 = vld [vmem:[#allocation4 + $0xc8] sm:$0xff]
      %v5224 = vld [vmem:[#allocation4 + $0xd0] sm:$0xff]
      %v5225 = vld [vmem:[#allocation4 + $0xd8] sm:$0xff]
      %v5226 = vld [vmem:[#allocation4 + $0xe0] sm:$0xff]
      %v5227 = vld [vmem:[#allocation4 + $0xe8] sm:$0xff]
      %v5228 = vld [vmem:[#allocation4 + $0xf0] sm:$0xff]
      %v5229 = vld [vmem:[#allocation4 + $0xf8] sm:$0xff]
      %v5231 = vshrl.u32 %v5180, 16
      %v5233 = vrot.slane %v5231, 7
      %v5235 = vshrl.u32 %v5181, 16
      %v5237 = vrot.slane %v5235, 7
      %v5238 = vshll.u32 %v5181, 16
      %v5240 = vor.u32 %v5237, %v5238
      %v5241 = vsel %vm858, %v5233, %v5240
      %v5243 = vshrl.u32 %v5182, 16
      %v5245 = vrot.slane %v5243, 7
      %v5246 = vshll.u32 %v5182, 16
      %v5248 = vor.u32 %v5245, %v5246
      %v5249 = vsel %vm858, %v5237, %v5248
      %v5251 = vshrl.u32 %v5183, 16
      %v5253 = vrot.slane %v5251, 7
      %v5254 = vshll.u32 %v5183, 16
      %v5256 = vor.u32 %v5253, %v5254
      %v5257 = vsel %vm858, %v5245, %v5256
      %v5259 = vshrl.u32 %v5184, 16
      %v5261 = vrot.slane %v5259, 7
      %v5262 = vshll.u32 %v5184, 16
      %v5264 = vor.u32 %v5261, %v5262
      %v5265 = vsel %vm858, %v5253, %v5264
      %v5267 = vshrl.u32 %v5185, 16
      %v5269 = vrot.slane %v5267, 7
      %v5270 = vshll.u32 %v5185, 16
      %v5272 = vor.u32 %v5269, %v5270
      %v5273 = vsel %vm858, %v5261, %v5272
      %v5275 = vshrl.u32 %v5186, 16
      %v5277 = vrot.slane %v5275, 7
      %v5278 = vshll.u32 %v5186, 16
      %v5280 = vor.u32 %v5277, %v5278
      %v5281 = vsel %vm858, %v5269, %v5280
      %v5283 = vshrl.u32 %v5187, 16
      %v5285 = vrot.slane %v5283, 7
      %v5286 = vshll.u32 %v5187, 16
      %v5288 = vor.u32 %v5285, %v5286
      %v5289 = vsel %vm858, %v5277, %v5288
      %v5291 = vshrl.u32 %v5188, 16
      %v5293 = vrot.slane %v5291, 7
      %v5294 = vshll.u32 %v5188, 16
      %v5296 = vor.u32 %v5293, %v5294
      %v5297 = vsel %vm858, %v5285, %v5296
      %v5299 = vshrl.u32 %v5189, 16
      %v5301 = vrot.slane %v5299, 7
      %v5302 = vshll.u32 %v5189, 16
      %v5304 = vor.u32 %v5301, %v5302
      %v5305 = vsel %vm858, %v5293, %v5304
      %v5307 = vshrl.u32 %v5190, 16
      %v5309 = vrot.slane %v5307, 7
      %v5310 = vshll.u32 %v5190, 16
      %v5312 = vor.u32 %v5309, %v5310
      %v5313 = vsel %vm858, %v5301, %v5312
      %v5315 = vshrl.u32 %v5191, 16
      %v5317 = vrot.slane %v5315, 7
      %v5318 = vshll.u32 %v5191, 16
      %v5320 = vor.u32 %v5317, %v5318
      %v5321 = vsel %vm858, %v5309, %v5320
      %v5323 = vshrl.u32 %v5192, 16
      %v5325 = vrot.slane %v5323, 7
      %v5326 = vshll.u32 %v5192, 16
      %v5328 = vor.u32 %v5325, %v5326
      %v5329 = vsel %vm858, %v5317, %v5328
      %v5331 = vshrl.u32 %v5193, 16
      %v5333 = vrot.slane %v5331, 7
      %v5334 = vshll.u32 %v5193, 16
      %v5336 = vor.u32 %v5333, %v5334
      %v5337 = vsel %vm858, %v5325, %v5336
      %v5339 = vshrl.u32 %v5194, 16
      %v5341 = vrot.slane %v5339, 7
      %v5342 = vshll.u32 %v5194, 16
      %v5344 = vor.u32 %v5341, %v5342
      %v5345 = vsel %vm858, %v5333, %v5344
      %v5347 = vshrl.u32 %v5195, 16
      %v5349 = vrot.slane %v5347, 7
      %v5350 = vshll.u32 %v5195, 16
      %v5352 = vor.u32 %v5349, %v5350
      %v5353 = vsel %vm858, %v5341, %v5352
      %v5355 = vshrl.u32 %v5196, 16
      %v5357 = vrot.slane %v5355, 7
      %v5358 = vshll.u32 %v5196, 16
      %v5360 = vor.u32 %v5357, %v5358
      %v5361 = vsel %vm858, %v5349, %v5360
      %v5363 = vsel %vm172, %v5241, 0
      %v5366 = vsel %vm172, %v5249, 0
      %v5369 = vsel %vm172, %v5257, 0
      %v5372 = vsel %vm172, %v5265, 0
      %v5375 = vsel %vm172, %v5273, 0
      %v5378 = vsel %vm172, %v5281, 0
      %v5381 = vsel %vm172, %v5289, 0
      %v5384 = vsel %vm172, %v5297, 0
      %v5387 = vsel %vm172, %v5305, 0
      %v5390 = vsel %vm172, %v5313, 0
      %v5393 = vsel %vm172, %v5321, 0
      %v5396 = vsel %vm172, %v5329, 0
      %v5399 = vsel %vm172, %v5337, 0
      %v5402 = vsel %vm172, %v5345, 0
      %v5405 = vsel %vm172, %v5353, 0
      %v5408 = vsel %vm172, %v5361, 0
      %v5411 = vsel %vm1039, %v5197, 0
      %5413 = vmatprep.subr.bf16.mxu0 0
      %5414 = vmatpush1.bf16.msra.mxu0 %v5411
      %5415 = vmatprep.subr.bf16.mxu0 0
      %5416 = vmatpush1.bf16.msra.mxu0 0
      %5417 = vmatprep.subr.bf16.mxu0 0
      %5418 = vmatpush1.bf16.msra.mxu0 0
      %5419 = vmatprep.subr.bf16.mxu0 0
      %5420 = vmatpush1.bf16.msra.mxu0 0
      %5421 = vmatprep.subr.bf16.mxu0 0
      %5422 = vmatpush1.bf16.msra.mxu0 0
      %5423 = vmatprep.subr.bf16.mxu0 0
      %5424 = vmatpush1.bf16.msra.mxu0 0
      %5425 = vmatprep.subr.bf16.mxu0 0
      %5426 = vmatpush1.bf16.msra.mxu0 0
      %5427 = vmatprep.subr.bf16.mxu0 0
      %5428 = vmatpush1.bf16.msra.mxu0 0
      %5429 = vmatprep.subr.bf16.mxu0 0
      %5430 = vmatpush1.bf16.msra.mxu0 0
      %5431 = vmatprep.subr.bf16.mxu0 0
      %5432 = vmatpush1.bf16.msra.mxu0 0
      %5433 = vmatprep.subr.bf16.mxu0 0
      %5434 = vmatpush1.bf16.msra.mxu0 0
      %5435 = vmatprep.subr.bf16.mxu0 0
      %5436 = vmatpush1.bf16.msra.mxu0 0
      %5437 = vmatprep.subr.bf16.mxu0 0
      %5438 = vmatpush1.bf16.msra.mxu0 0
      %5439 = vmatprep.subr.bf16.mxu0 0
      %5440 = vmatpush1.bf16.msra.mxu0 0
      %5441 = vmatprep.subr.bf16.mxu0 0
      %5442 = vmatpush1.bf16.msra.mxu0 0
      %5443 = vmatprep.subr.bf16.mxu0 0
      %5444 = vmatpush1.bf16.msra.mxu0 0
      %5445 = vmatprep.mubr.bf16.mxu0 0
      %5446 = vmatmul.mubr.bf16.gmra.mrb[0].mxu0 %v5363
      %v5447 = vpop.f32.mrb[0].mxu0
      %v5448 = vadd.f32 0.0, %v5447
      %v5449 = vpop.f32.mrb[0].mxu0
      %v5450 = vpop.f32.mrb[0].mxu0
      %v5451 = vadd.f32 0.0, %v5450
      %v5452 = vpop.f32.mrb[0].mxu0
      %5453 = vmatprep.mubr.bf16.mxu0 0
      %5454 = vmatmul.mubr.bf16.gmra.mrb[0].mxu0 %v5366
      %v5455 = vpop.f32.mrb[0].mxu0
      %v5456 = vadd.f32 0.0, %v5455
      %v5457 = vpop.f32.mrb[0].mxu0
      %v5458 = vpop.f32.mrb[0].mxu0
      %v5459 = vadd.f32 0.0, %v5458
      %v5460 = vpop.f32.mrb[0].mxu0
      %5461 = vmatprep.mubr.bf16.mxu0 0
      %5462 = vmatmul.mubr.bf16.gmra.mrb[0].mxu0 %v5369
      %v5463 = vpop.f32.mrb[0].mxu0
      %v5464 = vadd.f32 0.0, %v5463
      %v5465 = vpop.f32.mrb[0].mxu0
      %v5466 = vpop.f32.mrb[0].mxu0
      %v5467 = vadd.f32 0.0, %v5466
      %v5468 = vpop.f32.mrb[0].mxu0
      %5469 = vmatprep.mubr.bf16.mxu0 0
      %5470 = vmatmul.mubr.bf16.gmra.mrb[0].mxu0 %v5372
      %v5471 = vpop.f32.mrb[0].mxu0
      %v5472 = vadd.f32 0.0, %v5471
      %v5473 = vpop.f32.mrb[0].mxu0
      %v5474 = vpop.f32.mrb[0].mxu0
      %v5475 = vadd.f32 0.0, %v5474
      %v5476 = vpop.f32.mrb[0].mxu0
      %5477 = vmatprep.mubr.bf16.mxu0 0
      %5478 = vmatmul.mubr.bf16.gmra.mrb[0].mxu0 %v5375
      %v5479 = vpop.f32.mrb[0].mxu0
      %v5480 = vadd.f32 0.0, %v5479
      %v5481 = vpop.f32.mrb[0].mxu0
      %v5482 = vpop.f32.mrb[0].mxu0
      %v5483 = vadd.f32 0.0, %v5482
      %v5484 = vpop.f32.mrb[0].mxu0
      %5485 = vmatprep.mubr.bf16.mxu0 0
      %5486 = vmatmul.mubr.bf16.gmra.mrb[0].mxu0 %v5378
      %v5487 = vpop.f32.mrb[0].mxu0
      %v5488 = vadd.f32 0.0, %v5487
      %v5489 = vpop.f32.mrb[0].mxu0
      %v5490 = vpop.f32.mrb[0].mxu0
      %v5491 = vadd.f32 0.0, %v5490
      %v5492 = vpop.f32.mrb[0].mxu0
      %5493 = vmatprep.mubr.bf16.mxu0 0
      %5494 = vmatmul.mubr.bf16.gmra.mrb[0].mxu0 %v5381
      %v5495 = vpop.f32.mrb[0].mxu0
      %v5496 = vadd.f32 0.0, %v5495
      %v5497 = vpop.f32.mrb[0].mxu0
      %v5498 = vpop.f32.mrb[0].mxu0
      %v5499 = vadd.f32 0.0, %v5498
      %v5500 = vpop.f32.mrb[0].mxu0
      %5501 = vmatprep.mubr.bf16.mxu0 0
      %5502 = vmatmul.mubr.bf16.gmra.mrb[0].mxu0 %v5384
      %v5503 = vpop.f32.mrb[0].mxu0
      %v5504 = vadd.f32 0.0, %v5503
      %v5505 = vpop.f32.mrb[0].mxu0
      %v5506 = vpop.f32.mrb[0].mxu0
      %v5507 = vadd.f32 0.0, %v5506
      %v5508 = vpop.f32.mrb[0].mxu0
      %5509 = vmatprep.mubr.bf16.mxu0 0
      %5510 = vmatmul.mubr.bf16.gmra.mrb[0].mxu0 %v5387
      %v5511 = vpop.f32.mrb[0].mxu0
      %v5512 = vadd.f32 0.0, %v5511
      %v5513 = vpop.f32.mrb[0].mxu0
      %v5514 = vpop.f32.mrb[0].mxu0
      %v5515 = vadd.f32 0.0, %v5514
      %v5516 = vpop.f32.mrb[0].mxu0
      %5517 = vmatprep.mubr.bf16.mxu0 0
      %5518 = vmatmul.mubr.bf16.gmra.mrb[0].mxu0 %v5390
      %v5519 = vpop.f32.mrb[0].mxu0
      %v5520 = vadd.f32 0.0, %v5519
      %v5521 = vpop.f32.mrb[0].mxu0
      %v5522 = vpop.f32.mrb[0].mxu0
      %v5523 = vadd.f32 0.0, %v5522
      %v5524 = vpop.f32.mrb[0].mxu0
      %5525 = vmatprep.mubr.bf16.mxu0 0
      %5526 = vmatmul.mubr.bf16.gmra.mrb[0].mxu0 %v5393
      %v5527 = vpop.f32.mrb[0].mxu0
      %v5528 = vadd.f32 0.0, %v5527
      %v5529 = vpop.f32.mrb[0].mxu0
      %v5530 = vpop.f32.mrb[0].mxu0
      %v5531 = vadd.f32 0.0, %v5530
      %v5532 = vpop.f32.mrb[0].mxu0
      %5533 = vmatprep.mubr.bf16.mxu0 0
      %5534 = vmatmul.mubr.bf16.gmra.mrb[0].mxu0 %v5396
      %v5535 = vpop.f32.mrb[0].mxu0
      %v5536 = vadd.f32 0.0, %v5535
      %v5537 = vpop.f32.mrb[0].mxu0
      %v5538 = vpop.f32.mrb[0].mxu0
      %v5539 = vadd.f32 0.0, %v5538
      %v5540 = vpop.f32.mrb[0].mxu0
      %5541 = vmatprep.mubr.bf16.mxu0 0
      %5542 = vmatmul.mubr.bf16.gmra.mrb[0].mxu0 %v5399
      %v5543 = vpop.f32.mrb[0].mxu0
      %v5544 = vadd.f32 0.0, %v5543
      %v5545 = vpop.f32.mrb[0].mxu0
      %v5546 = vpop.f32.mrb[0].mxu0
      %v5547 = vadd.f32 0.0, %v5546
      %v5548 = vpop.f32.mrb[0].mxu0
      %5549 = vmatprep.mubr.bf16.mxu0 0
      %5550 = vmatmul.mubr.bf16.gmra.mrb[0].mxu0 %v5402
      %v5551 = vpop.f32.mrb[0].mxu0
      %v5552 = vadd.f32 0.0, %v5551
      %v5553 = vpop.f32.mrb[0].mxu0
      %v5554 = vpop.f32.mrb[0].mxu0
      %v5555 = vadd.f32 0.0, %v5554
      %v5556 = vpop.f32.mrb[0].mxu0
      %5557 = vmatprep.mubr.bf16.mxu0 0
      %5558 = vmatmul.mubr.bf16.gmra.mrb[0].mxu0 %v5405
      %v5559 = vpop.f32.mrb[0].mxu0
      %v5560 = vadd.f32 0.0, %v5559
      %v5561 = vpop.f32.mrb[0].mxu0
      %v5562 = vpop.f32.mrb[0].mxu0
      %v5563 = vadd.f32 0.0, %v5562
      %v5564 = vpop.f32.mrb[0].mxu0
      %5565 = vmatprep.mubr.bf16.mxu0 0
      %5566 = vmatmul.mubr.bf16.gmra.mrb[0].mxu0 %v5408
      %v5567 = vpop.f32.mrb[0].mxu0
      %v5568 = vadd.f32 0.0, %v5567
      %v5569 = vpop.f32.mrb[0].mxu0
      %v5570 = vpop.f32.mrb[0].mxu0
      %v5571 = vadd.f32 0.0, %v5570
      %v5572 = vpop.f32.mrb[0].mxu0
      %5573 = vdwg.mxu0
      %v5574 = vadd.f32 %v5198, %v5448
      %v5575 = vadd.f32 %v5199, %v5451
      %v5576 = vadd.f32 %v5200, %v5456
      %v5577 = vadd.f32 %v5201, %v5459
      %v5578 = vadd.f32 %v5202, %v5464
      %v5579 = vadd.f32 %v5203, %v5467
      %v5580 = vadd.f32 %v5204, %v5472
      %v5581 = vadd.f32 %v5205, %v5475
      %v5582 = vadd.f32 %v5206, %v5480
      %v5583 = vadd.f32 %v5207, %v5483
      %v5584 = vadd.f32 %v5208, %v5488
      %v5585 = vadd.f32 %v5209, %v5491
      %v5586 = vadd.f32 %v5210, %v5496
      %v5587 = vadd.f32 %v5211, %v5499
      %v5588 = vadd.f32 %v5212, %v5504
      %v5589 = vadd.f32 %v5213, %v5507
      %v5590 = vadd.f32 %v5214, %v5512
      %v5591 = vadd.f32 %v5215, %v5515
      %v5592 = vadd.f32 %v5216, %v5520
      %v5593 = vadd.f32 %v5217, %v5523
      %v5594 = vadd.f32 %v5218, %v5528
      %v5595 = vadd.f32 %v5219, %v5531
      %v5596 = vadd.f32 %v5220, %v5536
      %v5597 = vadd.f32 %v5221, %v5539
      %v5598 = vadd.f32 %v5222, %v5544
      %v5599 = vadd.f32 %v5223, %v5547
      %v5600 = vadd.f32 %v5224, %v5552
      %v5601 = vadd.f32 %v5225, %v5555
      %v5602 = vadd.f32 %v5226, %v5560
      %v5603 = vadd.f32 %v5227, %v5563
      %v5604 = vadd.f32 %v5228, %v5568
      %v5605 = vadd.f32 %v5229, %v5571
      %5606 = vst.msk [vmem:[#allocation4] sm:$0xff] %vm172, %v5574
      %5607 = vst.msk [vmem:[#allocation4 + $0x8] sm:$0xff] %vm172, %v5575
      %5608 = vst.msk [vmem:[#allocation4 + $0x10] sm:$0xff] %vm172, %v5576
      %5609 = vst.msk [vmem:[#allocation4 + $0x18] sm:$0xff] %vm172, %v5577
      %5610 = vst.msk [vmem:[#allocation4 + $0x20] sm:$0xff] %vm172, %v5578
      %5611 = vst.msk [vmem:[#allocation4 + $0x28] sm:$0xff] %vm172, %v5579
      %5612 = vst.msk [vmem:[#allocation4 + $0x30] sm:$0xff] %vm172, %v5580
      %5613 = vst.msk [vmem:[#allocation4 + $0x38] sm:$0xff] %vm172, %v5581
      %5614 = vst.msk [vmem:[#allocation4 + $0x40] sm:$0xff] %vm172, %v5582
      %5615 = vst.msk [vmem:[#allocation4 + $0x48] sm:$0xff] %vm172, %v5583
      %5616 = vst.msk [vmem:[#allocation4 + $0x50] sm:$0xff] %vm172, %v5584
      %5617 = vst.msk [vmem:[#allocation4 + $0x58] sm:$0xff] %vm172, %v5585
      %5618 = vst.msk [vmem:[#allocation4 + $0x60] sm:$0xff] %vm172, %v5586
      %5619 = vst.msk [vmem:[#allocation4 + $0x68] sm:$0xff] %vm172, %v5587
      %5620 = vst.msk [vmem:[#allocation4 + $0x70] sm:$0xff] %vm172, %v5588
      %5621 = vst.msk [vmem:[#allocation4 + $0x78] sm:$0xff] %vm172, %v5589
      %5622 = vst.msk [vmem:[#allocation4 + $0x80] sm:$0xff] %vm172, %v5590
      %5623 = vst.msk [vmem:[#allocation4 + $0x88] sm:$0xff] %vm172, %v5591
      %5624 = vst.msk [vmem:[#allocation4 + $0x90] sm:$0xff] %vm172, %v5592
      %5625 = vst.msk [vmem:[#allocation4 + $0x98] sm:$0xff] %vm172, %v5593
      %5626 = vst.msk [vmem:[#allocation4 + $0xa0] sm:$0xff] %vm172, %v5594
      %5627 = vst.msk [vmem:[#allocation4 + $0xa8] sm:$0xff] %vm172, %v5595
      %5628 = vst.msk [vmem:[#allocation4 + $0xb0] sm:$0xff] %vm172, %v5596
      %5629 = vst.msk [vmem:[#allocation4 + $0xb8] sm:$0xff] %vm172, %v5597
      %5630 = vst.msk [vmem:[#allocation4 + $0xc0] sm:$0xff] %vm172, %v5598
      %5631 = vst.msk [vmem:[#allocation4 + $0xc8] sm:$0xff] %vm172, %v5599
      %5632 = vst.msk [vmem:[#allocation4 + $0xd0] sm:$0xff] %vm172, %v5600
      %5633 = vst.msk [vmem:[#allocation4 + $0xd8] sm:$0xff] %vm172, %v5601
      %5634 = vst.msk [vmem:[#allocation4 + $0xe0] sm:$0xff] %vm172, %v5602
      %5635 = vst.msk [vmem:[#allocation4 + $0xe8] sm:$0xff] %vm172, %v5603
      %5636 = vst.msk [vmem:[#allocation4 + $0xf0] sm:$0xff] %vm172, %v5604
      %5637 = vst.msk [vmem:[#allocation4 + $0xf8] sm:$0xff] %vm172, %v5605
      %v5638 = vld [vmem:[#allocation3 + $0x8] sm:$0xff]
      %v5639 = vld [vmem:[#allocation3 + $0x10] sm:$0xff]
      %v5640 = vld [vmem:[#allocation3 + $0x18] sm:$0xff]
      %v5641 = vld [vmem:[#allocation3 + $0x20] sm:$0xff]
      %v5642 = vld [vmem:[#allocation3 + $0x28] sm:$0xff]
      %v5643 = vld [vmem:[#allocation3 + $0x30] sm:$0xff]
      %v5644 = vld [vmem:[#allocation3 + $0x38] sm:$0xff]
      %v5645 = vld [vmem:[#allocation3 + $0x40] sm:$0xff]
      %v5646 = vld [vmem:[#allocation3 + $0x48] sm:$0xff]
      %v5647 = vld [vmem:[#allocation3 + $0x50] sm:$0xff]
      %v5648 = vld [vmem:[#allocation3 + $0x58] sm:$0xff]
      %v5649 = vld [vmem:[#allocation3 + $0x60] sm:$0xff]
      %v5650 = vld [vmem:[#allocation3 + $0x68] sm:$0xff]
      %v5651 = vld [vmem:[#allocation3 + $0x70] sm:$0xff]
      %v5652 = vld [vmem:[#allocation3 + $0x78] sm:$0xff]
      %v5653 = vld [vmem:[#allocation3 + $0x80] sm:$0xff]
      %v5654 = vld [vmem:[%s2 + $0x4] sm:$0xf]
      %v5655 = vld [vmem:[#allocation4] sm:$0xff]
      %v5656 = vld [vmem:[#allocation4 + $0x8] sm:$0xff]
      %v5657 = vld [vmem:[#allocation4 + $0x10] sm:$0xff]
      %v5658 = vld [vmem:[#allocation4 + $0x18] sm:$0xff]
      %v5659 = vld [vmem:[#allocation4 + $0x20] sm:$0xff]
      %v5660 = vld [vmem:[#allocation4 + $0x28] sm:$0xff]
      %v5661 = vld [vmem:[#allocation4 + $0x30] sm:$0xff]
      %v5662 = vld [vmem:[#allocation4 + $0x38] sm:$0xff]
      %v5663 = vld [vmem:[#allocation4 + $0x40] sm:$0xff]
      %v5664 = vld [vmem:[#allocation4 + $0x48] sm:$0xff]
      %v5665 = vld [vmem:[#allocation4 + $0x50] sm:$0xff]
      %v5666 = vld [vmem:[#allocation4 + $0x58] sm:$0xff]
      %v5667 = vld [vmem:[#allocation4 + $0x60] sm:$0xff]
      %v5668 = vld [vmem:[#allocation4 + $0x68] sm:$0xff]
      %v5669 = vld [vmem:[#allocation4 + $0x70] sm:$0xff]
      %v5670 = vld [vmem:[#allocation4 + $0x78] sm:$0xff]
      %v5671 = vld [vmem:[#allocation4 + $0x80] sm:$0xff]
      %v5672 = vld [vmem:[#allocation4 + $0x88] sm:$0xff]
      %v5673 = vld [vmem:[#allocation4 + $0x90] sm:$0xff]
      %v5674 = vld [vmem:[#allocation4 + $0x98] sm:$0xff]
      %v5675 = vld [vmem:[#allocation4 + $0xa0] sm:$0xff]
      %v5676 = vld [vmem:[#allocation4 + $0xa8] sm:$0xff]
      %v5677 = vld [vmem:[#allocation4 + $0xb0] sm:$0xff]
      %v5678 = vld [vmem:[#allocation4 + $0xb8] sm:$0xff]
      %v5679 = vld [vmem:[#allocation4 + $0xc0] sm:$0xff]
      %v5680 = vld [vmem:[#allocation4 + $0xc8] sm:$0xff]
      %v5681 = vld [vmem:[#allocation4 + $0xd0] sm:$0xff]
      %v5682 = vld [vmem:[#allocation4 + $0xd8] sm:$0xff]
      %v5683 = vld [vmem:[#allocation4 + $0xe0] sm:$0xff]
      %v5684 = vld [vmem:[#allocation4 + $0xe8] sm:$0xff]
      %v5685 = vld [vmem:[#allocation4 + $0xf0] sm:$0xff]
      %v5686 = vld [vmem:[#allocation4 + $0xf8] sm:$0xff]
      %v5688 = vsel %vm172, %v5638, 0
      %v5691 = vsel %vm172, %v5639, 0
      %v5694 = vsel %vm172, %v5640, 0
      %v5697 = vsel %vm172, %v5641, 0
      %v5700 = vsel %vm172, %v5642, 0
      %v5703 = vsel %vm172, %v5643, 0
      %v5706 = vsel %vm172, %v5644, 0
      %v5709 = vsel %vm172, %v5645, 0
      %v5712 = vsel %vm172, %v5646, 0
      %v5715 = vsel %vm172, %v5647, 0
      %v5718 = vsel %vm172, %v5648, 0
      %v5721 = vsel %vm172, %v5649, 0
      %v5724 = vsel %vm172, %v5650, 0
      %v5727 = vsel %vm172, %v5651, 0
      %v5730 = vsel %vm172, %v5652, 0
      %v5733 = vsel %vm172, %v5653, 0
      %v5736 = vsel %vm1039, %v5654, 0
      %5738 = vmatprep.subr.bf16.mxu0 0
      %5739 = vmatpush1.bf16.msra.mxu0 %v5736
      %5740 = vmatprep.subr.bf16.mxu0 0
      %5741 = vmatpush1.bf16.msra.mxu0 0
      %5742 = vmatprep.subr.bf16.mxu0 0
      %5743 = vmatpush1.bf16.msra.mxu0 0
      %5744 = vmatprep.subr.bf16.mxu0 0
      %5745 = vmatpush1.bf16.msra.mxu0 0
      %5746 = vmatprep.subr.bf16.mxu0 0
      %5747 = vmatpush1.bf16.msra.mxu0 0
      %5748 = vmatprep.subr.bf16.mxu0 0
      %5749 = vmatpush1.bf16.msra.mxu0 0
      %5750 = vmatprep.subr.bf16.mxu0 0
      %5751 = vmatpush1.bf16.msra.mxu0 0
      %5752 = vmatprep.subr.bf16.mxu0 0
      %5753 = vmatpush1.bf16.msra.mxu0 0
      %5754 = vmatprep.subr.bf16.mxu0 0
      %5755 = vmatpush1.bf16.msra.mxu0 0
      %5756 = vmatprep.subr.bf16.mxu0 0
      %5757 = vmatpush1.bf16.msra.mxu0 0
      %5758 = vmatprep.subr.bf16.mxu0 0
      %5759 = vmatpush1.bf16.msra.mxu0 0
      %5760 = vmatprep.subr.bf16.mxu0 0
      %5761 = vmatpush1.bf16.msra.mxu0 0
      %5762 = vmatprep.subr.bf16.mxu0 0
      %5763 = vmatpush1.bf16.msra.mxu0 0
      %5764 = vmatprep.subr.bf16.mxu0 0
      %5765 = vmatpush1.bf16.msra.mxu0 0
      %5766 = vmatprep.subr.bf16.mxu0 0
      %5767 = vmatpush1.bf16.msra.mxu0 0
      %5768 = vmatprep.subr.bf16.mxu0 0
      %5769 = vmatpush1.bf16.msra.mxu0 0
      %5770 = vmatprep.mubr.bf16.mxu0 0
      %5771 = vmatmul.mubr.bf16.gmra.mrb[0].mxu0 %v5688
      %v5772 = vpop.f32.mrb[0].mxu0
      %v5773 = vadd.f32 0.0, %v5772
      %v5774 = vpop.f32.mrb[0].mxu0
      %v5775 = vpop.f32.mrb[0].mxu0
      %v5776 = vadd.f32 0.0, %v5775
      %v5777 = vpop.f32.mrb[0].mxu0
      %5778 = vmatprep.mubr.bf16.mxu0 0
      %5779 = vmatmul.mubr.bf16.gmra.mrb[0].mxu0 %v5691
      %v5780 = vpop.f32.mrb[0].mxu0
      %v5781 = vadd.f32 0.0, %v5780
      %v5782 = vpop.f32.mrb[0].mxu0
      %v5783 = vpop.f32.mrb[0].mxu0
      %v5784 = vadd.f32 0.0, %v5783
      %v5785 = vpop.f32.mrb[0].mxu0
      %5786 = vmatprep.mubr.bf16.mxu0 0
      %5787 = vmatmul.mubr.bf16.gmra.mrb[0].mxu0 %v5694
      %v5788 = vpop.f32.mrb[0].mxu0
      %v5789 = vadd.f32 0.0, %v5788
      %v5790 = vpop.f32.mrb[0].mxu0
      %v5791 = vpop.f32.mrb[0].mxu0
      %v5792 = vadd.f32 0.0, %v5791
      %v5793 = vpop.f32.mrb[0].mxu0
      %5794 = vmatprep.mubr.bf16.mxu0 0
      %5795 = vmatmul.mubr.bf16.gmra.mrb[0].mxu0 %v5697
      %v5796 = vpop.f32.mrb[0].mxu0
      %v5797 = vadd.f32 0.0, %v5796
      %v5798 = vpop.f32.mrb[0].mxu0
      %v5799 = vpop.f32.mrb[0].mxu0
      %v5800 = vadd.f32 0.0, %v5799
      %v5801 = vpop.f32.mrb[0].mxu0
      %5802 = vmatprep.mubr.bf16.mxu0 0
      %5803 = vmatmul.mubr.bf16.gmra.mrb[0].mxu0 %v5700
      %v5804 = vpop.f32.mrb[0].mxu0
      %v5805 = vadd.f32 0.0, %v5804
      %v5806 = vpop.f32.mrb[0].mxu0
      %v5807 = vpop.f32.mrb[0].mxu0
      %v5808 = vadd.f32 0.0, %v5807
      %v5809 = vpop.f32.mrb[0].mxu0
      %5810 = vmatprep.mubr.bf16.mxu0 0
      %5811 = vmatmul.mubr.bf16.gmra.mrb[0].mxu0 %v5703
      %v5812 = vpop.f32.mrb[0].mxu0
      %v5813 = vadd.f32 0.0, %v5812
      %v5814 = vpop.f32.mrb[0].mxu0
      %v5815 = vpop.f32.mrb[0].mxu0
      %v5816 = vadd.f32 0.0, %v5815
      %v5817 = vpop.f32.mrb[0].mxu0
      %5818 = vmatprep.mubr.bf16.mxu0 0
      %5819 = vmatmul.mubr.bf16.gmra.mrb[0].mxu0 %v5706
      %v5820 = vpop.f32.mrb[0].mxu0
      %v5821 = vadd.f32 0.0, %v5820
      %v5822 = vpop.f32.mrb[0].mxu0
      %v5823 = vpop.f32.mrb[0].mxu0
      %v5824 = vadd.f32 0.0, %v5823
      %v5825 = vpop.f32.mrb[0].mxu0
      %5826 = vmatprep.mubr.bf16.mxu0 0
      %5827 = vmatmul.mubr.bf16.gmra.mrb[0].mxu0 %v5709
      %v5828 = vpop.f32.mrb[0].mxu0
      %v5829 = vadd.f32 0.0, %v5828
      %v5830 = vpop.f32.mrb[0].mxu0
      %v5831 = vpop.f32.mrb[0].mxu0
      %v5832 = vadd.f32 0.0, %v5831
      %v5833 = vpop.f32.mrb[0].mxu0
      %5834 = vmatprep.mubr.bf16.mxu0 0
      %5835 = vmatmul.mubr.bf16.gmra.mrb[0].mxu0 %v5712
      %v5836 = vpop.f32.mrb[0].mxu0
      %v5837 = vadd.f32 0.0, %v5836
      %v5838 = vpop.f32.mrb[0].mxu0
      %v5839 = vpop.f32.mrb[0].mxu0
      %v5840 = vadd.f32 0.0, %v5839
      %v5841 = vpop.f32.mrb[0].mxu0
      %5842 = vmatprep.mubr.bf16.mxu0 0
      %5843 = vmatmul.mubr.bf16.gmra.mrb[0].mxu0 %v5715
      %v5844 = vpop.f32.mrb[0].mxu0
      %v5845 = vadd.f32 0.0, %v5844
      %v5846 = vpop.f32.mrb[0].mxu0
      %v5847 = vpop.f32.mrb[0].mxu0
      %v5848 = vadd.f32 0.0, %v5847
      %v5849 = vpop.f32.mrb[0].mxu0
      %5850 = vmatprep.mubr.bf16.mxu0 0
      %5851 = vmatmul.mubr.bf16.gmra.mrb[0].mxu0 %v5718
      %v5852 = vpop.f32.mrb[0].mxu0
      %v5853 = vadd.f32 0.0, %v5852
      %v5854 = vpop.f32.mrb[0].mxu0
      %v5855 = vpop.f32.mrb[0].mxu0
      %v5856 = vadd.f32 0.0, %v5855
      %v5857 = vpop.f32.mrb[0].mxu0
      %5858 = vmatprep.mubr.bf16.mxu0 0
      %5859 = vmatmul.mubr.bf16.gmra.mrb[0].mxu0 %v5721
      %v5860 = vpop.f32.mrb[0].mxu0
      %v5861 = vadd.f32 0.0, %v5860
      %v5862 = vpop.f32.mrb[0].mxu0
      %v5863 = vpop.f32.mrb[0].mxu0
      %v5864 = vadd.f32 0.0, %v5863
      %v5865 = vpop.f32.mrb[0].mxu0
      %5866 = vmatprep.mubr.bf16.mxu0 0
      %5867 = vmatmul.mubr.bf16.gmra.mrb[0].mxu0 %v5724
      %v5868 = vpop.f32.mrb[0].mxu0
      %v5869 = vadd.f32 0.0, %v5868
      %v5870 = vpop.f32.mrb[0].mxu0
      %v5871 = vpop.f32.mrb[0].mxu0
      %v5872 = vadd.f32 0.0, %v5871
      %v5873 = vpop.f32.mrb[0].mxu0
      %5874 = vmatprep.mubr.bf16.mxu0 0
      %5875 = vmatmul.mubr.bf16.gmra.mrb[0].mxu0 %v5727
      %v5876 = vpop.f32.mrb[0].mxu0
      %v5877 = vadd.f32 0.0, %v5876
      %v5878 = vpop.f32.mrb[0].mxu0
      %v5879 = vpop.f32.mrb[0].mxu0
      %v5880 = vadd.f32 0.0, %v5879
      %v5881 = vpop.f32.mrb[0].mxu0
      %5882 = vmatprep.mubr.bf16.mxu0 0
      %5883 = vmatmul.mubr.bf16.gmra.mrb[0].mxu0 %v5730
      %v5884 = vpop.f32.mrb[0].mxu0
      %v5885 = vadd.f32 0.0, %v5884
      %v5886 = vpop.f32.mrb[0].mxu0
      %v5887 = vpop.f32.mrb[0].mxu0
      %v5888 = vadd.f32 0.0, %v5887
      %v5889 = vpop.f32.mrb[0].mxu0
      %5890 = vmatprep.mubr.bf16.mxu0 0
      %5891 = vmatmul.mubr.bf16.gmra.mrb[0].mxu0 %v5733
      %v5892 = vpop.f32.mrb[0].mxu0
      %v5893 = vadd.f32 0.0, %v5892
      %v5894 = vpop.f32.mrb[0].mxu0
      %v5895 = vpop.f32.mrb[0].mxu0
      %v5896 = vadd.f32 0.0, %v5895
      %v5897 = vpop.f32.mrb[0].mxu0
      %5898 = vdwg.mxu0
      %v5899 = vadd.f32 %v5655, %v5773
      %v5900 = vadd.f32 %v5656, %v5776
      %v5901 = vadd.f32 %v5657, %v5781
      %v5902 = vadd.f32 %v5658, %v5784
      %v5903 = vadd.f32 %v5659, %v5789
      %v5904 = vadd.f32 %v5660, %v5792
      %v5905 = vadd.f32 %v5661, %v5797
      %v5906 = vadd.f32 %v5662, %v5800
      %v5907 = vadd.f32 %v5663, %v5805
      %v5908 = vadd.f32 %v5664, %v5808
      %v5909 = vadd.f32 %v5665, %v5813
      %v5910 = vadd.f32 %v5666, %v5816
      %v5911 = vadd.f32 %v5667, %v5821
      %v5912 = vadd.f32 %v5668, %v5824
      %v5913 = vadd.f32 %v5669, %v5829
      %v5914 = vadd.f32 %v5670, %v5832
      %v5915 = vadd.f32 %v5671, %v5837
      %v5916 = vadd.f32 %v5672, %v5840
      %v5917 = vadd.f32 %v5673, %v5845
      %v5918 = vadd.f32 %v5674, %v5848
      %v5919 = vadd.f32 %v5675, %v5853
      %v5920 = vadd.f32 %v5676, %v5856
      %v5921 = vadd.f32 %v5677, %v5861
      %v5922 = vadd.f32 %v5678, %v5864
      %v5923 = vadd.f32 %v5679, %v5869
      %v5924 = vadd.f32 %v5680, %v5872
      %v5925 = vadd.f32 %v5681, %v5877
      %v5926 = vadd.f32 %v5682, %v5880
      %v5927 = vadd.f32 %v5683, %v5885
      %v5928 = vadd.f32 %v5684, %v5888
      %v5929 = vadd.f32 %v5685, %v5893
      %v5930 = vadd.f32 %v5686, %v5896
      %5931 = vst.msk [vmem:[#allocation4] sm:$0xff] %vm172, %v5899
      %5932 = vst.msk [vmem:[#allocation4 + $0x8] sm:$0xff] %vm172, %v5900
      %5933 = vst.msk [vmem:[#allocation4 + $0x10] sm:$0xff] %vm172, %v5901
      %5934 = vst.msk [vmem:[#allocation4 + $0x18] sm:$0xff] %vm172, %v5902
      %5935 = vst.msk [vmem:[#allocation4 + $0x20] sm:$0xff] %vm172, %v5903
      %5936 = vst.msk [vmem:[#allocation4 + $0x28] sm:$0xff] %vm172, %v5904
      %5937 = vst.msk [vmem:[#allocation4 + $0x30] sm:$0xff] %vm172, %v5905
      %5938 = vst.msk [vmem:[#allocation4 + $0x38] sm:$0xff] %vm172, %v5906
      %5939 = vst.msk [vmem:[#allocation4 + $0x40] sm:$0xff] %vm172, %v5907
      %5940 = vst.msk [vmem:[#allocation4 + $0x48] sm:$0xff] %vm172, %v5908
      %5941 = vst.msk [vmem:[#allocation4 + $0x50] sm:$0xff] %vm172, %v5909
      %5942 = vst.msk [vmem:[#allocation4 + $0x58] sm:$0xff] %vm172, %v5910
      %5943 = vst.msk [vmem:[#allocation4 + $0x60] sm:$0xff] %vm172, %v5911
      %5944 = vst.msk [vmem:[#allocation4 + $0x68] sm:$0xff] %vm172, %v5912
      %5945 = vst.msk [vmem:[#allocation4 + $0x70] sm:$0xff] %vm172, %v5913
      %5946 = vst.msk [vmem:[#allocation4 + $0x78] sm:$0xff] %vm172, %v5914
      %5947 = vst.msk [vmem:[#allocation4 + $0x80] sm:$0xff] %vm172, %v5915
      %5948 = vst.msk [vmem:[#allocation4 + $0x88] sm:$0xff] %vm172, %v5916
      %5949 = vst.msk [vmem:[#allocation4 + $0x90] sm:$0xff] %vm172, %v5917
      %5950 = vst.msk [vmem:[#allocation4 + $0x98] sm:$0xff] %vm172, %v5918
      %5951 = vst.msk [vmem:[#allocation4 + $0xa0] sm:$0xff] %vm172, %v5919
      %5952 = vst.msk [vmem:[#allocation4 + $0xa8] sm:$0xff] %vm172, %v5920
      %5953 = vst.msk [vmem:[#allocation4 + $0xb0] sm:$0xff] %vm172, %v5921
      %5954 = vst.msk [vmem:[#allocation4 + $0xb8] sm:$0xff] %vm172, %v5922
      %5955 = vst.msk [vmem:[#allocation4 + $0xc0] sm:$0xff] %vm172, %v5923
      %5956 = vst.msk [vmem:[#allocation4 + $0xc8] sm:$0xff] %vm172, %v5924
      %5957 = vst.msk [vmem:[#allocation4 + $0xd0] sm:$0xff] %vm172, %v5925
      %5958 = vst.msk [vmem:[#allocation4 + $0xd8] sm:$0xff] %vm172, %v5926
      %5959 = vst.msk [vmem:[#allocation4 + $0xe0] sm:$0xff] %vm172, %v5927
      %5960 = vst.msk [vmem:[#allocation4 + $0xe8] sm:$0xff] %vm172, %v5928
      %5961 = vst.msk [vmem:[#allocation4 + $0xf0] sm:$0xff] %vm172, %v5929
      %5962 = vst.msk [vmem:[#allocation4 + $0xf8] sm:$0xff] %vm172, %v5930
      %v5963 = vld [vmem:[#allocation3 + $0x8] sm:$0xff]
      %v5964 = vld [vmem:[#allocation3 + $0x10] sm:$0xff]
      %v5965 = vld [vmem:[#allocation3 + $0x18] sm:$0xff]
      %v5966 = vld [vmem:[#allocation3 + $0x20] sm:$0xff]
      %v5967 = vld [vmem:[#allocation3 + $0x28] sm:$0xff]
      %v5968 = vld [vmem:[#allocation3 + $0x30] sm:$0xff]
      %v5969 = vld [vmem:[#allocation3 + $0x38] sm:$0xff]
      %v5970 = vld [vmem:[#allocation3 + $0x40] sm:$0xff]
      %v5971 = vld [vmem:[#allocation3 + $0x48] sm:$0xff]
      %v5972 = vld [vmem:[#allocation3 + $0x50] sm:$0xff]
      %v5973 = vld [vmem:[#allocation3 + $0x58] sm:$0xff]
      %v5974 = vld [vmem:[#allocation3 + $0x60] sm:$0xff]
      %v5975 = vld [vmem:[#allocation3 + $0x68] sm:$0xff]
      %v5976 = vld [vmem:[#allocation3 + $0x70] sm:$0xff]
      %v5977 = vld [vmem:[#allocation3 + $0x78] sm:$0xff]
      %v5978 = vld [vmem:[#allocation3 + $0x80] sm:$0xff]
      %v5979 = vld [vmem:[#allocation3 + $0x88] sm:$0x1]
      %v5980 = vmul.bf16 %v5963, %v1616
      %v5981 = vmul.bf16 %v5964, %v1624
      %v5982 = vmul.bf16 %v5965, %v1632
      %v5983 = vmul.bf16 %v5966, %v1640
      %v5984 = vmul.bf16 %v5967, %v1648
      %v5985 = vmul.bf16 %v5968, %v1656
      %v5986 = vmul.bf16 %v5969, %v1664
      %v5987 = vmul.bf16 %v5970, %v1672
      %v5988 = vmul.bf16 %v5971, %v1680
      %v5989 = vmul.bf16 %v5972, %v1688
      %v5990 = vmul.bf16 %v5973, %v1696
      %v5991 = vmul.bf16 %v5974, %v1704
      %v5992 = vmul.bf16 %v5975, %v1712
      %v5993 = vmul.bf16 %v5976, %v1720
      %v5994 = vmul.bf16 %v5977, %v1728
      %v5995 = vmul.bf16 %v5978, %v1736
      %v5996 = vmul.bf16 %v5979, %v1732
      %v5997 = vld [vmem:[%s2 + $0x8] sm:$0xf]
      %v5998 = vld [vmem:[#allocation4] sm:$0xff]
      %v5999 = vld [vmem:[#allocation4 + $0x8] sm:$0xff]
      %v6000 = vld [vmem:[#allocation4 + $0x10] sm:$0xff]
      %v6001 = vld [vmem:[#allocation4 + $0x18] sm:$0xff]
      %v6002 = vld [vmem:[#allocation4 + $0x20] sm:$0xff]
      %v6003 = vld [vmem:[#allocation4 + $0x28] sm:$0xff]
      %v6004 = vld [vmem:[#allocation4 + $0x30] sm:$0xff]
      %v6005 = vld [vmem:[#allocation4 + $0x38] sm:$0xff]
      %v6006 = vld [vmem:[#allocation4 + $0x40] sm:$0xff]
      %v6007 = vld [vmem:[#allocation4 + $0x48] sm:$0xff]
      %v6008 = vld [vmem:[#allocation4 + $0x50] sm:$0xff]
      %v6009 = vld [vmem:[#allocation4 + $0x58] sm:$0xff]
      %v6010 = vld [vmem:[#allocation4 + $0x60] sm:$0xff]
      %v6011 = vld [vmem:[#allocation4 + $0x68] sm:$0xff]
      %v6012 = vld [vmem:[#allocation4 + $0x70] sm:$0xff]
      %v6013 = vld [vmem:[#allocation4 + $0x78] sm:$0xff]
      %v6014 = vld [vmem:[#allocation4 + $0x80] sm:$0xff]
      %v6015 = vld [vmem:[#allocation4 + $0x88] sm:$0xff]
      %v6016 = vld [vmem:[#allocation4 + $0x90] sm:$0xff]
      %v6017 = vld [vmem:[#allocation4 + $0x98] sm:$0xff]
      %v6018 = vld [vmem:[#allocation4 + $0xa0] sm:$0xff]
      %v6019 = vld [vmem:[#allocation4 + $0xa8] sm:$0xff]
      %v6020 = vld [vmem:[#allocation4 + $0xb0] sm:$0xff]
      %v6021 = vld [vmem:[#allocation4 + $0xb8] sm:$0xff]
      %v6022 = vld [vmem:[#allocation4 + $0xc0] sm:$0xff]
      %v6023 = vld [vmem:[#allocation4 + $0xc8] sm:$0xff]
      %v6024 = vld [vmem:[#allocation4 + $0xd0] sm:$0xff]
      %v6025 = vld [vmem:[#allocation4 + $0xd8] sm:$0xff]
      %v6026 = vld [vmem:[#allocation4 + $0xe0] sm:$0xff]
      %v6027 = vld [vmem:[#allocation4 + $0xe8] sm:$0xff]
      %v6028 = vld [vmem:[#allocation4 + $0xf0] sm:$0xff]
      %v6029 = vld [vmem:[#allocation4 + $0xf8] sm:$0xff]
      %v6031 = vshrl.u32 %v5980, 16
      %v6033 = vshll.u32 %v5980, 16
      %v6035 = vrot.slane %v6033, 1
      %v6036 = vor.u32 %v6031, %v6035
      %v6038 = vshll.u32 %v5981, 16
      %v6040 = vrot.slane %v6038, 1
      %v6041 = vsel %vm663, %v6036, %v6040
      %v6042 = vshrl.u32 %v5981, 16
      %v6044 = vor.u32 %v6042, %v6040
      %v6046 = vshll.u32 %v5982, 16
      %v6048 = vrot.slane %v6046, 1
      %v6049 = vsel %vm663, %v6044, %v6048
      %v6050 = vshrl.u32 %v5982, 16
      %v6052 = vor.u32 %v6050, %v6048
      %v6054 = vshll.u32 %v5983, 16
      %v6056 = vrot.slane %v6054, 1
      %v6057 = vsel %vm663, %v6052, %v6056
      %v6058 = vshrl.u32 %v5983, 16
      %v6060 = vor.u32 %v6058, %v6056
      %v6062 = vshll.u32 %v5984, 16
      %v6064 = vrot.slane %v6062, 1
      %v6065 = vsel %vm663, %v6060, %v6064
      %v6066 = vshrl.u32 %v5984, 16
      %v6068 = vor.u32 %v6066, %v6064
      %v6070 = vshll.u32 %v5985, 16
      %v6072 = vrot.slane %v6070, 1
      %v6073 = vsel %vm663, %v6068, %v6072
      %v6074 = vshrl.u32 %v5985, 16
      %v6076 = vor.u32 %v6074, %v6072
      %v6078 = vshll.u32 %v5986, 16
      %v6080 = vrot.slane %v6078, 1
      %v6081 = vsel %vm663, %v6076, %v6080
      %v6082 = vshrl.u32 %v5986, 16
      %v6084 = vor.u32 %v6082, %v6080
      %v6086 = vshll.u32 %v5987, 16
      %v6088 = vrot.slane %v6086, 1
      %v6089 = vsel %vm663, %v6084, %v6088
      %v6090 = vshrl.u32 %v5987, 16
      %v6092 = vor.u32 %v6090, %v6088
      %v6094 = vshll.u32 %v5988, 16
      %v6096 = vrot.slane %v6094, 1
      %v6097 = vsel %vm663, %v6092, %v6096
      %v6098 = vshrl.u32 %v5988, 16
      %v6100 = vor.u32 %v6098, %v6096
      %v6102 = vshll.u32 %v5989, 16
      %v6104 = vrot.slane %v6102, 1
      %v6105 = vsel %vm663, %v6100, %v6104
      %v6106 = vshrl.u32 %v5989, 16
      %v6108 = vor.u32 %v6106, %v6104
      %v6110 = vshll.u32 %v5990, 16
      %v6112 = vrot.slane %v6110, 1
      %v6113 = vsel %vm663, %v6108, %v6112
      %v6114 = vshrl.u32 %v5990, 16
      %v6116 = vor.u32 %v6114, %v6112
      %v6118 = vshll.u32 %v5991, 16
      %v6120 = vrot.slane %v6118, 1
      %v6121 = vsel %vm663, %v6116, %v6120
      %v6122 = vshrl.u32 %v5991, 16
      %v6124 = vor.u32 %v6122, %v6120
      %v6126 = vshll.u32 %v5992, 16
      %v6128 = vrot.slane %v6126, 1
      %v6129 = vsel %vm663, %v6124, %v6128
      %v6130 = vshrl.u32 %v5992, 16
      %v6132 = vor.u32 %v6130, %v6128
      %v6134 = vshll.u32 %v5993, 16
      %v6136 = vrot.slane %v6134, 1
      %v6137 = vsel %vm663, %v6132, %v6136
      %v6138 = vshrl.u32 %v5993, 16
      %v6140 = vor.u32 %v6138, %v6136
      %v6142 = vshll.u32 %v5994, 16
      %v6144 = vrot.slane %v6142, 1
      %v6145 = vsel %vm663, %v6140, %v6144
      %v6146 = vshrl.u32 %v5994, 16
      %v6148 = vor.u32 %v6146, %v6144
      %v6150 = vshll.u32 %v5995, 16
      %v6152 = vrot.slane %v6150, 1
      %v6153 = vsel %vm663, %v6148, %v6152
      %v6154 = vshrl.u32 %v5995, 16
      %v6156 = vor.u32 %v6154, %v6152
      %v6158 = vshll.u32 %v5996, 16
      %v6160 = vrot.slane %v6158, 1
      %v6161 = vsel %vm663, %v6156, %v6160
      %v6163 = vsel %vm172, %v6041, 0
      %v6166 = vsel %vm172, %v6049, 0
      %v6169 = vsel %vm172, %v6057, 0
      %v6172 = vsel %vm172, %v6065, 0
      %v6175 = vsel %vm172, %v6073, 0
      %v6178 = vsel %vm172, %v6081, 0
      %v6181 = vsel %vm172, %v6089, 0
      %v6184 = vsel %vm172, %v6097, 0
      %v6187 = vsel %vm172, %v6105, 0
      %v6190 = vsel %vm172, %v6113, 0
      %v6193 = vsel %vm172, %v6121, 0
      %v6196 = vsel %vm172, %v6129, 0
      %v6199 = vsel %vm172, %v6137, 0
      %v6202 = vsel %vm172, %v6145, 0
      %v6205 = vsel %vm172, %v6153, 0
      %v6208 = vsel %vm172, %v6161, 0
      %v6211 = vsel %vm1039, %v5997, 0
      %6213 = vmatprep.subr.bf16.mxu0 0
      %6214 = vmatpush1.bf16.msra.mxu0 %v6211
      %6215 = vmatprep.subr.bf16.mxu0 0
      %6216 = vmatpush1.bf16.msra.mxu0 0
      %6217 = vmatprep.subr.bf16.mxu0 0
      %6218 = vmatpush1.bf16.msra.mxu0 0
      %6219 = vmatprep.subr.bf16.mxu0 0
      %6220 = vmatpush1.bf16.msra.mxu0 0
      %6221 = vmatprep.subr.bf16.mxu0 0
      %6222 = vmatpush1.bf16.msra.mxu0 0
      %6223 = vmatprep.subr.bf16.mxu0 0
      %6224 = vmatpush1.bf16.msra.mxu0 0
      %6225 = vmatprep.subr.bf16.mxu0 0
      %6226 = vmatpush1.bf16.msra.mxu0 0
      %6227 = vmatprep.subr.bf16.mxu0 0
      %6228 = vmatpush1.bf16.msra.mxu0 0
      %6229 = vmatprep.subr.bf16.mxu0 0
      %6230 = vmatpush1.bf16.msra.mxu0 0
      %6231 = vmatprep.subr.bf16.mxu0 0
      %6232 = vmatpush1.bf16.msra.mxu0 0
      %6233 = vmatprep.subr.bf16.mxu0 0
      %6234 = vmatpush1.bf16.msra.mxu0 0
      %6235 = vmatprep.subr.bf16.mxu0 0
      %6236 = vmatpush1.bf16.msra.mxu0 0
      %6237 = vmatprep.subr.bf16.mxu0 0
      %6238 = vmatpush1.bf16.msra.mxu0 0
      %6239 = vmatprep.subr.bf16.mxu0 0
      %6240 = vmatpush1.bf16.msra.mxu0 0
      %6241 = vmatprep.subr.bf16.mxu0 0
      %6242 = vmatpush1.bf16.msra.mxu0 0
      %6243 = vmatprep.subr.bf16.mxu0 0
      %6244 = vmatpush1.bf16.msra.mxu0 0
      %6245 = vmatprep.mubr.bf16.mxu0 0
      %6246 = vmatmul.mubr.bf16.gmra.mrb[0].mxu0 %v6163
      %v6247 = vpop.f32.mrb[0].mxu0
      %v6248 = vadd.f32 0.0, %v6247
      %v6249 = vpop.f32.mrb[0].mxu0
      %v6250 = vpop.f32.mrb[0].mxu0
      %v6251 = vadd.f32 0.0, %v6250
      %v6252 = vpop.f32.mrb[0].mxu0
      %6253 = vmatprep.mubr.bf16.mxu0 0
      %6254 = vmatmul.mubr.bf16.gmra.mrb[0].mxu0 %v6166
      %v6255 = vpop.f32.mrb[0].mxu0
      %v6256 = vadd.f32 0.0, %v6255
      %v6257 = vpop.f32.mrb[0].mxu0
      %v6258 = vpop.f32.mrb[0].mxu0
      %v6259 = vadd.f32 0.0, %v6258
      %v6260 = vpop.f32.mrb[0].mxu0
      %6261 = vmatprep.mubr.bf16.mxu0 0
      %6262 = vmatmul.mubr.bf16.gmra.mrb[0].mxu0 %v6169
      %v6263 = vpop.f32.mrb[0].mxu0
      %v6264 = vadd.f32 0.0, %v6263
      %v6265 = vpop.f32.mrb[0].mxu0
      %v6266 = vpop.f32.mrb[0].mxu0
      %v6267 = vadd.f32 0.0, %v6266
      %v6268 = vpop.f32.mrb[0].mxu0
      %6269 = vmatprep.mubr.bf16.mxu0 0
      %6270 = vmatmul.mubr.bf16.gmra.mrb[0].mxu0 %v6172
      %v6271 = vpop.f32.mrb[0].mxu0
      %v6272 = vadd.f32 0.0, %v6271
      %v6273 = vpop.f32.mrb[0].mxu0
      %v6274 = vpop.f32.mrb[0].mxu0
      %v6275 = vadd.f32 0.0, %v6274
      %v6276 = vpop.f32.mrb[0].mxu0
      %6277 = vmatprep.mubr.bf16.mxu0 0
      %6278 = vmatmul.mubr.bf16.gmra.mrb[0].mxu0 %v6175
      %v6279 = vpop.f32.mrb[0].mxu0
      %v6280 = vadd.f32 0.0, %v6279
      %v6281 = vpop.f32.mrb[0].mxu0
      %v6282 = vpop.f32.mrb[0].mxu0
      %v6283 = vadd.f32 0.0, %v6282
      %v6284 = vpop.f32.mrb[0].mxu0
      %6285 = vmatprep.mubr.bf16.mxu0 0
      %6286 = vmatmul.mubr.bf16.gmra.mrb[0].mxu0 %v6178
      %v6287 = vpop.f32.mrb[0].mxu0
      %v6288 = vadd.f32 0.0, %v6287
      %v6289 = vpop.f32.mrb[0].mxu0
      %v6290 = vpop.f32.mrb[0].mxu0
      %v6291 = vadd.f32 0.0, %v6290
      %v6292 = vpop.f32.mrb[0].mxu0
      %6293 = vmatprep.mubr.bf16.mxu0 0
      %6294 = vmatmul.mubr.bf16.gmra.mrb[0].mxu0 %v6181
      %v6295 = vpop.f32.mrb[0].mxu0
      %v6296 = vadd.f32 0.0, %v6295
      %v6297 = vpop.f32.mrb[0].mxu0
      %v6298 = vpop.f32.mrb[0].mxu0
      %v6299 = vadd.f32 0.0, %v6298
      %v6300 = vpop.f32.mrb[0].mxu0
      %6301 = vmatprep.mubr.bf16.mxu0 0
      %6302 = vmatmul.mubr.bf16.gmra.mrb[0].mxu0 %v6184
      %v6303 = vpop.f32.mrb[0].mxu0
      %v6304 = vadd.f32 0.0, %v6303
      %v6305 = vpop.f32.mrb[0].mxu0
      %v6306 = vpop.f32.mrb[0].mxu0
      %v6307 = vadd.f32 0.0, %v6306
      %v6308 = vpop.f32.mrb[0].mxu0
      %6309 = vmatprep.mubr.bf16.mxu0 0
      %6310 = vmatmul.mubr.bf16.gmra.mrb[0].mxu0 %v6187
      %v6311 = vpop.f32.mrb[0].mxu0
      %v6312 = vadd.f32 0.0, %v6311
      %v6313 = vpop.f32.mrb[0].mxu0
      %v6314 = vpop.f32.mrb[0].mxu0
      %v6315 = vadd.f32 0.0, %v6314
      %v6316 = vpop.f32.mrb[0].mxu0
      %6317 = vmatprep.mubr.bf16.mxu0 0
      %6318 = vmatmul.mubr.bf16.gmra.mrb[0].mxu0 %v6190
      %v6319 = vpop.f32.mrb[0].mxu0
      %v6320 = vadd.f32 0.0, %v6319
      %v6321 = vpop.f32.mrb[0].mxu0
      %v6322 = vpop.f32.mrb[0].mxu0
      %v6323 = vadd.f32 0.0, %v6322
      %v6324 = vpop.f32.mrb[0].mxu0
      %6325 = vmatprep.mubr.bf16.mxu0 0
      %6326 = vmatmul.mubr.bf16.gmra.mrb[0].mxu0 %v6193
      %v6327 = vpop.f32.mrb[0].mxu0
      %v6328 = vadd.f32 0.0, %v6327
      %v6329 = vpop.f32.mrb[0].mxu0
      %v6330 = vpop.f32.mrb[0].mxu0
      %v6331 = vadd.f32 0.0, %v6330
      %v6332 = vpop.f32.mrb[0].mxu0
      %6333 = vmatprep.mubr.bf16.mxu0 0
      %6334 = vmatmul.mubr.bf16.gmra.mrb[0].mxu0 %v6196
      %v6335 = vpop.f32.mrb[0].mxu0
      %v6336 = vadd.f32 0.0, %v6335
      %v6337 = vpop.f32.mrb[0].mxu0
      %v6338 = vpop.f32.mrb[0].mxu0
      %v6339 = vadd.f32 0.0, %v6338
      %v6340 = vpop.f32.mrb[0].mxu0
      %6341 = vmatprep.mubr.bf16.mxu0 0
      %6342 = vmatmul.mubr.bf16.gmra.mrb[0].mxu0 %v6199
      %v6343 = vpop.f32.mrb[0].mxu0
      %v6344 = vadd.f32 0.0, %v6343
      %v6345 = vpop.f32.mrb[0].mxu0
      %v6346 = vpop.f32.mrb[0].mxu0
      %v6347 = vadd.f32 0.0, %v6346
      %v6348 = vpop.f32.mrb[0].mxu0
      %6349 = vmatprep.mubr.bf16.mxu0 0
      %6350 = vmatmul.mubr.bf16.gmra.mrb[0].mxu0 %v6202
      %v6351 = vpop.f32.mrb[0].mxu0
      %v6352 = vadd.f32 0.0, %v6351
      %v6353 = vpop.f32.mrb[0].mxu0
      %v6354 = vpop.f32.mrb[0].mxu0
      %v6355 = vadd.f32 0.0, %v6354
      %v6356 = vpop.f32.mrb[0].mxu0
      %6357 = vmatprep.mubr.bf16.mxu0 0
      %6358 = vmatmul.mubr.bf16.gmra.mrb[0].mxu0 %v6205
      %v6359 = vpop.f32.mrb[0].mxu0
      %v6360 = vadd.f32 0.0, %v6359
      %v6361 = vpop.f32.mrb[0].mxu0
      %v6362 = vpop.f32.mrb[0].mxu0
      %v6363 = vadd.f32 0.0, %v6362
      %v6364 = vpop.f32.mrb[0].mxu0
      %6365 = vmatprep.mubr.bf16.mxu0 0
      %6366 = vmatmul.mubr.bf16.gmra.mrb[0].mxu0 %v6208
      %v6367 = vpop.f32.mrb[0].mxu0
      %v6368 = vadd.f32 0.0, %v6367
      %v6369 = vpop.f32.mrb[0].mxu0
      %v6370 = vpop.f32.mrb[0].mxu0
      %v6371 = vadd.f32 0.0, %v6370
      %v6372 = vpop.f32.mrb[0].mxu0
      %6373 = vdwg.mxu0
      %v6374 = vadd.f32 %v5998, %v6248
      %v6375 = vadd.f32 %v5999, %v6251
      %v6376 = vadd.f32 %v6000, %v6256
      %v6377 = vadd.f32 %v6001, %v6259
      %v6378 = vadd.f32 %v6002, %v6264
      %v6379 = vadd.f32 %v6003, %v6267
      %v6380 = vadd.f32 %v6004, %v6272
      %v6381 = vadd.f32 %v6005, %v6275
      %v6382 = vadd.f32 %v6006, %v6280
      %v6383 = vadd.f32 %v6007, %v6283
      %v6384 = vadd.f32 %v6008, %v6288
      %v6385 = vadd.f32 %v6009, %v6291
      %v6386 = vadd.f32 %v6010, %v6296
      %v6387 = vadd.f32 %v6011, %v6299
      %v6388 = vadd.f32 %v6012, %v6304
      %v6389 = vadd.f32 %v6013, %v6307
      %v6390 = vadd.f32 %v6014, %v6312
      %v6391 = vadd.f32 %v6015, %v6315
      %v6392 = vadd.f32 %v6016, %v6320
      %v6393 = vadd.f32 %v6017, %v6323
      %v6394 = vadd.f32 %v6018, %v6328
      %v6395 = vadd.f32 %v6019, %v6331
      %v6396 = vadd.f32 %v6020, %v6336
      %v6397 = vadd.f32 %v6021, %v6339
      %v6398 = vadd.f32 %v6022, %v6344
      %v6399 = vadd.f32 %v6023, %v6347
      %v6400 = vadd.f32 %v6024, %v6352
      %v6401 = vadd.f32 %v6025, %v6355
      %v6402 = vadd.f32 %v6026, %v6360
      %v6403 = vadd.f32 %v6027, %v6363
      %v6404 = vadd.f32 %v6028, %v6368
      %v6405 = vadd.f32 %v6029, %v6371
      %6406 = vst.msk [vmem:[#allocation4] sm:$0xff] %vm172, %v6374
      %6407 = vst.msk [vmem:[#allocation4 + $0x8] sm:$0xff] %vm172, %v6375
      %6408 = vst.msk [vmem:[#allocation4 + $0x10] sm:$0xff] %vm172, %v6376
      %6409 = vst.msk [vmem:[#allocation4 + $0x18] sm:$0xff] %vm172, %v6377
      %6410 = vst.msk [vmem:[#allocation4 + $0x20] sm:$0xff] %vm172, %v6378
      %6411 = vst.msk [vmem:[#allocation4 + $0x28] sm:$0xff] %vm172, %v6379
      %6412 = vst.msk [vmem:[#allocation4 + $0x30] sm:$0xff] %vm172, %v6380
      %6413 = vst.msk [vmem:[#allocation4 + $0x38] sm:$0xff] %vm172, %v6381
      %6414 = vst.msk [vmem:[#allocation4 + $0x40] sm:$0xff] %vm172, %v6382
      %6415 = vst.msk [vmem:[#allocation4 + $0x48] sm:$0xff] %vm172, %v6383
      %6416 = vst.msk [vmem:[#allocation4 + $0x50] sm:$0xff] %vm172, %v6384
      %6417 = vst.msk [vmem:[#allocation4 + $0x58] sm:$0xff] %vm172, %v6385
      %6418 = vst.msk [vmem:[#allocation4 + $0x60] sm:$0xff] %vm172, %v6386
      %6419 = vst.msk [vmem:[#allocation4 + $0x68] sm:$0xff] %vm172, %v6387
      %6420 = vst.msk [vmem:[#allocation4 + $0x70] sm:$0xff] %vm172, %v6388
      %6421 = vst.msk [vmem:[#allocation4 + $0x78] sm:$0xff] %vm172, %v6389
      %6422 = vst.msk [vmem:[#allocation4 + $0x80] sm:$0xff] %vm172, %v6390
      %6423 = vst.msk [vmem:[#allocation4 + $0x88] sm:$0xff] %vm172, %v6391
      %6424 = vst.msk [vmem:[#allocation4 + $0x90] sm:$0xff] %vm172, %v6392
      %6425 = vst.msk [vmem:[#allocation4 + $0x98] sm:$0xff] %vm172, %v6393
      %6426 = vst.msk [vmem:[#allocation4 + $0xa0] sm:$0xff] %vm172, %v6394
      %6427 = vst.msk [vmem:[#allocation4 + $0xa8] sm:$0xff] %vm172, %v6395
      %6428 = vst.msk [vmem:[#allocation4 + $0xb0] sm:$0xff] %vm172, %v6396
      %6429 = vst.msk [vmem:[#allocation4 + $0xb8] sm:$0xff] %vm172, %v6397
      %6430 = vst.msk [vmem:[#allocation4 + $0xc0] sm:$0xff] %vm172, %v6398
      %6431 = vst.msk [vmem:[#allocation4 + $0xc8] sm:$0xff] %vm172, %v6399
      %6432 = vst.msk [vmem:[#allocation4 + $0xd0] sm:$0xff] %vm172, %v6400
      %6433 = vst.msk [vmem:[#allocation4 + $0xd8] sm:$0xff] %vm172, %v6401
      %6434 = vst.msk [vmem:[#allocation4 + $0xe0] sm:$0xff] %vm172, %v6402
      %6435 = vst.msk [vmem:[#allocation4 + $0xe8] sm:$0xff] %vm172, %v6403
      %6436 = vst.msk [vmem:[#allocation4 + $0xf0] sm:$0xff] %vm172, %v6404
      %6437 = vst.msk [vmem:[#allocation4 + $0xf8] sm:$0xff] %vm172, %v6405
      %v6438 = vld [vmem:[#allocation3 + $0x8] sm:$0x80]
      %v6439 = vld [vmem:[#allocation3 + $0x10] sm:$0xff]
      %v6440 = vld [vmem:[#allocation3 + $0x18] sm:$0xff]
      %v6441 = vld [vmem:[#allocation3 + $0x20] sm:$0xff]
      %v6442 = vld [vmem:[#allocation3 + $0x28] sm:$0xff]
      %v6443 = vld [vmem:[#allocation3 + $0x30] sm:$0xff]
      %v6444 = vld [vmem:[#allocation3 + $0x38] sm:$0xff]
      %v6445 = vld [vmem:[#allocation3 + $0x40] sm:$0xff]
      %v6446 = vld [vmem:[#allocation3 + $0x48] sm:$0xff]
      %v6447 = vld [vmem:[#allocation3 + $0x50] sm:$0xff]
      %v6448 = vld [vmem:[#allocation3 + $0x58] sm:$0xff]
      %v6449 = vld [vmem:[#allocation3 + $0x60] sm:$0xff]
      %v6450 = vld [vmem:[#allocation3 + $0x68] sm:$0xff]
      %v6451 = vld [vmem:[#allocation3 + $0x70] sm:$0xff]
      %v6452 = vld [vmem:[#allocation3 + $0x78] sm:$0xff]
      %v6453 = vld [vmem:[#allocation3 + $0x80] sm:$0xff]
      %v6454 = vld [vmem:[#allocation3 + $0x88] sm:$0xff]
      %v6455 = vmul.bf16 %v6438, %v667
      %v6456 = vmul.bf16 %v6439, %v675
      %v6457 = vmul.bf16 %v6440, %v683
      %v6458 = vmul.bf16 %v6441, %v691
      %v6459 = vmul.bf16 %v6442, %v699
      %v6460 = vmul.bf16 %v6443, %v707
      %v6461 = vmul.bf16 %v6444, %v715
      %v6462 = vmul.bf16 %v6445, %v723
      %v6463 = vmul.bf16 %v6446, %v731
      %v6464 = vmul.bf16 %v6447, %v739
      %v6465 = vmul.bf16 %v6448, %v747
      %v6466 = vmul.bf16 %v6449, %v755
      %v6467 = vmul.bf16 %v6450, %v763
      %v6468 = vmul.bf16 %v6451, %v771
      %v6469 = vmul.bf16 %v6452, %v779
      %v6470 = vmul.bf16 %v6453, %v787
      %v6471 = vmul.bf16 %v6454, %v790
      %v6472 = vld [vmem:[%s2 + $0xc] sm:$0xf]
      %v6473 = vld [vmem:[#allocation4] sm:$0xff]
      %v6474 = vld [vmem:[#allocation4 + $0x8] sm:$0xff]
      %v6475 = vld [vmem:[#allocation4 + $0x10] sm:$0xff]
      %v6476 = vld [vmem:[#allocation4 + $0x18] sm:$0xff]
      %v6477 = vld [vmem:[#allocation4 + $0x20] sm:$0xff]
      %v6478 = vld [vmem:[#allocation4 + $0x28] sm:$0xff]
      %v6479 = vld [vmem:[#allocation4 + $0x30] sm:$0xff]
      %v6480 = vld [vmem:[#allocation4 + $0x38] sm:$0xff]
      %v6481 = vld [vmem:[#allocation4 + $0x40] sm:$0xff]
      %v6482 = vld [vmem:[#allocation4 + $0x48] sm:$0xff]
      %v6483 = vld [vmem:[#allocation4 + $0x50] sm:$0xff]
      %v6484 = vld [vmem:[#allocation4 + $0x58] sm:$0xff]
      %v6485 = vld [vmem:[#allocation4 + $0x60] sm:$0xff]
      %v6486 = vld [vmem:[#allocation4 + $0x68] sm:$0xff]
      %v6487 = vld [vmem:[#allocation4 + $0x70] sm:$0xff]
      %v6488 = vld [vmem:[#allocation4 + $0x78] sm:$0xff]
      %v6489 = vld [vmem:[#allocation4 + $0x80] sm:$0xff]
      %v6490 = vld [vmem:[#allocation4 + $0x88] sm:$0xff]
      %v6491 = vld [vmem:[#allocation4 + $0x90] sm:$0xff]
      %v6492 = vld [vmem:[#allocation4 + $0x98] sm:$0xff]
      %v6493 = vld [vmem:[#allocation4 + $0xa0] sm:$0xff]
      %v6494 = vld [vmem:[#allocation4 + $0xa8] sm:$0xff]
      %v6495 = vld [vmem:[#allocation4 + $0xb0] sm:$0xff]
      %v6496 = vld [vmem:[#allocation4 + $0xb8] sm:$0xff]
      %v6497 = vld [vmem:[#allocation4 + $0xc0] sm:$0xff]
      %v6498 = vld [vmem:[#allocation4 + $0xc8] sm:$0xff]
      %v6499 = vld [vmem:[#allocation4 + $0xd0] sm:$0xff]
      %v6500 = vld [vmem:[#allocation4 + $0xd8] sm:$0xff]
      %v6501 = vld [vmem:[#allocation4 + $0xe0] sm:$0xff]
      %v6502 = vld [vmem:[#allocation4 + $0xe8] sm:$0xff]
      %v6503 = vld [vmem:[#allocation4 + $0xf0] sm:$0xff]
      %v6504 = vld [vmem:[#allocation4 + $0xf8] sm:$0xff]
      %v6506 = vshrl.u32 %v6455, 16
      %v6508 = vrot.slane %v6506, 7
      %v6510 = vshrl.u32 %v6456, 16
      %v6512 = vrot.slane %v6510, 7
      %v6513 = vshll.u32 %v6456, 16
      %v6515 = vor.u32 %v6512, %v6513
      %v6516 = vsel %vm858, %v6508, %v6515
      %v6518 = vshrl.u32 %v6457, 16
      %v6520 = vrot.slane %v6518, 7
      %v6521 = vshll.u32 %v6457, 16
      %v6523 = vor.u32 %v6520, %v6521
      %v6524 = vsel %vm858, %v6512, %v6523
      %v6526 = vshrl.u32 %v6458, 16
      %v6528 = vrot.slane %v6526, 7
      %v6529 = vshll.u32 %v6458, 16
      %v6531 = vor.u32 %v6528, %v6529
      %v6532 = vsel %vm858, %v6520, %v6531
      %v6534 = vshrl.u32 %v6459, 16
      %v6536 = vrot.slane %v6534, 7
      %v6537 = vshll.u32 %v6459, 16
      %v6539 = vor.u32 %v6536, %v6537
      %v6540 = vsel %vm858, %v6528, %v6539
      %v6542 = vshrl.u32 %v6460, 16
      %v6544 = vrot.slane %v6542, 7
      %v6545 = vshll.u32 %v6460, 16
      %v6547 = vor.u32 %v6544, %v6545
      %v6548 = vsel %vm858, %v6536, %v6547
      %v6550 = vshrl.u32 %v6461, 16
      %v6552 = vrot.slane %v6550, 7
      %v6553 = vshll.u32 %v6461, 16
      %v6555 = vor.u32 %v6552, %v6553
      %v6556 = vsel %vm858, %v6544, %v6555
      %v6558 = vshrl.u32 %v6462, 16
      %v6560 = vrot.slane %v6558, 7
      %v6561 = vshll.u32 %v6462, 16
      %v6563 = vor.u32 %v6560, %v6561
      %v6564 = vsel %vm858, %v6552, %v6563
      %v6566 = vshrl.u32 %v6463, 16
      %v6568 = vrot.slane %v6566, 7
      %v6569 = vshll.u32 %v6463, 16
      %v6571 = vor.u32 %v6568, %v6569
      %v6572 = vsel %vm858, %v6560, %v6571
      %v6574 = vshrl.u32 %v6464, 16
      %v6576 = vrot.slane %v6574, 7
      %v6577 = vshll.u32 %v6464, 16
      %v6579 = vor.u32 %v6576, %v6577
      %v6580 = vsel %vm858, %v6568, %v6579
      %v6582 = vshrl.u32 %v6465, 16
      %v6584 = vrot.slane %v6582, 7
      %v6585 = vshll.u32 %v6465, 16
      %v6587 = vor.u32 %v6584, %v6585
      %v6588 = vsel %vm858, %v6576, %v6587
      %v6590 = vshrl.u32 %v6466, 16
      %v6592 = vrot.slane %v6590, 7
      %v6593 = vshll.u32 %v6466, 16
      %v6595 = vor.u32 %v6592, %v6593
      %v6596 = vsel %vm858, %v6584, %v6595
      %v6598 = vshrl.u32 %v6467, 16
      %v6600 = vrot.slane %v6598, 7
      %v6601 = vshll.u32 %v6467, 16
      %v6603 = vor.u32 %v6600, %v6601
      %v6604 = vsel %vm858, %v6592, %v6603
      %v6606 = vshrl.u32 %v6468, 16
      %v6608 = vrot.slane %v6606, 7
      %v6609 = vshll.u32 %v6468, 16
      %v6611 = vor.u32 %v6608, %v6609
      %v6612 = vsel %vm858, %v6600, %v6611
      %v6614 = vshrl.u32 %v6469, 16
      %v6616 = vrot.slane %v6614, 7
      %v6617 = vshll.u32 %v6469, 16
      %v6619 = vor.u32 %v6616, %v6617
      %v6620 = vsel %vm858, %v6608, %v6619
      %v6622 = vshrl.u32 %v6470, 16
      %v6624 = vrot.slane %v6622, 7
      %v6625 = vshll.u32 %v6470, 16
      %v6627 = vor.u32 %v6624, %v6625
      %v6628 = vsel %vm858, %v6616, %v6627
      %v6630 = vshrl.u32 %v6471, 16
      %v6632 = vrot.slane %v6630, 7
      %v6633 = vshll.u32 %v6471, 16
      %v6635 = vor.u32 %v6632, %v6633
      %v6636 = vsel %vm858, %v6624, %v6635
      %v6638 = vsel %vm172, %v6516, 0
      %v6641 = vsel %vm172, %v6524, 0
      %v6644 = vsel %vm172, %v6532, 0
      %v6647 = vsel %vm172, %v6540, 0
      %v6650 = vsel %vm172, %v6548, 0
      %v6653 = vsel %vm172, %v6556, 0
      %v6656 = vsel %vm172, %v6564, 0
      %v6659 = vsel %vm172, %v6572, 0
      %v6662 = vsel %vm172, %v6580, 0
      %v6665 = vsel %vm172, %v6588, 0
      %v6668 = vsel %vm172, %v6596, 0
      %v6671 = vsel %vm172, %v6604, 0
      %v6674 = vsel %vm172, %v6612, 0
      %v6677 = vsel %vm172, %v6620, 0
      %v6680 = vsel %vm172, %v6628, 0
      %v6683 = vsel %vm172, %v6636, 0
      %v6686 = vsel %vm1039, %v6472, 0
      %6688 = vmatprep.subr.bf16.mxu0 0
      %6689 = vmatpush1.bf16.msra.mxu0 %v6686
      %6690 = vmatprep.subr.bf16.mxu0 0
      %6691 = vmatpush1.bf16.msra.mxu0 0
      %6692 = vmatprep.subr.bf16.mxu0 0
      %6693 = vmatpush1.bf16.msra.mxu0 0
      %6694 = vmatprep.subr.bf16.mxu0 0
      %6695 = vmatpush1.bf16.msra.mxu0 0
      %6696 = vmatprep.subr.bf16.mxu0 0
      %6697 = vmatpush1.bf16.msra.mxu0 0
      %6698 = vmatprep.subr.bf16.mxu0 0
      %6699 = vmatpush1.bf16.msra.mxu0 0
      %6700 = vmatprep.subr.bf16.mxu0 0
      %6701 = vmatpush1.bf16.msra.mxu0 0
      %6702 = vmatprep.subr.bf16.mxu0 0
      %6703 = vmatpush1.bf16.msra.mxu0 0
      %6704 = vmatprep.subr.bf16.mxu0 0
      %6705 = vmatpush1.bf16.msra.mxu0 0
      %6706 = vmatprep.subr.bf16.mxu0 0
      %6707 = vmatpush1.bf16.msra.mxu0 0
      %6708 = vmatprep.subr.bf16.mxu0 0
      %6709 = vmatpush1.bf16.msra.mxu0 0
      %6710 = vmatprep.subr.bf16.mxu0 0
      %6711 = vmatpush1.bf16.msra.mxu0 0
      %6712 = vmatprep.subr.bf16.mxu0 0
      %6713 = vmatpush1.bf16.msra.mxu0 0
      %6714 = vmatprep.subr.bf16.mxu0 0
      %6715 = vmatpush1.bf16.msra.mxu0 0
      %6716 = vmatprep.subr.bf16.mxu0 0
      %6717 = vmatpush1.bf16.msra.mxu0 0
      %6718 = vmatprep.subr.bf16.mxu0 0
      %6719 = vmatpush1.bf16.msra.mxu0 0
      %6720 = vmatprep.mubr.bf16.mxu0 0
      %6721 = vmatmul.mubr.bf16.gmra.mrb[0].mxu0 %v6638
      %v6722 = vpop.f32.mrb[0].mxu0
      %v6723 = vadd.f32 0.0, %v6722
      %v6724 = vpop.f32.mrb[0].mxu0
      %v6725 = vpop.f32.mrb[0].mxu0
      %v6726 = vadd.f32 0.0, %v6725
      %v6727 = vpop.f32.mrb[0].mxu0
      %6728 = vmatprep.mubr.bf16.mxu0 0
      %6729 = vmatmul.mubr.bf16.gmra.mrb[0].mxu0 %v6641
      %v6730 = vpop.f32.mrb[0].mxu0
      %v6731 = vadd.f32 0.0, %v6730
      %v6732 = vpop.f32.mrb[0].mxu0
      %v6733 = vpop.f32.mrb[0].mxu0
      %v6734 = vadd.f32 0.0, %v6733
      %v6735 = vpop.f32.mrb[0].mxu0
      %6736 = vmatprep.mubr.bf16.mxu0 0
      %6737 = vmatmul.mubr.bf16.gmra.mrb[0].mxu0 %v6644
      %v6738 = vpop.f32.mrb[0].mxu0
      %v6739 = vadd.f32 0.0, %v6738
      %v6740 = vpop.f32.mrb[0].mxu0
      %v6741 = vpop.f32.mrb[0].mxu0
      %v6742 = vadd.f32 0.0, %v6741
      %v6743 = vpop.f32.mrb[0].mxu0
      %6744 = vmatprep.mubr.bf16.mxu0 0
      %6745 = vmatmul.mubr.bf16.gmra.mrb[0].mxu0 %v6647
      %v6746 = vpop.f32.mrb[0].mxu0
      %v6747 = vadd.f32 0.0, %v6746
      %v6748 = vpop.f32.mrb[0].mxu0
      %v6749 = vpop.f32.mrb[0].mxu0
      %v6750 = vadd.f32 0.0, %v6749
      %v6751 = vpop.f32.mrb[0].mxu0
      %6752 = vmatprep.mubr.bf16.mxu0 0
      %6753 = vmatmul.mubr.bf16.gmra.mrb[0].mxu0 %v6650
      %v6754 = vpop.f32.mrb[0].mxu0
      %v6755 = vadd.f32 0.0, %v6754
      %v6756 = vpop.f32.mrb[0].mxu0
      %v6757 = vpop.f32.mrb[0].mxu0
      %v6758 = vadd.f32 0.0, %v6757
      %v6759 = vpop.f32.mrb[0].mxu0
      %6760 = vmatprep.mubr.bf16.mxu0 0
      %6761 = vmatmul.mubr.bf16.gmra.mrb[0].mxu0 %v6653
      %v6762 = vpop.f32.mrb[0].mxu0
      %v6763 = vadd.f32 0.0, %v6762
      %v6764 = vpop.f32.mrb[0].mxu0
      %v6765 = vpop.f32.mrb[0].mxu0
      %v6766 = vadd.f32 0.0, %v6765
      %v6767 = vpop.f32.mrb[0].mxu0
      %6768 = vmatprep.mubr.bf16.mxu0 0
      %6769 = vmatmul.mubr.bf16.gmra.mrb[0].mxu0 %v6656
      %v6770 = vpop.f32.mrb[0].mxu0
      %v6771 = vadd.f32 0.0, %v6770
      %v6772 = vpop.f32.mrb[0].mxu0
      %v6773 = vpop.f32.mrb[0].mxu0
      %v6774 = vadd.f32 0.0, %v6773
      %v6775 = vpop.f32.mrb[0].mxu0
      %6776 = vmatprep.mubr.bf16.mxu0 0
      %6777 = vmatmul.mubr.bf16.gmra.mrb[0].mxu0 %v6659
      %v6778 = vpop.f32.mrb[0].mxu0
      %v6779 = vadd.f32 0.0, %v6778
      %v6780 = vpop.f32.mrb[0].mxu0
      %v6781 = vpop.f32.mrb[0].mxu0
      %v6782 = vadd.f32 0.0, %v6781
      %v6783 = vpop.f32.mrb[0].mxu0
      %6784 = vmatprep.mubr.bf16.mxu0 0
      %6785 = vmatmul.mubr.bf16.gmra.mrb[0].mxu0 %v6662
      %v6786 = vpop.f32.mrb[0].mxu0
      %v6787 = vadd.f32 0.0, %v6786
      %v6788 = vpop.f32.mrb[0].mxu0
      %v6789 = vpop.f32.mrb[0].mxu0
      %v6790 = vadd.f32 0.0, %v6789
      %v6791 = vpop.f32.mrb[0].mxu0
      %6792 = vmatprep.mubr.bf16.mxu0 0
      %6793 = vmatmul.mubr.bf16.gmra.mrb[0].mxu0 %v6665
      %v6794 = vpop.f32.mrb[0].mxu0
      %v6795 = vadd.f32 0.0, %v6794
      %v6796 = vpop.f32.mrb[0].mxu0
      %v6797 = vpop.f32.mrb[0].mxu0
      %v6798 = vadd.f32 0.0, %v6797
      %v6799 = vpop.f32.mrb[0].mxu0
      %6800 = vmatprep.mubr.bf16.mxu0 0
      %6801 = vmatmul.mubr.bf16.gmra.mrb[0].mxu0 %v6668
      %v6802 = vpop.f32.mrb[0].mxu0
      %v6803 = vadd.f32 0.0, %v6802
      %v6804 = vpop.f32.mrb[0].mxu0
      %v6805 = vpop.f32.mrb[0].mxu0
      %v6806 = vadd.f32 0.0, %v6805
      %v6807 = vpop.f32.mrb[0].mxu0
      %6808 = vmatprep.mubr.bf16.mxu0 0
      %6809 = vmatmul.mubr.bf16.gmra.mrb[0].mxu0 %v6671
      %v6810 = vpop.f32.mrb[0].mxu0
      %v6811 = vadd.f32 0.0, %v6810
      %v6812 = vpop.f32.mrb[0].mxu0
      %v6813 = vpop.f32.mrb[0].mxu0
      %v6814 = vadd.f32 0.0, %v6813
      %v6815 = vpop.f32.mrb[0].mxu0
      %6816 = vmatprep.mubr.bf16.mxu0 0
      %6817 = vmatmul.mubr.bf16.gmra.mrb[0].mxu0 %v6674
      %v6818 = vpop.f32.mrb[0].mxu0
      %v6819 = vadd.f32 0.0, %v6818
      %v6820 = vpop.f32.mrb[0].mxu0
      %v6821 = vpop.f32.mrb[0].mxu0
      %v6822 = vadd.f32 0.0, %v6821
      %v6823 = vpop.f32.mrb[0].mxu0
      %6824 = vmatprep.mubr.bf16.mxu0 0
      %6825 = vmatmul.mubr.bf16.gmra.mrb[0].mxu0 %v6677
      %v6826 = vpop.f32.mrb[0].mxu0
      %v6827 = vadd.f32 0.0, %v6826
      %v6828 = vpop.f32.mrb[0].mxu0
      %v6829 = vpop.f32.mrb[0].mxu0
      %v6830 = vadd.f32 0.0, %v6829
      %v6831 = vpop.f32.mrb[0].mxu0
      %6832 = vmatprep.mubr.bf16.mxu0 0
      %6833 = vmatmul.mubr.bf16.gmra.mrb[0].mxu0 %v6680
      %v6834 = vpop.f32.mrb[0].mxu0
      %v6835 = vadd.f32 0.0, %v6834
      %v6836 = vpop.f32.mrb[0].mxu0
      %v6837 = vpop.f32.mrb[0].mxu0
      %v6838 = vadd.f32 0.0, %v6837
      %v6839 = vpop.f32.mrb[0].mxu0
      %6840 = vmatprep.mubr.bf16.mxu0 0
      %6841 = vmatmul.mubr.bf16.gmra.mrb[0].mxu0 %v6683
      %v6842 = vpop.f32.mrb[0].mxu0
      %v6843 = vadd.f32 0.0, %v6842
      %v6844 = vpop.f32.mrb[0].mxu0
      %v6845 = vpop.f32.mrb[0].mxu0
      %v6846 = vadd.f32 0.0, %v6845
      %v6847 = vpop.f32.mrb[0].mxu0
      %6848 = vdwg.mxu0
      %v6849 = vadd.f32 %v6473, %v6723
      %v6850 = vadd.f32 %v6474, %v6726
      %v6851 = vadd.f32 %v6475, %v6731
      %v6852 = vadd.f32 %v6476, %v6734
      %v6853 = vadd.f32 %v6477, %v6739
      %v6854 = vadd.f32 %v6478, %v6742
      %v6855 = vadd.f32 %v6479, %v6747
      %v6856 = vadd.f32 %v6480, %v6750
      %v6857 = vadd.f32 %v6481, %v6755
      %v6858 = vadd.f32 %v6482, %v6758
      %v6859 = vadd.f32 %v6483, %v6763
      %v6860 = vadd.f32 %v6484, %v6766
      %v6861 = vadd.f32 %v6485, %v6771
      %v6862 = vadd.f32 %v6486, %v6774
      %v6863 = vadd.f32 %v6487, %v6779
      %v6864 = vadd.f32 %v6488, %v6782
      %v6865 = vadd.f32 %v6489, %v6787
      %v6866 = vadd.f32 %v6490, %v6790
      %v6867 = vadd.f32 %v6491, %v6795
      %v6868 = vadd.f32 %v6492, %v6798
      %v6869 = vadd.f32 %v6493, %v6803
      %v6870 = vadd.f32 %v6494, %v6806
      %v6871 = vadd.f32 %v6495, %v6811
      %v6872 = vadd.f32 %v6496, %v6814
      %v6873 = vadd.f32 %v6497, %v6819
      %v6874 = vadd.f32 %v6498, %v6822
      %v6875 = vadd.f32 %v6499, %v6827
      %v6876 = vadd.f32 %v6500, %v6830
      %v6877 = vadd.f32 %v6501, %v6835
      %v6878 = vadd.f32 %v6502, %v6838
      %v6879 = vadd.f32 %v6503, %v6843
      %v6880 = vadd.f32 %v6504, %v6846
      %6881 = vst.msk [vmem:[#allocation4] sm:$0xff] %vm172, %v6849
      %6882 = vst.msk [vmem:[#allocation4 + $0x8] sm:$0xff] %vm172, %v6850
      %6883 = vst.msk [vmem:[#allocation4 + $0x10] sm:$0xff] %vm172, %v6851
      %6884 = vst.msk [vmem:[#allocation4 + $0x18] sm:$0xff] %vm172, %v6852
      %6885 = vst.msk [vmem:[#allocation4 + $0x20] sm:$0xff] %vm172, %v6853
      %6886 = vst.msk [vmem:[#allocation4 + $0x28] sm:$0xff] %vm172, %v6854
      %6887 = vst.msk [vmem:[#allocation4 + $0x30] sm:$0xff] %vm172, %v6855
      %6888 = vst.msk [vmem:[#allocation4 + $0x38] sm:$0xff] %vm172, %v6856
      %6889 = vst.msk [vmem:[#allocation4 + $0x40] sm:$0xff] %vm172, %v6857
      %6890 = vst.msk [vmem:[#allocation4 + $0x48] sm:$0xff] %vm172, %v6858
      %6891 = vst.msk [vmem:[#allocation4 + $0x50] sm:$0xff] %vm172, %v6859
      %6892 = vst.msk [vmem:[#allocation4 + $0x58] sm:$0xff] %vm172, %v6860
      %6893 = vst.msk [vmem:[#allocation4 + $0x60] sm:$0xff] %vm172, %v6861
      %6894 = vst.msk [vmem:[#allocation4 + $0x68] sm:$0xff] %vm172, %v6862
      %6895 = vst.msk [vmem:[#allocation4 + $0x70] sm:$0xff] %vm172, %v6863
      %6896 = vst.msk [vmem:[#allocation4 + $0x78] sm:$0xff] %vm172, %v6864
      %6897 = vst.msk [vmem:[#allocation4 + $0x80] sm:$0xff] %vm172, %v6865
      %6898 = vst.msk [vmem:[#allocation4 + $0x88] sm:$0xff] %vm172, %v6866
      %6899 = vst.msk [vmem:[#allocation4 + $0x90] sm:$0xff] %vm172, %v6867
      %6900 = vst.msk [vmem:[#allocation4 + $0x98] sm:$0xff] %vm172, %v6868
      %6901 = vst.msk [vmem:[#allocation4 + $0xa0] sm:$0xff] %vm172, %v6869
      %6902 = vst.msk [vmem:[#allocation4 + $0xa8] sm:$0xff] %vm172, %v6870
      %6903 = vst.msk [vmem:[#allocation4 + $0xb0] sm:$0xff] %vm172, %v6871
      %6904 = vst.msk [vmem:[#allocation4 + $0xb8] sm:$0xff] %vm172, %v6872
      %6905 = vst.msk [vmem:[#allocation4 + $0xc0] sm:$0xff] %vm172, %v6873
      %6906 = vst.msk [vmem:[#allocation4 + $0xc8] sm:$0xff] %vm172, %v6874
      %6907 = vst.msk [vmem:[#allocation4 + $0xd0] sm:$0xff] %vm172, %v6875
      %6908 = vst.msk [vmem:[#allocation4 + $0xd8] sm:$0xff] %vm172, %v6876
      %6909 = vst.msk [vmem:[#allocation4 + $0xe0] sm:$0xff] %vm172, %v6877
      %6910 = vst.msk [vmem:[#allocation4 + $0xe8] sm:$0xff] %vm172, %v6878
      %6911 = vst.msk [vmem:[#allocation4 + $0xf0] sm:$0xff] %vm172, %v6879
      %6912 = vst.msk [vmem:[#allocation4 + $0xf8] sm:$0xff] %vm172, %v6880
      %v6913 = vld [vmem:[#allocation3 + $0x10] sm:$0xff]
      %v6914 = vld [vmem:[#allocation3 + $0x18] sm:$0xff]
      %v6915 = vld [vmem:[#allocation3 + $0x20] sm:$0xff]
      %v6916 = vld [vmem:[#allocation3 + $0x28] sm:$0xff]
      %v6917 = vld [vmem:[#allocation3 + $0x30] sm:$0xff]
      %v6918 = vld [vmem:[#allocation3 + $0x38] sm:$0xff]
      %v6919 = vld [vmem:[#allocation3 + $0x40] sm:$0xff]
      %v6920 = vld [vmem:[#allocation3 + $0x48] sm:$0xff]
      %v6921 = vld [vmem:[#allocation3 + $0x50] sm:$0xff]
      %v6922 = vld [vmem:[#allocation3 + $0x58] sm:$0xff]
      %v6923 = vld [vmem:[#allocation3 + $0x60] sm:$0xff]
      %v6924 = vld [vmem:[#allocation3 + $0x68] sm:$0xff]
      %v6925 = vld [vmem:[#allocation3 + $0x70] sm:$0xff]
      %v6926 = vld [vmem:[#allocation3 + $0x78] sm:$0xff]
      %v6927 = vld [vmem:[#allocation3 + $0x80] sm:$0xff]
      %v6928 = vld [vmem:[#allocation3 + $0x88] sm:$0xff]
      %v6929 = vld [vmem:[%s2 + $0x10] sm:$0xf]
      %v6930 = vld [vmem:[#allocation4] sm:$0xff]
      %v6931 = vld [vmem:[#allocation4 + $0x8] sm:$0xff]
      %v6932 = vld [vmem:[#allocation4 + $0x10] sm:$0xff]
      %v6933 = vld [vmem:[#allocation4 + $0x18] sm:$0xff]
      %v6934 = vld [vmem:[#allocation4 + $0x20] sm:$0xff]
      %v6935 = vld [vmem:[#allocation4 + $0x28] sm:$0xff]
      %v6936 = vld [vmem:[#allocation4 + $0x30] sm:$0xff]
      %v6937 = vld [vmem:[#allocation4 + $0x38] sm:$0xff]
      %v6938 = vld [vmem:[#allocation4 + $0x40] sm:$0xff]
      %v6939 = vld [vmem:[#allocation4 + $0x48] sm:$0xff]
      %v6940 = vld [vmem:[#allocation4 + $0x50] sm:$0xff]
      %v6941 = vld [vmem:[#allocation4 + $0x58] sm:$0xff]
      %v6942 = vld [vmem:[#allocation4 + $0x60] sm:$0xff]
      %v6943 = vld [vmem:[#allocation4 + $0x68] sm:$0xff]
      %v6944 = vld [vmem:[#allocation4 + $0x70] sm:$0xff]
      %v6945 = vld [vmem:[#allocation4 + $0x78] sm:$0xff]
      %v6946 = vld [vmem:[#allocation4 + $0x80] sm:$0xff]
      %v6947 = vld [vmem:[#allocation4 + $0x88] sm:$0xff]
      %v6948 = vld [vmem:[#allocation4 + $0x90] sm:$0xff]
      %v6949 = vld [vmem:[#allocation4 + $0x98] sm:$0xff]
      %v6950 = vld [vmem:[#allocation4 + $0xa0] sm:$0xff]
      %v6951 = vld [vmem:[#allocation4 + $0xa8] sm:$0xff]
      %v6952 = vld [vmem:[#allocation4 + $0xb0] sm:$0xff]
      %v6953 = vld [vmem:[#allocation4 + $0xb8] sm:$0xff]
      %v6954 = vld [vmem:[#allocation4 + $0xc0] sm:$0xff]
      %v6955 = vld [vmem:[#allocation4 + $0xc8] sm:$0xff]
      %v6956 = vld [vmem:[#allocation4 + $0xd0] sm:$0xff]
      %v6957 = vld [vmem:[#allocation4 + $0xd8] sm:$0xff]
      %v6958 = vld [vmem:[#allocation4 + $0xe0] sm:$0xff]
      %v6959 = vld [vmem:[#allocation4 + $0xe8] sm:$0xff]
      %v6960 = vld [vmem:[#allocation4 + $0xf0] sm:$0xff]
      %v6961 = vld [vmem:[#allocation4 + $0xf8] sm:$0xff]
      %v6963 = vsel %vm172, %v6913, 0
      %v6966 = vsel %vm172, %v6914, 0
      %v6969 = vsel %vm172, %v6915, 0
      %v6972 = vsel %vm172, %v6916, 0
      %v6975 = vsel %vm172, %v6917, 0
      %v6978 = vsel %vm172, %v6918, 0
      %v6981 = vsel %vm172, %v6919, 0
      %v6984 = vsel %vm172, %v6920, 0
      %v6987 = vsel %vm172, %v6921, 0
      %v6990 = vsel %vm172, %v6922, 0
      %v6993 = vsel %vm172, %v6923, 0
      %v6996 = vsel %vm172, %v6924, 0
      %v6999 = vsel %vm172, %v6925, 0
      %v7002 = vsel %vm172, %v6926, 0
      %v7005 = vsel %vm172, %v6927, 0
      %v7008 = vsel %vm172, %v6928, 0
      %v7011 = vsel %vm1039, %v6929, 0
      %7013 = vmatprep.subr.bf16.mxu0 0
      %7014 = vmatpush1.bf16.msra.mxu0 %v7011
      %7015 = vmatprep.subr.bf16.mxu0 0
      %7016 = vmatpush1.bf16.msra.mxu0 0
      %7017 = vmatprep.subr.bf16.mxu0 0
      %7018 = vmatpush1.bf16.msra.mxu0 0
      %7019 = vmatprep.subr.bf16.mxu0 0
      %7020 = vmatpush1.bf16.msra.mxu0 0
      %7021 = vmatprep.subr.bf16.mxu0 0
      %7022 = vmatpush1.bf16.msra.mxu0 0
      %7023 = vmatprep.subr.bf16.mxu0 0
      %7024 = vmatpush1.bf16.msra.mxu0 0
      %7025 = vmatprep.subr.bf16.mxu0 0
      %7026 = vmatpush1.bf16.msra.mxu0 0
      %7027 = vmatprep.subr.bf16.mxu0 0
      %7028 = vmatpush1.bf16.msra.mxu0 0
      %7029 = vmatprep.subr.bf16.mxu0 0
      %7030 = vmatpush1.bf16.msra.mxu0 0
      %7031 = vmatprep.subr.bf16.mxu0 0
      %7032 = vmatpush1.bf16.msra.mxu0 0
      %7033 = vmatprep.subr.bf16.mxu0 0
      %7034 = vmatpush1.bf16.msra.mxu0 0
      %7035 = vmatprep.subr.bf16.mxu0 0
      %7036 = vmatpush1.bf16.msra.mxu0 0
      %7037 = vmatprep.subr.bf16.mxu0 0
      %7038 = vmatpush1.bf16.msra.mxu0 0
      %7039 = vmatprep.subr.bf16.mxu0 0
      %7040 = vmatpush1.bf16.msra.mxu0 0
      %7041 = vmatprep.subr.bf16.mxu0 0
      %7042 = vmatpush1.bf16.msra.mxu0 0
      %7043 = vmatprep.subr.bf16.mxu0 0
      %7044 = vmatpush1.bf16.msra.mxu0 0
      %7045 = vmatprep.mubr.bf16.mxu0 0
      %7046 = vmatmul.mubr.bf16.gmra.mrb[0].mxu0 %v6963
      %v7047 = vpop.f32.mrb[0].mxu0
      %v7048 = vadd.f32 0.0, %v7047
      %v7049 = vpop.f32.mrb[0].mxu0
      %v7050 = vpop.f32.mrb[0].mxu0
      %v7051 = vadd.f32 0.0, %v7050
      %v7052 = vpop.f32.mrb[0].mxu0
      %7053 = vmatprep.mubr.bf16.mxu0 0
      %7054 = vmatmul.mubr.bf16.gmra.mrb[0].mxu0 %v6966
      %v7055 = vpop.f32.mrb[0].mxu0
      %v7056 = vadd.f32 0.0, %v7055
      %v7057 = vpop.f32.mrb[0].mxu0
      %v7058 = vpop.f32.mrb[0].mxu0
      %v7059 = vadd.f32 0.0, %v7058
      %v7060 = vpop.f32.mrb[0].mxu0
      %7061 = vmatprep.mubr.bf16.mxu0 0
      %7062 = vmatmul.mubr.bf16.gmra.mrb[0].mxu0 %v6969
      %v7063 = vpop.f32.mrb[0].mxu0
      %v7064 = vadd.f32 0.0, %v7063
      %v7065 = vpop.f32.mrb[0].mxu0
      %v7066 = vpop.f32.mrb[0].mxu0
      %v7067 = vadd.f32 0.0, %v7066
      %v7068 = vpop.f32.mrb[0].mxu0
      %7069 = vmatprep.mubr.bf16.mxu0 0
      %7070 = vmatmul.mubr.bf16.gmra.mrb[0].mxu0 %v6972
      %v7071 = vpop.f32.mrb[0].mxu0
      %v7072 = vadd.f32 0.0, %v7071
      %v7073 = vpop.f32.mrb[0].mxu0
      %v7074 = vpop.f32.mrb[0].mxu0
      %v7075 = vadd.f32 0.0, %v7074
      %v7076 = vpop.f32.mrb[0].mxu0
      %7077 = vmatprep.mubr.bf16.mxu0 0
      %7078 = vmatmul.mubr.bf16.gmra.mrb[0].mxu0 %v6975
      %v7079 = vpop.f32.mrb[0].mxu0
      %v7080 = vadd.f32 0.0, %v7079
      %v7081 = vpop.f32.mrb[0].mxu0
      %v7082 = vpop.f32.mrb[0].mxu0
      %v7083 = vadd.f32 0.0, %v7082
      %v7084 = vpop.f32.mrb[0].mxu0
      %7085 = vmatprep.mubr.bf16.mxu0 0
      %7086 = vmatmul.mubr.bf16.gmra.mrb[0].mxu0 %v6978
      %v7087 = vpop.f32.mrb[0].mxu0
      %v7088 = vadd.f32 0.0, %v7087
      %v7089 = vpop.f32.mrb[0].mxu0
      %v7090 = vpop.f32.mrb[0].mxu0
      %v7091 = vadd.f32 0.0, %v7090
      %v7092 = vpop.f32.mrb[0].mxu0
      %7093 = vmatprep.mubr.bf16.mxu0 0
      %7094 = vmatmul.mubr.bf16.gmra.mrb[0].mxu0 %v6981
      %v7095 = vpop.f32.mrb[0].mxu0
      %v7096 = vadd.f32 0.0, %v7095
      %v7097 = vpop.f32.mrb[0].mxu0
      %v7098 = vpop.f32.mrb[0].mxu0
      %v7099 = vadd.f32 0.0, %v7098
      %v7100 = vpop.f32.mrb[0].mxu0
      %7101 = vmatprep.mubr.bf16.mxu0 0
      %7102 = vmatmul.mubr.bf16.gmra.mrb[0].mxu0 %v6984
      %v7103 = vpop.f32.mrb[0].mxu0
      %v7104 = vadd.f32 0.0, %v7103
      %v7105 = vpop.f32.mrb[0].mxu0
      %v7106 = vpop.f32.mrb[0].mxu0
      %v7107 = vadd.f32 0.0, %v7106
      %v7108 = vpop.f32.mrb[0].mxu0
      %7109 = vmatprep.mubr.bf16.mxu0 0
      %7110 = vmatmul.mubr.bf16.gmra.mrb[0].mxu0 %v6987
      %v7111 = vpop.f32.mrb[0].mxu0
      %v7112 = vadd.f32 0.0, %v7111
      %v7113 = vpop.f32.mrb[0].mxu0
      %v7114 = vpop.f32.mrb[0].mxu0
      %v7115 = vadd.f32 0.0, %v7114
      %v7116 = vpop.f32.mrb[0].mxu0
      %7117 = vmatprep.mubr.bf16.mxu0 0
      %7118 = vmatmul.mubr.bf16.gmra.mrb[0].mxu0 %v6990
      %v7119 = vpop.f32.mrb[0].mxu0
      %v7120 = vadd.f32 0.0, %v7119
      %v7121 = vpop.f32.mrb[0].mxu0
      %v7122 = vpop.f32.mrb[0].mxu0
      %v7123 = vadd.f32 0.0, %v7122
      %v7124 = vpop.f32.mrb[0].mxu0
      %7125 = vmatprep.mubr.bf16.mxu0 0
      %7126 = vmatmul.mubr.bf16.gmra.mrb[0].mxu0 %v6993
      %v7127 = vpop.f32.mrb[0].mxu0
      %v7128 = vadd.f32 0.0, %v7127
      %v7129 = vpop.f32.mrb[0].mxu0
      %v7130 = vpop.f32.mrb[0].mxu0
      %v7131 = vadd.f32 0.0, %v7130
      %v7132 = vpop.f32.mrb[0].mxu0
      %7133 = vmatprep.mubr.bf16.mxu0 0
      %7134 = vmatmul.mubr.bf16.gmra.mrb[0].mxu0 %v6996
      %v7135 = vpop.f32.mrb[0].mxu0
      %v7136 = vadd.f32 0.0, %v7135
      %v7137 = vpop.f32.mrb[0].mxu0
      %v7138 = vpop.f32.mrb[0].mxu0
      %v7139 = vadd.f32 0.0, %v7138
      %v7140 = vpop.f32.mrb[0].mxu0
      %7141 = vmatprep.mubr.bf16.mxu0 0
      %7142 = vmatmul.mubr.bf16.gmra.mrb[0].mxu0 %v6999
      %v7143 = vpop.f32.mrb[0].mxu0
      %v7144 = vadd.f32 0.0, %v7143
      %v7145 = vpop.f32.mrb[0].mxu0
      %v7146 = vpop.f32.mrb[0].mxu0
      %v7147 = vadd.f32 0.0, %v7146
      %v7148 = vpop.f32.mrb[0].mxu0
      %7149 = vmatprep.mubr.bf16.mxu0 0
      %7150 = vmatmul.mubr.bf16.gmra.mrb[0].mxu0 %v7002
      %v7151 = vpop.f32.mrb[0].mxu0
      %v7152 = vadd.f32 0.0, %v7151
      %v7153 = vpop.f32.mrb[0].mxu0
      %v7154 = vpop.f32.mrb[0].mxu0
      %v7155 = vadd.f32 0.0, %v7154
      %v7156 = vpop.f32.mrb[0].mxu0
      %7157 = vmatprep.mubr.bf16.mxu0 0
      %7158 = vmatmul.mubr.bf16.gmra.mrb[0].mxu0 %v7005
      %v7159 = vpop.f32.mrb[0].mxu0
      %v7160 = vadd.f32 0.0, %v7159
      %v7161 = vpop.f32.mrb[0].mxu0
      %v7162 = vpop.f32.mrb[0].mxu0
      %v7163 = vadd.f32 0.0, %v7162
      %v7164 = vpop.f32.mrb[0].mxu0
      %7165 = vmatprep.mubr.bf16.mxu0 0
      %7166 = vmatmul.mubr.bf16.gmra.mrb[0].mxu0 %v7008
      %v7167 = vpop.f32.mrb[0].mxu0
      %v7168 = vadd.f32 0.0, %v7167
      %v7169 = vpop.f32.mrb[0].mxu0
      %v7170 = vpop.f32.mrb[0].mxu0
      %v7171 = vadd.f32 0.0, %v7170
      %v7172 = vpop.f32.mrb[0].mxu0
      %7173 = vdwg.mxu0
      %v7174 = vadd.f32 %v6930, %v7048
      %v7175 = vadd.f32 %v6931, %v7051
      %v7176 = vadd.f32 %v6932, %v7056
      %v7177 = vadd.f32 %v6933, %v7059
      %v7178 = vadd.f32 %v6934, %v7064
      %v7179 = vadd.f32 %v6935, %v7067
      %v7180 = vadd.f32 %v6936, %v7072
      %v7181 = vadd.f32 %v6937, %v7075
      %v7182 = vadd.f32 %v6938, %v7080
      %v7183 = vadd.f32 %v6939, %v7083
      %v7184 = vadd.f32 %v6940, %v7088
      %v7185 = vadd.f32 %v6941, %v7091
      %v7186 = vadd.f32 %v6942, %v7096
      %v7187 = vadd.f32 %v6943, %v7099
      %v7188 = vadd.f32 %v6944, %v7104
      %v7189 = vadd.f32 %v6945, %v7107
      %v7190 = vadd.f32 %v6946, %v7112
      %v7191 = vadd.f32 %v6947, %v7115
      %v7192 = vadd.f32 %v6948, %v7120
      %v7193 = vadd.f32 %v6949, %v7123
      %v7194 = vadd.f32 %v6950, %v7128
      %v7195 = vadd.f32 %v6951, %v7131
      %v7196 = vadd.f32 %v6952, %v7136
      %v7197 = vadd.f32 %v6953, %v7139
      %v7198 = vadd.f32 %v6954, %v7144
      %v7199 = vadd.f32 %v6955, %v7147
      %v7200 = vadd.f32 %v6956, %v7152
      %v7201 = vadd.f32 %v6957, %v7155
      %v7202 = vadd.f32 %v6958, %v7160
      %v7203 = vadd.f32 %v6959, %v7163
      %v7204 = vadd.f32 %v6960, %v7168
      %v7205 = vadd.f32 %v6961, %v7171
      %7206 = vst.msk [vmem:[#allocation4] sm:$0xff] %vm172, %v7174
      %7207 = vst.msk [vmem:[#allocation4 + $0x8] sm:$0xff] %vm172, %v7175
      %7208 = vst.msk [vmem:[#allocation4 + $0x10] sm:$0xff] %vm172, %v7176
      %7209 = vst.msk [vmem:[#allocation4 + $0x18] sm:$0xff] %vm172, %v7177
      %7210 = vst.msk [vmem:[#allocation4 + $0x20] sm:$0xff] %vm172, %v7178
      %7211 = vst.msk [vmem:[#allocation4 + $0x28] sm:$0xff] %vm172, %v7179
      %7212 = vst.msk [vmem:[#allocation4 + $0x30] sm:$0xff] %vm172, %v7180
      %7213 = vst.msk [vmem:[#allocation4 + $0x38] sm:$0xff] %vm172, %v7181
      %7214 = vst.msk [vmem:[#allocation4 + $0x40] sm:$0xff] %vm172, %v7182
      %7215 = vst.msk [vmem:[#allocation4 + $0x48] sm:$0xff] %vm172, %v7183
      %7216 = vst.msk [vmem:[#allocation4 + $0x50] sm:$0xff] %vm172, %v7184
      %7217 = vst.msk [vmem:[#allocation4 + $0x58] sm:$0xff] %vm172, %v7185
      %7218 = vst.msk [vmem:[#allocation4 + $0x60] sm:$0xff] %vm172, %v7186
      %7219 = vst.msk [vmem:[#allocation4 + $0x68] sm:$0xff] %vm172, %v7187
      %7220 = vst.msk [vmem:[#allocation4 + $0x70] sm:$0xff] %vm172, %v7188
      %7221 = vst.msk [vmem:[#allocation4 + $0x78] sm:$0xff] %vm172, %v7189
      %7222 = vst.msk [vmem:[#allocation4 + $0x80] sm:$0xff] %vm172, %v7190
      %7223 = vst.msk [vmem:[#allocation4 + $0x88] sm:$0xff] %vm172, %v7191
      %7224 = vst.msk [vmem:[#allocation4 + $0x90] sm:$0xff] %vm172, %v7192
      %7225 = vst.msk [vmem:[#allocation4 + $0x98] sm:$0xff] %vm172, %v7193
      %7226 = vst.msk [vmem:[#allocation4 + $0xa0] sm:$0xff] %vm172, %v7194
      %7227 = vst.msk [vmem:[#allocation4 + $0xa8] sm:$0xff] %vm172, %v7195
      %7228 = vst.msk [vmem:[#allocation4 + $0xb0] sm:$0xff] %vm172, %v7196
      %7229 = vst.msk [vmem:[#allocation4 + $0xb8] sm:$0xff] %vm172, %v7197
      %7230 = vst.msk [vmem:[#allocation4 + $0xc0] sm:$0xff] %vm172, %v7198
      %7231 = vst.msk [vmem:[#allocation4 + $0xc8] sm:$0xff] %vm172, %v7199
      %7232 = vst.msk [vmem:[#allocation4 + $0xd0] sm:$0xff] %vm172, %v7200
      %7233 = vst.msk [vmem:[#allocation4 + $0xd8] sm:$0xff] %vm172, %v7201
      %7234 = vst.msk [vmem:[#allocation4 + $0xe0] sm:$0xff] %vm172, %v7202
      %7235 = vst.msk [vmem:[#allocation4 + $0xe8] sm:$0xff] %vm172, %v7203
      %7236 = vst.msk [vmem:[#allocation4 + $0xf0] sm:$0xff] %vm172, %v7204
      %7237 = vst.msk [vmem:[#allocation4 + $0xf8] sm:$0xff] %vm172, %v7205
      %v7238 = vld [vmem:[#allocation3 + $0x10] sm:$0xff]
      %v7239 = vld [vmem:[#allocation3 + $0x18] sm:$0xff]
      %v7240 = vld [vmem:[#allocation3 + $0x20] sm:$0xff]
      %v7241 = vld [vmem:[#allocation3 + $0x28] sm:$0xff]
      %v7242 = vld [vmem:[#allocation3 + $0x30] sm:$0xff]
      %v7243 = vld [vmem:[#allocation3 + $0x38] sm:$0xff]
      %v7244 = vld [vmem:[#allocation3 + $0x40] sm:$0xff]
      %v7245 = vld [vmem:[#allocation3 + $0x48] sm:$0xff]
      %v7246 = vld [vmem:[#allocation3 + $0x50] sm:$0xff]
      %v7247 = vld [vmem:[#allocation3 + $0x58] sm:$0xff]
      %v7248 = vld [vmem:[#allocation3 + $0x60] sm:$0xff]
      %v7249 = vld [vmem:[#allocation3 + $0x68] sm:$0xff]
      %v7250 = vld [vmem:[#allocation3 + $0x70] sm:$0xff]
      %v7251 = vld [vmem:[#allocation3 + $0x78] sm:$0xff]
      %v7252 = vld [vmem:[#allocation3 + $0x80] sm:$0xff]
      %v7253 = vld [vmem:[#allocation3 + $0x88] sm:$0xff]
      %v7254 = vld [vmem:[#allocation3 + $0x90] sm:$0x1]
      %v7255 = vmul.bf16 %v7238, %v1616
      %v7256 = vmul.bf16 %v7239, %v1624
      %v7257 = vmul.bf16 %v7240, %v1632
      %v7258 = vmul.bf16 %v7241, %v1640
      %v7259 = vmul.bf16 %v7242, %v1648
      %v7260 = vmul.bf16 %v7243, %v1656
      %v7261 = vmul.bf16 %v7244, %v1664
      %v7262 = vmul.bf16 %v7245, %v1672
      %v7263 = vmul.bf16 %v7246, %v1680
      %v7264 = vmul.bf16 %v7247, %v1688
      %v7265 = vmul.bf16 %v7248, %v1696
      %v7266 = vmul.bf16 %v7249, %v1704
      %v7267 = vmul.bf16 %v7250, %v1712
      %v7268 = vmul.bf16 %v7251, %v1720
      %v7269 = vmul.bf16 %v7252, %v1728
      %v7270 = vmul.bf16 %v7253, %v1736
      %v7271 = vmul.bf16 %v7254, %v1732
      %v7272 = vld [vmem:[%s2 + $0x14] sm:$0xf]
      %v7273 = vld [vmem:[#allocation4] sm:$0xff]
      %v7274 = vld [vmem:[#allocation4 + $0x8] sm:$0xff]
      %v7275 = vld [vmem:[#allocation4 + $0x10] sm:$0xff]
      %v7276 = vld [vmem:[#allocation4 + $0x18] sm:$0xff]
      %v7277 = vld [vmem:[#allocation4 + $0x20] sm:$0xff]
      %v7278 = vld [vmem:[#allocation4 + $0x28] sm:$0xff]
      %v7279 = vld [vmem:[#allocation4 + $0x30] sm:$0xff]
      %v7280 = vld [vmem:[#allocation4 + $0x38] sm:$0xff]
      %v7281 = vld [vmem:[#allocation4 + $0x40] sm:$0xff]
      %v7282 = vld [vmem:[#allocation4 + $0x48] sm:$0xff]
      %v7283 = vld [vmem:[#allocation4 + $0x50] sm:$0xff]
      %v7284 = vld [vmem:[#allocation4 + $0x58] sm:$0xff]
      %v7285 = vld [vmem:[#allocation4 + $0x60] sm:$0xff]
      %v7286 = vld [vmem:[#allocation4 + $0x68] sm:$0xff]
      %v7287 = vld [vmem:[#allocation4 + $0x70] sm:$0xff]
      %v7288 = vld [vmem:[#allocation4 + $0x78] sm:$0xff]
      %v7289 = vld [vmem:[#allocation4 + $0x80] sm:$0xff]
      %v7290 = vld [vmem:[#allocation4 + $0x88] sm:$0xff]
      %v7291 = vld [vmem:[#allocation4 + $0x90] sm:$0xff]
      %v7292 = vld [vmem:[#allocation4 + $0x98] sm:$0xff]
      %v7293 = vld [vmem:[#allocation4 + $0xa0] sm:$0xff]
      %v7294 = vld [vmem:[#allocation4 + $0xa8] sm:$0xff]
      %v7295 = vld [vmem:[#allocation4 + $0xb0] sm:$0xff]
      %v7296 = vld [vmem:[#allocation4 + $0xb8] sm:$0xff]
      %v7297 = vld [vmem:[#allocation4 + $0xc0] sm:$0xff]
      %v7298 = vld [vmem:[#allocation4 + $0xc8] sm:$0xff]
      %v7299 = vld [vmem:[#allocation4 + $0xd0] sm:$0xff]
      %v7300 = vld [vmem:[#allocation4 + $0xd8] sm:$0xff]
      %v7301 = vld [vmem:[#allocation4 + $0xe0] sm:$0xff]
      %v7302 = vld [vmem:[#allocation4 + $0xe8] sm:$0xff]
      %v7303 = vld [vmem:[#allocation4 + $0xf0] sm:$0xff]
      %v7304 = vld [vmem:[#allocation4 + $0xf8] sm:$0xff]
      %v7306 = vshrl.u32 %v7255, 16
      %v7308 = vshll.u32 %v7255, 16
      %v7310 = vrot.slane %v7308, 1
      %v7311 = vor.u32 %v7306, %v7310
      %v7313 = vshll.u32 %v7256, 16
      %v7315 = vrot.slane %v7313, 1
      %v7316 = vsel %vm663, %v7311, %v7315
      %v7317 = vshrl.u32 %v7256, 16
      %v7319 = vor.u32 %v7317, %v7315
      %v7321 = vshll.u32 %v7257, 16
      %v7323 = vrot.slane %v7321, 1
      %v7324 = vsel %vm663, %v7319, %v7323
      %v7325 = vshrl.u32 %v7257, 16
      %v7327 = vor.u32 %v7325, %v7323
      %v7329 = vshll.u32 %v7258, 16
      %v7331 = vrot.slane %v7329, 1
      %v7332 = vsel %vm663, %v7327, %v7331
      %v7333 = vshrl.u32 %v7258, 16
      %v7335 = vor.u32 %v7333, %v7331
      %v7337 = vshll.u32 %v7259, 16
      %v7339 = vrot.slane %v7337, 1
      %v7340 = vsel %vm663, %v7335, %v7339
      %v7341 = vshrl.u32 %v7259, 16
      %v7343 = vor.u32 %v7341, %v7339
      %v7345 = vshll.u32 %v7260, 16
      %v7347 = vrot.slane %v7345, 1
      %v7348 = vsel %vm663, %v7343, %v7347
      %v7349 = vshrl.u32 %v7260, 16
      %v7351 = vor.u32 %v7349, %v7347
      %v7353 = vshll.u32 %v7261, 16
      %v7355 = vrot.slane %v7353, 1
      %v7356 = vsel %vm663, %v7351, %v7355
      %v7357 = vshrl.u32 %v7261, 16
      %v7359 = vor.u32 %v7357, %v7355
      %v7361 = vshll.u32 %v7262, 16
      %v7363 = vrot.slane %v7361, 1
      %v7364 = vsel %vm663, %v7359, %v7363
      %v7365 = vshrl.u32 %v7262, 16
      %v7367 = vor.u32 %v7365, %v7363
      %v7369 = vshll.u32 %v7263, 16
      %v7371 = vrot.slane %v7369, 1
      %v7372 = vsel %vm663, %v7367, %v7371
      %v7373 = vshrl.u32 %v7263, 16
      %v7375 = vor.u32 %v7373, %v7371
      %v7377 = vshll.u32 %v7264, 16
      %v7379 = vrot.slane %v7377, 1
      %v7380 = vsel %vm663, %v7375, %v7379
      %v7381 = vshrl.u32 %v7264, 16
      %v7383 = vor.u32 %v7381, %v7379
      %v7385 = vshll.u32 %v7265, 16
      %v7387 = vrot.slane %v7385, 1
      %v7388 = vsel %vm663, %v7383, %v7387
      %v7389 = vshrl.u32 %v7265, 16
      %v7391 = vor.u32 %v7389, %v7387
      %v7393 = vshll.u32 %v7266, 16
      %v7395 = vrot.slane %v7393, 1
      %v7396 = vsel %vm663, %v7391, %v7395
      %v7397 = vshrl.u32 %v7266, 16
      %v7399 = vor.u32 %v7397, %v7395
      %v7401 = vshll.u32 %v7267, 16
      %v7403 = vrot.slane %v7401, 1
      %v7404 = vsel %vm663, %v7399, %v7403
      %v7405 = vshrl.u32 %v7267, 16
      %v7407 = vor.u32 %v7405, %v7403
      %v7409 = vshll.u32 %v7268, 16
      %v7411 = vrot.slane %v7409, 1
      %v7412 = vsel %vm663, %v7407, %v7411
      %v7413 = vshrl.u32 %v7268, 16
      %v7415 = vor.u32 %v7413, %v7411
      %v7417 = vshll.u32 %v7269, 16
      %v7419 = vrot.slane %v7417, 1
      %v7420 = vsel %vm663, %v7415, %v7419
      %v7421 = vshrl.u32 %v7269, 16
      %v7423 = vor.u32 %v7421, %v7419
      %v7425 = vshll.u32 %v7270, 16
      %v7427 = vrot.slane %v7425, 1
      %v7428 = vsel %vm663, %v7423, %v7427
      %v7429 = vshrl.u32 %v7270, 16
      %v7431 = vor.u32 %v7429, %v7427
      %v7433 = vshll.u32 %v7271, 16
      %v7435 = vrot.slane %v7433, 1
      %v7436 = vsel %vm663, %v7431, %v7435
      %v7438 = vsel %vm172, %v7316, 0
      %v7441 = vsel %vm172, %v7324, 0
      %v7444 = vsel %vm172, %v7332, 0
      %v7447 = vsel %vm172, %v7340, 0
      %v7450 = vsel %vm172, %v7348, 0
      %v7453 = vsel %vm172, %v7356, 0
      %v7456 = vsel %vm172, %v7364, 0
      %v7459 = vsel %vm172, %v7372, 0
      %v7462 = vsel %vm172, %v7380, 0
      %v7465 = vsel %vm172, %v7388, 0
      %v7468 = vsel %vm172, %v7396, 0
      %v7471 = vsel %vm172, %v7404, 0
      %v7474 = vsel %vm172, %v7412, 0
      %v7477 = vsel %vm172, %v7420, 0
      %v7480 = vsel %vm172, %v7428, 0
      %v7483 = vsel %vm172, %v7436, 0
      %v7486 = vsel %vm1039, %v7272, 0
      %7488 = vmatprep.subr.bf16.mxu0 0
      %7489 = vmatpush1.bf16.msra.mxu0 %v7486
      %7490 = vmatprep.subr.bf16.mxu0 0
      %7491 = vmatpush1.bf16.msra.mxu0 0
      %7492 = vmatprep.subr.bf16.mxu0 0
      %7493 = vmatpush1.bf16.msra.mxu0 0
      %7494 = vmatprep.subr.bf16.mxu0 0
      %7495 = vmatpush1.bf16.msra.mxu0 0
      %7496 = vmatprep.subr.bf16.mxu0 0
      %7497 = vmatpush1.bf16.msra.mxu0 0
      %7498 = vmatprep.subr.bf16.mxu0 0
      %7499 = vmatpush1.bf16.msra.mxu0 0
      %7500 = vmatprep.subr.bf16.mxu0 0
      %7501 = vmatpush1.bf16.msra.mxu0 0
      %7502 = vmatprep.subr.bf16.mxu0 0
      %7503 = vmatpush1.bf16.msra.mxu0 0
      %7504 = vmatprep.subr.bf16.mxu0 0
      %7505 = vmatpush1.bf16.msra.mxu0 0
      %7506 = vmatprep.subr.bf16.mxu0 0
      %7507 = vmatpush1.bf16.msra.mxu0 0
      %7508 = vmatprep.subr.bf16.mxu0 0
      %7509 = vmatpush1.bf16.msra.mxu0 0
      %7510 = vmatprep.subr.bf16.mxu0 0
      %7511 = vmatpush1.bf16.msra.mxu0 0
      %7512 = vmatprep.subr.bf16.mxu0 0
      %7513 = vmatpush1.bf16.msra.mxu0 0
      %7514 = vmatprep.subr.bf16.mxu0 0
      %7515 = vmatpush1.bf16.msra.mxu0 0
      %7516 = vmatprep.subr.bf16.mxu0 0
      %7517 = vmatpush1.bf16.msra.mxu0 0
      %7518 = vmatprep.subr.bf16.mxu0 0
      %7519 = vmatpush1.bf16.msra.mxu0 0
      %7520 = vmatprep.mubr.bf16.mxu0 0
      %7521 = vmatmul.mubr.bf16.gmra.mrb[0].mxu0 %v7438
      %v7522 = vpop.f32.mrb[0].mxu0
      %v7523 = vadd.f32 0.0, %v7522
      %v7524 = vpop.f32.mrb[0].mxu0
      %v7525 = vpop.f32.mrb[0].mxu0
      %v7526 = vadd.f32 0.0, %v7525
      %v7527 = vpop.f32.mrb[0].mxu0
      %7528 = vmatprep.mubr.bf16.mxu0 0
      %7529 = vmatmul.mubr.bf16.gmra.mrb[0].mxu0 %v7441
      %v7530 = vpop.f32.mrb[0].mxu0
      %v7531 = vadd.f32 0.0, %v7530
      %v7532 = vpop.f32.mrb[0].mxu0
      %v7533 = vpop.f32.mrb[0].mxu0
      %v7534 = vadd.f32 0.0, %v7533
      %v7535 = vpop.f32.mrb[0].mxu0
      %7536 = vmatprep.mubr.bf16.mxu0 0
      %7537 = vmatmul.mubr.bf16.gmra.mrb[0].mxu0 %v7444
      %v7538 = vpop.f32.mrb[0].mxu0
      %v7539 = vadd.f32 0.0, %v7538
      %v7540 = vpop.f32.mrb[0].mxu0
      %v7541 = vpop.f32.mrb[0].mxu0
      %v7542 = vadd.f32 0.0, %v7541
      %v7543 = vpop.f32.mrb[0].mxu0
      %7544 = vmatprep.mubr.bf16.mxu0 0
      %7545 = vmatmul.mubr.bf16.gmra.mrb[0].mxu0 %v7447
      %v7546 = vpop.f32.mrb[0].mxu0
      %v7547 = vadd.f32 0.0, %v7546
      %v7548 = vpop.f32.mrb[0].mxu0
      %v7549 = vpop.f32.mrb[0].mxu0
      %v7550 = vadd.f32 0.0, %v7549
      %v7551 = vpop.f32.mrb[0].mxu0
      %7552 = vmatprep.mubr.bf16.mxu0 0
      %7553 = vmatmul.mubr.bf16.gmra.mrb[0].mxu0 %v7450
      %v7554 = vpop.f32.mrb[0].mxu0
      %v7555 = vadd.f32 0.0, %v7554
      %v7556 = vpop.f32.mrb[0].mxu0
      %v7557 = vpop.f32.mrb[0].mxu0
      %v7558 = vadd.f32 0.0, %v7557
      %v7559 = vpop.f32.mrb[0].mxu0
      %7560 = vmatprep.mubr.bf16.mxu0 0
      %7561 = vmatmul.mubr.bf16.gmra.mrb[0].mxu0 %v7453
      %v7562 = vpop.f32.mrb[0].mxu0
      %v7563 = vadd.f32 0.0, %v7562
      %v7564 = vpop.f32.mrb[0].mxu0
      %v7565 = vpop.f32.mrb[0].mxu0
      %v7566 = vadd.f32 0.0, %v7565
      %v7567 = vpop.f32.mrb[0].mxu0
      %7568 = vmatprep.mubr.bf16.mxu0 0
      %7569 = vmatmul.mubr.bf16.gmra.mrb[0].mxu0 %v7456
      %v7570 = vpop.f32.mrb[0].mxu0
      %v7571 = vadd.f32 0.0, %v7570
      %v7572 = vpop.f32.mrb[0].mxu0
      %v7573 = vpop.f32.mrb[0].mxu0
      %v7574 = vadd.f32 0.0, %v7573
      %v7575 = vpop.f32.mrb[0].mxu0
      %7576 = vmatprep.mubr.bf16.mxu0 0
      %7577 = vmatmul.mubr.bf16.gmra.mrb[0].mxu0 %v7459
      %v7578 = vpop.f32.mrb[0].mxu0
      %v7579 = vadd.f32 0.0, %v7578
      %v7580 = vpop.f32.mrb[0].mxu0
      %v7581 = vpop.f32.mrb[0].mxu0
      %v7582 = vadd.f32 0.0, %v7581
      %v7583 = vpop.f32.mrb[0].mxu0
      %7584 = vmatprep.mubr.bf16.mxu0 0
      %7585 = vmatmul.mubr.bf16.gmra.mrb[0].mxu0 %v7462
      %v7586 = vpop.f32.mrb[0].mxu0
      %v7587 = vadd.f32 0.0, %v7586
      %v7588 = vpop.f32.mrb[0].mxu0
      %v7589 = vpop.f32.mrb[0].mxu0
      %v7590 = vadd.f32 0.0, %v7589
      %v7591 = vpop.f32.mrb[0].mxu0
      %7592 = vmatprep.mubr.bf16.mxu0 0
      %7593 = vmatmul.mubr.bf16.gmra.mrb[0].mxu0 %v7465
      %v7594 = vpop.f32.mrb[0].mxu0
      %v7595 = vadd.f32 0.0, %v7594
      %v7596 = vpop.f32.mrb[0].mxu0
      %v7597 = vpop.f32.mrb[0].mxu0
      %v7598 = vadd.f32 0.0, %v7597
      %v7599 = vpop.f32.mrb[0].mxu0
      %7600 = vmatprep.mubr.bf16.mxu0 0
      %7601 = vmatmul.mubr.bf16.gmra.mrb[0].mxu0 %v7468
      %v7602 = vpop.f32.mrb[0].mxu0
      %v7603 = vadd.f32 0.0, %v7602
      %v7604 = vpop.f32.mrb[0].mxu0
      %v7605 = vpop.f32.mrb[0].mxu0
      %v7606 = vadd.f32 0.0, %v7605
      %v7607 = vpop.f32.mrb[0].mxu0
      %7608 = vmatprep.mubr.bf16.mxu0 0
      %7609 = vmatmul.mubr.bf16.gmra.mrb[0].mxu0 %v7471
      %v7610 = vpop.f32.mrb[0].mxu0
      %v7611 = vadd.f32 0.0, %v7610
      %v7612 = vpop.f32.mrb[0].mxu0
      %v7613 = vpop.f32.mrb[0].mxu0
      %v7614 = vadd.f32 0.0, %v7613
      %v7615 = vpop.f32.mrb[0].mxu0
      %7616 = vmatprep.mubr.bf16.mxu0 0
      %7617 = vmatmul.mubr.bf16.gmra.mrb[0].mxu0 %v7474
      %v7618 = vpop.f32.mrb[0].mxu0
      %v7619 = vadd.f32 0.0, %v7618
      %v7620 = vpop.f32.mrb[0].mxu0
      %v7621 = vpop.f32.mrb[0].mxu0
      %v7622 = vadd.f32 0.0, %v7621
      %v7623 = vpop.f32.mrb[0].mxu0
      %7624 = vmatprep.mubr.bf16.mxu0 0
      %7625 = vmatmul.mubr.bf16.gmra.mrb[0].mxu0 %v7477
      %v7626 = vpop.f32.mrb[0].mxu0
      %v7627 = vadd.f32 0.0, %v7626
      %v7628 = vpop.f32.mrb[0].mxu0
      %v7629 = vpop.f32.mrb[0].mxu0
      %v7630 = vadd.f32 0.0, %v7629
      %v7631 = vpop.f32.mrb[0].mxu0
      %7632 = vmatprep.mubr.bf16.mxu0 0
      %7633 = vmatmul.mubr.bf16.gmra.mrb[0].mxu0 %v7480
      %v7634 = vpop.f32.mrb[0].mxu0
      %v7635 = vadd.f32 0.0, %v7634
      %v7636 = vpop.f32.mrb[0].mxu0
      %v7637 = vpop.f32.mrb[0].mxu0
      %v7638 = vadd.f32 0.0, %v7637
      %v7639 = vpop.f32.mrb[0].mxu0
      %7640 = vmatprep.mubr.bf16.mxu0 0
      %7641 = vmatmul.mubr.bf16.gmra.mrb[0].mxu0 %v7483
      %v7642 = vpop.f32.mrb[0].mxu0
      %v7643 = vadd.f32 0.0, %v7642
      %v7644 = vpop.f32.mrb[0].mxu0
      %v7645 = vpop.f32.mrb[0].mxu0
      %v7646 = vadd.f32 0.0, %v7645
      %v7647 = vpop.f32.mrb[0].mxu0
      %7648 = vdwg.mxu0
      %v7649 = vadd.f32 %v7273, %v7523
      %v7650 = vadd.f32 %v7274, %v7526
      %v7651 = vadd.f32 %v7275, %v7531
      %v7652 = vadd.f32 %v7276, %v7534
      %v7653 = vadd.f32 %v7277, %v7539
      %v7654 = vadd.f32 %v7278, %v7542
      %v7655 = vadd.f32 %v7279, %v7547
      %v7656 = vadd.f32 %v7280, %v7550
      %v7657 = vadd.f32 %v7281, %v7555
      %v7658 = vadd.f32 %v7282, %v7558
      %v7659 = vadd.f32 %v7283, %v7563
      %v7660 = vadd.f32 %v7284, %v7566
      %v7661 = vadd.f32 %v7285, %v7571
      %v7662 = vadd.f32 %v7286, %v7574
      %v7663 = vadd.f32 %v7287, %v7579
      %v7664 = vadd.f32 %v7288, %v7582
      %v7665 = vadd.f32 %v7289, %v7587
      %v7666 = vadd.f32 %v7290, %v7590
      %v7667 = vadd.f32 %v7291, %v7595
      %v7668 = vadd.f32 %v7292, %v7598
      %v7669 = vadd.f32 %v7293, %v7603
      %v7670 = vadd.f32 %v7294, %v7606
      %v7671 = vadd.f32 %v7295, %v7611
      %v7672 = vadd.f32 %v7296, %v7614
      %v7673 = vadd.f32 %v7297, %v7619
      %v7674 = vadd.f32 %v7298, %v7622
      %v7675 = vadd.f32 %v7299, %v7627
      %v7676 = vadd.f32 %v7300, %v7630
      %v7677 = vadd.f32 %v7301, %v7635
      %v7678 = vadd.f32 %v7302, %v7638
      %v7679 = vadd.f32 %v7303, %v7643
      %v7680 = vadd.f32 %v7304, %v7646
      %7681 = vst.msk [vmem:[#allocation4] sm:$0xff] %vm172, %v7649
      %7682 = vst.msk [vmem:[#allocation4 + $0x8] sm:$0xff] %vm172, %v7650
      %7683 = vst.msk [vmem:[#allocation4 + $0x10] sm:$0xff] %vm172, %v7651
      %7684 = vst.msk [vmem:[#allocation4 + $0x18] sm:$0xff] %vm172, %v7652
      %7685 = vst.msk [vmem:[#allocation4 + $0x20] sm:$0xff] %vm172, %v7653
      %7686 = vst.msk [vmem:[#allocation4 + $0x28] sm:$0xff] %vm172, %v7654
      %7687 = vst.msk [vmem:[#allocation4 + $0x30] sm:$0xff] %vm172, %v7655
      %7688 = vst.msk [vmem:[#allocation4 + $0x38] sm:$0xff] %vm172, %v7656
      %7689 = vst.msk [vmem:[#allocation4 + $0x40] sm:$0xff] %vm172, %v7657
      %7690 = vst.msk [vmem:[#allocation4 + $0x48] sm:$0xff] %vm172, %v7658
      %7691 = vst.msk [vmem:[#allocation4 + $0x50] sm:$0xff] %vm172, %v7659
      %7692 = vst.msk [vmem:[#allocation4 + $0x58] sm:$0xff] %vm172, %v7660
      %7693 = vst.msk [vmem:[#allocation4 + $0x60] sm:$0xff] %vm172, %v7661
      %7694 = vst.msk [vmem:[#allocation4 + $0x68] sm:$0xff] %vm172, %v7662
      %7695 = vst.msk [vmem:[#allocation4 + $0x70] sm:$0xff] %vm172, %v7663
      %7696 = vst.msk [vmem:[#allocation4 + $0x78] sm:$0xff] %vm172, %v7664
      %7697 = vst.msk [vmem:[#allocation4 + $0x80] sm:$0xff] %vm172, %v7665
      %7698 = vst.msk [vmem:[#allocation4 + $0x88] sm:$0xff] %vm172, %v7666
      %7699 = vst.msk [vmem:[#allocation4 + $0x90] sm:$0xff] %vm172, %v7667
      %7700 = vst.msk [vmem:[#allocation4 + $0x98] sm:$0xff] %vm172, %v7668
      %7701 = vst.msk [vmem:[#allocation4 + $0xa0] sm:$0xff] %vm172, %v7669
      %7702 = vst.msk [vmem:[#allocation4 + $0xa8] sm:$0xff] %vm172, %v7670
      %7703 = vst.msk [vmem:[#allocation4 + $0xb0] sm:$0xff] %vm172, %v7671
      %7704 = vst.msk [vmem:[#allocation4 + $0xb8] sm:$0xff] %vm172, %v7672
      %7705 = vst.msk [vmem:[#allocation4 + $0xc0] sm:$0xff] %vm172, %v7673
      %7706 = vst.msk [vmem:[#allocation4 + $0xc8] sm:$0xff] %vm172, %v7674
      %7707 = vst.msk [vmem:[#allocation4 + $0xd0] sm:$0xff] %vm172, %v7675
      %7708 = vst.msk [vmem:[#allocation4 + $0xd8] sm:$0xff] %vm172, %v7676
      %7709 = vst.msk [vmem:[#allocation4 + $0xe0] sm:$0xff] %vm172, %v7677
      %7710 = vst.msk [vmem:[#allocation4 + $0xe8] sm:$0xff] %vm172, %v7678
      %7711 = vst.msk [vmem:[#allocation4 + $0xf0] sm:$0xff] %vm172, %v7679
      %7712 = vst.msk [vmem:[#allocation4 + $0xf8] sm:$0xff] %vm172, %v7680
      %v7713 = vld [vmem:[#allocation3 + $0x10] sm:$0x80]
      %v7714 = vld [vmem:[#allocation3 + $0x18] sm:$0xff]
      %v7715 = vld [vmem:[#allocation3 + $0x20] sm:$0xff]
      %v7716 = vld [vmem:[#allocation3 + $0x28] sm:$0xff]
      %v7717 = vld [vmem:[#allocation3 + $0x30] sm:$0xff]
      %v7718 = vld [vmem:[#allocation3 + $0x38] sm:$0xff]
      %v7719 = vld [vmem:[#allocation3 + $0x40] sm:$0xff]
      %v7720 = vld [vmem:[#allocation3 + $0x48] sm:$0xff]
      %v7721 = vld [vmem:[#allocation3 + $0x50] sm:$0xff]
      %v7722 = vld [vmem:[#allocation3 + $0x58] sm:$0xff]
      %v7723 = vld [vmem:[#allocation3 + $0x60] sm:$0xff]
      %v7724 = vld [vmem:[#allocation3 + $0x68] sm:$0xff]
      %v7725 = vld [vmem:[#allocation3 + $0x70] sm:$0xff]
      %v7726 = vld [vmem:[#allocation3 + $0x78] sm:$0xff]
      %v7727 = vld [vmem:[#allocation3 + $0x80] sm:$0xff]
      %v7728 = vld [vmem:[#allocation3 + $0x88] sm:$0xff]
      %v7729 = vld [vmem:[#allocation3 + $0x90] sm:$0xff]
      %v7730 = vmul.bf16 %v7713, %v667
      %v7731 = vmul.bf16 %v7714, %v675
      %v7732 = vmul.bf16 %v7715, %v683
      %v7733 = vmul.bf16 %v7716, %v691
      %v7734 = vmul.bf16 %v7717, %v699
      %v7735 = vmul.bf16 %v7718, %v707
      %v7736 = vmul.bf16 %v7719, %v715
      %v7737 = vmul.bf16 %v7720, %v723
      %v7738 = vmul.bf16 %v7721, %v731
      %v7739 = vmul.bf16 %v7722, %v739
      %v7740 = vmul.bf16 %v7723, %v747
      %v7741 = vmul.bf16 %v7724, %v755
      %v7742 = vmul.bf16 %v7725, %v763
      %v7743 = vmul.bf16 %v7726, %v771
      %v7744 = vmul.bf16 %v7727, %v779
      %v7745 = vmul.bf16 %v7728, %v787
      %v7746 = vmul.bf16 %v7729, %v790
      %v7747 = vld [vmem:[%s2 + $0x18] sm:$0xf]
      %v7748 = vld [vmem:[#allocation4] sm:$0xff]
      %v7749 = vld [vmem:[#allocation4 + $0x8] sm:$0xff]
      %v7750 = vld [vmem:[#allocation4 + $0x10] sm:$0xff]
      %v7751 = vld [vmem:[#allocation4 + $0x18] sm:$0xff]
      %v7752 = vld [vmem:[#allocation4 + $0x20] sm:$0xff]
      %v7753 = vld [vmem:[#allocation4 + $0x28] sm:$0xff]
      %v7754 = vld [vmem:[#allocation4 + $0x30] sm:$0xff]
      %v7755 = vld [vmem:[#allocation4 + $0x38] sm:$0xff]
      %v7756 = vld [vmem:[#allocation4 + $0x40] sm:$0xff]
      %v7757 = vld [vmem:[#allocation4 + $0x48] sm:$0xff]
      %v7758 = vld [vmem:[#allocation4 + $0x50] sm:$0xff]
      %v7759 = vld [vmem:[#allocation4 + $0x58] sm:$0xff]
      %v7760 = vld [vmem:[#allocation4 + $0x60] sm:$0xff]
      %v7761 = vld [vmem:[#allocation4 + $0x68] sm:$0xff]
      %v7762 = vld [vmem:[#allocation4 + $0x70] sm:$0xff]
      %v7763 = vld [vmem:[#allocation4 + $0x78] sm:$0xff]
      %v7764 = vld [vmem:[#allocation4 + $0x80] sm:$0xff]
      %v7765 = vld [vmem:[#allocation4 + $0x88] sm:$0xff]
      %v7766 = vld [vmem:[#allocation4 + $0x90] sm:$0xff]
      %v7767 = vld [vmem:[#allocation4 + $0x98] sm:$0xff]
      %v7768 = vld [vmem:[#allocation4 + $0xa0] sm:$0xff]
      %v7769 = vld [vmem:[#allocation4 + $0xa8] sm:$0xff]
      %v7770 = vld [vmem:[#allocation4 + $0xb0] sm:$0xff]
      %v7771 = vld [vmem:[#allocation4 + $0xb8] sm:$0xff]
      %v7772 = vld [vmem:[#allocation4 + $0xc0] sm:$0xff]
      %v7773 = vld [vmem:[#allocation4 + $0xc8] sm:$0xff]
      %v7774 = vld [vmem:[#allocation4 + $0xd0] sm:$0xff]
      %v7775 = vld [vmem:[#allocation4 + $0xd8] sm:$0xff]
      %v7776 = vld [vmem:[#allocation4 + $0xe0] sm:$0xff]
      %v7777 = vld [vmem:[#allocation4 + $0xe8] sm:$0xff]
      %v7778 = vld [vmem:[#allocation4 + $0xf0] sm:$0xff]
      %v7779 = vld [vmem:[#allocation4 + $0xf8] sm:$0xff]
      %v7781 = vshrl.u32 %v7730, 16
      %v7783 = vrot.slane %v7781, 7
      %v7785 = vshrl.u32 %v7731, 16
      %v7787 = vrot.slane %v7785, 7
      %v7788 = vshll.u32 %v7731, 16
      %v7790 = vor.u32 %v7787, %v7788
      %v7791 = vsel %vm858, %v7783, %v7790
      %v7793 = vshrl.u32 %v7732, 16
      %v7795 = vrot.slane %v7793, 7
      %v7796 = vshll.u32 %v7732, 16
      %v7798 = vor.u32 %v7795, %v7796
      %v7799 = vsel %vm858, %v7787, %v7798
      %v7801 = vshrl.u32 %v7733, 16
      %v7803 = vrot.slane %v7801, 7
      %v7804 = vshll.u32 %v7733, 16
      %v7806 = vor.u32 %v7803, %v7804
      %v7807 = vsel %vm858, %v7795, %v7806
      %v7809 = vshrl.u32 %v7734, 16
      %v7811 = vrot.slane %v7809, 7
      %v7812 = vshll.u32 %v7734, 16
      %v7814 = vor.u32 %v7811, %v7812
      %v7815 = vsel %vm858, %v7803, %v7814
      %v7817 = vshrl.u32 %v7735, 16
      %v7819 = vrot.slane %v7817, 7
      %v7820 = vshll.u32 %v7735, 16
      %v7822 = vor.u32 %v7819, %v7820
      %v7823 = vsel %vm858, %v7811, %v7822
      %v7825 = vshrl.u32 %v7736, 16
      %v7827 = vrot.slane %v7825, 7
      %v7828 = vshll.u32 %v7736, 16
      %v7830 = vor.u32 %v7827, %v7828
      %v7831 = vsel %vm858, %v7819, %v7830
      %v7833 = vshrl.u32 %v7737, 16
      %v7835 = vrot.slane %v7833, 7
      %v7836 = vshll.u32 %v7737, 16
      %v7838 = vor.u32 %v7835, %v7836
      %v7839 = vsel %vm858, %v7827, %v7838
      %v7841 = vshrl.u32 %v7738, 16
      %v7843 = vrot.slane %v7841, 7
      %v7844 = vshll.u32 %v7738, 16
      %v7846 = vor.u32 %v7843, %v7844
      %v7847 = vsel %vm858, %v7835, %v7846
      %v7849 = vshrl.u32 %v7739, 16
      %v7851 = vrot.slane %v7849, 7
      %v7852 = vshll.u32 %v7739, 16
      %v7854 = vor.u32 %v7851, %v7852
      %v7855 = vsel %vm858, %v7843, %v7854
      %v7857 = vshrl.u32 %v7740, 16
      %v7859 = vrot.slane %v7857, 7
      %v7860 = vshll.u32 %v7740, 16
      %v7862 = vor.u32 %v7859, %v7860
      %v7863 = vsel %vm858, %v7851, %v7862
      %v7865 = vshrl.u32 %v7741, 16
      %v7867 = vrot.slane %v7865, 7
      %v7868 = vshll.u32 %v7741, 16
      %v7870 = vor.u32 %v7867, %v7868
      %v7871 = vsel %vm858, %v7859, %v7870
      %v7873 = vshrl.u32 %v7742, 16
      %v7875 = vrot.slane %v7873, 7
      %v7876 = vshll.u32 %v7742, 16
      %v7878 = vor.u32 %v7875, %v7876
      %v7879 = vsel %vm858, %v7867, %v7878
      %v7881 = vshrl.u32 %v7743, 16
      %v7883 = vrot.slane %v7881, 7
      %v7884 = vshll.u32 %v7743, 16
      %v7886 = vor.u32 %v7883, %v7884
      %v7887 = vsel %vm858, %v7875, %v7886
      %v7889 = vshrl.u32 %v7744, 16
      %v7891 = vrot.slane %v7889, 7
      %v7892 = vshll.u32 %v7744, 16
      %v7894 = vor.u32 %v7891, %v7892
      %v7895 = vsel %vm858, %v7883, %v7894
      %v7897 = vshrl.u32 %v7745, 16
      %v7899 = vrot.slane %v7897, 7
      %v7900 = vshll.u32 %v7745, 16
      %v7902 = vor.u32 %v7899, %v7900
      %v7903 = vsel %vm858, %v7891, %v7902
      %v7905 = vshrl.u32 %v7746, 16
      %v7907 = vrot.slane %v7905, 7
      %v7908 = vshll.u32 %v7746, 16
      %v7910 = vor.u32 %v7907, %v7908
      %v7911 = vsel %vm858, %v7899, %v7910
      %v7913 = vsel %vm172, %v7791, 0
      %v7916 = vsel %vm172, %v7799, 0
      %v7919 = vsel %vm172, %v7807, 0
      %v7922 = vsel %vm172, %v7815, 0
      %v7925 = vsel %vm172, %v7823, 0
      %v7928 = vsel %vm172, %v7831, 0
      %v7931 = vsel %vm172, %v7839, 0
      %v7934 = vsel %vm172, %v7847, 0
      %v7937 = vsel %vm172, %v7855, 0
      %v7940 = vsel %vm172, %v7863, 0
      %v7943 = vsel %vm172, %v7871, 0
      %v7946 = vsel %vm172, %v7879, 0
      %v7949 = vsel %vm172, %v7887, 0
      %v7952 = vsel %vm172, %v7895, 0
      %v7955 = vsel %vm172, %v7903, 0
      %v7958 = vsel %vm172, %v7911, 0
      %v7961 = vsel %vm1039, %v7747, 0
      %7963 = vmatprep.subr.bf16.mxu0 0
      %7964 = vmatpush1.bf16.msra.mxu0 %v7961
      %7965 = vmatprep.subr.bf16.mxu0 0
      %7966 = vmatpush1.bf16.msra.mxu0 0
      %7967 = vmatprep.subr.bf16.mxu0 0
      %7968 = vmatpush1.bf16.msra.mxu0 0
      %7969 = vmatprep.subr.bf16.mxu0 0
      %7970 = vmatpush1.bf16.msra.mxu0 0
      %7971 = vmatprep.subr.bf16.mxu0 0
      %7972 = vmatpush1.bf16.msra.mxu0 0
      %7973 = vmatprep.subr.bf16.mxu0 0
      %7974 = vmatpush1.bf16.msra.mxu0 0
      %7975 = vmatprep.subr.bf16.mxu0 0
      %7976 = vmatpush1.bf16.msra.mxu0 0
      %7977 = vmatprep.subr.bf16.mxu0 0
      %7978 = vmatpush1.bf16.msra.mxu0 0
      %7979 = vmatprep.subr.bf16.mxu0 0
      %7980 = vmatpush1.bf16.msra.mxu0 0
      %7981 = vmatprep.subr.bf16.mxu0 0
      %7982 = vmatpush1.bf16.msra.mxu0 0
      %7983 = vmatprep.subr.bf16.mxu0 0
      %7984 = vmatpush1.bf16.msra.mxu0 0
      %7985 = vmatprep.subr.bf16.mxu0 0
      %7986 = vmatpush1.bf16.msra.mxu0 0
      %7987 = vmatprep.subr.bf16.mxu0 0
      %7988 = vmatpush1.bf16.msra.mxu0 0
      %7989 = vmatprep.subr.bf16.mxu0 0
      %7990 = vmatpush1.bf16.msra.mxu0 0
      %7991 = vmatprep.subr.bf16.mxu0 0
      %7992 = vmatpush1.bf16.msra.mxu0 0
      %7993 = vmatprep.subr.bf16.mxu0 0
      %7994 = vmatpush1.bf16.msra.mxu0 0
      %7995 = vmatprep.mubr.bf16.mxu0 0
      %7996 = vmatmul.mubr.bf16.gmra.mrb[0].mxu0 %v7913
      %v7997 = vpop.f32.mrb[0].mxu0
      %v7998 = vadd.f32 0.0, %v7997
      %v7999 = vpop.f32.mrb[0].mxu0
      %v8000 = vpop.f32.mrb[0].mxu0
      %v8001 = vadd.f32 0.0, %v8000
      %v8002 = vpop.f32.mrb[0].mxu0
      %8003 = vmatprep.mubr.bf16.mxu0 0
      %8004 = vmatmul.mubr.bf16.gmra.mrb[0].mxu0 %v7916
      %v8005 = vpop.f32.mrb[0].mxu0
      %v8006 = vadd.f32 0.0, %v8005
      %v8007 = vpop.f32.mrb[0].mxu0
      %v8008 = vpop.f32.mrb[0].mxu0
      %v8009 = vadd.f32 0.0, %v8008
      %v8010 = vpop.f32.mrb[0].mxu0
      %8011 = vmatprep.mubr.bf16.mxu0 0
      %8012 = vmatmul.mubr.bf16.gmra.mrb[0].mxu0 %v7919
      %v8013 = vpop.f32.mrb[0].mxu0
      %v8014 = vadd.f32 0.0, %v8013
      %v8015 = vpop.f32.mrb[0].mxu0
      %v8016 = vpop.f32.mrb[0].mxu0
      %v8017 = vadd.f32 0.0, %v8016
      %v8018 = vpop.f32.mrb[0].mxu0
      %8019 = vmatprep.mubr.bf16.mxu0 0
      %8020 = vmatmul.mubr.bf16.gmra.mrb[0].mxu0 %v7922
      %v8021 = vpop.f32.mrb[0].mxu0
      %v8022 = vadd.f32 0.0, %v8021
      %v8023 = vpop.f32.mrb[0].mxu0
      %v8024 = vpop.f32.mrb[0].mxu0
      %v8025 = vadd.f32 0.0, %v8024
      %v8026 = vpop.f32.mrb[0].mxu0
      %8027 = vmatprep.mubr.bf16.mxu0 0
      %8028 = vmatmul.mubr.bf16.gmra.mrb[0].mxu0 %v7925
      %v8029 = vpop.f32.mrb[0].mxu0
      %v8030 = vadd.f32 0.0, %v8029
      %v8031 = vpop.f32.mrb[0].mxu0
      %v8032 = vpop.f32.mrb[0].mxu0
      %v8033 = vadd.f32 0.0, %v8032
      %v8034 = vpop.f32.mrb[0].mxu0
      %8035 = vmatprep.mubr.bf16.mxu0 0
      %8036 = vmatmul.mubr.bf16.gmra.mrb[0].mxu0 %v7928
      %v8037 = vpop.f32.mrb[0].mxu0
      %v8038 = vadd.f32 0.0, %v8037
      %v8039 = vpop.f32.mrb[0].mxu0
      %v8040 = vpop.f32.mrb[0].mxu0
      %v8041 = vadd.f32 0.0, %v8040
      %v8042 = vpop.f32.mrb[0].mxu0
      %8043 = vmatprep.mubr.bf16.mxu0 0
      %8044 = vmatmul.mubr.bf16.gmra.mrb[0].mxu0 %v7931
      %v8045 = vpop.f32.mrb[0].mxu0
      %v8046 = vadd.f32 0.0, %v8045
      %v8047 = vpop.f32.mrb[0].mxu0
      %v8048 = vpop.f32.mrb[0].mxu0
      %v8049 = vadd.f32 0.0, %v8048
      %v8050 = vpop.f32.mrb[0].mxu0
      %8051 = vmatprep.mubr.bf16.mxu0 0
      %8052 = vmatmul.mubr.bf16.gmra.mrb[0].mxu0 %v7934
      %v8053 = vpop.f32.mrb[0].mxu0
      %v8054 = vadd.f32 0.0, %v8053
      %v8055 = vpop.f32.mrb[0].mxu0
      %v8056 = vpop.f32.mrb[0].mxu0
      %v8057 = vadd.f32 0.0, %v8056
      %v8058 = vpop.f32.mrb[0].mxu0
      %8059 = vmatprep.mubr.bf16.mxu0 0
      %8060 = vmatmul.mubr.bf16.gmra.mrb[0].mxu0 %v7937
      %v8061 = vpop.f32.mrb[0].mxu0
      %v8062 = vadd.f32 0.0, %v8061
      %v8063 = vpop.f32.mrb[0].mxu0
      %v8064 = vpop.f32.mrb[0].mxu0
      %v8065 = vadd.f32 0.0, %v8064
      %v8066 = vpop.f32.mrb[0].mxu0
      %8067 = vmatprep.mubr.bf16.mxu0 0
      %8068 = vmatmul.mubr.bf16.gmra.mrb[0].mxu0 %v7940
      %v8069 = vpop.f32.mrb[0].mxu0
      %v8070 = vadd.f32 0.0, %v8069
      %v8071 = vpop.f32.mrb[0].mxu0
      %v8072 = vpop.f32.mrb[0].mxu0
      %v8073 = vadd.f32 0.0, %v8072
      %v8074 = vpop.f32.mrb[0].mxu0
      %8075 = vmatprep.mubr.bf16.mxu0 0
      %8076 = vmatmul.mubr.bf16.gmra.mrb[0].mxu0 %v7943
      %v8077 = vpop.f32.mrb[0].mxu0
      %v8078 = vadd.f32 0.0, %v8077
      %v8079 = vpop.f32.mrb[0].mxu0
      %v8080 = vpop.f32.mrb[0].mxu0
      %v8081 = vadd.f32 0.0, %v8080
      %v8082 = vpop.f32.mrb[0].mxu0
      %8083 = vmatprep.mubr.bf16.mxu0 0
      %8084 = vmatmul.mubr.bf16.gmra.mrb[0].mxu0 %v7946
      %v8085 = vpop.f32.mrb[0].mxu0
      %v8086 = vadd.f32 0.0, %v8085
      %v8087 = vpop.f32.mrb[0].mxu0
      %v8088 = vpop.f32.mrb[0].mxu0
      %v8089 = vadd.f32 0.0, %v8088
      %v8090 = vpop.f32.mrb[0].mxu0
      %8091 = vmatprep.mubr.bf16.mxu0 0
      %8092 = vmatmul.mubr.bf16.gmra.mrb[0].mxu0 %v7949
      %v8093 = vpop.f32.mrb[0].mxu0
      %v8094 = vadd.f32 0.0, %v8093
      %v8095 = vpop.f32.mrb[0].mxu0
      %v8096 = vpop.f32.mrb[0].mxu0
      %v8097 = vadd.f32 0.0, %v8096
      %v8098 = vpop.f32.mrb[0].mxu0
      %8099 = vmatprep.mubr.bf16.mxu0 0
      %8100 = vmatmul.mubr.bf16.gmra.mrb[0].mxu0 %v7952
      %v8101 = vpop.f32.mrb[0].mxu0
      %v8102 = vadd.f32 0.0, %v8101
      %v8103 = vpop.f32.mrb[0].mxu0
      %v8104 = vpop.f32.mrb[0].mxu0
      %v8105 = vadd.f32 0.0, %v8104
      %v8106 = vpop.f32.mrb[0].mxu0
      %8107 = vmatprep.mubr.bf16.mxu0 0
      %8108 = vmatmul.mubr.bf16.gmra.mrb[0].mxu0 %v7955
      %v8109 = vpop.f32.mrb[0].mxu0
      %v8110 = vadd.f32 0.0, %v8109
      %v8111 = vpop.f32.mrb[0].mxu0
      %v8112 = vpop.f32.mrb[0].mxu0
      %v8113 = vadd.f32 0.0, %v8112
      %v8114 = vpop.f32.mrb[0].mxu0
      %8115 = vmatprep.mubr.bf16.mxu0 0
      %8116 = vmatmul.mubr.bf16.gmra.mrb[0].mxu0 %v7958
      %v8117 = vpop.f32.mrb[0].mxu0
      %v8118 = vadd.f32 0.0, %v8117
      %v8119 = vpop.f32.mrb[0].mxu0
      %v8120 = vpop.f32.mrb[0].mxu0
      %v8121 = vadd.f32 0.0, %v8120
      %v8122 = vpop.f32.mrb[0].mxu0
      %8123 = vdwg.mxu0
      %v8124 = vadd.f32 %v7748, %v7998
      %v8125 = vadd.f32 %v7749, %v8001
      %v8126 = vadd.f32 %v7750, %v8006
      %v8127 = vadd.f32 %v7751, %v8009
      %v8128 = vadd.f32 %v7752, %v8014
      %v8129 = vadd.f32 %v7753, %v8017
      %v8130 = vadd.f32 %v7754, %v8022
      %v8131 = vadd.f32 %v7755, %v8025
      %v8132 = vadd.f32 %v7756, %v8030
      %v8133 = vadd.f32 %v7757, %v8033
      %v8134 = vadd.f32 %v7758, %v8038
      %v8135 = vadd.f32 %v7759, %v8041
      %v8136 = vadd.f32 %v7760, %v8046
      %v8137 = vadd.f32 %v7761, %v8049
      %v8138 = vadd.f32 %v7762, %v8054
      %v8139 = vadd.f32 %v7763, %v8057
      %v8140 = vadd.f32 %v7764, %v8062
      %v8141 = vadd.f32 %v7765, %v8065
      %v8142 = vadd.f32 %v7766, %v8070
      %v8143 = vadd.f32 %v7767, %v8073
      %v8144 = vadd.f32 %v7768, %v8078
      %v8145 = vadd.f32 %v7769, %v8081
      %v8146 = vadd.f32 %v7770, %v8086
      %v8147 = vadd.f32 %v7771, %v8089
      %v8148 = vadd.f32 %v7772, %v8094
      %v8149 = vadd.f32 %v7773, %v8097
      %v8150 = vadd.f32 %v7774, %v8102
      %v8151 = vadd.f32 %v7775, %v8105
      %v8152 = vadd.f32 %v7776, %v8110
      %v8153 = vadd.f32 %v7777, %v8113
      %v8154 = vadd.f32 %v7778, %v8118
      %v8155 = vadd.f32 %v7779, %v8121
      %8156 = vst.msk [vmem:[#allocation4] sm:$0xff] %vm172, %v8124
      %8157 = vst.msk [vmem:[#allocation4 + $0x8] sm:$0xff] %vm172, %v8125
      %8158 = vst.msk [vmem:[#allocation4 + $0x10] sm:$0xff] %vm172, %v8126
      %8159 = vst.msk [vmem:[#allocation4 + $0x18] sm:$0xff] %vm172, %v8127
      %8160 = vst.msk [vmem:[#allocation4 + $0x20] sm:$0xff] %vm172, %v8128
      %8161 = vst.msk [vmem:[#allocation4 + $0x28] sm:$0xff] %vm172, %v8129
      %8162 = vst.msk [vmem:[#allocation4 + $0x30] sm:$0xff] %vm172, %v8130
      %8163 = vst.msk [vmem:[#allocation4 + $0x38] sm:$0xff] %vm172, %v8131
      %8164 = vst.msk [vmem:[#allocation4 + $0x40] sm:$0xff] %vm172, %v8132
      %8165 = vst.msk [vmem:[#allocation4 + $0x48] sm:$0xff] %vm172, %v8133
      %8166 = vst.msk [vmem:[#allocation4 + $0x50] sm:$0xff] %vm172, %v8134
      %8167 = vst.msk [vmem:[#allocation4 + $0x58] sm:$0xff] %vm172, %v8135
      %8168 = vst.msk [vmem:[#allocation4 + $0x60] sm:$0xff] %vm172, %v8136
      %8169 = vst.msk [vmem:[#allocation4 + $0x68] sm:$0xff] %vm172, %v8137
      %8170 = vst.msk [vmem:[#allocation4 + $0x70] sm:$0xff] %vm172, %v8138
      %8171 = vst.msk [vmem:[#allocation4 + $0x78] sm:$0xff] %vm172, %v8139
      %8172 = vst.msk [vmem:[#allocation4 + $0x80] sm:$0xff] %vm172, %v8140
      %8173 = vst.msk [vmem:[#allocation4 + $0x88] sm:$0xff] %vm172, %v8141
      %8174 = vst.msk [vmem:[#allocation4 + $0x90] sm:$0xff] %vm172, %v8142
      %8175 = vst.msk [vmem:[#allocation4 + $0x98] sm:$0xff] %vm172, %v8143
      %8176 = vst.msk [vmem:[#allocation4 + $0xa0] sm:$0xff] %vm172, %v8144
      %8177 = vst.msk [vmem:[#allocation4 + $0xa8] sm:$0xff] %vm172, %v8145
      %8178 = vst.msk [vmem:[#allocation4 + $0xb0] sm:$0xff] %vm172, %v8146
      %8179 = vst.msk [vmem:[#allocation4 + $0xb8] sm:$0xff] %vm172, %v8147
      %8180 = vst.msk [vmem:[#allocation4 + $0xc0] sm:$0xff] %vm172, %v8148
      %8181 = vst.msk [vmem:[#allocation4 + $0xc8] sm:$0xff] %vm172, %v8149
      %8182 = vst.msk [vmem:[#allocation4 + $0xd0] sm:$0xff] %vm172, %v8150
      %8183 = vst.msk [vmem:[#allocation4 + $0xd8] sm:$0xff] %vm172, %v8151
      %8184 = vst.msk [vmem:[#allocation4 + $0xe0] sm:$0xff] %vm172, %v8152
      %8185 = vst.msk [vmem:[#allocation4 + $0xe8] sm:$0xff] %vm172, %v8153
      %8186 = vst.msk [vmem:[#allocation4 + $0xf0] sm:$0xff] %vm172, %v8154
      %8187 = vst.msk [vmem:[#allocation4 + $0xf8] sm:$0xff] %vm172, %v8155
      %v8188 = vld [vmem:[#allocation3 + $0x18] sm:$0xff]
      %v8189 = vld [vmem:[#allocation3 + $0x20] sm:$0xff]
      %v8190 = vld [vmem:[#allocation3 + $0x28] sm:$0xff]
      %v8191 = vld [vmem:[#allocation3 + $0x30] sm:$0xff]
      %v8192 = vld [vmem:[#allocation3 + $0x38] sm:$0xff]
      %v8193 = vld [vmem:[#allocation3 + $0x40] sm:$0xff]
      %v8194 = vld [vmem:[#allocation3 + $0x48] sm:$0xff]
      %v8195 = vld [vmem:[#allocation3 + $0x50] sm:$0xff]
      %v8196 = vld [vmem:[#allocation3 + $0x58] sm:$0xff]
      %v8197 = vld [vmem:[#allocation3 + $0x60] sm:$0xff]
      %v8198 = vld [vmem:[#allocation3 + $0x68] sm:$0xff]
      %v8199 = vld [vmem:[#allocation3 + $0x70] sm:$0xff]
      %v8200 = vld [vmem:[#allocation3 + $0x78] sm:$0xff]
      %v8201 = vld [vmem:[#allocation3 + $0x80] sm:$0xff]
      %v8202 = vld [vmem:[#allocation3 + $0x88] sm:$0xff]
      %v8203 = vld [vmem:[#allocation3 + $0x90] sm:$0xff]
      %v8204 = vld [vmem:[%s2 + $0x1c] sm:$0xf]
      %v8205 = vld [vmem:[#allocation4] sm:$0xff]
      %v8206 = vld [vmem:[#allocation4 + $0x8] sm:$0xff]
      %v8207 = vld [vmem:[#allocation4 + $0x10] sm:$0xff]
      %v8208 = vld [vmem:[#allocation4 + $0x18] sm:$0xff]
      %v8209 = vld [vmem:[#allocation4 + $0x20] sm:$0xff]
      %v8210 = vld [vmem:[#allocation4 + $0x28] sm:$0xff]
      %v8211 = vld [vmem:[#allocation4 + $0x30] sm:$0xff]
      %v8212 = vld [vmem:[#allocation4 + $0x38] sm:$0xff]
      %v8213 = vld [vmem:[#allocation4 + $0x40] sm:$0xff]
      %v8214 = vld [vmem:[#allocation4 + $0x48] sm:$0xff]
      %v8215 = vld [vmem:[#allocation4 + $0x50] sm:$0xff]
      %v8216 = vld [vmem:[#allocation4 + $0x58] sm:$0xff]
      %v8217 = vld [vmem:[#allocation4 + $0x60] sm:$0xff]
      %v8218 = vld [vmem:[#allocation4 + $0x68] sm:$0xff]
      %v8219 = vld [vmem:[#allocation4 + $0x70] sm:$0xff]
      %v8220 = vld [vmem:[#allocation4 + $0x78] sm:$0xff]
      %v8221 = vld [vmem:[#allocation4 + $0x80] sm:$0xff]
      %v8222 = vld [vmem:[#allocation4 + $0x88] sm:$0xff]
      %v8223 = vld [vmem:[#allocation4 + $0x90] sm:$0xff]
      %v8224 = vld [vmem:[#allocation4 + $0x98] sm:$0xff]
      %v8225 = vld [vmem:[#allocation4 + $0xa0] sm:$0xff]
      %v8226 = vld [vmem:[#allocation4 + $0xa8] sm:$0xff]
      %v8227 = vld [vmem:[#allocation4 + $0xb0] sm:$0xff]
      %v8228 = vld [vmem:[#allocation4 + $0xb8] sm:$0xff]
      %v8229 = vld [vmem:[#allocation4 + $0xc0] sm:$0xff]
      %v8230 = vld [vmem:[#allocation4 + $0xc8] sm:$0xff]
      %v8231 = vld [vmem:[#allocation4 + $0xd0] sm:$0xff]
      %v8232 = vld [vmem:[#allocation4 + $0xd8] sm:$0xff]
      %v8233 = vld [vmem:[#allocation4 + $0xe0] sm:$0xff]
      %v8234 = vld [vmem:[#allocation4 + $0xe8] sm:$0xff]
      %v8235 = vld [vmem:[#allocation4 + $0xf0] sm:$0xff]
      %v8236 = vld [vmem:[#allocation4 + $0xf8] sm:$0xff]
      %v8238 = vsel %vm172, %v8188, 0
      %v8241 = vsel %vm172, %v8189, 0
      %v8244 = vsel %vm172, %v8190, 0
      %v8247 = vsel %vm172, %v8191, 0
      %v8250 = vsel %vm172, %v8192, 0
      %v8253 = vsel %vm172, %v8193, 0
      %v8256 = vsel %vm172, %v8194, 0
      %v8259 = vsel %vm172, %v8195, 0
      %v8262 = vsel %vm172, %v8196, 0
      %v8265 = vsel %vm172, %v8197, 0
      %v8268 = vsel %vm172, %v8198, 0
      %v8271 = vsel %vm172, %v8199, 0
      %v8274 = vsel %vm172, %v8200, 0
      %v8277 = vsel %vm172, %v8201, 0
      %v8280 = vsel %vm172, %v8202, 0
      %v8283 = vsel %vm172, %v8203, 0
      %v8286 = vsel %vm1039, %v8204, 0
      %8288 = vmatprep.subr.bf16.mxu0 0
      %8289 = vmatpush1.bf16.msra.mxu0 %v8286
      %8290 = vmatprep.subr.bf16.mxu0 0
      %8291 = vmatpush1.bf16.msra.mxu0 0
      %8292 = vmatprep.subr.bf16.mxu0 0
      %8293 = vmatpush1.bf16.msra.mxu0 0
      %8294 = vmatprep.subr.bf16.mxu0 0
      %8295 = vmatpush1.bf16.msra.mxu0 0
      %8296 = vmatprep.subr.bf16.mxu0 0
      %8297 = vmatpush1.bf16.msra.mxu0 0
      %8298 = vmatprep.subr.bf16.mxu0 0
      %8299 = vmatpush1.bf16.msra.mxu0 0
      %8300 = vmatprep.subr.bf16.mxu0 0
      %8301 = vmatpush1.bf16.msra.mxu0 0
      %8302 = vmatprep.subr.bf16.mxu0 0
      %8303 = vmatpush1.bf16.msra.mxu0 0
      %8304 = vmatprep.subr.bf16.mxu0 0
      %8305 = vmatpush1.bf16.msra.mxu0 0
      %8306 = vmatprep.subr.bf16.mxu0 0
      %8307 = vmatpush1.bf16.msra.mxu0 0
      %8308 = vmatprep.subr.bf16.mxu0 0
      %8309 = vmatpush1.bf16.msra.mxu0 0
      %8310 = vmatprep.subr.bf16.mxu0 0
      %8311 = vmatpush1.bf16.msra.mxu0 0
      %8312 = vmatprep.subr.bf16.mxu0 0
      %8313 = vmatpush1.bf16.msra.mxu0 0
      %8314 = vmatprep.subr.bf16.mxu0 0
      %8315 = vmatpush1.bf16.msra.mxu0 0
      %8316 = vmatprep.subr.bf16.mxu0 0
      %8317 = vmatpush1.bf16.msra.mxu0 0
      %8318 = vmatprep.subr.bf16.mxu0 0
      %8319 = vmatpush1.bf16.msra.mxu0 0
      %8320 = vmatprep.mubr.bf16.mxu0 0
      %8321 = vmatmul.mubr.bf16.gmra.mrb[0].mxu0 %v8238
      %v8322 = vpop.f32.mrb[0].mxu0
      %v8323 = vadd.f32 0.0, %v8322
      %v8324 = vpop.f32.mrb[0].mxu0
      %v8325 = vpop.f32.mrb[0].mxu0
      %v8326 = vadd.f32 0.0, %v8325
      %v8327 = vpop.f32.mrb[0].mxu0
      %8328 = vmatprep.mubr.bf16.mxu0 0
      %8329 = vmatmul.mubr.bf16.gmra.mrb[0].mxu0 %v8241
      %v8330 = vpop.f32.mrb[0].mxu0
      %v8331 = vadd.f32 0.0, %v8330
      %v8332 = vpop.f32.mrb[0].mxu0
      %v8333 = vpop.f32.mrb[0].mxu0
      %v8334 = vadd.f32 0.0, %v8333
      %v8335 = vpop.f32.mrb[0].mxu0
      %8336 = vmatprep.mubr.bf16.mxu0 0
      %8337 = vmatmul.mubr.bf16.gmra.mrb[0].mxu0 %v8244
      %v8338 = vpop.f32.mrb[0].mxu0
      %v8339 = vadd.f32 0.0, %v8338
      %v8340 = vpop.f32.mrb[0].mxu0
      %v8341 = vpop.f32.mrb[0].mxu0
      %v8342 = vadd.f32 0.0, %v8341
      %v8343 = vpop.f32.mrb[0].mxu0
      %8344 = vmatprep.mubr.bf16.mxu0 0
      %8345 = vmatmul.mubr.bf16.gmra.mrb[0].mxu0 %v8247
      %v8346 = vpop.f32.mrb[0].mxu0
      %v8347 = vadd.f32 0.0, %v8346
      %v8348 = vpop.f32.mrb[0].mxu0
      %v8349 = vpop.f32.mrb[0].mxu0
      %v8350 = vadd.f32 0.0, %v8349
      %v8351 = vpop.f32.mrb[0].mxu0
      %8352 = vmatprep.mubr.bf16.mxu0 0
      %8353 = vmatmul.mubr.bf16.gmra.mrb[0].mxu0 %v8250
      %v8354 = vpop.f32.mrb[0].mxu0
      %v8355 = vadd.f32 0.0, %v8354
      %v8356 = vpop.f32.mrb[0].mxu0
      %v8357 = vpop.f32.mrb[0].mxu0
      %v8358 = vadd.f32 0.0, %v8357
      %v8359 = vpop.f32.mrb[0].mxu0
      %8360 = vmatprep.mubr.bf16.mxu0 0
      %8361 = vmatmul.mubr.bf16.gmra.mrb[0].mxu0 %v8253
      %v8362 = vpop.f32.mrb[0].mxu0
      %v8363 = vadd.f32 0.0, %v8362
      %v8364 = vpop.f32.mrb[0].mxu0
      %v8365 = vpop.f32.mrb[0].mxu0
      %v8366 = vadd.f32 0.0, %v8365
      %v8367 = vpop.f32.mrb[0].mxu0
      %8368 = vmatprep.mubr.bf16.mxu0 0
      %8369 = vmatmul.mubr.bf16.gmra.mrb[0].mxu0 %v8256
      %v8370 = vpop.f32.mrb[0].mxu0
      %v8371 = vadd.f32 0.0, %v8370
      %v8372 = vpop.f32.mrb[0].mxu0
      %v8373 = vpop.f32.mrb[0].mxu0
      %v8374 = vadd.f32 0.0, %v8373
      %v8375 = vpop.f32.mrb[0].mxu0
      %8376 = vmatprep.mubr.bf16.mxu0 0
      %8377 = vmatmul.mubr.bf16.gmra.mrb[0].mxu0 %v8259
      %v8378 = vpop.f32.mrb[0].mxu0
      %v8379 = vadd.f32 0.0, %v8378
      %v8380 = vpop.f32.mrb[0].mxu0
      %v8381 = vpop.f32.mrb[0].mxu0
      %v8382 = vadd.f32 0.0, %v8381
      %v8383 = vpop.f32.mrb[0].mxu0
      %8384 = vmatprep.mubr.bf16.mxu0 0
      %8385 = vmatmul.mubr.bf16.gmra.mrb[0].mxu0 %v8262
      %v8386 = vpop.f32.mrb[0].mxu0
      %v8387 = vadd.f32 0.0, %v8386
      %v8388 = vpop.f32.mrb[0].mxu0
      %v8389 = vpop.f32.mrb[0].mxu0
      %v8390 = vadd.f32 0.0, %v8389
      %v8391 = vpop.f32.mrb[0].mxu0
      %8392 = vmatprep.mubr.bf16.mxu0 0
      %8393 = vmatmul.mubr.bf16.gmra.mrb[0].mxu0 %v8265
      %v8394 = vpop.f32.mrb[0].mxu0
      %v8395 = vadd.f32 0.0, %v8394
      %v8396 = vpop.f32.mrb[0].mxu0
      %v8397 = vpop.f32.mrb[0].mxu0
      %v8398 = vadd.f32 0.0, %v8397
      %v8399 = vpop.f32.mrb[0].mxu0
      %8400 = vmatprep.mubr.bf16.mxu0 0
      %8401 = vmatmul.mubr.bf16.gmra.mrb[0].mxu0 %v8268
      %v8402 = vpop.f32.mrb[0].mxu0
      %v8403 = vadd.f32 0.0, %v8402
      %v8404 = vpop.f32.mrb[0].mxu0
      %v8405 = vpop.f32.mrb[0].mxu0
      %v8406 = vadd.f32 0.0, %v8405
      %v8407 = vpop.f32.mrb[0].mxu0
      %8408 = vmatprep.mubr.bf16.mxu0 0
      %8409 = vmatmul.mubr.bf16.gmra.mrb[0].mxu0 %v8271
      %v8410 = vpop.f32.mrb[0].mxu0
      %v8411 = vadd.f32 0.0, %v8410
      %v8412 = vpop.f32.mrb[0].mxu0
      %v8413 = vpop.f32.mrb[0].mxu0
      %v8414 = vadd.f32 0.0, %v8413
      %v8415 = vpop.f32.mrb[0].mxu0
      %8416 = vmatprep.mubr.bf16.mxu0 0
      %8417 = vmatmul.mubr.bf16.gmra.mrb[0].mxu0 %v8274
      %v8418 = vpop.f32.mrb[0].mxu0
      %v8419 = vadd.f32 0.0, %v8418
      %v8420 = vpop.f32.mrb[0].mxu0
      %v8421 = vpop.f32.mrb[0].mxu0
      %v8422 = vadd.f32 0.0, %v8421
      %v8423 = vpop.f32.mrb[0].mxu0
      %8424 = vmatprep.mubr.bf16.mxu0 0
      %8425 = vmatmul.mubr.bf16.gmra.mrb[0].mxu0 %v8277
      %v8426 = vpop.f32.mrb[0].mxu0
      %v8427 = vadd.f32 0.0, %v8426
      %v8428 = vpop.f32.mrb[0].mxu0
      %v8429 = vpop.f32.mrb[0].mxu0
      %v8430 = vadd.f32 0.0, %v8429
      %v8431 = vpop.f32.mrb[0].mxu0
      %8432 = vmatprep.mubr.bf16.mxu0 0
      %8433 = vmatmul.mubr.bf16.gmra.mrb[0].mxu0 %v8280
      %v8434 = vpop.f32.mrb[0].mxu0
      %v8435 = vadd.f32 0.0, %v8434
      %v8436 = vpop.f32.mrb[0].mxu0
      %v8437 = vpop.f32.mrb[0].mxu0
      %v8438 = vadd.f32 0.0, %v8437
      %v8439 = vpop.f32.mrb[0].mxu0
      %8440 = vmatprep.mubr.bf16.mxu0 0
      %8441 = vmatmul.mubr.bf16.gmra.mrb[0].mxu0 %v8283
      %v8442 = vpop.f32.mrb[0].mxu0
      %v8443 = vadd.f32 0.0, %v8442
      %v8444 = vpop.f32.mrb[0].mxu0
      %v8445 = vpop.f32.mrb[0].mxu0
      %v8446 = vadd.f32 0.0, %v8445
      %v8447 = vpop.f32.mrb[0].mxu0
      %8448 = vdwg.mxu0
      %v8449 = vadd.f32 %v8205, %v8323
      %v8450 = vadd.f32 %v8206, %v8326
      %v8451 = vadd.f32 %v8207, %v8331
      %v8452 = vadd.f32 %v8208, %v8334
      %v8453 = vadd.f32 %v8209, %v8339
      %v8454 = vadd.f32 %v8210, %v8342
      %v8455 = vadd.f32 %v8211, %v8347
      %v8456 = vadd.f32 %v8212, %v8350
      %v8457 = vadd.f32 %v8213, %v8355
      %v8458 = vadd.f32 %v8214, %v8358
      %v8459 = vadd.f32 %v8215, %v8363
      %v8460 = vadd.f32 %v8216, %v8366
      %v8461 = vadd.f32 %v8217, %v8371
      %v8462 = vadd.f32 %v8218, %v8374
      %v8463 = vadd.f32 %v8219, %v8379
      %v8464 = vadd.f32 %v8220, %v8382
      %v8465 = vadd.f32 %v8221, %v8387
      %v8466 = vadd.f32 %v8222, %v8390
      %v8467 = vadd.f32 %v8223, %v8395
      %v8468 = vadd.f32 %v8224, %v8398
      %v8469 = vadd.f32 %v8225, %v8403
      %v8470 = vadd.f32 %v8226, %v8406
      %v8471 = vadd.f32 %v8227, %v8411
      %v8472 = vadd.f32 %v8228, %v8414
      %v8473 = vadd.f32 %v8229, %v8419
      %v8474 = vadd.f32 %v8230, %v8422
      %v8475 = vadd.f32 %v8231, %v8427
      %v8476 = vadd.f32 %v8232, %v8430
      %v8477 = vadd.f32 %v8233, %v8435
      %v8478 = vadd.f32 %v8234, %v8438
      %v8479 = vadd.f32 %v8235, %v8443
      %v8480 = vadd.f32 %v8236, %v8446
      %8481 = vst.msk [vmem:[#allocation4] sm:$0xff] %vm172, %v8449
      %8482 = vst.msk [vmem:[#allocation4 + $0x8] sm:$0xff] %vm172, %v8450
      %8483 = vst.msk [vmem:[#allocation4 + $0x10] sm:$0xff] %vm172, %v8451
      %8484 = vst.msk [vmem:[#allocation4 + $0x18] sm:$0xff] %vm172, %v8452
      %8485 = vst.msk [vmem:[#allocation4 + $0x20] sm:$0xff] %vm172, %v8453
      %8486 = vst.msk [vmem:[#allocation4 + $0x28] sm:$0xff] %vm172, %v8454
      %8487 = vst.msk [vmem:[#allocation4 + $0x30] sm:$0xff] %vm172, %v8455
      %8488 = vst.msk [vmem:[#allocation4 + $0x38] sm:$0xff] %vm172, %v8456
      %8489 = vst.msk [vmem:[#allocation4 + $0x40] sm:$0xff] %vm172, %v8457
      %8490 = vst.msk [vmem:[#allocation4 + $0x48] sm:$0xff] %vm172, %v8458
      %8491 = vst.msk [vmem:[#allocation4 + $0x50] sm:$0xff] %vm172, %v8459
      %8492 = vst.msk [vmem:[#allocation4 + $0x58] sm:$0xff] %vm172, %v8460
      %8493 = vst.msk [vmem:[#allocation4 + $0x60] sm:$0xff] %vm172, %v8461
      %8494 = vst.msk [vmem:[#allocation4 + $0x68] sm:$0xff] %vm172, %v8462
      %8495 = vst.msk [vmem:[#allocation4 + $0x70] sm:$0xff] %vm172, %v8463
      %8496 = vst.msk [vmem:[#allocation4 + $0x78] sm:$0xff] %vm172, %v8464
      %8497 = vst.msk [vmem:[#allocation4 + $0x80] sm:$0xff] %vm172, %v8465
      %8498 = vst.msk [vmem:[#allocation4 + $0x88] sm:$0xff] %vm172, %v8466
      %8499 = vst.msk [vmem:[#allocation4 + $0x90] sm:$0xff] %vm172, %v8467
      %8500 = vst.msk [vmem:[#allocation4 + $0x98] sm:$0xff] %vm172, %v8468
      %8501 = vst.msk [vmem:[#allocation4 + $0xa0] sm:$0xff] %vm172, %v8469
      %8502 = vst.msk [vmem:[#allocation4 + $0xa8] sm:$0xff] %vm172, %v8470
      %8503 = vst.msk [vmem:[#allocation4 + $0xb0] sm:$0xff] %vm172, %v8471
      %8504 = vst.msk [vmem:[#allocation4 + $0xb8] sm:$0xff] %vm172, %v8472
      %8505 = vst.msk [vmem:[#allocation4 + $0xc0] sm:$0xff] %vm172, %v8473
      %8506 = vst.msk [vmem:[#allocation4 + $0xc8] sm:$0xff] %vm172, %v8474
      %8507 = vst.msk [vmem:[#allocation4 + $0xd0] sm:$0xff] %vm172, %v8475
      %8508 = vst.msk [vmem:[#allocation4 + $0xd8] sm:$0xff] %vm172, %v8476
      %8509 = vst.msk [vmem:[#allocation4 + $0xe0] sm:$0xff] %vm172, %v8477
      %8510 = vst.msk [vmem:[#allocation4 + $0xe8] sm:$0xff] %vm172, %v8478
      %8511 = vst.msk [vmem:[#allocation4 + $0xf0] sm:$0xff] %vm172, %v8479
      %8512 = vst.msk [vmem:[#allocation4 + $0xf8] sm:$0xff] %vm172, %v8480
      %v8513 = vld [vmem:[#allocation3 + $0x18] sm:$0xff]
      %v8514 = vld [vmem:[#allocation3 + $0x20] sm:$0xff]
      %v8515 = vld [vmem:[#allocation3 + $0x28] sm:$0xff]
      %v8516 = vld [vmem:[#allocation3 + $0x30] sm:$0xff]
      %v8517 = vld [vmem:[#allocation3 + $0x38] sm:$0xff]
      %v8518 = vld [vmem:[#allocation3 + $0x40] sm:$0xff]
      %v8519 = vld [vmem:[#allocation3 + $0x48] sm:$0xff]
      %v8520 = vld [vmem:[#allocation3 + $0x50] sm:$0xff]
      %v8521 = vld [vmem:[#allocation3 + $0x58] sm:$0xff]
      %v8522 = vld [vmem:[#allocation3 + $0x60] sm:$0xff]
      %v8523 = vld [vmem:[#allocation3 + $0x68] sm:$0xff]
      %v8524 = vld [vmem:[#allocation3 + $0x70] sm:$0xff]
      %v8525 = vld [vmem:[#allocation3 + $0x78] sm:$0xff]
      %v8526 = vld [vmem:[#allocation3 + $0x80] sm:$0xff]
      %v8527 = vld [vmem:[#allocation3 + $0x88] sm:$0xff]
      %v8528 = vld [vmem:[#allocation3 + $0x90] sm:$0xff]
      %v8529 = vld [vmem:[#allocation3 + $0x98] sm:$0x1]
      %v8530 = vmul.bf16 %v8513, %v1616
      %v8531 = vmul.bf16 %v8514, %v1624
      %v8532 = vmul.bf16 %v8515, %v1632
      %v8533 = vmul.bf16 %v8516, %v1640
      %v8534 = vmul.bf16 %v8517, %v1648
      %v8535 = vmul.bf16 %v8518, %v1656
      %v8536 = vmul.bf16 %v8519, %v1664
      %v8537 = vmul.bf16 %v8520, %v1672
      %v8538 = vmul.bf16 %v8521, %v1680
      %v8539 = vmul.bf16 %v8522, %v1688
      %v8540 = vmul.bf16 %v8523, %v1696
      %v8541 = vmul.bf16 %v8524, %v1704
      %v8542 = vmul.bf16 %v8525, %v1712
      %v8543 = vmul.bf16 %v8526, %v1720
      %v8544 = vmul.bf16 %v8527, %v1728
      %v8545 = vmul.bf16 %v8528, %v1736
      %v8546 = vmul.bf16 %v8529, %v1732
      %v8547 = vld [vmem:[%s2 + $0x20] sm:$0xf]
      %v8548 = vld [vmem:[#allocation4] sm:$0xff]
      %v8549 = vld [vmem:[#allocation4 + $0x8] sm:$0xff]
      %v8550 = vld [vmem:[#allocation4 + $0x10] sm:$0xff]
      %v8551 = vld [vmem:[#allocation4 + $0x18] sm:$0xff]
      %v8552 = vld [vmem:[#allocation4 + $0x20] sm:$0xff]
      %v8553 = vld [vmem:[#allocation4 + $0x28] sm:$0xff]
      %v8554 = vld [vmem:[#allocation4 + $0x30] sm:$0xff]
      %v8555 = vld [vmem:[#allocation4 + $0x38] sm:$0xff]
      %v8556 = vld [vmem:[#allocation4 + $0x40] sm:$0xff]
      %v8557 = vld [vmem:[#allocation4 + $0x48] sm:$0xff]
      %v8558 = vld [vmem:[#allocation4 + $0x50] sm:$0xff]
      %v8559 = vld [vmem:[#allocation4 + $0x58] sm:$0xff]
      %v8560 = vld [vmem:[#allocation4 + $0x60] sm:$0xff]
      %v8561 = vld [vmem:[#allocation4 + $0x68] sm:$0xff]
      %v8562 = vld [vmem:[#allocation4 + $0x70] sm:$0xff]
      %v8563 = vld [vmem:[#allocation4 + $0x78] sm:$0xff]
      %v8564 = vld [vmem:[#allocation4 + $0x80] sm:$0xff]
      %v8565 = vld [vmem:[#allocation4 + $0x88] sm:$0xff]
      %v8566 = vld [vmem:[#allocation4 + $0x90] sm:$0xff]
      %v8567 = vld [vmem:[#allocation4 + $0x98] sm:$0xff]
      %v8568 = vld [vmem:[#allocation4 + $0xa0] sm:$0xff]
      %v8569 = vld [vmem:[#allocation4 + $0xa8] sm:$0xff]
      %v8570 = vld [vmem:[#allocation4 + $0xb0] sm:$0xff]
      %v8571 = vld [vmem:[#allocation4 + $0xb8] sm:$0xff]
      %v8572 = vld [vmem:[#allocation4 + $0xc0] sm:$0xff]
      %v8573 = vld [vmem:[#allocation4 + $0xc8] sm:$0xff]
      %v8574 = vld [vmem:[#allocation4 + $0xd0] sm:$0xff]
      %v8575 = vld [vmem:[#allocation4 + $0xd8] sm:$0xff]
      %v8576 = vld [vmem:[#allocation4 + $0xe0] sm:$0xff]
      %v8577 = vld [vmem:[#allocation4 + $0xe8] sm:$0xff]
      %v8578 = vld [vmem:[#allocation4 + $0xf0] sm:$0xff]
      %v8579 = vld [vmem:[#allocation4 + $0xf8] sm:$0xff]
      %v8581 = vshrl.u32 %v8530, 16
      %v8583 = vshll.u32 %v8530, 16
      %v8585 = vrot.slane %v8583, 1
      %v8586 = vor.u32 %v8581, %v8585
      %v8588 = vshll.u32 %v8531, 16
      %v8590 = vrot.slane %v8588, 1
      %v8591 = vsel %vm663, %v8586, %v8590
      %v8592 = vshrl.u32 %v8531, 16
      %v8594 = vor.u32 %v8592, %v8590
      %v8596 = vshll.u32 %v8532, 16
      %v8598 = vrot.slane %v8596, 1
      %v8599 = vsel %vm663, %v8594, %v8598
      %v8600 = vshrl.u32 %v8532, 16
      %v8602 = vor.u32 %v8600, %v8598
      %v8604 = vshll.u32 %v8533, 16
      %v8606 = vrot.slane %v8604, 1
      %v8607 = vsel %vm663, %v8602, %v8606
      %v8608 = vshrl.u32 %v8533, 16
      %v8610 = vor.u32 %v8608, %v8606
      %v8612 = vshll.u32 %v8534, 16
      %v8614 = vrot.slane %v8612, 1
      %v8615 = vsel %vm663, %v8610, %v8614
      %v8616 = vshrl.u32 %v8534, 16
      %v8618 = vor.u32 %v8616, %v8614
      %v8620 = vshll.u32 %v8535, 16
      %v8622 = vrot.slane %v8620, 1
      %v8623 = vsel %vm663, %v8618, %v8622
      %v8624 = vshrl.u32 %v8535, 16
      %v8626 = vor.u32 %v8624, %v8622
      %v8628 = vshll.u32 %v8536, 16
      %v8630 = vrot.slane %v8628, 1
      %v8631 = vsel %vm663, %v8626, %v8630
      %v8632 = vshrl.u32 %v8536, 16
      %v8634 = vor.u32 %v8632, %v8630
      %v8636 = vshll.u32 %v8537, 16
      %v8638 = vrot.slane %v8636, 1
      %v8639 = vsel %vm663, %v8634, %v8638
      %v8640 = vshrl.u32 %v8537, 16
      %v8642 = vor.u32 %v8640, %v8638
      %v8644 = vshll.u32 %v8538, 16
      %v8646 = vrot.slane %v8644, 1
      %v8647 = vsel %vm663, %v8642, %v8646
      %v8648 = vshrl.u32 %v8538, 16
      %v8650 = vor.u32 %v8648, %v8646
      %v8652 = vshll.u32 %v8539, 16
      %v8654 = vrot.slane %v8652, 1
      %v8655 = vsel %vm663, %v8650, %v8654
      %v8656 = vshrl.u32 %v8539, 16
      %v8658 = vor.u32 %v8656, %v8654
      %v8660 = vshll.u32 %v8540, 16
      %v8662 = vrot.slane %v8660, 1
      %v8663 = vsel %vm663, %v8658, %v8662
      %v8664 = vshrl.u32 %v8540, 16
      %v8666 = vor.u32 %v8664, %v8662
      %v8668 = vshll.u32 %v8541, 16
      %v8670 = vrot.slane %v8668, 1
      %v8671 = vsel %vm663, %v8666, %v8670
      %v8672 = vshrl.u32 %v8541, 16
      %v8674 = vor.u32 %v8672, %v8670
      %v8676 = vshll.u32 %v8542, 16
      %v8678 = vrot.slane %v8676, 1
      %v8679 = vsel %vm663, %v8674, %v8678
      %v8680 = vshrl.u32 %v8542, 16
      %v8682 = vor.u32 %v8680, %v8678
      %v8684 = vshll.u32 %v8543, 16
      %v8686 = vrot.slane %v8684, 1
      %v8687 = vsel %vm663, %v8682, %v8686
      %v8688 = vshrl.u32 %v8543, 16
      %v8690 = vor.u32 %v8688, %v8686
      %v8692 = vshll.u32 %v8544, 16
      %v8694 = vrot.slane %v8692, 1
      %v8695 = vsel %vm663, %v8690, %v8694
      %v8696 = vshrl.u32 %v8544, 16
      %v8698 = vor.u32 %v8696, %v8694
      %v8700 = vshll.u32 %v8545, 16
      %v8702 = vrot.slane %v8700, 1
      %v8703 = vsel %vm663, %v8698, %v8702
      %v8704 = vshrl.u32 %v8545, 16
      %v8706 = vor.u32 %v8704, %v8702
      %v8708 = vshll.u32 %v8546, 16
      %v8710 = vrot.slane %v8708, 1
      %v8711 = vsel %vm663, %v8706, %v8710
      %v8713 = vsel %vm172, %v8591, 0
      %v8716 = vsel %vm172, %v8599, 0
      %v8719 = vsel %vm172, %v8607, 0
      %v8722 = vsel %vm172, %v8615, 0
      %v8725 = vsel %vm172, %v8623, 0
      %v8728 = vsel %vm172, %v8631, 0
      %v8731 = vsel %vm172, %v8639, 0
      %v8734 = vsel %vm172, %v8647, 0
      %v8737 = vsel %vm172, %v8655, 0
      %v8740 = vsel %vm172, %v8663, 0
      %v8743 = vsel %vm172, %v8671, 0
      %v8746 = vsel %vm172, %v8679, 0
      %v8749 = vsel %vm172, %v8687, 0
      %v8752 = vsel %vm172, %v8695, 0
      %v8755 = vsel %vm172, %v8703, 0
      %v8758 = vsel %vm172, %v8711, 0
      %v8761 = vsel %vm1039, %v8547, 0
      %8763 = vmatprep.subr.bf16.mxu0 0
      %8764 = vmatpush1.bf16.msra.mxu0 %v8761
      %8765 = vmatprep.subr.bf16.mxu0 0
      %8766 = vmatpush1.bf16.msra.mxu0 0
      %8767 = vmatprep.subr.bf16.mxu0 0
      %8768 = vmatpush1.bf16.msra.mxu0 0
      %8769 = vmatprep.subr.bf16.mxu0 0
      %8770 = vmatpush1.bf16.msra.mxu0 0
      %8771 = vmatprep.subr.bf16.mxu0 0
      %8772 = vmatpush1.bf16.msra.mxu0 0
      %8773 = vmatprep.subr.bf16.mxu0 0
      %8774 = vmatpush1.bf16.msra.mxu0 0
      %8775 = vmatprep.subr.bf16.mxu0 0
      %8776 = vmatpush1.bf16.msra.mxu0 0
      %8777 = vmatprep.subr.bf16.mxu0 0
      %8778 = vmatpush1.bf16.msra.mxu0 0
      %8779 = vmatprep.subr.bf16.mxu0 0
      %8780 = vmatpush1.bf16.msra.mxu0 0
      %8781 = vmatprep.subr.bf16.mxu0 0
      %8782 = vmatpush1.bf16.msra.mxu0 0
      %8783 = vmatprep.subr.bf16.mxu0 0
      %8784 = vmatpush1.bf16.msra.mxu0 0
      %8785 = vmatprep.subr.bf16.mxu0 0
      %8786 = vmatpush1.bf16.msra.mxu0 0
      %8787 = vmatprep.subr.bf16.mxu0 0
      %8788 = vmatpush1.bf16.msra.mxu0 0
      %8789 = vmatprep.subr.bf16.mxu0 0
      %8790 = vmatpush1.bf16.msra.mxu0 0
      %8791 = vmatprep.subr.bf16.mxu0 0
      %8792 = vmatpush1.bf16.msra.mxu0 0
      %8793 = vmatprep.subr.bf16.mxu0 0
      %8794 = vmatpush1.bf16.msra.mxu0 0
      %8795 = vmatprep.mubr.bf16.mxu0 0
      %8796 = vmatmul.mubr.bf16.gmra.mrb[0].mxu0 %v8713
      %v8797 = vpop.f32.mrb[0].mxu0
      %v8798 = vadd.f32 0.0, %v8797
      %v8799 = vpop.f32.mrb[0].mxu0
      %v8800 = vpop.f32.mrb[0].mxu0
      %v8801 = vadd.f32 0.0, %v8800
      %v8802 = vpop.f32.mrb[0].mxu0
      %8803 = vmatprep.mubr.bf16.mxu0 0
      %8804 = vmatmul.mubr.bf16.gmra.mrb[0].mxu0 %v8716
      %v8805 = vpop.f32.mrb[0].mxu0
      %v8806 = vadd.f32 0.0, %v8805
      %v8807 = vpop.f32.mrb[0].mxu0
      %v8808 = vpop.f32.mrb[0].mxu0
      %v8809 = vadd.f32 0.0, %v8808
      %v8810 = vpop.f32.mrb[0].mxu0
      %8811 = vmatprep.mubr.bf16.mxu0 0
      %8812 = vmatmul.mubr.bf16.gmra.mrb[0].mxu0 %v8719
      %v8813 = vpop.f32.mrb[0].mxu0
      %v8814 = vadd.f32 0.0, %v8813
      %v8815 = vpop.f32.mrb[0].mxu0
      %v8816 = vpop.f32.mrb[0].mxu0
      %v8817 = vadd.f32 0.0, %v8816
      %v8818 = vpop.f32.mrb[0].mxu0
      %8819 = vmatprep.mubr.bf16.mxu0 0
      %8820 = vmatmul.mubr.bf16.gmra.mrb[0].mxu0 %v8722
      %v8821 = vpop.f32.mrb[0].mxu0
      %v8822 = vadd.f32 0.0, %v8821
      %v8823 = vpop.f32.mrb[0].mxu0
      %v8824 = vpop.f32.mrb[0].mxu0
      %v8825 = vadd.f32 0.0, %v8824
      %v8826 = vpop.f32.mrb[0].mxu0
      %8827 = vmatprep.mubr.bf16.mxu0 0
      %8828 = vmatmul.mubr.bf16.gmra.mrb[0].mxu0 %v8725
      %v8829 = vpop.f32.mrb[0].mxu0
      %v8830 = vadd.f32 0.0, %v8829
      %v8831 = vpop.f32.mrb[0].mxu0
      %v8832 = vpop.f32.mrb[0].mxu0
      %v8833 = vadd.f32 0.0, %v8832
      %v8834 = vpop.f32.mrb[0].mxu0
      %8835 = vmatprep.mubr.bf16.mxu0 0
      %8836 = vmatmul.mubr.bf16.gmra.mrb[0].mxu0 %v8728
      %v8837 = vpop.f32.mrb[0].mxu0
      %v8838 = vadd.f32 0.0, %v8837
      %v8839 = vpop.f32.mrb[0].mxu0
      %v8840 = vpop.f32.mrb[0].mxu0
      %v8841 = vadd.f32 0.0, %v8840
      %v8842 = vpop.f32.mrb[0].mxu0
      %8843 = vmatprep.mubr.bf16.mxu0 0
      %8844 = vmatmul.mubr.bf16.gmra.mrb[0].mxu0 %v8731
      %v8845 = vpop.f32.mrb[0].mxu0
      %v8846 = vadd.f32 0.0, %v8845
      %v8847 = vpop.f32.mrb[0].mxu0
      %v8848 = vpop.f32.mrb[0].mxu0
      %v8849 = vadd.f32 0.0, %v8848
      %v8850 = vpop.f32.mrb[0].mxu0
      %8851 = vmatprep.mubr.bf16.mxu0 0
      %8852 = vmatmul.mubr.bf16.gmra.mrb[0].mxu0 %v8734
      %v8853 = vpop.f32.mrb[0].mxu0
      %v8854 = vadd.f32 0.0, %v8853
      %v8855 = vpop.f32.mrb[0].mxu0
      %v8856 = vpop.f32.mrb[0].mxu0
      %v8857 = vadd.f32 0.0, %v8856
      %v8858 = vpop.f32.mrb[0].mxu0
      %8859 = vmatprep.mubr.bf16.mxu0 0
      %8860 = vmatmul.mubr.bf16.gmra.mrb[0].mxu0 %v8737
      %v8861 = vpop.f32.mrb[0].mxu0
      %v8862 = vadd.f32 0.0, %v8861
      %v8863 = vpop.f32.mrb[0].mxu0
      %v8864 = vpop.f32.mrb[0].mxu0
      %v8865 = vadd.f32 0.0, %v8864
      %v8866 = vpop.f32.mrb[0].mxu0
      %8867 = vmatprep.mubr.bf16.mxu0 0
      %8868 = vmatmul.mubr.bf16.gmra.mrb[0].mxu0 %v8740
      %v8869 = vpop.f32.mrb[0].mxu0
      %v8870 = vadd.f32 0.0, %v8869
      %v8871 = vpop.f32.mrb[0].mxu0
      %v8872 = vpop.f32.mrb[0].mxu0
      %v8873 = vadd.f32 0.0, %v8872
      %v8874 = vpop.f32.mrb[0].mxu0
      %8875 = vmatprep.mubr.bf16.mxu0 0
      %8876 = vmatmul.mubr.bf16.gmra.mrb[0].mxu0 %v8743
      %v8877 = vpop.f32.mrb[0].mxu0
      %v8878 = vadd.f32 0.0, %v8877
      %v8879 = vpop.f32.mrb[0].mxu0
      %v8880 = vpop.f32.mrb[0].mxu0
      %v8881 = vadd.f32 0.0, %v8880
      %v8882 = vpop.f32.mrb[0].mxu0
      %8883 = vmatprep.mubr.bf16.mxu0 0
      %8884 = vmatmul.mubr.bf16.gmra.mrb[0].mxu0 %v8746
      %v8885 = vpop.f32.mrb[0].mxu0
      %v8886 = vadd.f32 0.0, %v8885
      %v8887 = vpop.f32.mrb[0].mxu0
      %v8888 = vpop.f32.mrb[0].mxu0
      %v8889 = vadd.f32 0.0, %v8888
      %v8890 = vpop.f32.mrb[0].mxu0
      %8891 = vmatprep.mubr.bf16.mxu0 0
      %8892 = vmatmul.mubr.bf16.gmra.mrb[0].mxu0 %v8749
      %v8893 = vpop.f32.mrb[0].mxu0
      %v8894 = vadd.f32 0.0, %v8893
      %v8895 = vpop.f32.mrb[0].mxu0
      %v8896 = vpop.f32.mrb[0].mxu0
      %v8897 = vadd.f32 0.0, %v8896
      %v8898 = vpop.f32.mrb[0].mxu0
      %8899 = vmatprep.mubr.bf16.mxu0 0
      %8900 = vmatmul.mubr.bf16.gmra.mrb[0].mxu0 %v8752
      %v8901 = vpop.f32.mrb[0].mxu0
      %v8902 = vadd.f32 0.0, %v8901
      %v8903 = vpop.f32.mrb[0].mxu0
      %v8904 = vpop.f32.mrb[0].mxu0
      %v8905 = vadd.f32 0.0, %v8904
      %v8906 = vpop.f32.mrb[0].mxu0
      %8907 = vmatprep.mubr.bf16.mxu0 0
      %8908 = vmatmul.mubr.bf16.gmra.mrb[0].mxu0 %v8755
      %v8909 = vpop.f32.mrb[0].mxu0
      %v8910 = vadd.f32 0.0, %v8909
      %v8911 = vpop.f32.mrb[0].mxu0
      %v8912 = vpop.f32.mrb[0].mxu0
      %v8913 = vadd.f32 0.0, %v8912
      %v8914 = vpop.f32.mrb[0].mxu0
      %8915 = vmatprep.mubr.bf16.mxu0 0
      %8916 = vmatmul.mubr.bf16.gmra.mrb[0].mxu0 %v8758
      %v8917 = vpop.f32.mrb[0].mxu0
      %v8918 = vadd.f32 0.0, %v8917
      %v8919 = vpop.f32.mrb[0].mxu0
      %v8920 = vpop.f32.mrb[0].mxu0
      %v8921 = vadd.f32 0.0, %v8920
      %v8922 = vpop.f32.mrb[0].mxu0
      %8923 = vdwg.mxu0
      %v8924 = vadd.f32 %v8548, %v8798
      %v8925 = vadd.f32 %v8549, %v8801
      %v8926 = vadd.f32 %v8550, %v8806
      %v8927 = vadd.f32 %v8551, %v8809
      %v8928 = vadd.f32 %v8552, %v8814
      %v8929 = vadd.f32 %v8553, %v8817
      %v8930 = vadd.f32 %v8554, %v8822
      %v8931 = vadd.f32 %v8555, %v8825
      %v8932 = vadd.f32 %v8556, %v8830
      %v8933 = vadd.f32 %v8557, %v8833
      %v8934 = vadd.f32 %v8558, %v8838
      %v8935 = vadd.f32 %v8559, %v8841
      %v8936 = vadd.f32 %v8560, %v8846
      %v8937 = vadd.f32 %v8561, %v8849
      %v8938 = vadd.f32 %v8562, %v8854
      %v8939 = vadd.f32 %v8563, %v8857
      %v8940 = vadd.f32 %v8564, %v8862
      %v8941 = vadd.f32 %v8565, %v8865
      %v8942 = vadd.f32 %v8566, %v8870
      %v8943 = vadd.f32 %v8567, %v8873
      %v8944 = vadd.f32 %v8568, %v8878
      %v8945 = vadd.f32 %v8569, %v8881
      %v8946 = vadd.f32 %v8570, %v8886
      %v8947 = vadd.f32 %v8571, %v8889
      %v8948 = vadd.f32 %v8572, %v8894
      %v8949 = vadd.f32 %v8573, %v8897
      %v8950 = vadd.f32 %v8574, %v8902
      %v8951 = vadd.f32 %v8575, %v8905
      %v8952 = vadd.f32 %v8576, %v8910
      %v8953 = vadd.f32 %v8577, %v8913
      %v8954 = vadd.f32 %v8578, %v8918
      %v8955 = vadd.f32 %v8579, %v8921
      %8956 = vst.msk [vmem:[#allocation4] sm:$0xff] %vm172, %v8924
      %8957 = vst.msk [vmem:[#allocation4 + $0x8] sm:$0xff] %vm172, %v8925
      %8958 = vst.msk [vmem:[#allocation4 + $0x10] sm:$0xff] %vm172, %v8926
      %8959 = vst.msk [vmem:[#allocation4 + $0x18] sm:$0xff] %vm172, %v8927
      %8960 = vst.msk [vmem:[#allocation4 + $0x20] sm:$0xff] %vm172, %v8928
      %8961 = vst.msk [vmem:[#allocation4 + $0x28] sm:$0xff] %vm172, %v8929
      %8962 = vst.msk [vmem:[#allocation4 + $0x30] sm:$0xff] %vm172, %v8930
      %8963 = vst.msk [vmem:[#allocation4 + $0x38] sm:$0xff] %vm172, %v8931
      %8964 = vst.msk [vmem:[#allocation4 + $0x40] sm:$0xff] %vm172, %v8932
      %8965 = vst.msk [vmem:[#allocation4 + $0x48] sm:$0xff] %vm172, %v8933
      %8966 = vst.msk [vmem:[#allocation4 + $0x50] sm:$0xff] %vm172, %v8934
      %8967 = vst.msk [vmem:[#allocation4 + $0x58] sm:$0xff] %vm172, %v8935
      %8968 = vst.msk [vmem:[#allocation4 + $0x60] sm:$0xff] %vm172, %v8936
      %8969 = vst.msk [vmem:[#allocation4 + $0x68] sm:$0xff] %vm172, %v8937
      %8970 = vst.msk [vmem:[#allocation4 + $0x70] sm:$0xff] %vm172, %v8938
      %8971 = vst.msk [vmem:[#allocation4 + $0x78] sm:$0xff] %vm172, %v8939
      %8972 = vst.msk [vmem:[#allocation4 + $0x80] sm:$0xff] %vm172, %v8940
      %8973 = vst.msk [vmem:[#allocation4 + $0x88] sm:$0xff] %vm172, %v8941
      %8974 = vst.msk [vmem:[#allocation4 + $0x90] sm:$0xff] %vm172, %v8942
      %8975 = vst.msk [vmem:[#allocation4 + $0x98] sm:$0xff] %vm172, %v8943
      %8976 = vst.msk [vmem:[#allocation4 + $0xa0] sm:$0xff] %vm172, %v8944
      %8977 = vst.msk [vmem:[#allocation4 + $0xa8] sm:$0xff] %vm172, %v8945
      %8978 = vst.msk [vmem:[#allocation4 + $0xb0] sm:$0xff] %vm172, %v8946
      %8979 = vst.msk [vmem:[#allocation4 + $0xb8] sm:$0xff] %vm172, %v8947
      %8980 = vst.msk [vmem:[#allocation4 + $0xc0] sm:$0xff] %vm172, %v8948
      %8981 = vst.msk [vmem:[#allocation4 + $0xc8] sm:$0xff] %vm172, %v8949
      %8982 = vst.msk [vmem:[#allocation4 + $0xd0] sm:$0xff] %vm172, %v8950
      %8983 = vst.msk [vmem:[#allocation4 + $0xd8] sm:$0xff] %vm172, %v8951
      %8984 = vst.msk [vmem:[#allocation4 + $0xe0] sm:$0xff] %vm172, %v8952
      %8985 = vst.msk [vmem:[#allocation4 + $0xe8] sm:$0xff] %vm172, %v8953
      %8986 = vst.msk [vmem:[#allocation4 + $0xf0] sm:$0xff] %vm172, %v8954
      %8987 = vst.msk [vmem:[#allocation4 + $0xf8] sm:$0xff] %vm172, %v8955
      %v8988 = vld [vmem:[#allocation4] sm:$0xff]
      %v8989 = vld [vmem:[#allocation4 + $0x8] sm:$0xff]
      %v8990 = vld [vmem:[#allocation4 + $0x10] sm:$0xff]
      %v8991 = vld [vmem:[#allocation4 + $0x18] sm:$0xff]
      %v8992 = vld [vmem:[#allocation4 + $0x20] sm:$0xff]
      %v8993 = vld [vmem:[#allocation4 + $0x28] sm:$0xff]
      %v8994 = vld [vmem:[#allocation4 + $0x30] sm:$0xff]
      %v8995 = vld [vmem:[#allocation4 + $0x38] sm:$0xff]
      %v8996 = vld [vmem:[#allocation4 + $0x40] sm:$0xff]
      %v8997 = vld [vmem:[#allocation4 + $0x48] sm:$0xff]
      %v8998 = vld [vmem:[#allocation4 + $0x50] sm:$0xff]
      %v8999 = vld [vmem:[#allocation4 + $0x58] sm:$0xff]
      %v9000 = vld [vmem:[#allocation4 + $0x60] sm:$0xff]
      %v9001 = vld [vmem:[#allocation4 + $0x68] sm:$0xff]
      %v9002 = vld [vmem:[#allocation4 + $0x70] sm:$0xff]
      %v9003 = vld [vmem:[#allocation4 + $0x78] sm:$0xff]
      %v9004 = vld [vmem:[#allocation4 + $0x80] sm:$0xff]
      %v9005 = vld [vmem:[#allocation4 + $0x88] sm:$0xff]
      %v9006 = vld [vmem:[#allocation4 + $0x90] sm:$0xff]
      %v9007 = vld [vmem:[#allocation4 + $0x98] sm:$0xff]
      %v9008 = vld [vmem:[#allocation4 + $0xa0] sm:$0xff]
      %v9009 = vld [vmem:[#allocation4 + $0xa8] sm:$0xff]
      %v9010 = vld [vmem:[#allocation4 + $0xb0] sm:$0xff]
      %v9011 = vld [vmem:[#allocation4 + $0xb8] sm:$0xff]
      %v9012 = vld [vmem:[#allocation4 + $0xc0] sm:$0xff]
      %v9013 = vld [vmem:[#allocation4 + $0xc8] sm:$0xff]
      %v9014 = vld [vmem:[#allocation4 + $0xd0] sm:$0xff]
      %v9015 = vld [vmem:[#allocation4 + $0xd8] sm:$0xff]
      %v9016 = vld [vmem:[#allocation4 + $0xe0] sm:$0xff]
      %v9017 = vld [vmem:[#allocation4 + $0xe8] sm:$0xff]
      %v9018 = vld [vmem:[#allocation4 + $0xf0] sm:$0xff]
      %v9019 = vld [vmem:[#allocation4 + $0xf8] sm:$0xff]
      %v9020 = vsel %vm172, %v8988, 0.0
      %v9021 = vsel %vm172, %v8989, 0.0
      %v9022 = vadd.f32 %v9020, %v9021
      %v9023 = vsel %vm172, %v8990, 0.0
      %v9024 = vadd.f32 %v9022, %v9023
      %v9025 = vsel %vm172, %v8991, 0.0
      %v9026 = vadd.f32 %v9024, %v9025
      %v9027 = vsel %vm172, %v8992, 0.0
      %v9028 = vadd.f32 %v9026, %v9027
      %v9029 = vsel %vm172, %v8993, 0.0
      %v9030 = vadd.f32 %v9028, %v9029
      %v9031 = vsel %vm172, %v8994, 0.0
      %v9032 = vadd.f32 %v9030, %v9031
      %v9033 = vsel %vm172, %v8995, 0.0
      %v9034 = vadd.f32 %v9032, %v9033
      %v9035 = vsel %vm172, %v8996, 0.0
      %v9036 = vadd.f32 %v9034, %v9035
      %v9037 = vsel %vm172, %v8997, 0.0
      %v9038 = vadd.f32 %v9036, %v9037
      %v9039 = vsel %vm172, %v8998, 0.0
      %v9040 = vadd.f32 %v9038, %v9039
      %v9041 = vsel %vm172, %v8999, 0.0
      %v9042 = vadd.f32 %v9040, %v9041
      %v9043 = vsel %vm172, %v9000, 0.0
      %v9044 = vadd.f32 %v9042, %v9043
      %v9045 = vsel %vm172, %v9001, 0.0
      %v9046 = vadd.f32 %v9044, %v9045
      %v9047 = vsel %vm172, %v9002, 0.0
      %v9048 = vadd.f32 %v9046, %v9047
      %v9049 = vsel %vm172, %v9003, 0.0
      %v9050 = vadd.f32 %v9048, %v9049
      %v9051 = vsel %vm172, %v9004, 0.0
      %v9052 = vadd.f32 %v9050, %v9051
      %v9053 = vsel %vm172, %v9005, 0.0
      %v9054 = vadd.f32 %v9052, %v9053
      %v9055 = vsel %vm172, %v9006, 0.0
      %v9056 = vadd.f32 %v9054, %v9055
      %v9057 = vsel %vm172, %v9007, 0.0
      %v9058 = vadd.f32 %v9056, %v9057
      %v9059 = vsel %vm172, %v9008, 0.0
      %v9060 = vadd.f32 %v9058, %v9059
      %v9061 = vsel %vm172, %v9009, 0.0
      %v9062 = vadd.f32 %v9060, %v9061
      %v9063 = vsel %vm172, %v9010, 0.0
      %v9064 = vadd.f32 %v9062, %v9063
      %v9065 = vsel %vm172, %v9011, 0.0
      %v9066 = vadd.f32 %v9064, %v9065
      %v9067 = vsel %vm172, %v9012, 0.0
      %v9068 = vadd.f32 %v9066, %v9067
      %v9069 = vsel %vm172, %v9013, 0.0
      %v9070 = vadd.f32 %v9068, %v9069
      %v9071 = vsel %vm172, %v9014, 0.0
      %v9072 = vadd.f32 %v9070, %v9071
      %v9073 = vsel %vm172, %v9015, 0.0
      %v9074 = vadd.f32 %v9072, %v9073
      %v9075 = vsel %vm172, %v9016, 0.0
      %v9076 = vadd.f32 %v9074, %v9075
      %v9077 = vsel %vm172, %v9017, 0.0
      %v9078 = vadd.f32 %v9076, %v9077
      %v9079 = vsel %vm172, %v9018, 0.0
      %v9080 = vadd.f32 %v9078, %v9079
      %v9081 = vsel %vm172, %v9019, 0.0
      %v9082 = vadd.f32 %v9080, %v9081
      %v9083 = vrot.slane %v9082, 4
      %v9084 = vadd.f32 %v9082, %v9083
      %v9085 = vrot.slane %v9084, 2
      %v9086 = vadd.f32 %v9084, %v9085
      %v9087 = vrot.slane %v9086, 1
      %v9088 = vadd.f32 %v9086, %v9087
      %v9089 = vmul.f32 %v9088, 0.00390625
      %v9090 = vmul.f32 %v8988, %v8988
      %v9091 = vmul.f32 %v8989, %v8989
      %v9092 = vmul.f32 %v8990, %v8990
      %v9093 = vmul.f32 %v8991, %v8991
      %v9094 = vmul.f32 %v8992, %v8992
      %v9095 = vmul.f32 %v8993, %v8993
      %v9096 = vmul.f32 %v8994, %v8994
      %v9097 = vmul.f32 %v8995, %v8995
      %v9098 = vmul.f32 %v8996, %v8996
      %v9099 = vmul.f32 %v8997, %v8997
      %v9100 = vmul.f32 %v8998, %v8998
      %v9101 = vmul.f32 %v8999, %v8999
      %v9102 = vmul.f32 %v9000, %v9000
      %v9103 = vmul.f32 %v9001, %v9001
      %v9104 = vmul.f32 %v9002, %v9002
      %v9105 = vmul.f32 %v9003, %v9003
      %v9106 = vmul.f32 %v9004, %v9004
      %v9107 = vmul.f32 %v9005, %v9005
      %v9108 = vmul.f32 %v9006, %v9006
      %v9109 = vmul.f32 %v9007, %v9007
      %v9110 = vmul.f32 %v9008, %v9008
      %v9111 = vmul.f32 %v9009, %v9009
      %v9112 = vmul.f32 %v9010, %v9010
      %v9113 = vmul.f32 %v9011, %v9011
      %v9114 = vmul.f32 %v9012, %v9012
      %v9115 = vmul.f32 %v9013, %v9013
      %v9116 = vmul.f32 %v9014, %v9014
      %v9117 = vmul.f32 %v9015, %v9015
      %v9118 = vmul.f32 %v9016, %v9016
      %v9119 = vmul.f32 %v9017, %v9017
      %v9120 = vmul.f32 %v9018, %v9018
      %v9121 = vmul.f32 %v9019, %v9019
      %v9122 = vsel %vm172, %v9090, 0.0
      %v9123 = vsel %vm172, %v9091, 0.0
      %v9124 = vadd.f32 %v9122, %v9123
      %v9125 = vsel %vm172, %v9092, 0.0
      %v9126 = vadd.f32 %v9124, %v9125
      %v9127 = vsel %vm172, %v9093, 0.0
      %v9128 = vadd.f32 %v9126, %v9127
      %v9129 = vsel %vm172, %v9094, 0.0
      %v9130 = vadd.f32 %v9128, %v9129
      %v9131 = vsel %vm172, %v9095, 0.0
      %v9132 = vadd.f32 %v9130, %v9131
      %v9133 = vsel %vm172, %v9096, 0.0
      %v9134 = vadd.f32 %v9132, %v9133
      %v9135 = vsel %vm172, %v9097, 0.0
      %v9136 = vadd.f32 %v9134, %v9135
      %v9137 = vsel %vm172, %v9098, 0.0
      %v9138 = vadd.f32 %v9136, %v9137
      %v9139 = vsel %vm172, %v9099, 0.0
      %v9140 = vadd.f32 %v9138, %v9139
      %v9141 = vsel %vm172, %v9100, 0.0
      %v9142 = vadd.f32 %v9140, %v9141
      %v9143 = vsel %vm172, %v9101, 0.0
      %v9144 = vadd.f32 %v9142, %v9143
      %v9145 = vsel %vm172, %v9102, 0.0
      %v9146 = vadd.f32 %v9144, %v9145
      %v9147 = vsel %vm172, %v9103, 0.0
      %v9148 = vadd.f32 %v9146, %v9147
      %v9149 = vsel %vm172, %v9104, 0.0
      %v9150 = vadd.f32 %v9148, %v9149
      %v9151 = vsel %vm172, %v9105, 0.0
      %v9152 = vadd.f32 %v9150, %v9151
      %v9153 = vsel %vm172, %v9106, 0.0
      %v9154 = vadd.f32 %v9152, %v9153
      %v9155 = vsel %vm172, %v9107, 0.0
      %v9156 = vadd.f32 %v9154, %v9155
      %v9157 = vsel %vm172, %v9108, 0.0
      %v9158 = vadd.f32 %v9156, %v9157
      %v9159 = vsel %vm172, %v9109, 0.0
      %v9160 = vadd.f32 %v9158, %v9159
      %v9161 = vsel %vm172, %v9110, 0.0
      %v9162 = vadd.f32 %v9160, %v9161
      %v9163 = vsel %vm172, %v9111, 0.0
      %v9164 = vadd.f32 %v9162, %v9163
      %v9165 = vsel %vm172, %v9112, 0.0
      %v9166 = vadd.f32 %v9164, %v9165
      %v9167 = vsel %vm172, %v9113, 0.0
      %v9168 = vadd.f32 %v9166, %v9167
      %v9169 = vsel %vm172, %v9114, 0.0
      %v9170 = vadd.f32 %v9168, %v9169
      %v9171 = vsel %vm172, %v9115, 0.0
      %v9172 = vadd.f32 %v9170, %v9171
      %v9173 = vsel %vm172, %v9116, 0.0
      %v9174 = vadd.f32 %v9172, %v9173
      %v9175 = vsel %vm172, %v9117, 0.0
      %v9176 = vadd.f32 %v9174, %v9175
      %v9177 = vsel %vm172, %v9118, 0.0
      %v9178 = vadd.f32 %v9176, %v9177
      %v9179 = vsel %vm172, %v9119, 0.0
      %v9180 = vadd.f32 %v9178, %v9179
      %v9181 = vsel %vm172, %v9120, 0.0
      %v9182 = vadd.f32 %v9180, %v9181
      %v9183 = vsel %vm172, %v9121, 0.0
      %v9184 = vadd.f32 %v9182, %v9183
      %v9185 = vrot.slane %v9184, 4
      %v9186 = vadd.f32 %v9184, %v9185
      %v9187 = vrot.slane %v9186, 2
      %v9188 = vadd.f32 %v9186, %v9187
      %v9189 = vrot.slane %v9188, 1
      %v9190 = vadd.f32 %v9188, %v9189
      %v9191 = vmul.f32 %v9190, 0.00390625
      %v9192 = vmul.f32 %v9089, %v9089
      %v9193 = vsub.f32 %v9191, %v9192
      %v9194 = vmax.f32 %v9193, 0.0
      %v9195 = vsub.f32 %v8988, %v9089
      %v9196 = vsub.f32 %v8989, %v9089
      %v9197 = vsub.f32 %v8990, %v9089
      %v9198 = vsub.f32 %v8991, %v9089
      %v9199 = vsub.f32 %v8992, %v9089
      %v9200 = vsub.f32 %v8993, %v9089
      %v9201 = vsub.f32 %v8994, %v9089
      %v9202 = vsub.f32 %v8995, %v9089
      %v9203 = vsub.f32 %v8996, %v9089
      %v9204 = vsub.f32 %v8997, %v9089
      %v9205 = vsub.f32 %v8998, %v9089
      %v9206 = vsub.f32 %v8999, %v9089
      %v9207 = vsub.f32 %v9000, %v9089
      %v9208 = vsub.f32 %v9001, %v9089
      %v9209 = vsub.f32 %v9002, %v9089
      %v9210 = vsub.f32 %v9003, %v9089
      %v9211 = vsub.f32 %v9004, %v9089
      %v9212 = vsub.f32 %v9005, %v9089
      %v9213 = vsub.f32 %v9006, %v9089
      %v9214 = vsub.f32 %v9007, %v9089
      %v9215 = vsub.f32 %v9008, %v9089
      %v9216 = vsub.f32 %v9009, %v9089
      %v9217 = vsub.f32 %v9010, %v9089
      %v9218 = vsub.f32 %v9011, %v9089
      %v9219 = vsub.f32 %v9012, %v9089
      %v9220 = vsub.f32 %v9013, %v9089
      %v9221 = vsub.f32 %v9014, %v9089
      %v9222 = vsub.f32 %v9015, %v9089
      %v9223 = vsub.f32 %v9016, %v9089
      %v9224 = vsub.f32 %v9017, %v9089
      %v9225 = vsub.f32 %v9018, %v9089
      %v9226 = vsub.f32 %v9019, %v9089
      %v9227 = vadd.f32 %v9194, 1e-05
      %v9228 = vrsqrt.pop %v9227
      %v9229 = vmul.f32 %v9195, %v9228
      %v9230 = vmul.f32 %v9196, %v9228
      %v9231 = vmul.f32 %v9197, %v9228
      %v9232 = vmul.f32 %v9198, %v9228
      %v9233 = vmul.f32 %v9199, %v9228
      %v9234 = vmul.f32 %v9200, %v9228
      %v9235 = vmul.f32 %v9201, %v9228
      %v9236 = vmul.f32 %v9202, %v9228
      %v9237 = vmul.f32 %v9203, %v9228
      %v9238 = vmul.f32 %v9204, %v9228
      %v9239 = vmul.f32 %v9205, %v9228
      %v9240 = vmul.f32 %v9206, %v9228
      %v9241 = vmul.f32 %v9207, %v9228
      %v9242 = vmul.f32 %v9208, %v9228
      %v9243 = vmul.f32 %v9209, %v9228
      %v9244 = vmul.f32 %v9210, %v9228
      %v9245 = vmul.f32 %v9211, %v9228
      %v9246 = vmul.f32 %v9212, %v9228
      %v9247 = vmul.f32 %v9213, %v9228
      %v9248 = vmul.f32 %v9214, %v9228
      %v9249 = vmul.f32 %v9215, %v9228
      %v9250 = vmul.f32 %v9216, %v9228
      %v9251 = vmul.f32 %v9217, %v9228
      %v9252 = vmul.f32 %v9218, %v9228
      %v9253 = vmul.f32 %v9219, %v9228
      %v9254 = vmul.f32 %v9220, %v9228
      %v9255 = vmul.f32 %v9221, %v9228
      %v9256 = vmul.f32 %v9222, %v9228
      %v9257 = vmul.f32 %v9223, %v9228
      %v9258 = vmul.f32 %v9224, %v9228
      %v9259 = vmul.f32 %v9225, %v9228
      %v9260 = vmul.f32 %v9226, %v9228
      %v9261 = vmul.f32 %v9229, 0.2
      %v9262 = vmul.f32 %v9230, 0.2
      %v9263 = vmul.f32 %v9231, 0.2
      %v9264 = vmul.f32 %v9232, 0.2
      %v9265 = vmul.f32 %v9233, 0.2
      %v9266 = vmul.f32 %v9234, 0.2
      %v9267 = vmul.f32 %v9235, 0.2
      %v9268 = vmul.f32 %v9236, 0.2
      %v9269 = vmul.f32 %v9237, 0.2
      %v9270 = vmul.f32 %v9238, 0.2
      %v9271 = vmul.f32 %v9239, 0.2
      %v9272 = vmul.f32 %v9240, 0.2
      %v9273 = vmul.f32 %v9241, 0.2
      %v9274 = vmul.f32 %v9242, 0.2
      %v9275 = vmul.f32 %v9243, 0.2
      %v9276 = vmul.f32 %v9244, 0.2
      %v9277 = vmul.f32 %v9245, 0.2
      %v9278 = vmul.f32 %v9246, 0.2
      %v9279 = vmul.f32 %v9247, 0.2
      %v9280 = vmul.f32 %v9248, 0.2
      %v9281 = vmul.f32 %v9249, 0.2
      %v9282 = vmul.f32 %v9250, 0.2
      %v9283 = vmul.f32 %v9251, 0.2
      %v9284 = vmul.f32 %v9252, 0.2
      %v9285 = vmul.f32 %v9253, 0.2
      %v9286 = vmul.f32 %v9254, 0.2
      %v9287 = vmul.f32 %v9255, 0.2
      %v9288 = vmul.f32 %v9256, 0.2
      %v9289 = vmul.f32 %v9257, 0.2
      %v9290 = vmul.f32 %v9258, 0.2
      %v9291 = vmul.f32 %v9259, 0.2
      %v9292 = vmul.f32 %v9260, 0.2
      %v9293 = vmax.f32 %v9229, %v9261
      %v9294 = vmax.f32 %v9230, %v9262
      %v9295 = vmax.f32 %v9231, %v9263
      %v9296 = vmax.f32 %v9232, %v9264
      %v9297 = vmax.f32 %v9233, %v9265
      %v9298 = vmax.f32 %v9234, %v9266
      %v9299 = vmax.f32 %v9235, %v9267
      %v9300 = vmax.f32 %v9236, %v9268
      %v9301 = vmax.f32 %v9237, %v9269
      %v9302 = vmax.f32 %v9238, %v9270
      %v9303 = vmax.f32 %v9239, %v9271
      %v9304 = vmax.f32 %v9240, %v9272
      %v9305 = vmax.f32 %v9241, %v9273
      %v9306 = vmax.f32 %v9242, %v9274
      %v9307 = vmax.f32 %v9243, %v9275
      %v9308 = vmax.f32 %v9244, %v9276
      %v9309 = vmax.f32 %v9245, %v9277
      %v9310 = vmax.f32 %v9246, %v9278
      %v9311 = vmax.f32 %v9247, %v9279
      %v9312 = vmax.f32 %v9248, %v9280
      %v9313 = vmax.f32 %v9249, %v9281
      %v9314 = vmax.f32 %v9250, %v9282
      %v9315 = vmax.f32 %v9251, %v9283
      %v9316 = vmax.f32 %v9252, %v9284
      %v9317 = vmax.f32 %v9253, %v9285
      %v9318 = vmax.f32 %v9254, %v9286
      %v9319 = vmax.f32 %v9255, %v9287
      %v9320 = vmax.f32 %v9256, %v9288
      %v9321 = vmax.f32 %v9257, %v9289
      %v9322 = vmax.f32 %v9258, %v9290
      %v9323 = vmax.f32 %v9259, %v9291
      %v9324 = vmax.f32 %v9260, %v9292
      %9325 = vst.msk [vmem:[%s170] sm:$0xff] %vm172, %v9293
      %9326 = vst.msk [vmem:[%s170 + $0x8] sm:$0xff] %vm172, %v9294
      %9327 = vst.msk [vmem:[%s170 + $0x10] sm:$0xff] %vm172, %v9295
      %9328 = vst.msk [vmem:[%s170 + $0x18] sm:$0xff] %vm172, %v9296
      %9329 = vst.msk [vmem:[%s170 + $0x20] sm:$0xff] %vm172, %v9297
      %9330 = vst.msk [vmem:[%s170 + $0x28] sm:$0xff] %vm172, %v9298
      %9331 = vst.msk [vmem:[%s170 + $0x30] sm:$0xff] %vm172, %v9299
      %9332 = vst.msk [vmem:[%s170 + $0x38] sm:$0xff] %vm172, %v9300
      %9333 = vst.msk [vmem:[%s170 + $0x40] sm:$0xff] %vm172, %v9301
      %9334 = vst.msk [vmem:[%s170 + $0x48] sm:$0xff] %vm172, %v9302
      %9335 = vst.msk [vmem:[%s170 + $0x50] sm:$0xff] %vm172, %v9303
      %9336 = vst.msk [vmem:[%s170 + $0x58] sm:$0xff] %vm172, %v9304
      %9337 = vst.msk [vmem:[%s170 + $0x60] sm:$0xff] %vm172, %v9305
      %9338 = vst.msk [vmem:[%s170 + $0x68] sm:$0xff] %vm172, %v9306
      %9339 = vst.msk [vmem:[%s170 + $0x70] sm:$0xff] %vm172, %v9307
      %9340 = vst.msk [vmem:[%s170 + $0x78] sm:$0xff] %vm172, %v9308
      %9341 = vst.msk [vmem:[%s170 + $0x80] sm:$0xff] %vm172, %v9309
      %9342 = vst.msk [vmem:[%s170 + $0x88] sm:$0xff] %vm172, %v9310
      %9343 = vst.msk [vmem:[%s170 + $0x90] sm:$0xff] %vm172, %v9311
      %9344 = vst.msk [vmem:[%s170 + $0x98] sm:$0xff] %vm172, %v9312
      %9345 = vst.msk [vmem:[%s170 + $0xa0] sm:$0xff] %vm172, %v9313
      %9346 = vst.msk [vmem:[%s170 + $0xa8] sm:$0xff] %vm172, %v9314
      %9347 = vst.msk [vmem:[%s170 + $0xb0] sm:$0xff] %vm172, %v9315
      %9348 = vst.msk [vmem:[%s170 + $0xb8] sm:$0xff] %vm172, %v9316
      %9349 = vst.msk [vmem:[%s170 + $0xc0] sm:$0xff] %vm172, %v9317
      %9350 = vst.msk [vmem:[%s170 + $0xc8] sm:$0xff] %vm172, %v9318
      %9351 = vst.msk [vmem:[%s170 + $0xd0] sm:$0xff] %vm172, %v9319
      %9352 = vst.msk [vmem:[%s170 + $0xd8] sm:$0xff] %vm172, %v9320
      %9353 = vst.msk [vmem:[%s170 + $0xe0] sm:$0xff] %vm172, %v9321
      %9354 = vst.msk [vmem:[%s170 + $0xe8] sm:$0xff] %vm172, %v9322
      %9355 = vst.msk [vmem:[%s170 + $0xf0] sm:$0xff] %vm172, %v9323
      %9356 = vst.msk [vmem:[%s170 + $0xf8] sm:$0xff] %vm172, %v9324
      %p9357 = scmp.lt.s32.totalorder %s14, 1
      %s9358 = scalar_select %p9357, %s14, 1
      %s9359 = smul.addr %s9358, 32
      %s9360 = smul.addr %s9359, 8
      %s9361 = scalar_lea.vmem %s3, %s9360
      // Predicated region
      $region33: #{conv_block_forward.1} parent=31 // pred_check
        %p9362 = pneg %p100
      $region34: #{conv_block_forward.1} parent=31 // pred_check_branch
        %9364 = sbr.rel (%p9362) target = $region36
      $region35: #{conv_block_forward.1} parent=31 // pred_region
        _
      $region36: #{conv_block_forward.1} parent=31 // pred_fallthru
        _
    $region32: #{conv_block_forward.1} parent=5 // pred_fallthru
      _
    %p9365 = scmp.le.s32.totalorder 2, %s9
    // Predicated region
    $region37: #{conv_block_forward.1} parent=5 // pred_check
      %p9366 = pneg %p9365
    $region38: #{conv_block_forward.1} parent=5 // pred_check_branch
      %9368 = sbr.rel (%p9366) target = $region40
    $region39: #{conv_block_forward.1} parent=5 // pred_region
      %s9369 = ssub.s32 %s9, 2
      // Predicated region
      $region41: #{conv_block_forward.1} parent=39 // pred_check
        %p9370 = pneg %p106
      $region42: #{conv_block_forward.1} parent=39 // pred_check_branch
        %9372 = sbr.rel (%p9370) target = $region44
      $region43: #{conv_block_forward.1} parent=39 // pred_region
        %p9373 = scmp.lt.s32.totalorder %s15, 1
        %s9374 = scalar_select %p9373, %s15, 1
        %s9375 = smul.addr %s9374, 32
        %s9376 = smul.addr %s9375, 8
        %s9377 = scalar_lea.vmem %s3, %s9376
      $region44: #{conv_block_forward.1} parent=39 // pred_fallthru
        _
    $region40: #{conv_block_forward.1} parent=5 // pred_fallthru
      _
  $region6: #{conv_block_forward.1} parent=0 // loop_footer
    %s13 = sadd.s32 1, %s9
  $region7: #{conv_block_forward.1} parent=0 // loop_footer_branch
    %8 = sbr.rel target = $region3
  $region8: #{conv_block_forward.1} parent=0 // loop_exit
    _

</llo_original>
